<compile_context>
chip_gen: v5e
topology: v5e:2x2
jax: 0.10.0
libtpu: 0.0.40
codegen_flags: <defaults>
</compile_context>

<pallas_src>
import functools
import numpy as np

import jax
import jax.numpy as jnp
from jax.experimental import pallas as pl
from jax.experimental.pallas import tpu as pltpu

LEAKY_SLOPE = 0.01   # F.leaky_relu default
BN_EPS = 1e-5        # nn.BatchNorm default


def _full_spec(shape):
    """Whole-array block for a grid=(1,) call."""
    nd = len(shape)
    return pl.BlockSpec(shape, lambda *_: (0,) * nd)


# ---------------------------------------------------------------------------
# Fused stage kernel: [optional 3D head] + one full DenseNet2D_down_block
# (conv1, conv21, conv22, conv31, conv32, conv4); everything VMEM resident.
# Activations are (C, Mp) with the flattened padded pixel grid on the lane axis
# and exact zeros on the padding lanes.
# ---------------------------------------------------------------------------
def _stage_kernel(*refs, wp, count, has_head):
    n_layers = 7 if has_head else 6
    x_ref, mask_ref = refs[0], refs[1]
    prefs = refs[2:2 + 3 * n_layers]
    skip_ref = refs[2 + 3 * n_layers]
    z4_ref = refs[3 + 3 * n_layers]
    slab_ref = refs[4 + 3 * n_layers]            # VMEM scratch (9*cin_max, Mp) f32

    mask = mask_ref[...]                         # (1, Mp), 1.0 on real pixels
    mp = mask.shape[1]
    tail = wp + 1                                # largest |tap shift|
    inv_n = 1.0 / count

    # Columns some taps never write live only in the first/last `tail` lanes of the
    # slab; zero them once so masked-out conv outputs stay finite (no 0*NaN in BN).
    rows = slab_ref.shape[0]
    slab_ref[:, :tail] = jnp.zeros((rows, tail), jnp.float32)
    slab_ref[:, mp - tail:] = jnp.zeros((rows, tail), jnp.float32)

    def bn_act(acc, g_ref, b_ref):
        # BatchNorm (biased batch statistics over valid pixels) + leaky_relu, then
        # re-zero the padding lanes so the result can directly feed the next 3x3 conv.
        mean = jnp.sum(acc * mask, axis=1, keepdims=True) * inv_n
        diff = (acc - mean) * mask
        var = jnp.sum(diff * diff, axis=1, keepdims=True) * inv_n
        scale = g_ref[...] * jax.lax.rsqrt(var + BN_EPS)
        shift = b_ref[...] - mean * scale
        z = acc * scale + shift
        z = jnp.where(z >= 0.0, z, LEAKY_SLOPE * z)
        return z * mask

    def conv3(x, w_ref, g_ref, b_ref):
        # 3x3 conv: stack the 9 shifted taps along the contraction (sublane) axis in
        # the scratch slab, then ONE deep-K matmul (cout, 9*cin) @ (9*cin, Mp).
        cin = x.shape[0]
        for dy in range(3):
            for dx in range(3):
                t = dy * 3 + dx
                s = (dy - 1) * wp + (dx - 1)
                dst_lo = max(0, -s)
                dst_hi = mp - max(0, s)
                src_lo = dst_lo + s
                src_hi = dst_hi + s
                slab_ref[t * cin:(t + 1) * cin, dst_lo:dst_hi] = x[:, src_lo:src_hi]
        slab = slab_ref[:9 * cin, :].astype(jnp.bfloat16)
        acc = jnp.dot(w_ref[...], slab, preferred_element_type=jnp.float32)
        return bn_act(acc, g_ref, b_ref)

    def conv1(parts, w_ref, g_ref, b_ref):
        # 1x1 conv on an implicit torch.cat(parts, dim=1): split-weight matmuls,
        # concat never materialised.
        acc = None
        off = 0
        for p in parts:
            c = p.shape[0]
            term = jnp.dot(w_ref[:, off:off + c], p.astype(jnp.bfloat16),
                           preferred_element_type=jnp.float32)
            acc = term if acc is None else acc + term
            off += c
        return bn_act(acc, g_ref, b_ref)

    layer = [tuple(prefs[3 * i:3 * i + 3]) for i in range(n_layers)]
    li = iter(layer)

    x = x_ref[...]
    if has_head:
        x = conv3(x, *next(li))                  # 3D head collapsed to a 2D conv
    y1 = conv3(x, *next(li))                     # conv1
    t21 = conv1([x, y1], *next(li))              # conv21 on cat([x, y1], 1)
    out22 = conv3(t21, *next(li))                # conv22
    t31 = conv1([x, y1, out22], *next(li))       # conv31 on cat([x, y1, out22], 1)
    out32 = conv3(t31, *next(li))                # conv32
    it = out32.shape[0]
    skip_ref[:it, :] = out32                     # skip = cat([out32, x], 1)
    skip_ref[it:it + x.shape[0], :] = x
    z4_ref[...] = conv1([out32, x], *next(li))   # conv4 (AvgPool applied outside)


# ---------------------------------------------------------------------------
# Wrappers
# ---------------------------------------------------------------------------
def fused_stage(x_pad, mask, layers, *, n, h, w, has_head):
    """One pallas_call running [optional head conv] + a full down block.

    x_pad : (cin, Mp) f32 activation on the zero-padded pixel grid.
    layers: list of (w_bf16 (cout, K), gamma (cout, 1), beta (cout, 1)) in execution
            order [head?, conv1, conv21, conv22, conv31, conv32, conv4].
    Returns (skip_padded (it+ic, Mp), conv4_padded (oc, Mp)), both f32 padded grid.
    """
    mp = x_pad.shape[1]
    wp = w + 2
    x_c = layers[0][0].shape[0] if has_head else x_pad.shape[0]
    it = layers[-2][0].shape[0]                  # conv32 out channels
    skip_c = it + x_c
    oc = layers[-1][0].shape[0]                  # conv4 out channels

    # Scratch slab must hold the 9 shifted taps of the widest 3x3 conv input.
    conv3_cins = ([x_pad.shape[0]] if has_head else []) + [x_c, it, it]
    cin_max = max(conv3_cins)

    inputs = [x_pad, mask]
    in_specs = [_full_spec(tuple(x_pad.shape)), _full_spec(tuple(mask.shape))]
    for wt, g, b in layers:
        inputs += [wt, g, b]
        in_specs += [_full_spec(tuple(wt.shape)), _full_spec(tuple(g.shape)),
                     _full_spec(tuple(b.shape))]

    kern = functools.partial(_stage_kernel, wp=wp, count=float(n * h * w),
                             has_head=has_head)
    return pl.pallas_call(
        kern,
        out_shape=(jax.ShapeDtypeStruct((skip_c, mp), jnp.float32),
                   jax.ShapeDtypeStruct((oc, mp), jnp.float32)),
        grid=(1,),
        in_specs=in_specs,
        out_specs=(_full_spec((skip_c, mp)), _full_spec((oc, mp))),
        scratch_shapes=[pltpu.VMEM((9 * cin_max, mp), jnp.float32)],
    )(*inputs)


def _pad_grid(x_cnhw):
    c, n, h, w = x_cnhw.shape
    xp = jnp.pad(x_cnhw, ((0, 0), (0, 0), (1, 1), (1, 1)))
    return xp.reshape(c, n * (h + 2) * (w + 2))


def _strip_grid(x_cm, n, h, w):
    c = x_cm.shape[0]
    return x_cm.reshape(c, n, h + 2, w + 2)[:, :, 1:h + 1, 1:w + 1]


def _avg_pool2(x_cnhw):
    c, n, h, w = x_cnhw.shape
    return x_cnhw.reshape(c, n, h // 2, 2, w // 2, 2).mean(axis=(3, 5))


def _make_mask(n, h, w):
    hp, wp = h + 2, w + 2
    m = np.zeros((n, hp, wp), np.float32)
    m[:, 1:h + 1, 1:w + 1] = 1.0
    return jnp.asarray(m.reshape(1, n * hp * wp))


def _prep3(p):
    w = p['w']                                         # (3, 3, cin, cout) HWIO f32
    kh, kw, cin, cout = w.shape
    wt = jnp.transpose(w.reshape(kh * kw * cin, cout)).astype(jnp.bfloat16)
    return (wt, p['gamma'].reshape(cout, 1), p['beta'].reshape(cout, 1))


def _prep1(p):
    cout = p['w'].shape[1]
    wt = jnp.transpose(p['w']).astype(jnp.bfloat16)    # (cout, cin)
    return (wt, p['gamma'].reshape(cout, 1), p['beta'].reshape(cout, 1))


# ---------------------------------------------------------------------------
# Model structure
# ---------------------------------------------------------------------------
def getSizes(chz, growth, blks=4):
    sizes = {'enc': {'inter': [], 'ip': [], 'op': []}}
    sizes['enc']['inter'] = np.array([chz * (i + 1) for i in range(blks)])
    sizes['enc']['op'] = np.array([int(growth * chz * (i + 1)) for i in range(blks)])
    sizes['enc']['ip'] = np.array(
        [chz] + [int(growth * chz * (i + 1)) for i in range(blks - 1)])
    return sizes


def _conv3_param(key, cin, cout):
    return {'w': 0.1 * jax.random.normal(key, (3, 3, cin, cout), jnp.float32),
            'gamma': jnp.ones((cout,), jnp.float32),
            'beta': jnp.zeros((cout,), jnp.float32)}


def _conv1_param(key, cin, cout):
    return {'w': 0.1 * jax.random.normal(key, (cin, cout), jnp.float32),
            'gamma': jnp.ones((cout,), jnp.float32),
            'beta': jnp.zeros((cout,), jnp.float32)}


def init_params(key, args, in_c=1):
    chz = args['base_channel_size']
    sizes = getSizes(chz, args['growth_rate'], args['num_blocks'])
    keys = jax.random.split(key, 1 + 6 * args['num_blocks'])
    params = {'head': _conv3_param(keys[0], in_c * args['frames'], chz),
              'blocks': []}
    ki = 1
    for b in range(args['num_blocks']):
        ic = int(sizes['enc']['ip'][b])
        it = int(sizes['enc']['inter'][b])
        oc = int(sizes['enc']['op'][b])
        blk = {
            'conv1':  _conv3_param(keys[ki + 0], ic, it),
            'conv21': _conv1_param(keys[ki + 1], ic + it, it),
            'conv22': _conv3_param(keys[ki + 2], it, it),
            'conv31': _conv1_param(keys[ki + 3], ic + 2 * it, it),
            'conv32': _conv3_param(keys[ki + 4], it, it),
            'conv4':  _conv1_param(keys[ki + 5], ic + it, oc),
        }
        ki += 6
        params['blocks'].append(blk)
    return params


def dense_net_encoder(x_ncdhw, params):
    # x: (N, in_c, frames, H, W) -- PyTorch NCDHW.
    n, cin, f, h, w = x_ncdhw.shape
    # 3D head with kernel (frames,3,3), pad (0,1,1) == 2D conv over in_c*frames
    # channels (depth collapses to 1, matching x.squeeze(2)); channel-major layout.
    x = jnp.transpose(x_ncdhw, (1, 2, 0, 3, 4)).reshape(cin * f, n, h, w)

    skips = []
    cur = x
    for b, blk in enumerate(params['blocks']):
        has_head = (b == 0)
        layers = ([_prep3(params['head'])] if has_head else [])
        layers += [_prep3(blk['conv1']), _prep1(blk['conv21']), _prep3(blk['conv22']),
                   _prep1(blk['conv31']), _prep3(blk['conv32']), _prep1(blk['conv4'])]
        skip_p, z4_p = fused_stage(_pad_grid(cur), _make_mask(n, h, w), layers,
                                   n=n, h=h, w=w, has_head=has_head)
        skips.append(jnp.transpose(_strip_grid(skip_p, n, h, w), (1, 0, 2, 3)))
        # Transition_down: AvgPool2d(2) on the conv4(+BN+act) output (tiny XLA glue).
        cur = _avg_pool2(_strip_grid(z4_p, n, h, w))
        h, w = h // 2, w // 2

    # recalib is None (use_ada_instance_norm / _mixup are False)
    skips.append(jnp.transpose(cur, (1, 0, 2, 3)))
    return tuple(skips)


# ---------------------------------------------------------------------------
if __name__ == "__main__":
    args = dict(
        frames=4,
        base_channel_size=8,
        growth_rate=1.5,
        num_blocks=2,
        use_scSE=False,
        groups=1,
        dropout=False,
        track_running_stats=False,
        use_ada_instance_norm=False,
        use_ada_instance_norm_mixup=False,
    )

    key = jax.random.PRNGKey(0)
    kx, kp = jax.random.split(key)
    x = jax.random.normal(kx, (2, 1, args['frames'], 16, 16), jnp.float32)
    params = init_params(kp, args)

    fwd = jax.jit(functools.partial(dense_net_encoder, params=params))
    outs = jax.block_until_ready(fwd(x))

    # expected: skip0 (2,16,16,16), skip1 (2,28,8,8), bottleneck (2,24,4,4)
    assert outs[0].shape == (2, 16, 16, 16), outs[0].shape
    assert outs[1].shape == (2, 28, 8, 8), outs[1].shape
    assert outs[2].shape == (2, 24, 4, 4), outs[2].shape
    assert all(bool(jnp.all(jnp.isfinite(o))) for o in outs)

    print("KERNEL_OK")
</pallas_src>

<mosaic_0001>
module attributes {stable_mosaic.version = 11 : i64} {
  func.func @_stage_kernel(%arg0: i32, %arg1: memref<4x648xf32, #tpu.memory_space<vmem>>, %arg2: memref<1x648xf32, #tpu.memory_space<vmem>>, %arg3: memref<8x36xbf16, #tpu.memory_space<vmem>>, %arg4: memref<8x1xf32, #tpu.memory_space<vmem>>, %arg5: memref<8x1xf32, #tpu.memory_space<vmem>>, %arg6: memref<8x72xbf16, #tpu.memory_space<vmem>>, %arg7: memref<8x1xf32, #tpu.memory_space<vmem>>, %arg8: memref<8x1xf32, #tpu.memory_space<vmem>>, %arg9: memref<8x16xbf16, #tpu.memory_space<vmem>>, %arg10: memref<8x1xf32, #tpu.memory_space<vmem>>, %arg11: memref<8x1xf32, #tpu.memory_space<vmem>>, %arg12: memref<8x72xbf16, #tpu.memory_space<vmem>>, %arg13: memref<8x1xf32, #tpu.memory_space<vmem>>, %arg14: memref<8x1xf32, #tpu.memory_space<vmem>>, %arg15: memref<8x24xbf16, #tpu.memory_space<vmem>>, %arg16: memref<8x1xf32, #tpu.memory_space<vmem>>, %arg17: memref<8x1xf32, #tpu.memory_space<vmem>>, %arg18: memref<8x72xbf16, #tpu.memory_space<vmem>>, %arg19: memref<8x1xf32, #tpu.memory_space<vmem>>, %arg20: memref<8x1xf32, #tpu.memory_space<vmem>>, %arg21: memref<12x16xbf16, #tpu.memory_space<vmem>>, %arg22: memref<12x1xf32, #tpu.memory_space<vmem>>, %arg23: memref<12x1xf32, #tpu.memory_space<vmem>>, %arg24: memref<16x648xf32, #tpu.memory_space<vmem>>, %arg25: memref<12x648xf32, #tpu.memory_space<vmem>>, %arg26: memref<72x648xf32, #tpu.memory_space<vmem>>) attributes {dimension_semantics = [#tpu.dimension_semantics<arbitrary>], iteration_bounds = array<i64: 1>, scalar_prefetch = 0 : i64, scratch_operands = 1 : i64, tpu.core_type = #tpu.core_type<tc>, window_params = [{pipeline_mode = #tpu.pipeline_mode<synchronous>, transform_indices = @transform_0, window_bounds = array<i64: 4, 648>}, {pipeline_mode = #tpu.pipeline_mode<synchronous>, transform_indices = @transform_1, window_bounds = array<i64: 1, 648>}, {pipeline_mode = #tpu.pipeline_mode<synchronous>, transform_indices = @transform_2, window_bounds = array<i64: 8, 36>}, {pipeline_mode = #tpu.pipeline_mode<synchronous>, transform_indices = @transform_3, window_bounds = array<i64: 8, 1>}, {pipeline_mode = #tpu.pipeline_mode<synchronous>, transform_indices = @transform_4, window_bounds = array<i64: 8, 1>}, {pipeline_mode = #tpu.pipeline_mode<synchronous>, transform_indices = @transform_5, window_bounds = array<i64: 8, 72>}, {pipeline_mode = #tpu.pipeline_mode<synchronous>, transform_indices = @transform_6, window_bounds = array<i64: 8, 1>}, {pipeline_mode = #tpu.pipeline_mode<synchronous>, transform_indices = @transform_7, window_bounds = array<i64: 8, 1>}, {pipeline_mode = #tpu.pipeline_mode<synchronous>, transform_indices = @transform_8, window_bounds = array<i64: 8, 16>}, {pipeline_mode = #tpu.pipeline_mode<synchronous>, transform_indices = @transform_9, window_bounds = array<i64: 8, 1>}, {pipeline_mode = #tpu.pipeline_mode<synchronous>, transform_indices = @transform_10, window_bounds = array<i64: 8, 1>}, {pipeline_mode = #tpu.pipeline_mode<synchronous>, transform_indices = @transform_11, window_bounds = array<i64: 8, 72>}, {pipeline_mode = #tpu.pipeline_mode<synchronous>, transform_indices = @transform_12, window_bounds = array<i64: 8, 1>}, {pipeline_mode = #tpu.pipeline_mode<synchronous>, transform_indices = @transform_13, window_bounds = array<i64: 8, 1>}, {pipeline_mode = #tpu.pipeline_mode<synchronous>, transform_indices = @transform_14, window_bounds = array<i64: 8, 24>}, {pipeline_mode = #tpu.pipeline_mode<synchronous>, transform_indices = @transform_15, window_bounds = array<i64: 8, 1>}, {pipeline_mode = #tpu.pipeline_mode<synchronous>, transform_indices = @transform_16, window_bounds = array<i64: 8, 1>}, {pipeline_mode = #tpu.pipeline_mode<synchronous>, transform_indices = @transform_17, window_bounds = array<i64: 8, 72>}, {pipeline_mode = #tpu.pipeline_mode<synchronous>, transform_indices = @transform_18, window_bounds = array<i64: 8, 1>}, {pipeline_mode = #tpu.pipeline_mode<synchronous>, transform_indices = @transform_19, window_bounds = array<i64: 8, 1>}, {pipeline_mode = #tpu.pipeline_mode<synchronous>, transform_indices = @transform_20, window_bounds = array<i64: 12, 16>}, {pipeline_mode = #tpu.pipeline_mode<synchronous>, transform_indices = @transform_21, window_bounds = array<i64: 12, 1>}, {pipeline_mode = #tpu.pipeline_mode<synchronous>, transform_indices = @transform_22, window_bounds = array<i64: 12, 1>}, {pipeline_mode = #tpu.pipeline_mode<synchronous>, transform_indices = @transform_23, window_bounds = array<i64: 16, 648>}, {pipeline_mode = #tpu.pipeline_mode<synchronous>, transform_indices = @transform_24, window_bounds = array<i64: 12, 648>}]} {
    %c0 = arith.constant 0 : index
    %c0_0 = arith.constant 0 : index
    %0 = vector.load %arg2[%c0, %c0_0] : memref<1x648xf32, #tpu.memory_space<vmem>>, vector<1x648xf32>
    %cst = arith.constant 0.000000e+00 : f32
    %1 = vector.broadcast %cst : f32 to vector<72x19xf32>
    %c0_1 = arith.constant 0 : index
    %c0_2 = arith.constant 0 : index
    %2 = vector.load %arg26[%c0_1, %c0_2] : memref<72x648xf32, #tpu.memory_space<vmem>>, vector<72x19xf32>
    tpu.vector_store %arg26[%c0_1, %c0_2], %1 {strides = array<i32>} : memref<72x648xf32, #tpu.memory_space<vmem>>, vector<72x19xf32>,
    %cst_3 = arith.constant 0.000000e+00 : f32
    %3 = vector.broadcast %cst_3 : f32 to vector<72x19xf32>
    %c0_4 = arith.constant 0 : index
    %c629 = arith.constant 629 : index
    %4 = vector.load %arg26[%c0_4, %c629] : memref<72x648xf32, #tpu.memory_space<vmem>>, vector<72x19xf32>
    tpu.vector_store %arg26[%c0_4, %c629], %3 {strides = array<i32>} : memref<72x648xf32, #tpu.memory_space<vmem>>, vector<72x19xf32>,
    %c0_5 = arith.constant 0 : index
    %c0_6 = arith.constant 0 : index
    %5 = vector.load %arg1[%c0_5, %c0_6] : memref<4x648xf32, #tpu.memory_space<vmem>>, vector<4x648xf32>
    %6 = vector.extract_strided_slice %5 {offsets = [0, 0], sizes = [4, 629], strides = [1, 1]} : vector<4x648xf32> to vector<4x629xf32>
    %c0_7 = arith.constant 0 : index
    %c19 = arith.constant 19 : index
    %7 = vector.load %arg26[%c0_7, %c19] : memref<72x648xf32, #tpu.memory_space<vmem>>, vector<4x629xf32>
    tpu.vector_store %arg26[%c0_7, %c19], %6 {strides = array<i32>} : memref<72x648xf32, #tpu.memory_space<vmem>>, vector<4x629xf32>,
    %8 = vector.extract_strided_slice %5 {offsets = [0, 0], sizes = [4, 630], strides = [1, 1]} : vector<4x648xf32> to vector<4x630xf32>
    %c4 = arith.constant 4 : index
    %c18 = arith.constant 18 : index
    %9 = vector.load %arg26[%c4, %c18] : memref<72x648xf32, #tpu.memory_space<vmem>>, vector<4x630xf32>
    tpu.vector_store %arg26[%c4, %c18], %8 {strides = array<i32>} : memref<72x648xf32, #tpu.memory_space<vmem>>, vector<4x630xf32>,
    %10 = vector.extract_strided_slice %5 {offsets = [0, 0], sizes = [4, 631], strides = [1, 1]} : vector<4x648xf32> to vector<4x631xf32>
    %c8 = arith.constant 8 : index
    %c17 = arith.constant 17 : index
    %11 = vector.load %arg26[%c8, %c17] : memref<72x648xf32, #tpu.memory_space<vmem>>, vector<4x631xf32>
    tpu.vector_store %arg26[%c8, %c17], %10 {strides = array<i32>} : memref<72x648xf32, #tpu.memory_space<vmem>>, vector<4x631xf32>,
    %12 = vector.extract_strided_slice %5 {offsets = [0, 0], sizes = [4, 647], strides = [1, 1]} : vector<4x648xf32> to vector<4x647xf32>
    %c12 = arith.constant 12 : index
    %c1 = arith.constant 1 : index
    %13 = vector.load %arg26[%c12, %c1] : memref<72x648xf32, #tpu.memory_space<vmem>>, vector<4x647xf32>
    tpu.vector_store %arg26[%c12, %c1], %12 {strides = array<i32>} : memref<72x648xf32, #tpu.memory_space<vmem>>, vector<4x647xf32>,
    %c16 = arith.constant 16 : index
    %c0_8 = arith.constant 0 : index
    %14 = vector.load %arg26[%c16, %c0_8] : memref<72x648xf32, #tpu.memory_space<vmem>>, vector<4x648xf32>
    tpu.vector_store %arg26[%c16, %c0_8], %5 {strides = array<i32>} : memref<72x648xf32, #tpu.memory_space<vmem>>, vector<4x648xf32>,
    %15 = vector.extract_strided_slice %5 {offsets = [0, 1], sizes = [4, 647], strides = [1, 1]} : vector<4x648xf32> to vector<4x647xf32>
    %c20 = arith.constant 20 : index
    %c0_9 = arith.constant 0 : index
    %16 = vector.load %arg26[%c20, %c0_9] : memref<72x648xf32, #tpu.memory_space<vmem>>, vector<4x647xf32>
    tpu.vector_store %arg26[%c20, %c0_9], %15 {strides = array<i32>} : memref<72x648xf32, #tpu.memory_space<vmem>>, vector<4x647xf32>,
    %17 = vector.extract_strided_slice %5 {offsets = [0, 17], sizes = [4, 631], strides = [1, 1]} : vector<4x648xf32> to vector<4x631xf32>
    %c24 = arith.constant 24 : index
    %c0_10 = arith.constant 0 : index
    %18 = vector.load %arg26[%c24, %c0_10] : memref<72x648xf32, #tpu.memory_space<vmem>>, vector<4x631xf32>
    tpu.vector_store %arg26[%c24, %c0_10], %17 {strides = array<i32>} : memref<72x648xf32, #tpu.memory_space<vmem>>, vector<4x631xf32>,
    %19 = vector.extract_strided_slice %5 {offsets = [0, 18], sizes = [4, 630], strides = [1, 1]} : vector<4x648xf32> to vector<4x630xf32>
    %c28 = arith.constant 28 : index
    %c0_11 = arith.constant 0 : index
    %20 = vector.load %arg26[%c28, %c0_11] : memref<72x648xf32, #tpu.memory_space<vmem>>, vector<4x630xf32>
    tpu.vector_store %arg26[%c28, %c0_11], %19 {strides = array<i32>} : memref<72x648xf32, #tpu.memory_space<vmem>>, vector<4x630xf32>,
    %21 = vector.extract_strided_slice %5 {offsets = [0, 19], sizes = [4, 629], strides = [1, 1]} : vector<4x648xf32> to vector<4x629xf32>
    %c32 = arith.constant 32 : index
    %c0_12 = arith.constant 0 : index
    %22 = vector.load %arg26[%c32, %c0_12] : memref<72x648xf32, #tpu.memory_space<vmem>>, vector<4x629xf32>
    tpu.vector_store %arg26[%c32, %c0_12], %21 {strides = array<i32>} : memref<72x648xf32, #tpu.memory_space<vmem>>, vector<4x629xf32>,
    %c0_13 = arith.constant 0 : index
    %c0_14 = arith.constant 0 : index
    %23 = vector.load %arg26[%c0_13, %c0_14] : memref<72x648xf32, #tpu.memory_space<vmem>>, vector<36x648xf32>
    %24 = arith.truncf %23 : vector<36x648xf32> to vector<36x648xbf16>
    %c0_15 = arith.constant 0 : index
    %c0_16 = arith.constant 0 : index
    %25 = vector.load %arg3[%c0_15, %c0_16] : memref<8x36xbf16, #tpu.memory_space<vmem>>, vector<8x36xbf16>
    %cst_17 = arith.constant dense<0.000000e+00> : vector<8x648xf32>
    %26 = tpu.matmul %25, %24, %cst_17 {dimension_numbers = #tpu.dot_dimension_numbers<[1], [0], [0], [1], [0, 0, 1, 1], [], []>} : vector<8x36xbf16>, vector<36x648xbf16>, vector<8x648xf32> -> vector<8x648xf32>
    %27 = vector.broadcast %0 : vector<1x648xf32> to vector<8x648xf32>
    %28 = arith.mulf %26, %27 : vector<8x648xf32>
    %cst_18 = arith.constant dense<0.000000e+00> : vector<8xf32>
    %29 = vector.multi_reduction <add>, %28, %cst_18 [1] : vector<8x648xf32> to vector<8xf32>
    %30 = vector.shape_cast %29 : vector<8xf32> to vector<8x1xf32>
    %cst_19 = arith.constant 0.001953125 : f32
    %31 = vector.broadcast %cst_19 : f32 to vector<8x1xf32>
    %32 = arith.mulf %30, %31 : vector<8x1xf32>
    %33 = vector.broadcast %32 : vector<8x1xf32> to vector<8x648xf32>
    %34 = arith.subf %26, %33 : vector<8x648xf32>
    %35 = vector.broadcast %0 : vector<1x648xf32> to vector<8x648xf32>
    %36 = arith.mulf %34, %35 : vector<8x648xf32>
    %37 = arith.mulf %36, %36 : vector<8x648xf32>
    %cst_20 = arith.constant dense<0.000000e+00> : vector<8xf32>
    %38 = vector.multi_reduction <add>, %37, %cst_20 [1] : vector<8x648xf32> to vector<8xf32>
    %39 = vector.shape_cast %38 : vector<8xf32> to vector<8x1xf32>
    %cst_21 = arith.constant 0.001953125 : f32
    %40 = vector.broadcast %cst_21 : f32 to vector<8x1xf32>
    %41 = arith.mulf %39, %40 : vector<8x1xf32>
    %c0_22 = arith.constant 0 : index
    %c0_23 = arith.constant 0 : index
    %42 = vector.load %arg4[%c0_22, %c0_23] : memref<8x1xf32, #tpu.memory_space<vmem>>, vector<8x1xf32>
    %cst_24 = arith.constant 9.99999974E-6 : f32
    %43 = vector.broadcast %cst_24 : f32 to vector<8x1xf32>
    %44 = arith.addf %41, %43 : vector<8x1xf32>
    %45 = math.rsqrt %44 : vector<8x1xf32>
    %46 = arith.mulf %42, %45 : vector<8x1xf32>
    %c0_25 = arith.constant 0 : index
    %c0_26 = arith.constant 0 : index
    %47 = vector.load %arg5[%c0_25, %c0_26] : memref<8x1xf32, #tpu.memory_space<vmem>>, vector<8x1xf32>
    %48 = arith.mulf %32, %46 : vector<8x1xf32>
    %49 = arith.subf %47, %48 : vector<8x1xf32>
    %50 = vector.broadcast %46 : vector<8x1xf32> to vector<8x648xf32>
    %51 = arith.mulf %26, %50 : vector<8x648xf32>
    %52 = vector.broadcast %49 : vector<8x1xf32> to vector<8x648xf32>
    %53 = arith.addf %51, %52 : vector<8x648xf32>
    %cst_27 = arith.constant 0.000000e+00 : f32
    %54 = vector.broadcast %cst_27 : f32 to vector<8x648xf32>
    %55 = arith.cmpf oge, %53, %54 : vector<8x648xf32>
    %cst_28 = arith.constant 0.00999999977 : f32
    %56 = vector.broadcast %cst_28 : f32 to vector<8x648xf32>
    %57 = arith.mulf %56, %53 : vector<8x648xf32>
    %58 = arith.select %55, %53, %57 : vector<8x648xi1>, vector<8x648xf32>
    %59 = vector.broadcast %0 : vector<1x648xf32> to vector<8x648xf32>
    %60 = arith.mulf %58, %59 : vector<8x648xf32>
    %61 = vector.extract_strided_slice %60 {offsets = [0, 0], sizes = [8, 629], strides = [1, 1]} : vector<8x648xf32> to vector<8x629xf32>
    %c0_29 = arith.constant 0 : index
    %c19_30 = arith.constant 19 : index
    %62 = vector.load %arg26[%c0_29, %c19_30] : memref<72x648xf32, #tpu.memory_space<vmem>>, vector<8x629xf32>
    tpu.vector_store %arg26[%c0_29, %c19_30], %61 {strides = array<i32>} : memref<72x648xf32, #tpu.memory_space<vmem>>, vector<8x629xf32>,
    %63 = vector.extract_strided_slice %60 {offsets = [0, 0], sizes = [8, 630], strides = [1, 1]} : vector<8x648xf32> to vector<8x630xf32>
    %c8_31 = arith.constant 8 : index
    %c18_32 = arith.constant 18 : index
    %64 = vector.load %arg26[%c8_31, %c18_32] : memref<72x648xf32, #tpu.memory_space<vmem>>, vector<8x630xf32>
    tpu.vector_store %arg26[%c8_31, %c18_32], %63 {strides = array<i32>} : memref<72x648xf32, #tpu.memory_space<vmem>>, vector<8x630xf32>,
    %65 = vector.extract_strided_slice %60 {offsets = [0, 0], sizes = [8, 631], strides = [1, 1]} : vector<8x648xf32> to vector<8x631xf32>
    %c16_33 = arith.constant 16 : index
    %c17_34 = arith.constant 17 : index
    %66 = vector.load %arg26[%c16_33, %c17_34] : memref<72x648xf32, #tpu.memory_space<vmem>>, vector<8x631xf32>
    tpu.vector_store %arg26[%c16_33, %c17_34], %65 {strides = array<i32>} : memref<72x648xf32, #tpu.memory_space<vmem>>, vector<8x631xf32>,
    %67 = vector.extract_strided_slice %60 {offsets = [0, 0], sizes = [8, 647], strides = [1, 1]} : vector<8x648xf32> to vector<8x647xf32>
    %c24_35 = arith.constant 24 : index
    %c1_36 = arith.constant 1 : index
    %68 = vector.load %arg26[%c24_35, %c1_36] : memref<72x648xf32, #tpu.memory_space<vmem>>, vector<8x647xf32>
    tpu.vector_store %arg26[%c24_35, %c1_36], %67 {strides = array<i32>} : memref<72x648xf32, #tpu.memory_space<vmem>>, vector<8x647xf32>,
    %c32_37 = arith.constant 32 : index
    %c0_38 = arith.constant 0 : index
    %69 = vector.load %arg26[%c32_37, %c0_38] : memref<72x648xf32, #tpu.memory_space<vmem>>, vector<8x648xf32>
    tpu.vector_store %arg26[%c32_37, %c0_38], %60 {strides = array<i32>} : memref<72x648xf32, #tpu.memory_space<vmem>>, vector<8x648xf32>,
    %70 = vector.extract_strided_slice %60 {offsets = [0, 1], sizes = [8, 647], strides = [1, 1]} : vector<8x648xf32> to vector<8x647xf32>
    %c40 = arith.constant 40 : index
    %c0_39 = arith.constant 0 : index
    %71 = vector.load %arg26[%c40, %c0_39] : memref<72x648xf32, #tpu.memory_space<vmem>>, vector<8x647xf32>
    tpu.vector_store %arg26[%c40, %c0_39], %70 {strides = array<i32>} : memref<72x648xf32, #tpu.memory_space<vmem>>, vector<8x647xf32>,
    %72 = vector.extract_strided_slice %60 {offsets = [0, 17], sizes = [8, 631], strides = [1, 1]} : vector<8x648xf32> to vector<8x631xf32>
    %c48 = arith.constant 48 : index
    %c0_40 = arith.constant 0 : index
    %73 = vector.load %arg26[%c48, %c0_40] : memref<72x648xf32, #tpu.memory_space<vmem>>, vector<8x631xf32>
    tpu.vector_store %arg26[%c48, %c0_40], %72 {strides = array<i32>} : memref<72x648xf32, #tpu.memory_space<vmem>>, vector<8x631xf32>,
    %74 = vector.extract_strided_slice %60 {offsets = [0, 18], sizes = [8, 630], strides = [1, 1]} : vector<8x648xf32> to vector<8x630xf32>
    %c56 = arith.constant 56 : index
    %c0_41 = arith.constant 0 : index
    %75 = vector.load %arg26[%c56, %c0_41] : memref<72x648xf32, #tpu.memory_space<vmem>>, vector<8x630xf32>
    tpu.vector_store %arg26[%c56, %c0_41], %74 {strides = array<i32>} : memref<72x648xf32, #tpu.memory_space<vmem>>, vector<8x630xf32>,
    %76 = vector.extract_strided_slice %60 {offsets = [0, 19], sizes = [8, 629], strides = [1, 1]} : vector<8x648xf32> to vector<8x629xf32>
    %c64 = arith.constant 64 : index
    %c0_42 = arith.constant 0 : index
    %77 = vector.load %arg26[%c64, %c0_42] : memref<72x648xf32, #tpu.memory_space<vmem>>, vector<8x629xf32>
    tpu.vector_store %arg26[%c64, %c0_42], %76 {strides = array<i32>} : memref<72x648xf32, #tpu.memory_space<vmem>>, vector<8x629xf32>,
    %c0_43 = arith.constant 0 : index
    %c0_44 = arith.constant 0 : index
    %78 = vector.load %arg26[%c0_43, %c0_44] : memref<72x648xf32, #tpu.memory_space<vmem>>, vector<72x648xf32>
    %79 = arith.truncf %78 : vector<72x648xf32> to vector<72x648xbf16>
    %c0_45 = arith.constant 0 : index
    %c0_46 = arith.constant 0 : index
    %80 = vector.load %arg6[%c0_45, %c0_46] : memref<8x72xbf16, #tpu.memory_space<vmem>>, vector<8x72xbf16>
    %cst_47 = arith.constant dense<0.000000e+00> : vector<8x648xf32>
    %81 = tpu.matmul %80, %79, %cst_47 {dimension_numbers = #tpu.dot_dimension_numbers<[1], [0], [0], [1], [0, 0, 1, 1], [], []>} : vector<8x72xbf16>, vector<72x648xbf16>, vector<8x648xf32> -> vector<8x648xf32>
    %82 = vector.broadcast %0 : vector<1x648xf32> to vector<8x648xf32>
    %83 = arith.mulf %81, %82 : vector<8x648xf32>
    %cst_48 = arith.constant dense<0.000000e+00> : vector<8xf32>
    %84 = vector.multi_reduction <add>, %83, %cst_48 [1] : vector<8x648xf32> to vector<8xf32>
    %85 = vector.shape_cast %84 : vector<8xf32> to vector<8x1xf32>
    %cst_49 = arith.constant 0.001953125 : f32
    %86 = vector.broadcast %cst_49 : f32 to vector<8x1xf32>
    %87 = arith.mulf %85, %86 : vector<8x1xf32>
    %88 = vector.broadcast %87 : vector<8x1xf32> to vector<8x648xf32>
    %89 = arith.subf %81, %88 : vector<8x648xf32>
    %90 = vector.broadcast %0 : vector<1x648xf32> to vector<8x648xf32>
    %91 = arith.mulf %89, %90 : vector<8x648xf32>
    %92 = arith.mulf %91, %91 : vector<8x648xf32>
    %cst_50 = arith.constant dense<0.000000e+00> : vector<8xf32>
    %93 = vector.multi_reduction <add>, %92, %cst_50 [1] : vector<8x648xf32> to vector<8xf32>
    %94 = vector.shape_cast %93 : vector<8xf32> to vector<8x1xf32>
    %cst_51 = arith.constant 0.001953125 : f32
    %95 = vector.broadcast %cst_51 : f32 to vector<8x1xf32>
    %96 = arith.mulf %94, %95 : vector<8x1xf32>
    %c0_52 = arith.constant 0 : index
    %c0_53 = arith.constant 0 : index
    %97 = vector.load %arg7[%c0_52, %c0_53] : memref<8x1xf32, #tpu.memory_space<vmem>>, vector<8x1xf32>
    %cst_54 = arith.constant 9.99999974E-6 : f32
    %98 = vector.broadcast %cst_54 : f32 to vector<8x1xf32>
    %99 = arith.addf %96, %98 : vector<8x1xf32>
    %100 = math.rsqrt %99 : vector<8x1xf32>
    %101 = arith.mulf %97, %100 : vector<8x1xf32>
    %c0_55 = arith.constant 0 : index
    %c0_56 = arith.constant 0 : index
    %102 = vector.load %arg8[%c0_55, %c0_56] : memref<8x1xf32, #tpu.memory_space<vmem>>, vector<8x1xf32>
    %103 = arith.mulf %87, %101 : vector<8x1xf32>
    %104 = arith.subf %102, %103 : vector<8x1xf32>
    %105 = vector.broadcast %101 : vector<8x1xf32> to vector<8x648xf32>
    %106 = arith.mulf %81, %105 : vector<8x648xf32>
    %107 = vector.broadcast %104 : vector<8x1xf32> to vector<8x648xf32>
    %108 = arith.addf %106, %107 : vector<8x648xf32>
    %cst_57 = arith.constant 0.000000e+00 : f32
    %109 = vector.broadcast %cst_57 : f32 to vector<8x648xf32>
    %110 = arith.cmpf oge, %108, %109 : vector<8x648xf32>
    %cst_58 = arith.constant 0.00999999977 : f32
    %111 = vector.broadcast %cst_58 : f32 to vector<8x648xf32>
    %112 = arith.mulf %111, %108 : vector<8x648xf32>
    %113 = arith.select %110, %108, %112 : vector<8x648xi1>, vector<8x648xf32>
    %114 = vector.broadcast %0 : vector<1x648xf32> to vector<8x648xf32>
    %115 = arith.mulf %113, %114 : vector<8x648xf32>
    %c0_59 = arith.constant 0 : index
    %c0_60 = arith.constant 0 : index
    %116 = vector.load %arg9[%c0_59, %c0_60] : memref<8x16xbf16, #tpu.memory_space<vmem>>, vector<8x8xbf16>
    %117 = arith.truncf %60 : vector<8x648xf32> to vector<8x648xbf16>
    %cst_61 = arith.constant dense<0.000000e+00> : vector<8x648xf32>
    %118 = tpu.matmul %116, %117, %cst_61 {dimension_numbers = #tpu.dot_dimension_numbers<[1], [0], [0], [1], [0, 0, 1, 1], [], []>} : vector<8x8xbf16>, vector<8x648xbf16>, vector<8x648xf32> -> vector<8x648xf32>
    %c0_62 = arith.constant 0 : index
    %c8_63 = arith.constant 8 : index
    %119 = vector.load %arg9[%c0_62, %c8_63] : memref<8x16xbf16, #tpu.memory_space<vmem>>, vector<8x8xbf16>
    %120 = arith.truncf %115 : vector<8x648xf32> to vector<8x648xbf16>
    %cst_64 = arith.constant dense<0.000000e+00> : vector<8x648xf32>
    %121 = tpu.matmul %119, %120, %cst_64 {dimension_numbers = #tpu.dot_dimension_numbers<[1], [0], [0], [1], [0, 0, 1, 1], [], []>} : vector<8x8xbf16>, vector<8x648xbf16>, vector<8x648xf32> -> vector<8x648xf32>
    %122 = arith.addf %118, %121 : vector<8x648xf32>
    %123 = vector.broadcast %0 : vector<1x648xf32> to vector<8x648xf32>
    %124 = arith.mulf %122, %123 : vector<8x648xf32>
    %cst_65 = arith.constant dense<0.000000e+00> : vector<8xf32>
    %125 = vector.multi_reduction <add>, %124, %cst_65 [1] : vector<8x648xf32> to vector<8xf32>
    %126 = vector.shape_cast %125 : vector<8xf32> to vector<8x1xf32>
    %cst_66 = arith.constant 0.001953125 : f32
    %127 = vector.broadcast %cst_66 : f32 to vector<8x1xf32>
    %128 = arith.mulf %126, %127 : vector<8x1xf32>
    %129 = vector.broadcast %128 : vector<8x1xf32> to vector<8x648xf32>
    %130 = arith.subf %122, %129 : vector<8x648xf32>
    %131 = vector.broadcast %0 : vector<1x648xf32> to vector<8x648xf32>
    %132 = arith.mulf %130, %131 : vector<8x648xf32>
    %133 = arith.mulf %132, %132 : vector<8x648xf32>
    %cst_67 = arith.constant dense<0.000000e+00> : vector<8xf32>
    %134 = vector.multi_reduction <add>, %133, %cst_67 [1] : vector<8x648xf32> to vector<8xf32>
    %135 = vector.shape_cast %134 : vector<8xf32> to vector<8x1xf32>
    %cst_68 = arith.constant 0.001953125 : f32
    %136 = vector.broadcast %cst_68 : f32 to vector<8x1xf32>
    %137 = arith.mulf %135, %136 : vector<8x1xf32>
    %c0_69 = arith.constant 0 : index
    %c0_70 = arith.constant 0 : index
    %138 = vector.load %arg10[%c0_69, %c0_70] : memref<8x1xf32, #tpu.memory_space<vmem>>, vector<8x1xf32>
    %cst_71 = arith.constant 9.99999974E-6 : f32
    %139 = vector.broadcast %cst_71 : f32 to vector<8x1xf32>
    %140 = arith.addf %137, %139 : vector<8x1xf32>
    %141 = math.rsqrt %140 : vector<8x1xf32>
    %142 = arith.mulf %138, %141 : vector<8x1xf32>
    %c0_72 = arith.constant 0 : index
    %c0_73 = arith.constant 0 : index
    %143 = vector.load %arg11[%c0_72, %c0_73] : memref<8x1xf32, #tpu.memory_space<vmem>>, vector<8x1xf32>
    %144 = arith.mulf %128, %142 : vector<8x1xf32>
    %145 = arith.subf %143, %144 : vector<8x1xf32>
    %146 = vector.broadcast %142 : vector<8x1xf32> to vector<8x648xf32>
    %147 = arith.mulf %122, %146 : vector<8x648xf32>
    %148 = vector.broadcast %145 : vector<8x1xf32> to vector<8x648xf32>
    %149 = arith.addf %147, %148 : vector<8x648xf32>
    %cst_74 = arith.constant 0.000000e+00 : f32
    %150 = vector.broadcast %cst_74 : f32 to vector<8x648xf32>
    %151 = arith.cmpf oge, %149, %150 : vector<8x648xf32>
    %cst_75 = arith.constant 0.00999999977 : f32
    %152 = vector.broadcast %cst_75 : f32 to vector<8x648xf32>
    %153 = arith.mulf %152, %149 : vector<8x648xf32>
    %154 = arith.select %151, %149, %153 : vector<8x648xi1>, vector<8x648xf32>
    %155 = vector.broadcast %0 : vector<1x648xf32> to vector<8x648xf32>
    %156 = arith.mulf %154, %155 : vector<8x648xf32>
    %157 = vector.extract_strided_slice %156 {offsets = [0, 0], sizes = [8, 629], strides = [1, 1]} : vector<8x648xf32> to vector<8x629xf32>
    %c0_76 = arith.constant 0 : index
    %c19_77 = arith.constant 19 : index
    %158 = vector.load %arg26[%c0_76, %c19_77] : memref<72x648xf32, #tpu.memory_space<vmem>>, vector<8x629xf32>
    tpu.vector_store %arg26[%c0_76, %c19_77], %157 {strides = array<i32>} : memref<72x648xf32, #tpu.memory_space<vmem>>, vector<8x629xf32>,
    %159 = vector.extract_strided_slice %156 {offsets = [0, 0], sizes = [8, 630], strides = [1, 1]} : vector<8x648xf32> to vector<8x630xf32>
    %c8_78 = arith.constant 8 : index
    %c18_79 = arith.constant 18 : index
    %160 = vector.load %arg26[%c8_78, %c18_79] : memref<72x648xf32, #tpu.memory_space<vmem>>, vector<8x630xf32>
    tpu.vector_store %arg26[%c8_78, %c18_79], %159 {strides = array<i32>} : memref<72x648xf32, #tpu.memory_space<vmem>>, vector<8x630xf32>,
    %161 = vector.extract_strided_slice %156 {offsets = [0, 0], sizes = [8, 631], strides = [1, 1]} : vector<8x648xf32> to vector<8x631xf32>
    %c16_80 = arith.constant 16 : index
    %c17_81 = arith.constant 17 : index
    %162 = vector.load %arg26[%c16_80, %c17_81] : memref<72x648xf32, #tpu.memory_space<vmem>>, vector<8x631xf32>
    tpu.vector_store %arg26[%c16_80, %c17_81], %161 {strides = array<i32>} : memref<72x648xf32, #tpu.memory_space<vmem>>, vector<8x631xf32>,
    %163 = vector.extract_strided_slice %156 {offsets = [0, 0], sizes = [8, 647], strides = [1, 1]} : vector<8x648xf32> to vector<8x647xf32>
    %c24_82 = arith.constant 24 : index
    %c1_83 = arith.constant 1 : index
    %164 = vector.load %arg26[%c24_82, %c1_83] : memref<72x648xf32, #tpu.memory_space<vmem>>, vector<8x647xf32>
    tpu.vector_store %arg26[%c24_82, %c1_83], %163 {strides = array<i32>} : memref<72x648xf32, #tpu.memory_space<vmem>>, vector<8x647xf32>,
    %c32_84 = arith.constant 32 : index
    %c0_85 = arith.constant 0 : index
    %165 = vector.load %arg26[%c32_84, %c0_85] : memref<72x648xf32, #tpu.memory_space<vmem>>, vector<8x648xf32>
    tpu.vector_store %arg26[%c32_84, %c0_85], %156 {strides = array<i32>} : memref<72x648xf32, #tpu.memory_space<vmem>>, vector<8x648xf32>,
    %166 = vector.extract_strided_slice %156 {offsets = [0, 1], sizes = [8, 647], strides = [1, 1]} : vector<8x648xf32> to vector<8x647xf32>
    %c40_86 = arith.constant 40 : index
    %c0_87 = arith.constant 0 : index
    %167 = vector.load %arg26[%c40_86, %c0_87] : memref<72x648xf32, #tpu.memory_space<vmem>>, vector<8x647xf32>
    tpu.vector_store %arg26[%c40_86, %c0_87], %166 {strides = array<i32>} : memref<72x648xf32, #tpu.memory_space<vmem>>, vector<8x647xf32>,
    %168 = vector.extract_strided_slice %156 {offsets = [0, 17], sizes = [8, 631], strides = [1, 1]} : vector<8x648xf32> to vector<8x631xf32>
    %c48_88 = arith.constant 48 : index
    %c0_89 = arith.constant 0 : index
    %169 = vector.load %arg26[%c48_88, %c0_89] : memref<72x648xf32, #tpu.memory_space<vmem>>, vector<8x631xf32>
    tpu.vector_store %arg26[%c48_88, %c0_89], %168 {strides = array<i32>} : memref<72x648xf32, #tpu.memory_space<vmem>>, vector<8x631xf32>,
    %170 = vector.extract_strided_slice %156 {offsets = [0, 18], sizes = [8, 630], strides = [1, 1]} : vector<8x648xf32> to vector<8x630xf32>
    %c56_90 = arith.constant 56 : index
    %c0_91 = arith.constant 0 : index
    %171 = vector.load %arg26[%c56_90, %c0_91] : memref<72x648xf32, #tpu.memory_space<vmem>>, vector<8x630xf32>
    tpu.vector_store %arg26[%c56_90, %c0_91], %170 {strides = array<i32>} : memref<72x648xf32, #tpu.memory_space<vmem>>, vector<8x630xf32>,
    %172 = vector.extract_strided_slice %156 {offsets = [0, 19], sizes = [8, 629], strides = [1, 1]} : vector<8x648xf32> to vector<8x629xf32>
    %c64_92 = arith.constant 64 : index
    %c0_93 = arith.constant 0 : index
    %173 = vector.load %arg26[%c64_92, %c0_93] : memref<72x648xf32, #tpu.memory_space<vmem>>, vector<8x629xf32>
    tpu.vector_store %arg26[%c64_92, %c0_93], %172 {strides = array<i32>} : memref<72x648xf32, #tpu.memory_space<vmem>>, vector<8x629xf32>,
    %c0_94 = arith.constant 0 : index
    %c0_95 = arith.constant 0 : index
    %174 = vector.load %arg26[%c0_94, %c0_95] : memref<72x648xf32, #tpu.memory_space<vmem>>, vector<72x648xf32>
    %175 = arith.truncf %174 : vector<72x648xf32> to vector<72x648xbf16>
    %c0_96 = arith.constant 0 : index
    %c0_97 = arith.constant 0 : index
    %176 = vector.load %arg12[%c0_96, %c0_97] : memref<8x72xbf16, #tpu.memory_space<vmem>>, vector<8x72xbf16>
    %cst_98 = arith.constant dense<0.000000e+00> : vector<8x648xf32>
    %177 = tpu.matmul %176, %175, %cst_98 {dimension_numbers = #tpu.dot_dimension_numbers<[1], [0], [0], [1], [0, 0, 1, 1], [], []>} : vector<8x72xbf16>, vector<72x648xbf16>, vector<8x648xf32> -> vector<8x648xf32>
    %178 = vector.broadcast %0 : vector<1x648xf32> to vector<8x648xf32>
    %179 = arith.mulf %177, %178 : vector<8x648xf32>
    %cst_99 = arith.constant dense<0.000000e+00> : vector<8xf32>
    %180 = vector.multi_reduction <add>, %179, %cst_99 [1] : vector<8x648xf32> to vector<8xf32>
    %181 = vector.shape_cast %180 : vector<8xf32> to vector<8x1xf32>
    %cst_100 = arith.constant 0.001953125 : f32
    %182 = vector.broadcast %cst_100 : f32 to vector<8x1xf32>
    %183 = arith.mulf %181, %182 : vector<8x1xf32>
    %184 = vector.broadcast %183 : vector<8x1xf32> to vector<8x648xf32>
    %185 = arith.subf %177, %184 : vector<8x648xf32>
    %186 = vector.broadcast %0 : vector<1x648xf32> to vector<8x648xf32>
    %187 = arith.mulf %185, %186 : vector<8x648xf32>
    %188 = arith.mulf %187, %187 : vector<8x648xf32>
    %cst_101 = arith.constant dense<0.000000e+00> : vector<8xf32>
    %189 = vector.multi_reduction <add>, %188, %cst_101 [1] : vector<8x648xf32> to vector<8xf32>
    %190 = vector.shape_cast %189 : vector<8xf32> to vector<8x1xf32>
    %cst_102 = arith.constant 0.001953125 : f32
    %191 = vector.broadcast %cst_102 : f32 to vector<8x1xf32>
    %192 = arith.mulf %190, %191 : vector<8x1xf32>
    %c0_103 = arith.constant 0 : index
    %c0_104 = arith.constant 0 : index
    %193 = vector.load %arg13[%c0_103, %c0_104] : memref<8x1xf32, #tpu.memory_space<vmem>>, vector<8x1xf32>
    %cst_105 = arith.constant 9.99999974E-6 : f32
    %194 = vector.broadcast %cst_105 : f32 to vector<8x1xf32>
    %195 = arith.addf %192, %194 : vector<8x1xf32>
    %196 = math.rsqrt %195 : vector<8x1xf32>
    %197 = arith.mulf %193, %196 : vector<8x1xf32>
    %c0_106 = arith.constant 0 : index
    %c0_107 = arith.constant 0 : index
    %198 = vector.load %arg14[%c0_106, %c0_107] : memref<8x1xf32, #tpu.memory_space<vmem>>, vector<8x1xf32>
    %199 = arith.mulf %183, %197 : vector<8x1xf32>
    %200 = arith.subf %198, %199 : vector<8x1xf32>
    %201 = vector.broadcast %197 : vector<8x1xf32> to vector<8x648xf32>
    %202 = arith.mulf %177, %201 : vector<8x648xf32>
    %203 = vector.broadcast %200 : vector<8x1xf32> to vector<8x648xf32>
    %204 = arith.addf %202, %203 : vector<8x648xf32>
    %cst_108 = arith.constant 0.000000e+00 : f32
    %205 = vector.broadcast %cst_108 : f32 to vector<8x648xf32>
    %206 = arith.cmpf oge, %204, %205 : vector<8x648xf32>
    %cst_109 = arith.constant 0.00999999977 : f32
    %207 = vector.broadcast %cst_109 : f32 to vector<8x648xf32>
    %208 = arith.mulf %207, %204 : vector<8x648xf32>
    %209 = arith.select %206, %204, %208 : vector<8x648xi1>, vector<8x648xf32>
    %210 = vector.broadcast %0 : vector<1x648xf32> to vector<8x648xf32>
    %211 = arith.mulf %209, %210 : vector<8x648xf32>
    %c0_110 = arith.constant 0 : index
    %c0_111 = arith.constant 0 : index
    %212 = vector.load %arg15[%c0_110, %c0_111] : memref<8x24xbf16, #tpu.memory_space<vmem>>, vector<8x8xbf16>
    %213 = arith.truncf %60 : vector<8x648xf32> to vector<8x648xbf16>
    %cst_112 = arith.constant dense<0.000000e+00> : vector<8x648xf32>
    %214 = tpu.matmul %212, %213, %cst_112 {dimension_numbers = #tpu.dot_dimension_numbers<[1], [0], [0], [1], [0, 0, 1, 1], [], []>} : vector<8x8xbf16>, vector<8x648xbf16>, vector<8x648xf32> -> vector<8x648xf32>
    %c0_113 = arith.constant 0 : index
    %c8_114 = arith.constant 8 : index
    %215 = vector.load %arg15[%c0_113, %c8_114] : memref<8x24xbf16, #tpu.memory_space<vmem>>, vector<8x8xbf16>
    %216 = arith.truncf %115 : vector<8x648xf32> to vector<8x648xbf16>
    %cst_115 = arith.constant dense<0.000000e+00> : vector<8x648xf32>
    %217 = tpu.matmul %215, %216, %cst_115 {dimension_numbers = #tpu.dot_dimension_numbers<[1], [0], [0], [1], [0, 0, 1, 1], [], []>} : vector<8x8xbf16>, vector<8x648xbf16>, vector<8x648xf32> -> vector<8x648xf32>
    %218 = arith.addf %214, %217 : vector<8x648xf32>
    %c0_116 = arith.constant 0 : index
    %c16_117 = arith.constant 16 : index
    %219 = vector.load %arg15[%c0_116, %c16_117] : memref<8x24xbf16, #tpu.memory_space<vmem>>, vector<8x8xbf16>
    %220 = arith.truncf %211 : vector<8x648xf32> to vector<8x648xbf16>
    %cst_118 = arith.constant dense<0.000000e+00> : vector<8x648xf32>
    %221 = tpu.matmul %219, %220, %cst_118 {dimension_numbers = #tpu.dot_dimension_numbers<[1], [0], [0], [1], [0, 0, 1, 1], [], []>} : vector<8x8xbf16>, vector<8x648xbf16>, vector<8x648xf32> -> vector<8x648xf32>
    %222 = arith.addf %218, %221 : vector<8x648xf32>
    %223 = vector.broadcast %0 : vector<1x648xf32> to vector<8x648xf32>
    %224 = arith.mulf %222, %223 : vector<8x648xf32>
    %cst_119 = arith.constant dense<0.000000e+00> : vector<8xf32>
    %225 = vector.multi_reduction <add>, %224, %cst_119 [1] : vector<8x648xf32> to vector<8xf32>
    %226 = vector.shape_cast %225 : vector<8xf32> to vector<8x1xf32>
    %cst_120 = arith.constant 0.001953125 : f32
    %227 = vector.broadcast %cst_120 : f32 to vector<8x1xf32>
    %228 = arith.mulf %226, %227 : vector<8x1xf32>
    %229 = vector.broadcast %228 : vector<8x1xf32> to vector<8x648xf32>
    %230 = arith.subf %222, %229 : vector<8x648xf32>
    %231 = vector.broadcast %0 : vector<1x648xf32> to vector<8x648xf32>
    %232 = arith.mulf %230, %231 : vector<8x648xf32>
    %233 = arith.mulf %232, %232 : vector<8x648xf32>
    %cst_121 = arith.constant dense<0.000000e+00> : vector<8xf32>
    %234 = vector.multi_reduction <add>, %233, %cst_121 [1] : vector<8x648xf32> to vector<8xf32>
    %235 = vector.shape_cast %234 : vector<8xf32> to vector<8x1xf32>
    %cst_122 = arith.constant 0.001953125 : f32
    %236 = vector.broadcast %cst_122 : f32 to vector<8x1xf32>
    %237 = arith.mulf %235, %236 : vector<8x1xf32>
    %c0_123 = arith.constant 0 : index
    %c0_124 = arith.constant 0 : index
    %238 = vector.load %arg16[%c0_123, %c0_124] : memref<8x1xf32, #tpu.memory_space<vmem>>, vector<8x1xf32>
    %cst_125 = arith.constant 9.99999974E-6 : f32
    %239 = vector.broadcast %cst_125 : f32 to vector<8x1xf32>
    %240 = arith.addf %237, %239 : vector<8x1xf32>
    %241 = math.rsqrt %240 : vector<8x1xf32>
    %242 = arith.mulf %238, %241 : vector<8x1xf32>
    %c0_126 = arith.constant 0 : index
    %c0_127 = arith.constant 0 : index
    %243 = vector.load %arg17[%c0_126, %c0_127] : memref<8x1xf32, #tpu.memory_space<vmem>>, vector<8x1xf32>
    %244 = arith.mulf %228, %242 : vector<8x1xf32>
    %245 = arith.subf %243, %244 : vector<8x1xf32>
    %246 = vector.broadcast %242 : vector<8x1xf32> to vector<8x648xf32>
    %247 = arith.mulf %222, %246 : vector<8x648xf32>
    %248 = vector.broadcast %245 : vector<8x1xf32> to vector<8x648xf32>
    %249 = arith.addf %247, %248 : vector<8x648xf32>
    %cst_128 = arith.constant 0.000000e+00 : f32
    %250 = vector.broadcast %cst_128 : f32 to vector<8x648xf32>
    %251 = arith.cmpf oge, %249, %250 : vector<8x648xf32>
    %cst_129 = arith.constant 0.00999999977 : f32
    %252 = vector.broadcast %cst_129 : f32 to vector<8x648xf32>
    %253 = arith.mulf %252, %249 : vector<8x648xf32>
    %254 = arith.select %251, %249, %253 : vector<8x648xi1>, vector<8x648xf32>
    %255 = vector.broadcast %0 : vector<1x648xf32> to vector<8x648xf32>
    %256 = arith.mulf %254, %255 : vector<8x648xf32>
    %257 = vector.extract_strided_slice %256 {offsets = [0, 0], sizes = [8, 629], strides = [1, 1]} : vector<8x648xf32> to vector<8x629xf32>
    %c0_130 = arith.constant 0 : index
    %c19_131 = arith.constant 19 : index
    %258 = vector.load %arg26[%c0_130, %c19_131] : memref<72x648xf32, #tpu.memory_space<vmem>>, vector<8x629xf32>
    tpu.vector_store %arg26[%c0_130, %c19_131], %257 {strides = array<i32>} : memref<72x648xf32, #tpu.memory_space<vmem>>, vector<8x629xf32>,
    %259 = vector.extract_strided_slice %256 {offsets = [0, 0], sizes = [8, 630], strides = [1, 1]} : vector<8x648xf32> to vector<8x630xf32>
    %c8_132 = arith.constant 8 : index
    %c18_133 = arith.constant 18 : index
    %260 = vector.load %arg26[%c8_132, %c18_133] : memref<72x648xf32, #tpu.memory_space<vmem>>, vector<8x630xf32>
    tpu.vector_store %arg26[%c8_132, %c18_133], %259 {strides = array<i32>} : memref<72x648xf32, #tpu.memory_space<vmem>>, vector<8x630xf32>,
    %261 = vector.extract_strided_slice %256 {offsets = [0, 0], sizes = [8, 631], strides = [1, 1]} : vector<8x648xf32> to vector<8x631xf32>
    %c16_134 = arith.constant 16 : index
    %c17_135 = arith.constant 17 : index
    %262 = vector.load %arg26[%c16_134, %c17_135] : memref<72x648xf32, #tpu.memory_space<vmem>>, vector<8x631xf32>
    tpu.vector_store %arg26[%c16_134, %c17_135], %261 {strides = array<i32>} : memref<72x648xf32, #tpu.memory_space<vmem>>, vector<8x631xf32>,
    %263 = vector.extract_strided_slice %256 {offsets = [0, 0], sizes = [8, 647], strides = [1, 1]} : vector<8x648xf32> to vector<8x647xf32>
    %c24_136 = arith.constant 24 : index
    %c1_137 = arith.constant 1 : index
    %264 = vector.load %arg26[%c24_136, %c1_137] : memref<72x648xf32, #tpu.memory_space<vmem>>, vector<8x647xf32>
    tpu.vector_store %arg26[%c24_136, %c1_137], %263 {strides = array<i32>} : memref<72x648xf32, #tpu.memory_space<vmem>>, vector<8x647xf32>,
    %c32_138 = arith.constant 32 : index
    %c0_139 = arith.constant 0 : index
    %265 = vector.load %arg26[%c32_138, %c0_139] : memref<72x648xf32, #tpu.memory_space<vmem>>, vector<8x648xf32>
    tpu.vector_store %arg26[%c32_138, %c0_139], %256 {strides = array<i32>} : memref<72x648xf32, #tpu.memory_space<vmem>>, vector<8x648xf32>,
    %266 = vector.extract_strided_slice %256 {offsets = [0, 1], sizes = [8, 647], strides = [1, 1]} : vector<8x648xf32> to vector<8x647xf32>
    %c40_140 = arith.constant 40 : index
    %c0_141 = arith.constant 0 : index
    %267 = vector.load %arg26[%c40_140, %c0_141] : memref<72x648xf32, #tpu.memory_space<vmem>>, vector<8x647xf32>
    tpu.vector_store %arg26[%c40_140, %c0_141], %266 {strides = array<i32>} : memref<72x648xf32, #tpu.memory_space<vmem>>, vector<8x647xf32>,
    %268 = vector.extract_strided_slice %256 {offsets = [0, 17], sizes = [8, 631], strides = [1, 1]} : vector<8x648xf32> to vector<8x631xf32>
    %c48_142 = arith.constant 48 : index
    %c0_143 = arith.constant 0 : index
    %269 = vector.load %arg26[%c48_142, %c0_143] : memref<72x648xf32, #tpu.memory_space<vmem>>, vector<8x631xf32>
    tpu.vector_store %arg26[%c48_142, %c0_143], %268 {strides = array<i32>} : memref<72x648xf32, #tpu.memory_space<vmem>>, vector<8x631xf32>,
    %270 = vector.extract_strided_slice %256 {offsets = [0, 18], sizes = [8, 630], strides = [1, 1]} : vector<8x648xf32> to vector<8x630xf32>
    %c56_144 = arith.constant 56 : index
    %c0_145 = arith.constant 0 : index
    %271 = vector.load %arg26[%c56_144, %c0_145] : memref<72x648xf32, #tpu.memory_space<vmem>>, vector<8x630xf32>
    tpu.vector_store %arg26[%c56_144, %c0_145], %270 {strides = array<i32>} : memref<72x648xf32, #tpu.memory_space<vmem>>, vector<8x630xf32>,
    %272 = vector.extract_strided_slice %256 {offsets = [0, 19], sizes = [8, 629], strides = [1, 1]} : vector<8x648xf32> to vector<8x629xf32>
    %c64_146 = arith.constant 64 : index
    %c0_147 = arith.constant 0 : index
    %273 = vector.load %arg26[%c64_146, %c0_147] : memref<72x648xf32, #tpu.memory_space<vmem>>, vector<8x629xf32>
    tpu.vector_store %arg26[%c64_146, %c0_147], %272 {strides = array<i32>} : memref<72x648xf32, #tpu.memory_space<vmem>>, vector<8x629xf32>,
    %c0_148 = arith.constant 0 : index
    %c0_149 = arith.constant 0 : index
    %274 = vector.load %arg26[%c0_148, %c0_149] : memref<72x648xf32, #tpu.memory_space<vmem>>, vector<72x648xf32>
    %275 = arith.truncf %274 : vector<72x648xf32> to vector<72x648xbf16>
    %c0_150 = arith.constant 0 : index
    %c0_151 = arith.constant 0 : index
    %276 = vector.load %arg18[%c0_150, %c0_151] : memref<8x72xbf16, #tpu.memory_space<vmem>>, vector<8x72xbf16>
    %cst_152 = arith.constant dense<0.000000e+00> : vector<8x648xf32>
    %277 = tpu.matmul %276, %275, %cst_152 {dimension_numbers = #tpu.dot_dimension_numbers<[1], [0], [0], [1], [0, 0, 1, 1], [], []>} : vector<8x72xbf16>, vector<72x648xbf16>, vector<8x648xf32> -> vector<8x648xf32>
    %278 = vector.broadcast %0 : vector<1x648xf32> to vector<8x648xf32>
    %279 = arith.mulf %277, %278 : vector<8x648xf32>
    %cst_153 = arith.constant dense<0.000000e+00> : vector<8xf32>
    %280 = vector.multi_reduction <add>, %279, %cst_153 [1] : vector<8x648xf32> to vector<8xf32>
    %281 = vector.shape_cast %280 : vector<8xf32> to vector<8x1xf32>
    %cst_154 = arith.constant 0.001953125 : f32
    %282 = vector.broadcast %cst_154 : f32 to vector<8x1xf32>
    %283 = arith.mulf %281, %282 : vector<8x1xf32>
    %284 = vector.broadcast %283 : vector<8x1xf32> to vector<8x648xf32>
    %285 = arith.subf %277, %284 : vector<8x648xf32>
    %286 = vector.broadcast %0 : vector<1x648xf32> to vector<8x648xf32>
    %287 = arith.mulf %285, %286 : vector<8x648xf32>
    %288 = arith.mulf %287, %287 : vector<8x648xf32>
    %cst_155 = arith.constant dense<0.000000e+00> : vector<8xf32>
    %289 = vector.multi_reduction <add>, %288, %cst_155 [1] : vector<8x648xf32> to vector<8xf32>
    %290 = vector.shape_cast %289 : vector<8xf32> to vector<8x1xf32>
    %cst_156 = arith.constant 0.001953125 : f32
    %291 = vector.broadcast %cst_156 : f32 to vector<8x1xf32>
    %292 = arith.mulf %290, %291 : vector<8x1xf32>
    %c0_157 = arith.constant 0 : index
    %c0_158 = arith.constant 0 : index
    %293 = vector.load %arg19[%c0_157, %c0_158] : memref<8x1xf32, #tpu.memory_space<vmem>>, vector<8x1xf32>
    %cst_159 = arith.constant 9.99999974E-6 : f32
    %294 = vector.broadcast %cst_159 : f32 to vector<8x1xf32>
    %295 = arith.addf %292, %294 : vector<8x1xf32>
    %296 = math.rsqrt %295 : vector<8x1xf32>
    %297 = arith.mulf %293, %296 : vector<8x1xf32>
    %c0_160 = arith.constant 0 : index
    %c0_161 = arith.constant 0 : index
    %298 = vector.load %arg20[%c0_160, %c0_161] : memref<8x1xf32, #tpu.memory_space<vmem>>, vector<8x1xf32>
    %299 = arith.mulf %283, %297 : vector<8x1xf32>
    %300 = arith.subf %298, %299 : vector<8x1xf32>
    %301 = vector.broadcast %297 : vector<8x1xf32> to vector<8x648xf32>
    %302 = arith.mulf %277, %301 : vector<8x648xf32>
    %303 = vector.broadcast %300 : vector<8x1xf32> to vector<8x648xf32>
    %304 = arith.addf %302, %303 : vector<8x648xf32>
    %cst_162 = arith.constant 0.000000e+00 : f32
    %305 = vector.broadcast %cst_162 : f32 to vector<8x648xf32>
    %306 = arith.cmpf oge, %304, %305 : vector<8x648xf32>
    %cst_163 = arith.constant 0.00999999977 : f32
    %307 = vector.broadcast %cst_163 : f32 to vector<8x648xf32>
    %308 = arith.mulf %307, %304 : vector<8x648xf32>
    %309 = arith.select %306, %304, %308 : vector<8x648xi1>, vector<8x648xf32>
    %310 = vector.broadcast %0 : vector<1x648xf32> to vector<8x648xf32>
    %311 = arith.mulf %309, %310 : vector<8x648xf32>
    %c0_164 = arith.constant 0 : index
    %c0_165 = arith.constant 0 : index
    %312 = vector.load %arg24[%c0_164, %c0_165] : memref<16x648xf32, #tpu.memory_space<vmem>>, vector<8x648xf32>
    tpu.vector_store %arg24[%c0_164, %c0_165], %311 {strides = array<i32>} : memref<16x648xf32, #tpu.memory_space<vmem>>, vector<8x648xf32>,
    %c8_166 = arith.constant 8 : index
    %c0_167 = arith.constant 0 : index
    %313 = vector.load %arg24[%c8_166, %c0_167] : memref<16x648xf32, #tpu.memory_space<vmem>>, vector<8x648xf32>
    tpu.vector_store %arg24[%c8_166, %c0_167], %60 {strides = array<i32>} : memref<16x648xf32, #tpu.memory_space<vmem>>, vector<8x648xf32>,
    %c0_168 = arith.constant 0 : index
    %c0_169 = arith.constant 0 : index
    %314 = vector.load %arg21[%c0_168, %c0_169] : memref<12x16xbf16, #tpu.memory_space<vmem>>, vector<12x8xbf16>
    %315 = arith.truncf %311 : vector<8x648xf32> to vector<8x648xbf16>
    %cst_170 = arith.constant dense<0.000000e+00> : vector<12x648xf32>
    %316 = tpu.matmul %314, %315, %cst_170 {dimension_numbers = #tpu.dot_dimension_numbers<[1], [0], [0], [1], [0, 0, 1, 1], [], []>} : vector<12x8xbf16>, vector<8x648xbf16>, vector<12x648xf32> -> vector<12x648xf32>
    %c0_171 = arith.constant 0 : index
    %c8_172 = arith.constant 8 : index
    %317 = vector.load %arg21[%c0_171, %c8_172] : memref<12x16xbf16, #tpu.memory_space<vmem>>, vector<12x8xbf16>
    %318 = arith.truncf %60 : vector<8x648xf32> to vector<8x648xbf16>
    %cst_173 = arith.constant dense<0.000000e+00> : vector<12x648xf32>
    %319 = tpu.matmul %317, %318, %cst_173 {dimension_numbers = #tpu.dot_dimension_numbers<[1], [0], [0], [1], [0, 0, 1, 1], [], []>} : vector<12x8xbf16>, vector<8x648xbf16>, vector<12x648xf32> -> vector<12x648xf32>
    %320 = arith.addf %316, %319 : vector<12x648xf32>
    %321 = vector.broadcast %0 : vector<1x648xf32> to vector<12x648xf32>
    %322 = arith.mulf %320, %321 : vector<12x648xf32>
    %cst_174 = arith.constant dense<0.000000e+00> : vector<12xf32>
    %323 = vector.multi_reduction <add>, %322, %cst_174 [1] : vector<12x648xf32> to vector<12xf32>
    %324 = vector.shape_cast %323 : vector<12xf32> to vector<12x1xf32>
    %cst_175 = arith.constant 0.001953125 : f32
    %325 = vector.broadcast %cst_175 : f32 to vector<12x1xf32>
    %326 = arith.mulf %324, %325 : vector<12x1xf32>
    %327 = vector.broadcast %326 : vector<12x1xf32> to vector<12x648xf32>
    %328 = arith.subf %320, %327 : vector<12x648xf32>
    %329 = vector.broadcast %0 : vector<1x648xf32> to vector<12x648xf32>
    %330 = arith.mulf %328, %329 : vector<12x648xf32>
    %331 = arith.mulf %330, %330 : vector<12x648xf32>
    %cst_176 = arith.constant dense<0.000000e+00> : vector<12xf32>
    %332 = vector.multi_reduction <add>, %331, %cst_176 [1] : vector<12x648xf32> to vector<12xf32>
    %333 = vector.shape_cast %332 : vector<12xf32> to vector<12x1xf32>
    %cst_177 = arith.constant 0.001953125 : f32
    %334 = vector.broadcast %cst_177 : f32 to vector<12x1xf32>
    %335 = arith.mulf %333, %334 : vector<12x1xf32>
    %c0_178 = arith.constant 0 : index
    %c0_179 = arith.constant 0 : index
    %336 = vector.load %arg22[%c0_178, %c0_179] : memref<12x1xf32, #tpu.memory_space<vmem>>, vector<12x1xf32>
    %cst_180 = arith.constant 9.99999974E-6 : f32
    %337 = vector.broadcast %cst_180 : f32 to vector<12x1xf32>
    %338 = arith.addf %335, %337 : vector<12x1xf32>
    %339 = math.rsqrt %338 : vector<12x1xf32>
    %340 = arith.mulf %336, %339 : vector<12x1xf32>
    %c0_181 = arith.constant 0 : index
    %c0_182 = arith.constant 0 : index
    %341 = vector.load %arg23[%c0_181, %c0_182] : memref<12x1xf32, #tpu.memory_space<vmem>>, vector<12x1xf32>
    %342 = arith.mulf %326, %340 : vector<12x1xf32>
    %343 = arith.subf %341, %342 : vector<12x1xf32>
    %344 = vector.broadcast %340 : vector<12x1xf32> to vector<12x648xf32>
    %345 = arith.mulf %320, %344 : vector<12x648xf32>
    %346 = vector.broadcast %343 : vector<12x1xf32> to vector<12x648xf32>
    %347 = arith.addf %345, %346 : vector<12x648xf32>
    %cst_183 = arith.constant 0.000000e+00 : f32
    %348 = vector.broadcast %cst_183 : f32 to vector<12x648xf32>
    %349 = arith.cmpf oge, %347, %348 : vector<12x648xf32>
    %cst_184 = arith.constant 0.00999999977 : f32
    %350 = vector.broadcast %cst_184 : f32 to vector<12x648xf32>
    %351 = arith.mulf %350, %347 : vector<12x648xf32>
    %352 = arith.select %349, %347, %351 : vector<12x648xi1>, vector<12x648xf32>
    %353 = vector.broadcast %0 : vector<1x648xf32> to vector<12x648xf32>
    %354 = arith.mulf %352, %353 : vector<12x648xf32>
    %c0_185 = arith.constant 0 : index
    %c0_186 = arith.constant 0 : index
    %355 = vector.load %arg25[%c0_185, %c0_186] : memref<12x648xf32, #tpu.memory_space<vmem>>, vector<12x648xf32>
    tpu.vector_store %arg25[%c0_185, %c0_186], %354 {strides = array<i32>} : memref<12x648xf32, #tpu.memory_space<vmem>>, vector<12x648xf32>,
    return
  }
  func.func @transform_0(%arg0: i32) -> (i32, i32) {
    %c0_i32 = arith.constant 0 : i32
    %c0_i32_0 = arith.constant 0 : i32
    %c0_i32_1 = arith.constant 0 : i32
    return %c0_i32, %c0_i32_0 : i32, i32
  }
  func.func @transform_1(%arg0: i32) -> (i32, i32) {
    %c0_i32 = arith.constant 0 : i32
    %c0_i32_0 = arith.constant 0 : i32
    %c0_i32_1 = arith.constant 0 : i32
    return %c0_i32, %c0_i32_0 : i32, i32
  }
  func.func @transform_2(%arg0: i32) -> (i32, i32) {
    %c0_i32 = arith.constant 0 : i32
    %c0_i32_0 = arith.constant 0 : i32
    %c0_i32_1 = arith.constant 0 : i32
    return %c0_i32, %c0_i32_0 : i32, i32
  }
  func.func @transform_3(%arg0: i32) -> (i32, i32) {
    %c0_i32 = arith.constant 0 : i32
    %c0_i32_0 = arith.constant 0 : i32
    %c0_i32_1 = arith.constant 0 : i32
    return %c0_i32, %c0_i32_0 : i32, i32
  }
  func.func @transform_4(%arg0: i32) -> (i32, i32) {
    %c0_i32 = arith.constant 0 : i32
    %c0_i32_0 = arith.constant 0 : i32
    %c0_i32_1 = arith.constant 0 : i32
    return %c0_i32, %c0_i32_0 : i32, i32
  }
  func.func @transform_5(%arg0: i32) -> (i32, i32) {
    %c0_i32 = arith.constant 0 : i32
    %c0_i32_0 = arith.constant 0 : i32
    %c0_i32_1 = arith.constant 0 : i32
    return %c0_i32, %c0_i32_0 : i32, i32
  }
  func.func @transform_6(%arg0: i32) -> (i32, i32) {
    %c0_i32 = arith.constant 0 : i32
    %c0_i32_0 = arith.constant 0 : i32
    %c0_i32_1 = arith.constant 0 : i32
    return %c0_i32, %c0_i32_0 : i32, i32
  }
  func.func @transform_7(%arg0: i32) -> (i32, i32) {
    %c0_i32 = arith.constant 0 : i32
    %c0_i32_0 = arith.constant 0 : i32
    %c0_i32_1 = arith.constant 0 : i32
    return %c0_i32, %c0_i32_0 : i32, i32
  }
  func.func @transform_8(%arg0: i32) -> (i32, i32) {
    %c0_i32 = arith.constant 0 : i32
    %c0_i32_0 = arith.constant 0 : i32
    %c0_i32_1 = arith.constant 0 : i32
    return %c0_i32, %c0_i32_0 : i32, i32
  }
  func.func @transform_9(%arg0: i32) -> (i32, i32) {
    %c0_i32 = arith.constant 0 : i32
    %c0_i32_0 = arith.constant 0 : i32
    %c0_i32_1 = arith.constant 0 : i32
    return %c0_i32, %c0_i32_0 : i32, i32
  }
  func.func @transform_10(%arg0: i32) -> (i32, i32) {
    %c0_i32 = arith.constant 0 : i32
    %c0_i32_0 = arith.constant 0 : i32
    %c0_i32_1 = arith.constant 0 : i32
    return %c0_i32, %c0_i32_0 : i32, i32
  }
  func.func @transform_11(%arg0: i32) -> (i32, i32) {
    %c0_i32 = arith.constant 0 : i32
    %c0_i32_0 = arith.constant 0 : i32
    %c0_i32_1 = arith.constant 0 : i32
    return %c0_i32, %c0_i32_0 : i32, i32
  }
  func.func @transform_12(%arg0: i32) -> (i32, i32) {
    %c0_i32 = arith.constant 0 : i32
    %c0_i32_0 = arith.constant 0 : i32
    %c0_i32_1 = arith.constant 0 : i32
    return %c0_i32, %c0_i32_0 : i32, i32
  }
  func.func @transform_13(%arg0: i32) -> (i32, i32) {
    %c0_i32 = arith.constant 0 : i32
    %c0_i32_0 = arith.constant 0 : i32
    %c0_i32_1 = arith.constant 0 : i32
    return %c0_i32, %c0_i32_0 : i32, i32
  }
  func.func @transform_14(%arg0: i32) -> (i32, i32) {
    %c0_i32 = arith.constant 0 : i32
    %c0_i32_0 = arith.constant 0 : i32
    %c0_i32_1 = arith.constant 0 : i32
    return %c0_i32, %c0_i32_0 : i32, i32
  }
  func.func @transform_15(%arg0: i32) -> (i32, i32) {
    %c0_i32 = arith.constant 0 : i32
    %c0_i32_0 = arith.constant 0 : i32
    %c0_i32_1 = arith.constant 0 : i32
    return %c0_i32, %c0_i32_0 : i32, i32
  }
  func.func @transform_16(%arg0: i32) -> (i32, i32) {
    %c0_i32 = arith.constant 0 : i32
    %c0_i32_0 = arith.constant 0 : i32
    %c0_i32_1 = arith.constant 0 : i32
    return %c0_i32, %c0_i32_0 : i32, i32
  }
  func.func @transform_17(%arg0: i32) -> (i32, i32) {
    %c0_i32 = arith.constant 0 : i32
    %c0_i32_0 = arith.constant 0 : i32
    %c0_i32_1 = arith.constant 0 : i32
    return %c0_i32, %c0_i32_0 : i32, i32
  }
  func.func @transform_18(%arg0: i32) -> (i32, i32) {
    %c0_i32 = arith.constant 0 : i32
    %c0_i32_0 = arith.constant 0 : i32
    %c0_i32_1 = arith.constant 0 : i32
    return %c0_i32, %c0_i32_0 : i32, i32
  }
  func.func @transform_19(%arg0: i32) -> (i32, i32) {
    %c0_i32 = arith.constant 0 : i32
    %c0_i32_0 = arith.constant 0 : i32
    %c0_i32_1 = arith.constant 0 : i32
    return %c0_i32, %c0_i32_0 : i32, i32
  }
  func.func @transform_20(%arg0: i32) -> (i32, i32) {
    %c0_i32 = arith.constant 0 : i32
    %c0_i32_0 = arith.constant 0 : i32
    %c0_i32_1 = arith.constant 0 : i32
    return %c0_i32, %c0_i32_0 : i32, i32
  }
  func.func @transform_21(%arg0: i32) -> (i32, i32) {
    %c0_i32 = arith.constant 0 : i32
    %c0_i32_0 = arith.constant 0 : i32
    %c0_i32_1 = arith.constant 0 : i32
    return %c0_i32, %c0_i32_0 : i32, i32
  }
  func.func @transform_22(%arg0: i32) -> (i32, i32) {
    %c0_i32 = arith.constant 0 : i32
    %c0_i32_0 = arith.constant 0 : i32
    %c0_i32_1 = arith.constant 0 : i32
    return %c0_i32, %c0_i32_0 : i32, i32
  }
  func.func @transform_23(%arg0: i32) -> (i32, i32) {
    %c0_i32 = arith.constant 0 : i32
    %c0_i32_0 = arith.constant 0 : i32
    %c0_i32_1 = arith.constant 0 : i32
    return %c0_i32, %c0_i32_0 : i32, i32
  }
  func.func @transform_24(%arg0: i32) -> (i32, i32) {
    %c0_i32 = arith.constant 0 : i32
    %c0_i32_0 = arith.constant 0 : i32
    %c0_i32_1 = arith.constant 0 : i32
    return %c0_i32, %c0_i32_0 : i32, i32
  }
}

module attributes {stable_mosaic.version = 11 : i64} {
  func.func @_stage_kernel(%arg0: i32, %arg1: memref<12x200xf32, #tpu.memory_space<vmem>>, %arg2: memref<1x200xf32, #tpu.memory_space<vmem>>, %arg3: memref<16x108xbf16, #tpu.memory_space<vmem>>, %arg4: memref<16x1xf32, #tpu.memory_space<vmem>>, %arg5: memref<16x1xf32, #tpu.memory_space<vmem>>, %arg6: memref<16x28xbf16, #tpu.memory_space<vmem>>, %arg7: memref<16x1xf32, #tpu.memory_space<vmem>>, %arg8: memref<16x1xf32, #tpu.memory_space<vmem>>, %arg9: memref<16x144xbf16, #tpu.memory_space<vmem>>, %arg10: memref<16x1xf32, #tpu.memory_space<vmem>>, %arg11: memref<16x1xf32, #tpu.memory_space<vmem>>, %arg12: memref<16x44xbf16, #tpu.memory_space<vmem>>, %arg13: memref<16x1xf32, #tpu.memory_space<vmem>>, %arg14: memref<16x1xf32, #tpu.memory_space<vmem>>, %arg15: memref<16x144xbf16, #tpu.memory_space<vmem>>, %arg16: memref<16x1xf32, #tpu.memory_space<vmem>>, %arg17: memref<16x1xf32, #tpu.memory_space<vmem>>, %arg18: memref<24x28xbf16, #tpu.memory_space<vmem>>, %arg19: memref<24x1xf32, #tpu.memory_space<vmem>>, %arg20: memref<24x1xf32, #tpu.memory_space<vmem>>, %arg21: memref<28x200xf32, #tpu.memory_space<vmem>>, %arg22: memref<24x200xf32, #tpu.memory_space<vmem>>, %arg23: memref<144x200xf32, #tpu.memory_space<vmem>>) attributes {dimension_semantics = [#tpu.dimension_semantics<arbitrary>], iteration_bounds = array<i64: 1>, scalar_prefetch = 0 : i64, scratch_operands = 1 : i64, tpu.core_type = #tpu.core_type<tc>, window_params = [{pipeline_mode = #tpu.pipeline_mode<synchronous>, transform_indices = @transform_0, window_bounds = array<i64: 12, 200>}, {pipeline_mode = #tpu.pipeline_mode<synchronous>, transform_indices = @transform_1, window_bounds = array<i64: 1, 200>}, {pipeline_mode = #tpu.pipeline_mode<synchronous>, transform_indices = @transform_2, window_bounds = array<i64: 16, 108>}, {pipeline_mode = #tpu.pipeline_mode<synchronous>, transform_indices = @transform_3, window_bounds = array<i64: 16, 1>}, {pipeline_mode = #tpu.pipeline_mode<synchronous>, transform_indices = @transform_4, window_bounds = array<i64: 16, 1>}, {pipeline_mode = #tpu.pipeline_mode<synchronous>, transform_indices = @transform_5, window_bounds = array<i64: 16, 28>}, {pipeline_mode = #tpu.pipeline_mode<synchronous>, transform_indices = @transform_6, window_bounds = array<i64: 16, 1>}, {pipeline_mode = #tpu.pipeline_mode<synchronous>, transform_indices = @transform_7, window_bounds = array<i64: 16, 1>}, {pipeline_mode = #tpu.pipeline_mode<synchronous>, transform_indices = @transform_8, window_bounds = array<i64: 16, 144>}, {pipeline_mode = #tpu.pipeline_mode<synchronous>, transform_indices = @transform_9, window_bounds = array<i64: 16, 1>}, {pipeline_mode = #tpu.pipeline_mode<synchronous>, transform_indices = @transform_10, window_bounds = array<i64: 16, 1>}, {pipeline_mode = #tpu.pipeline_mode<synchronous>, transform_indices = @transform_11, window_bounds = array<i64: 16, 44>}, {pipeline_mode = #tpu.pipeline_mode<synchronous>, transform_indices = @transform_12, window_bounds = array<i64: 16, 1>}, {pipeline_mode = #tpu.pipeline_mode<synchronous>, transform_indices = @transform_13, window_bounds = array<i64: 16, 1>}, {pipeline_mode = #tpu.pipeline_mode<synchronous>, transform_indices = @transform_14, window_bounds = array<i64: 16, 144>}, {pipeline_mode = #tpu.pipeline_mode<synchronous>, transform_indices = @transform_15, window_bounds = array<i64: 16, 1>}, {pipeline_mode = #tpu.pipeline_mode<synchronous>, transform_indices = @transform_16, window_bounds = array<i64: 16, 1>}, {pipeline_mode = #tpu.pipeline_mode<synchronous>, transform_indices = @transform_17, window_bounds = array<i64: 24, 28>}, {pipeline_mode = #tpu.pipeline_mode<synchronous>, transform_indices = @transform_18, window_bounds = array<i64: 24, 1>}, {pipeline_mode = #tpu.pipeline_mode<synchronous>, transform_indices = @transform_19, window_bounds = array<i64: 24, 1>}, {pipeline_mode = #tpu.pipeline_mode<synchronous>, transform_indices = @transform_20, window_bounds = array<i64: 28, 200>}, {pipeline_mode = #tpu.pipeline_mode<synchronous>, transform_indices = @transform_21, window_bounds = array<i64: 24, 200>}]} {
    %c0 = arith.constant 0 : index
    %c0_0 = arith.constant 0 : index
    %0 = vector.load %arg2[%c0, %c0_0] : memref<1x200xf32, #tpu.memory_space<vmem>>, vector<1x200xf32>
    %cst = arith.constant 0.000000e+00 : f32
    %1 = vector.broadcast %cst : f32 to vector<144x11xf32>
    %c0_1 = arith.constant 0 : index
    %c0_2 = arith.constant 0 : index
    %2 = vector.load %arg23[%c0_1, %c0_2] : memref<144x200xf32, #tpu.memory_space<vmem>>, vector<144x11xf32>
    tpu.vector_store %arg23[%c0_1, %c0_2], %1 {strides = array<i32>} : memref<144x200xf32, #tpu.memory_space<vmem>>, vector<144x11xf32>,
    %cst_3 = arith.constant 0.000000e+00 : f32
    %3 = vector.broadcast %cst_3 : f32 to vector<144x11xf32>
    %c0_4 = arith.constant 0 : index
    %c189 = arith.constant 189 : index
    %4 = vector.load %arg23[%c0_4, %c189] : memref<144x200xf32, #tpu.memory_space<vmem>>, vector<144x11xf32>
    tpu.vector_store %arg23[%c0_4, %c189], %3 {strides = array<i32>} : memref<144x200xf32, #tpu.memory_space<vmem>>, vector<144x11xf32>,
    %c0_5 = arith.constant 0 : index
    %c0_6 = arith.constant 0 : index
    %5 = vector.load %arg1[%c0_5, %c0_6] : memref<12x200xf32, #tpu.memory_space<vmem>>, vector<12x200xf32>
    %6 = vector.extract_strided_slice %5 {offsets = [0, 0], sizes = [12, 189], strides = [1, 1]} : vector<12x200xf32> to vector<12x189xf32>
    %c0_7 = arith.constant 0 : index
    %c11 = arith.constant 11 : index
    %7 = vector.load %arg23[%c0_7, %c11] : memref<144x200xf32, #tpu.memory_space<vmem>>, vector<12x189xf32>
    tpu.vector_store %arg23[%c0_7, %c11], %6 {strides = array<i32>} : memref<144x200xf32, #tpu.memory_space<vmem>>, vector<12x189xf32>,
    %8 = vector.extract_strided_slice %5 {offsets = [0, 0], sizes = [12, 190], strides = [1, 1]} : vector<12x200xf32> to vector<12x190xf32>
    %c12 = arith.constant 12 : index
    %c10 = arith.constant 10 : index
    %9 = vector.load %arg23[%c12, %c10] : memref<144x200xf32, #tpu.memory_space<vmem>>, vector<12x190xf32>
    tpu.vector_store %arg23[%c12, %c10], %8 {strides = array<i32>} : memref<144x200xf32, #tpu.memory_space<vmem>>, vector<12x190xf32>,
    %10 = vector.extract_strided_slice %5 {offsets = [0, 0], sizes = [12, 191], strides = [1, 1]} : vector<12x200xf32> to vector<12x191xf32>
    %c24 = arith.constant 24 : index
    %c9 = arith.constant 9 : index
    %11 = vector.load %arg23[%c24, %c9] : memref<144x200xf32, #tpu.memory_space<vmem>>, vector<12x191xf32>
    tpu.vector_store %arg23[%c24, %c9], %10 {strides = array<i32>} : memref<144x200xf32, #tpu.memory_space<vmem>>, vector<12x191xf32>,
    %12 = vector.extract_strided_slice %5 {offsets = [0, 0], sizes = [12, 199], strides = [1, 1]} : vector<12x200xf32> to vector<12x199xf32>
    %c36 = arith.constant 36 : index
    %c1 = arith.constant 1 : index
    %13 = vector.load %arg23[%c36, %c1] : memref<144x200xf32, #tpu.memory_space<vmem>>, vector<12x199xf32>
    tpu.vector_store %arg23[%c36, %c1], %12 {strides = array<i32>} : memref<144x200xf32, #tpu.memory_space<vmem>>, vector<12x199xf32>,
    %c48 = arith.constant 48 : index
    %c0_8 = arith.constant 0 : index
    %14 = vector.load %arg23[%c48, %c0_8] : memref<144x200xf32, #tpu.memory_space<vmem>>, vector<12x200xf32>
    tpu.vector_store %arg23[%c48, %c0_8], %5 {strides = array<i32>} : memref<144x200xf32, #tpu.memory_space<vmem>>, vector<12x200xf32>,
    %15 = vector.extract_strided_slice %5 {offsets = [0, 1], sizes = [12, 199], strides = [1, 1]} : vector<12x200xf32> to vector<12x199xf32>
    %c60 = arith.constant 60 : index
    %c0_9 = arith.constant 0 : index
    %16 = vector.load %arg23[%c60, %c0_9] : memref<144x200xf32, #tpu.memory_space<vmem>>, vector<12x199xf32>
    tpu.vector_store %arg23[%c60, %c0_9], %15 {strides = array<i32>} : memref<144x200xf32, #tpu.memory_space<vmem>>, vector<12x199xf32>,
    %17 = vector.extract_strided_slice %5 {offsets = [0, 9], sizes = [12, 191], strides = [1, 1]} : vector<12x200xf32> to vector<12x191xf32>
    %c72 = arith.constant 72 : index
    %c0_10 = arith.constant 0 : index
    %18 = vector.load %arg23[%c72, %c0_10] : memref<144x200xf32, #tpu.memory_space<vmem>>, vector<12x191xf32>
    tpu.vector_store %arg23[%c72, %c0_10], %17 {strides = array<i32>} : memref<144x200xf32, #tpu.memory_space<vmem>>, vector<12x191xf32>,
    %19 = vector.extract_strided_slice %5 {offsets = [0, 10], sizes = [12, 190], strides = [1, 1]} : vector<12x200xf32> to vector<12x190xf32>
    %c84 = arith.constant 84 : index
    %c0_11 = arith.constant 0 : index
    %20 = vector.load %arg23[%c84, %c0_11] : memref<144x200xf32, #tpu.memory_space<vmem>>, vector<12x190xf32>
    tpu.vector_store %arg23[%c84, %c0_11], %19 {strides = array<i32>} : memref<144x200xf32, #tpu.memory_space<vmem>>, vector<12x190xf32>,
    %21 = vector.extract_strided_slice %5 {offsets = [0, 11], sizes = [12, 189], strides = [1, 1]} : vector<12x200xf32> to vector<12x189xf32>
    %c96 = arith.constant 96 : index
    %c0_12 = arith.constant 0 : index
    %22 = vector.load %arg23[%c96, %c0_12] : memref<144x200xf32, #tpu.memory_space<vmem>>, vector<12x189xf32>
    tpu.vector_store %arg23[%c96, %c0_12], %21 {strides = array<i32>} : memref<144x200xf32, #tpu.memory_space<vmem>>, vector<12x189xf32>,
    %c0_13 = arith.constant 0 : index
    %c0_14 = arith.constant 0 : index
    %23 = vector.load %arg23[%c0_13, %c0_14] : memref<144x200xf32, #tpu.memory_space<vmem>>, vector<108x200xf32>
    %24 = arith.truncf %23 : vector<108x200xf32> to vector<108x200xbf16>
    %c0_15 = arith.constant 0 : index
    %c0_16 = arith.constant 0 : index
    %25 = vector.load %arg3[%c0_15, %c0_16] : memref<16x108xbf16, #tpu.memory_space<vmem>>, vector<16x108xbf16>
    %cst_17 = arith.constant dense<0.000000e+00> : vector<16x200xf32>
    %26 = tpu.matmul %25, %24, %cst_17 {dimension_numbers = #tpu.dot_dimension_numbers<[1], [0], [0], [1], [0, 0, 1, 1], [], []>} : vector<16x108xbf16>, vector<108x200xbf16>, vector<16x200xf32> -> vector<16x200xf32>
    %27 = vector.broadcast %0 : vector<1x200xf32> to vector<16x200xf32>
    %28 = arith.mulf %26, %27 : vector<16x200xf32>
    %cst_18 = arith.constant dense<0.000000e+00> : vector<16xf32>
    %29 = vector.multi_reduction <add>, %28, %cst_18 [1] : vector<16x200xf32> to vector<16xf32>
    %30 = vector.shape_cast %29 : vector<16xf32> to vector<16x1xf32>
    %cst_19 = arith.constant 7.812500e-03 : f32
    %31 = vector.broadcast %cst_19 : f32 to vector<16x1xf32>
    %32 = arith.mulf %30, %31 : vector<16x1xf32>
    %33 = vector.broadcast %32 : vector<16x1xf32> to vector<16x200xf32>
    %34 = arith.subf %26, %33 : vector<16x200xf32>
    %35 = vector.broadcast %0 : vector<1x200xf32> to vector<16x200xf32>
    %36 = arith.mulf %34, %35 : vector<16x200xf32>
    %37 = arith.mulf %36, %36 : vector<16x200xf32>
    %cst_20 = arith.constant dense<0.000000e+00> : vector<16xf32>
    %38 = vector.multi_reduction <add>, %37, %cst_20 [1] : vector<16x200xf32> to vector<16xf32>
    %39 = vector.shape_cast %38 : vector<16xf32> to vector<16x1xf32>
    %cst_21 = arith.constant 7.812500e-03 : f32
    %40 = vector.broadcast %cst_21 : f32 to vector<16x1xf32>
    %41 = arith.mulf %39, %40 : vector<16x1xf32>
    %c0_22 = arith.constant 0 : index
    %c0_23 = arith.constant 0 : index
    %42 = vector.load %arg4[%c0_22, %c0_23] : memref<16x1xf32, #tpu.memory_space<vmem>>, vector<16x1xf32>
    %cst_24 = arith.constant 9.99999974E-6 : f32
    %43 = vector.broadcast %cst_24 : f32 to vector<16x1xf32>
    %44 = arith.addf %41, %43 : vector<16x1xf32>
    %45 = math.rsqrt %44 : vector<16x1xf32>
    %46 = arith.mulf %42, %45 : vector<16x1xf32>
    %c0_25 = arith.constant 0 : index
    %c0_26 = arith.constant 0 : index
    %47 = vector.load %arg5[%c0_25, %c0_26] : memref<16x1xf32, #tpu.memory_space<vmem>>, vector<16x1xf32>
    %48 = arith.mulf %32, %46 : vector<16x1xf32>
    %49 = arith.subf %47, %48 : vector<16x1xf32>
    %50 = vector.broadcast %46 : vector<16x1xf32> to vector<16x200xf32>
    %51 = arith.mulf %26, %50 : vector<16x200xf32>
    %52 = vector.broadcast %49 : vector<16x1xf32> to vector<16x200xf32>
    %53 = arith.addf %51, %52 : vector<16x200xf32>
    %cst_27 = arith.constant 0.000000e+00 : f32
    %54 = vector.broadcast %cst_27 : f32 to vector<16x200xf32>
    %55 = arith.cmpf oge, %53, %54 : vector<16x200xf32>
    %cst_28 = arith.constant 0.00999999977 : f32
    %56 = vector.broadcast %cst_28 : f32 to vector<16x200xf32>
    %57 = arith.mulf %56, %53 : vector<16x200xf32>
    %58 = arith.select %55, %53, %57 : vector<16x200xi1>, vector<16x200xf32>
    %59 = vector.broadcast %0 : vector<1x200xf32> to vector<16x200xf32>
    %60 = arith.mulf %58, %59 : vector<16x200xf32>
    %c0_29 = arith.constant 0 : index
    %c0_30 = arith.constant 0 : index
    %61 = vector.load %arg6[%c0_29, %c0_30] : memref<16x28xbf16, #tpu.memory_space<vmem>>, vector<16x12xbf16>
    %62 = arith.truncf %5 : vector<12x200xf32> to vector<12x200xbf16>
    %cst_31 = arith.constant dense<0.000000e+00> : vector<16x200xf32>
    %63 = tpu.matmul %61, %62, %cst_31 {dimension_numbers = #tpu.dot_dimension_numbers<[1], [0], [0], [1], [0, 0, 1, 1], [], []>} : vector<16x12xbf16>, vector<12x200xbf16>, vector<16x200xf32> -> vector<16x200xf32>
    %c0_32 = arith.constant 0 : index
    %c12_33 = arith.constant 12 : index
    %64 = vector.load %arg6[%c0_32, %c12_33] : memref<16x28xbf16, #tpu.memory_space<vmem>>, vector<16x16xbf16>
    %65 = arith.truncf %60 : vector<16x200xf32> to vector<16x200xbf16>
    %cst_34 = arith.constant dense<0.000000e+00> : vector<16x200xf32>
    %66 = tpu.matmul %64, %65, %cst_34 {dimension_numbers = #tpu.dot_dimension_numbers<[1], [0], [0], [1], [0, 0, 1, 1], [], []>} : vector<16x16xbf16>, vector<16x200xbf16>, vector<16x200xf32> -> vector<16x200xf32>
    %67 = arith.addf %63, %66 : vector<16x200xf32>
    %68 = vector.broadcast %0 : vector<1x200xf32> to vector<16x200xf32>
    %69 = arith.mulf %67, %68 : vector<16x200xf32>
    %cst_35 = arith.constant dense<0.000000e+00> : vector<16xf32>
    %70 = vector.multi_reduction <add>, %69, %cst_35 [1] : vector<16x200xf32> to vector<16xf32>
    %71 = vector.shape_cast %70 : vector<16xf32> to vector<16x1xf32>
    %cst_36 = arith.constant 7.812500e-03 : f32
    %72 = vector.broadcast %cst_36 : f32 to vector<16x1xf32>
    %73 = arith.mulf %71, %72 : vector<16x1xf32>
    %74 = vector.broadcast %73 : vector<16x1xf32> to vector<16x200xf32>
    %75 = arith.subf %67, %74 : vector<16x200xf32>
    %76 = vector.broadcast %0 : vector<1x200xf32> to vector<16x200xf32>
    %77 = arith.mulf %75, %76 : vector<16x200xf32>
    %78 = arith.mulf %77, %77 : vector<16x200xf32>
    %cst_37 = arith.constant dense<0.000000e+00> : vector<16xf32>
    %79 = vector.multi_reduction <add>, %78, %cst_37 [1] : vector<16x200xf32> to vector<16xf32>
    %80 = vector.shape_cast %79 : vector<16xf32> to vector<16x1xf32>
    %cst_38 = arith.constant 7.812500e-03 : f32
    %81 = vector.broadcast %cst_38 : f32 to vector<16x1xf32>
    %82 = arith.mulf %80, %81 : vector<16x1xf32>
    %c0_39 = arith.constant 0 : index
    %c0_40 = arith.constant 0 : index
    %83 = vector.load %arg7[%c0_39, %c0_40] : memref<16x1xf32, #tpu.memory_space<vmem>>, vector<16x1xf32>
    %cst_41 = arith.constant 9.99999974E-6 : f32
    %84 = vector.broadcast %cst_41 : f32 to vector<16x1xf32>
    %85 = arith.addf %82, %84 : vector<16x1xf32>
    %86 = math.rsqrt %85 : vector<16x1xf32>
    %87 = arith.mulf %83, %86 : vector<16x1xf32>
    %c0_42 = arith.constant 0 : index
    %c0_43 = arith.constant 0 : index
    %88 = vector.load %arg8[%c0_42, %c0_43] : memref<16x1xf32, #tpu.memory_space<vmem>>, vector<16x1xf32>
    %89 = arith.mulf %73, %87 : vector<16x1xf32>
    %90 = arith.subf %88, %89 : vector<16x1xf32>
    %91 = vector.broadcast %87 : vector<16x1xf32> to vector<16x200xf32>
    %92 = arith.mulf %67, %91 : vector<16x200xf32>
    %93 = vector.broadcast %90 : vector<16x1xf32> to vector<16x200xf32>
    %94 = arith.addf %92, %93 : vector<16x200xf32>
    %cst_44 = arith.constant 0.000000e+00 : f32
    %95 = vector.broadcast %cst_44 : f32 to vector<16x200xf32>
    %96 = arith.cmpf oge, %94, %95 : vector<16x200xf32>
    %cst_45 = arith.constant 0.00999999977 : f32
    %97 = vector.broadcast %cst_45 : f32 to vector<16x200xf32>
    %98 = arith.mulf %97, %94 : vector<16x200xf32>
    %99 = arith.select %96, %94, %98 : vector<16x200xi1>, vector<16x200xf32>
    %100 = vector.broadcast %0 : vector<1x200xf32> to vector<16x200xf32>
    %101 = arith.mulf %99, %100 : vector<16x200xf32>
    %102 = vector.extract_strided_slice %101 {offsets = [0, 0], sizes = [16, 189], strides = [1, 1]} : vector<16x200xf32> to vector<16x189xf32>
    %c0_46 = arith.constant 0 : index
    %c11_47 = arith.constant 11 : index
    %103 = vector.load %arg23[%c0_46, %c11_47] : memref<144x200xf32, #tpu.memory_space<vmem>>, vector<16x189xf32>
    tpu.vector_store %arg23[%c0_46, %c11_47], %102 {strides = array<i32>} : memref<144x200xf32, #tpu.memory_space<vmem>>, vector<16x189xf32>,
    %104 = vector.extract_strided_slice %101 {offsets = [0, 0], sizes = [16, 190], strides = [1, 1]} : vector<16x200xf32> to vector<16x190xf32>
    %c16 = arith.constant 16 : index
    %c10_48 = arith.constant 10 : index
    %105 = vector.load %arg23[%c16, %c10_48] : memref<144x200xf32, #tpu.memory_space<vmem>>, vector<16x190xf32>
    tpu.vector_store %arg23[%c16, %c10_48], %104 {strides = array<i32>} : memref<144x200xf32, #tpu.memory_space<vmem>>, vector<16x190xf32>,
    %106 = vector.extract_strided_slice %101 {offsets = [0, 0], sizes = [16, 191], strides = [1, 1]} : vector<16x200xf32> to vector<16x191xf32>
    %c32 = arith.constant 32 : index
    %c9_49 = arith.constant 9 : index
    %107 = vector.load %arg23[%c32, %c9_49] : memref<144x200xf32, #tpu.memory_space<vmem>>, vector<16x191xf32>
    tpu.vector_store %arg23[%c32, %c9_49], %106 {strides = array<i32>} : memref<144x200xf32, #tpu.memory_space<vmem>>, vector<16x191xf32>,
    %108 = vector.extract_strided_slice %101 {offsets = [0, 0], sizes = [16, 199], strides = [1, 1]} : vector<16x200xf32> to vector<16x199xf32>
    %c48_50 = arith.constant 48 : index
    %c1_51 = arith.constant 1 : index
    %109 = vector.load %arg23[%c48_50, %c1_51] : memref<144x200xf32, #tpu.memory_space<vmem>>, vector<16x199xf32>
    tpu.vector_store %arg23[%c48_50, %c1_51], %108 {strides = array<i32>} : memref<144x200xf32, #tpu.memory_space<vmem>>, vector<16x199xf32>,
    %c64 = arith.constant 64 : index
    %c0_52 = arith.constant 0 : index
    %110 = vector.load %arg23[%c64, %c0_52] : memref<144x200xf32, #tpu.memory_space<vmem>>, vector<16x200xf32>
    tpu.vector_store %arg23[%c64, %c0_52], %101 {strides = array<i32>} : memref<144x200xf32, #tpu.memory_space<vmem>>, vector<16x200xf32>,
    %111 = vector.extract_strided_slice %101 {offsets = [0, 1], sizes = [16, 199], strides = [1, 1]} : vector<16x200xf32> to vector<16x199xf32>
    %c80 = arith.constant 80 : index
    %c0_53 = arith.constant 0 : index
    %112 = vector.load %arg23[%c80, %c0_53] : memref<144x200xf32, #tpu.memory_space<vmem>>, vector<16x199xf32>
    tpu.vector_store %arg23[%c80, %c0_53], %111 {strides = array<i32>} : memref<144x200xf32, #tpu.memory_space<vmem>>, vector<16x199xf32>,
    %113 = vector.extract_strided_slice %101 {offsets = [0, 9], sizes = [16, 191], strides = [1, 1]} : vector<16x200xf32> to vector<16x191xf32>
    %c96_54 = arith.constant 96 : index
    %c0_55 = arith.constant 0 : index
    %114 = vector.load %arg23[%c96_54, %c0_55] : memref<144x200xf32, #tpu.memory_space<vmem>>, vector<16x191xf32>
    tpu.vector_store %arg23[%c96_54, %c0_55], %113 {strides = array<i32>} : memref<144x200xf32, #tpu.memory_space<vmem>>, vector<16x191xf32>,
    %115 = vector.extract_strided_slice %101 {offsets = [0, 10], sizes = [16, 190], strides = [1, 1]} : vector<16x200xf32> to vector<16x190xf32>
    %c112 = arith.constant 112 : index
    %c0_56 = arith.constant 0 : index
    %116 = vector.load %arg23[%c112, %c0_56] : memref<144x200xf32, #tpu.memory_space<vmem>>, vector<16x190xf32>
    tpu.vector_store %arg23[%c112, %c0_56], %115 {strides = array<i32>} : memref<144x200xf32, #tpu.memory_space<vmem>>, vector<16x190xf32>,
    %117 = vector.extract_strided_slice %101 {offsets = [0, 11], sizes = [16, 189], strides = [1, 1]} : vector<16x200xf32> to vector<16x189xf32>
    %c128 = arith.constant 128 : index
    %c0_57 = arith.constant 0 : index
    %118 = vector.load %arg23[%c128, %c0_57] : memref<144x200xf32, #tpu.memory_space<vmem>>, vector<16x189xf32>
    tpu.vector_store %arg23[%c128, %c0_57], %117 {strides = array<i32>} : memref<144x200xf32, #tpu.memory_space<vmem>>, vector<16x189xf32>,
    %c0_58 = arith.constant 0 : index
    %c0_59 = arith.constant 0 : index
    %119 = vector.load %arg23[%c0_58, %c0_59] : memref<144x200xf32, #tpu.memory_space<vmem>>, vector<144x200xf32>
    %120 = arith.truncf %119 : vector<144x200xf32> to vector<144x200xbf16>
    %c0_60 = arith.constant 0 : index
    %c0_61 = arith.constant 0 : index
    %121 = vector.load %arg9[%c0_60, %c0_61] : memref<16x144xbf16, #tpu.memory_space<vmem>>, vector<16x144xbf16>
    %cst_62 = arith.constant dense<0.000000e+00> : vector<16x200xf32>
    %122 = tpu.matmul %121, %120, %cst_62 {dimension_numbers = #tpu.dot_dimension_numbers<[1], [0], [0], [1], [0, 0, 1, 1], [], []>} : vector<16x144xbf16>, vector<144x200xbf16>, vector<16x200xf32> -> vector<16x200xf32>
    %123 = vector.broadcast %0 : vector<1x200xf32> to vector<16x200xf32>
    %124 = arith.mulf %122, %123 : vector<16x200xf32>
    %cst_63 = arith.constant dense<0.000000e+00> : vector<16xf32>
    %125 = vector.multi_reduction <add>, %124, %cst_63 [1] : vector<16x200xf32> to vector<16xf32>
    %126 = vector.shape_cast %125 : vector<16xf32> to vector<16x1xf32>
    %cst_64 = arith.constant 7.812500e-03 : f32
    %127 = vector.broadcast %cst_64 : f32 to vector<16x1xf32>
    %128 = arith.mulf %126, %127 : vector<16x1xf32>
    %129 = vector.broadcast %128 : vector<16x1xf32> to vector<16x200xf32>
    %130 = arith.subf %122, %129 : vector<16x200xf32>
    %131 = vector.broadcast %0 : vector<1x200xf32> to vector<16x200xf32>
    %132 = arith.mulf %130, %131 : vector<16x200xf32>
    %133 = arith.mulf %132, %132 : vector<16x200xf32>
    %cst_65 = arith.constant dense<0.000000e+00> : vector<16xf32>
    %134 = vector.multi_reduction <add>, %133, %cst_65 [1] : vector<16x200xf32> to vector<16xf32>
    %135 = vector.shape_cast %134 : vector<16xf32> to vector<16x1xf32>
    %cst_66 = arith.constant 7.812500e-03 : f32
    %136 = vector.broadcast %cst_66 : f32 to vector<16x1xf32>
    %137 = arith.mulf %135, %136 : vector<16x1xf32>
    %c0_67 = arith.constant 0 : index
    %c0_68 = arith.constant 0 : index
    %138 = vector.load %arg10[%c0_67, %c0_68] : memref<16x1xf32, #tpu.memory_space<vmem>>, vector<16x1xf32>
    %cst_69 = arith.constant 9.99999974E-6 : f32
    %139 = vector.broadcast %cst_69 : f32 to vector<16x1xf32>
    %140 = arith.addf %137, %139 : vector<16x1xf32>
    %141 = math.rsqrt %140 : vector<16x1xf32>
    %142 = arith.mulf %138, %141 : vector<16x1xf32>
    %c0_70 = arith.constant 0 : index
    %c0_71 = arith.constant 0 : index
    %143 = vector.load %arg11[%c0_70, %c0_71] : memref<16x1xf32, #tpu.memory_space<vmem>>, vector<16x1xf32>
    %144 = arith.mulf %128, %142 : vector<16x1xf32>
    %145 = arith.subf %143, %144 : vector<16x1xf32>
    %146 = vector.broadcast %142 : vector<16x1xf32> to vector<16x200xf32>
    %147 = arith.mulf %122, %146 : vector<16x200xf32>
    %148 = vector.broadcast %145 : vector<16x1xf32> to vector<16x200xf32>
    %149 = arith.addf %147, %148 : vector<16x200xf32>
    %cst_72 = arith.constant 0.000000e+00 : f32
    %150 = vector.broadcast %cst_72 : f32 to vector<16x200xf32>
    %151 = arith.cmpf oge, %149, %150 : vector<16x200xf32>
    %cst_73 = arith.constant 0.00999999977 : f32
    %152 = vector.broadcast %cst_73 : f32 to vector<16x200xf32>
    %153 = arith.mulf %152, %149 : vector<16x200xf32>
    %154 = arith.select %151, %149, %153 : vector<16x200xi1>, vector<16x200xf32>
    %155 = vector.broadcast %0 : vector<1x200xf32> to vector<16x200xf32>
    %156 = arith.mulf %154, %155 : vector<16x200xf32>
    %c0_74 = arith.constant 0 : index
    %c0_75 = arith.constant 0 : index
    %157 = vector.load %arg12[%c0_74, %c0_75] : memref<16x44xbf16, #tpu.memory_space<vmem>>, vector<16x12xbf16>
    %158 = arith.truncf %5 : vector<12x200xf32> to vector<12x200xbf16>
    %cst_76 = arith.constant dense<0.000000e+00> : vector<16x200xf32>
    %159 = tpu.matmul %157, %158, %cst_76 {dimension_numbers = #tpu.dot_dimension_numbers<[1], [0], [0], [1], [0, 0, 1, 1], [], []>} : vector<16x12xbf16>, vector<12x200xbf16>, vector<16x200xf32> -> vector<16x200xf32>
    %c0_77 = arith.constant 0 : index
    %c12_78 = arith.constant 12 : index
    %160 = vector.load %arg12[%c0_77, %c12_78] : memref<16x44xbf16, #tpu.memory_space<vmem>>, vector<16x16xbf16>
    %161 = arith.truncf %60 : vector<16x200xf32> to vector<16x200xbf16>
    %cst_79 = arith.constant dense<0.000000e+00> : vector<16x200xf32>
    %162 = tpu.matmul %160, %161, %cst_79 {dimension_numbers = #tpu.dot_dimension_numbers<[1], [0], [0], [1], [0, 0, 1, 1], [], []>} : vector<16x16xbf16>, vector<16x200xbf16>, vector<16x200xf32> -> vector<16x200xf32>
    %163 = arith.addf %159, %162 : vector<16x200xf32>
    %c0_80 = arith.constant 0 : index
    %c28 = arith.constant 28 : index
    %164 = vector.load %arg12[%c0_80, %c28] : memref<16x44xbf16, #tpu.memory_space<vmem>>, vector<16x16xbf16>
    %165 = arith.truncf %156 : vector<16x200xf32> to vector<16x200xbf16>
    %cst_81 = arith.constant dense<0.000000e+00> : vector<16x200xf32>
    %166 = tpu.matmul %164, %165, %cst_81 {dimension_numbers = #tpu.dot_dimension_numbers<[1], [0], [0], [1], [0, 0, 1, 1], [], []>} : vector<16x16xbf16>, vector<16x200xbf16>, vector<16x200xf32> -> vector<16x200xf32>
    %167 = arith.addf %163, %166 : vector<16x200xf32>
    %168 = vector.broadcast %0 : vector<1x200xf32> to vector<16x200xf32>
    %169 = arith.mulf %167, %168 : vector<16x200xf32>
    %cst_82 = arith.constant dense<0.000000e+00> : vector<16xf32>
    %170 = vector.multi_reduction <add>, %169, %cst_82 [1] : vector<16x200xf32> to vector<16xf32>
    %171 = vector.shape_cast %170 : vector<16xf32> to vector<16x1xf32>
    %cst_83 = arith.constant 7.812500e-03 : f32
    %172 = vector.broadcast %cst_83 : f32 to vector<16x1xf32>
    %173 = arith.mulf %171, %172 : vector<16x1xf32>
    %174 = vector.broadcast %173 : vector<16x1xf32> to vector<16x200xf32>
    %175 = arith.subf %167, %174 : vector<16x200xf32>
    %176 = vector.broadcast %0 : vector<1x200xf32> to vector<16x200xf32>
    %177 = arith.mulf %175, %176 : vector<16x200xf32>
    %178 = arith.mulf %177, %177 : vector<16x200xf32>
    %cst_84 = arith.constant dense<0.000000e+00> : vector<16xf32>
    %179 = vector.multi_reduction <add>, %178, %cst_84 [1] : vector<16x200xf32> to vector<16xf32>
    %180 = vector.shape_cast %179 : vector<16xf32> to vector<16x1xf32>
    %cst_85 = arith.constant 7.812500e-03 : f32
    %181 = vector.broadcast %cst_85 : f32 to vector<16x1xf32>
    %182 = arith.mulf %180, %181 : vector<16x1xf32>
    %c0_86 = arith.constant 0 : index
    %c0_87 = arith.constant 0 : index
    %183 = vector.load %arg13[%c0_86, %c0_87] : memref<16x1xf32, #tpu.memory_space<vmem>>, vector<16x1xf32>
    %cst_88 = arith.constant 9.99999974E-6 : f32
    %184 = vector.broadcast %cst_88 : f32 to vector<16x1xf32>
    %185 = arith.addf %182, %184 : vector<16x1xf32>
    %186 = math.rsqrt %185 : vector<16x1xf32>
    %187 = arith.mulf %183, %186 : vector<16x1xf32>
    %c0_89 = arith.constant 0 : index
    %c0_90 = arith.constant 0 : index
    %188 = vector.load %arg14[%c0_89, %c0_90] : memref<16x1xf32, #tpu.memory_space<vmem>>, vector<16x1xf32>
    %189 = arith.mulf %173, %187 : vector<16x1xf32>
    %190 = arith.subf %188, %189 : vector<16x1xf32>
    %191 = vector.broadcast %187 : vector<16x1xf32> to vector<16x200xf32>
    %192 = arith.mulf %167, %191 : vector<16x200xf32>
    %193 = vector.broadcast %190 : vector<16x1xf32> to vector<16x200xf32>
    %194 = arith.addf %192, %193 : vector<16x200xf32>
    %cst_91 = arith.constant 0.000000e+00 : f32
    %195 = vector.broadcast %cst_91 : f32 to vector<16x200xf32>
    %196 = arith.cmpf oge, %194, %195 : vector<16x200xf32>
    %cst_92 = arith.constant 0.00999999977 : f32
    %197 = vector.broadcast %cst_92 : f32 to vector<16x200xf32>
    %198 = arith.mulf %197, %194 : vector<16x200xf32>
    %199 = arith.select %196, %194, %198 : vector<16x200xi1>, vector<16x200xf32>
    %200 = vector.broadcast %0 : vector<1x200xf32> to vector<16x200xf32>
    %201 = arith.mulf %199, %200 : vector<16x200xf32>
    %202 = vector.extract_strided_slice %201 {offsets = [0, 0], sizes = [16, 189], strides = [1, 1]} : vector<16x200xf32> to vector<16x189xf32>
    %c0_93 = arith.constant 0 : index
    %c11_94 = arith.constant 11 : index
    %203 = vector.load %arg23[%c0_93, %c11_94] : memref<144x200xf32, #tpu.memory_space<vmem>>, vector<16x189xf32>
    tpu.vector_store %arg23[%c0_93, %c11_94], %202 {strides = array<i32>} : memref<144x200xf32, #tpu.memory_space<vmem>>, vector<16x189xf32>,
    %204 = vector.extract_strided_slice %201 {offsets = [0, 0], sizes = [16, 190], strides = [1, 1]} : vector<16x200xf32> to vector<16x190xf32>
    %c16_95 = arith.constant 16 : index
    %c10_96 = arith.constant 10 : index
    %205 = vector.load %arg23[%c16_95, %c10_96] : memref<144x200xf32, #tpu.memory_space<vmem>>, vector<16x190xf32>
    tpu.vector_store %arg23[%c16_95, %c10_96], %204 {strides = array<i32>} : memref<144x200xf32, #tpu.memory_space<vmem>>, vector<16x190xf32>,
    %206 = vector.extract_strided_slice %201 {offsets = [0, 0], sizes = [16, 191], strides = [1, 1]} : vector<16x200xf32> to vector<16x191xf32>
    %c32_97 = arith.constant 32 : index
    %c9_98 = arith.constant 9 : index
    %207 = vector.load %arg23[%c32_97, %c9_98] : memref<144x200xf32, #tpu.memory_space<vmem>>, vector<16x191xf32>
    tpu.vector_store %arg23[%c32_97, %c9_98], %206 {strides = array<i32>} : memref<144x200xf32, #tpu.memory_space<vmem>>, vector<16x191xf32>,
    %208 = vector.extract_strided_slice %201 {offsets = [0, 0], sizes = [16, 199], strides = [1, 1]} : vector<16x200xf32> to vector<16x199xf32>
    %c48_99 = arith.constant 48 : index
    %c1_100 = arith.constant 1 : index
    %209 = vector.load %arg23[%c48_99, %c1_100] : memref<144x200xf32, #tpu.memory_space<vmem>>, vector<16x199xf32>
    tpu.vector_store %arg23[%c48_99, %c1_100], %208 {strides = array<i32>} : memref<144x200xf32, #tpu.memory_space<vmem>>, vector<16x199xf32>,
    %c64_101 = arith.constant 64 : index
    %c0_102 = arith.constant 0 : index
    %210 = vector.load %arg23[%c64_101, %c0_102] : memref<144x200xf32, #tpu.memory_space<vmem>>, vector<16x200xf32>
    tpu.vector_store %arg23[%c64_101, %c0_102], %201 {strides = array<i32>} : memref<144x200xf32, #tpu.memory_space<vmem>>, vector<16x200xf32>,
    %211 = vector.extract_strided_slice %201 {offsets = [0, 1], sizes = [16, 199], strides = [1, 1]} : vector<16x200xf32> to vector<16x199xf32>
    %c80_103 = arith.constant 80 : index
    %c0_104 = arith.constant 0 : index
    %212 = vector.load %arg23[%c80_103, %c0_104] : memref<144x200xf32, #tpu.memory_space<vmem>>, vector<16x199xf32>
    tpu.vector_store %arg23[%c80_103, %c0_104], %211 {strides = array<i32>} : memref<144x200xf32, #tpu.memory_space<vmem>>, vector<16x199xf32>,
    %213 = vector.extract_strided_slice %201 {offsets = [0, 9], sizes = [16, 191], strides = [1, 1]} : vector<16x200xf32> to vector<16x191xf32>
    %c96_105 = arith.constant 96 : index
    %c0_106 = arith.constant 0 : index
    %214 = vector.load %arg23[%c96_105, %c0_106] : memref<144x200xf32, #tpu.memory_space<vmem>>, vector<16x191xf32>
    tpu.vector_store %arg23[%c96_105, %c0_106], %213 {strides = array<i32>} : memref<144x200xf32, #tpu.memory_space<vmem>>, vector<16x191xf32>,
    %215 = vector.extract_strided_slice %201 {offsets = [0, 10], sizes = [16, 190], strides = [1, 1]} : vector<16x200xf32> to vector<16x190xf32>
    %c112_107 = arith.constant 112 : index
    %c0_108 = arith.constant 0 : index
    %216 = vector.load %arg23[%c112_107, %c0_108] : memref<144x200xf32, #tpu.memory_space<vmem>>, vector<16x190xf32>
    tpu.vector_store %arg23[%c112_107, %c0_108], %215 {strides = array<i32>} : memref<144x200xf32, #tpu.memory_space<vmem>>, vector<16x190xf32>,
    %217 = vector.extract_strided_slice %201 {offsets = [0, 11], sizes = [16, 189], strides = [1, 1]} : vector<16x200xf32> to vector<16x189xf32>
    %c128_109 = arith.constant 128 : index
    %c0_110 = arith.constant 0 : index
    %218 = vector.load %arg23[%c128_109, %c0_110] : memref<144x200xf32, #tpu.memory_space<vmem>>, vector<16x189xf32>
    tpu.vector_store %arg23[%c128_109, %c0_110], %217 {strides = array<i32>} : memref<144x200xf32, #tpu.memory_space<vmem>>, vector<16x189xf32>,
    %c0_111 = arith.constant 0 : index
    %c0_112 = arith.constant 0 : index
    %219 = vector.load %arg23[%c0_111, %c0_112] : memref<144x200xf32, #tpu.memory_space<vmem>>, vector<144x200xf32>
    %220 = arith.truncf %219 : vector<144x200xf32> to vector<144x200xbf16>
    %c0_113 = arith.constant 0 : index
    %c0_114 = arith.constant 0 : index
    %221 = vector.load %arg15[%c0_113, %c0_114] : memref<16x144xbf16, #tpu.memory_space<vmem>>, vector<16x144xbf16>
    %cst_115 = arith.constant dense<0.000000e+00> : vector<16x200xf32>
    %222 = tpu.matmul %221, %220, %cst_115 {dimension_numbers = #tpu.dot_dimension_numbers<[1], [0], [0], [1], [0, 0, 1, 1], [], []>} : vector<16x144xbf16>, vector<144x200xbf16>, vector<16x200xf32> -> vector<16x200xf32>
    %223 = vector.broadcast %0 : vector<1x200xf32> to vector<16x200xf32>
    %224 = arith.mulf %222, %223 : vector<16x200xf32>
    %cst_116 = arith.constant dense<0.000000e+00> : vector<16xf32>
    %225 = vector.multi_reduction <add>, %224, %cst_116 [1] : vector<16x200xf32> to vector<16xf32>
    %226 = vector.shape_cast %225 : vector<16xf32> to vector<16x1xf32>
    %cst_117 = arith.constant 7.812500e-03 : f32
    %227 = vector.broadcast %cst_117 : f32 to vector<16x1xf32>
    %228 = arith.mulf %226, %227 : vector<16x1xf32>
    %229 = vector.broadcast %228 : vector<16x1xf32> to vector<16x200xf32>
    %230 = arith.subf %222, %229 : vector<16x200xf32>
    %231 = vector.broadcast %0 : vector<1x200xf32> to vector<16x200xf32>
    %232 = arith.mulf %230, %231 : vector<16x200xf32>
    %233 = arith.mulf %232, %232 : vector<16x200xf32>
    %cst_118 = arith.constant dense<0.000000e+00> : vector<16xf32>
    %234 = vector.multi_reduction <add>, %233, %cst_118 [1] : vector<16x200xf32> to vector<16xf32>
    %235 = vector.shape_cast %234 : vector<16xf32> to vector<16x1xf32>
    %cst_119 = arith.constant 7.812500e-03 : f32
    %236 = vector.broadcast %cst_119 : f32 to vector<16x1xf32>
    %237 = arith.mulf %235, %236 : vector<16x1xf32>
    %c0_120 = arith.constant 0 : index
    %c0_121 = arith.constant 0 : index
    %238 = vector.load %arg16[%c0_120, %c0_121] : memref<16x1xf32, #tpu.memory_space<vmem>>, vector<16x1xf32>
    %cst_122 = arith.constant 9.99999974E-6 : f32
    %239 = vector.broadcast %cst_122 : f32 to vector<16x1xf32>
    %240 = arith.addf %237, %239 : vector<16x1xf32>
    %241 = math.rsqrt %240 : vector<16x1xf32>
    %242 = arith.mulf %238, %241 : vector<16x1xf32>
    %c0_123 = arith.constant 0 : index
    %c0_124 = arith.constant 0 : index
    %243 = vector.load %arg17[%c0_123, %c0_124] : memref<16x1xf32, #tpu.memory_space<vmem>>, vector<16x1xf32>
    %244 = arith.mulf %228, %242 : vector<16x1xf32>
    %245 = arith.subf %243, %244 : vector<16x1xf32>
    %246 = vector.broadcast %242 : vector<16x1xf32> to vector<16x200xf32>
    %247 = arith.mulf %222, %246 : vector<16x200xf32>
    %248 = vector.broadcast %245 : vector<16x1xf32> to vector<16x200xf32>
    %249 = arith.addf %247, %248 : vector<16x200xf32>
    %cst_125 = arith.constant 0.000000e+00 : f32
    %250 = vector.broadcast %cst_125 : f32 to vector<16x200xf32>
    %251 = arith.cmpf oge, %249, %250 : vector<16x200xf32>
    %cst_126 = arith.constant 0.00999999977 : f32
    %252 = vector.broadcast %cst_126 : f32 to vector<16x200xf32>
    %253 = arith.mulf %252, %249 : vector<16x200xf32>
    %254 = arith.select %251, %249, %253 : vector<16x200xi1>, vector<16x200xf32>
    %255 = vector.broadcast %0 : vector<1x200xf32> to vector<16x200xf32>
    %256 = arith.mulf %254, %255 : vector<16x200xf32>
    %c0_127 = arith.constant 0 : index
    %c0_128 = arith.constant 0 : index
    %257 = vector.load %arg21[%c0_127, %c0_128] : memref<28x200xf32, #tpu.memory_space<vmem>>, vector<16x200xf32>
    tpu.vector_store %arg21[%c0_127, %c0_128], %256 {strides = array<i32>} : memref<28x200xf32, #tpu.memory_space<vmem>>, vector<16x200xf32>,
    %c16_129 = arith.constant 16 : index
    %c0_130 = arith.constant 0 : index
    %258 = vector.load %arg21[%c16_129, %c0_130] : memref<28x200xf32, #tpu.memory_space<vmem>>, vector<12x200xf32>
    tpu.vector_store %arg21[%c16_129, %c0_130], %5 {strides = array<i32>} : memref<28x200xf32, #tpu.memory_space<vmem>>, vector<12x200xf32>,
    %c0_131 = arith.constant 0 : index
    %c0_132 = arith.constant 0 : index
    %259 = vector.load %arg18[%c0_131, %c0_132] : memref<24x28xbf16, #tpu.memory_space<vmem>>, vector<24x16xbf16>
    %260 = arith.truncf %256 : vector<16x200xf32> to vector<16x200xbf16>
    %cst_133 = arith.constant dense<0.000000e+00> : vector<24x200xf32>
    %261 = tpu.matmul %259, %260, %cst_133 {dimension_numbers = #tpu.dot_dimension_numbers<[1], [0], [0], [1], [0, 0, 1, 1], [], []>} : vector<24x16xbf16>, vector<16x200xbf16>, vector<24x200xf32> -> vector<24x200xf32>
    %c0_134 = arith.constant 0 : index
    %c16_135 = arith.constant 16 : index
    %262 = vector.load %arg18[%c0_134, %c16_135] : memref<24x28xbf16, #tpu.memory_space<vmem>>, vector<24x12xbf16>
    %263 = arith.truncf %5 : vector<12x200xf32> to vector<12x200xbf16>
    %cst_136 = arith.constant dense<0.000000e+00> : vector<24x200xf32>
    %264 = tpu.matmul %262, %263, %cst_136 {dimension_numbers = #tpu.dot_dimension_numbers<[1], [0], [0], [1], [0, 0, 1, 1], [], []>} : vector<24x12xbf16>, vector<12x200xbf16>, vector<24x200xf32> -> vector<24x200xf32>
    %265 = arith.addf %261, %264 : vector<24x200xf32>
    %266 = vector.broadcast %0 : vector<1x200xf32> to vector<24x200xf32>
    %267 = arith.mulf %265, %266 : vector<24x200xf32>
    %cst_137 = arith.constant dense<0.000000e+00> : vector<24xf32>
    %268 = vector.multi_reduction <add>, %267, %cst_137 [1] : vector<24x200xf32> to vector<24xf32>
    %269 = vector.shape_cast %268 : vector<24xf32> to vector<24x1xf32>
    %cst_138 = arith.constant 7.812500e-03 : f32
    %270 = vector.broadcast %cst_138 : f32 to vector<24x1xf32>
    %271 = arith.mulf %269, %270 : vector<24x1xf32>
    %272 = vector.broadcast %271 : vector<24x1xf32> to vector<24x200xf32>
    %273 = arith.subf %265, %272 : vector<24x200xf32>
    %274 = vector.broadcast %0 : vector<1x200xf32> to vector<24x200xf32>
    %275 = arith.mulf %273, %274 : vector<24x200xf32>
    %276 = arith.mulf %275, %275 : vector<24x200xf32>
    %cst_139 = arith.constant dense<0.000000e+00> : vector<24xf32>
    %277 = vector.multi_reduction <add>, %276, %cst_139 [1] : vector<24x200xf32> to vector<24xf32>
    %278 = vector.shape_cast %277 : vector<24xf32> to vector<24x1xf32>
    %cst_140 = arith.constant 7.812500e-03 : f32
    %279 = vector.broadcast %cst_140 : f32 to vector<24x1xf32>
    %280 = arith.mulf %278, %279 : vector<24x1xf32>
    %c0_141 = arith.constant 0 : index
    %c0_142 = arith.constant 0 : index
    %281 = vector.load %arg19[%c0_141, %c0_142] : memref<24x1xf32, #tpu.memory_space<vmem>>, vector<24x1xf32>
    %cst_143 = arith.constant 9.99999974E-6 : f32
    %282 = vector.broadcast %cst_143 : f32 to vector<24x1xf32>
    %283 = arith.addf %280, %282 : vector<24x1xf32>
    %284 = math.rsqrt %283 : vector<24x1xf32>
    %285 = arith.mulf %281, %284 : vector<24x1xf32>
    %c0_144 = arith.constant 0 : index
    %c0_145 = arith.constant 0 : index
    %286 = vector.load %arg20[%c0_144, %c0_145] : memref<24x1xf32, #tpu.memory_space<vmem>>, vector<24x1xf32>
    %287 = arith.mulf %271, %285 : vector<24x1xf32>
    %288 = arith.subf %286, %287 : vector<24x1xf32>
    %289 = vector.broadcast %285 : vector<24x1xf32> to vector<24x200xf32>
    %290 = arith.mulf %265, %289 : vector<24x200xf32>
    %291 = vector.broadcast %288 : vector<24x1xf32> to vector<24x200xf32>
    %292 = arith.addf %290, %291 : vector<24x200xf32>
    %cst_146 = arith.constant 0.000000e+00 : f32
    %293 = vector.broadcast %cst_146 : f32 to vector<24x200xf32>
    %294 = arith.cmpf oge, %292, %293 : vector<24x200xf32>
    %cst_147 = arith.constant 0.00999999977 : f32
    %295 = vector.broadcast %cst_147 : f32 to vector<24x200xf32>
    %296 = arith.mulf %295, %292 : vector<24x200xf32>
    %297 = arith.select %294, %292, %296 : vector<24x200xi1>, vector<24x200xf32>
    %298 = vector.broadcast %0 : vector<1x200xf32> to vector<24x200xf32>
    %299 = arith.mulf %297, %298 : vector<24x200xf32>
    %c0_148 = arith.constant 0 : index
    %c0_149 = arith.constant 0 : index
    %300 = vector.load %arg22[%c0_148, %c0_149] : memref<24x200xf32, #tpu.memory_space<vmem>>, vector<24x200xf32>
    tpu.vector_store %arg22[%c0_148, %c0_149], %299 {strides = array<i32>} : memref<24x200xf32, #tpu.memory_space<vmem>>, vector<24x200xf32>,
    return
  }
  func.func @transform_0(%arg0: i32) -> (i32, i32) {
    %c0_i32 = arith.constant 0 : i32
    %c0_i32_0 = arith.constant 0 : i32
    %c0_i32_1 = arith.constant 0 : i32
    return %c0_i32, %c0_i32_0 : i32, i32
  }
  func.func @transform_1(%arg0: i32) -> (i32, i32) {
    %c0_i32 = arith.constant 0 : i32
    %c0_i32_0 = arith.constant 0 : i32
    %c0_i32_1 = arith.constant 0 : i32
    return %c0_i32, %c0_i32_0 : i32, i32
  }
  func.func @transform_2(%arg0: i32) -> (i32, i32) {
    %c0_i32 = arith.constant 0 : i32
    %c0_i32_0 = arith.constant 0 : i32
    %c0_i32_1 = arith.constant 0 : i32
    return %c0_i32, %c0_i32_0 : i32, i32
  }
  func.func @transform_3(%arg0: i32) -> (i32, i32) {
    %c0_i32 = arith.constant 0 : i32
    %c0_i32_0 = arith.constant 0 : i32
    %c0_i32_1 = arith.constant 0 : i32
    return %c0_i32, %c0_i32_0 : i32, i32
  }
  func.func @transform_4(%arg0: i32) -> (i32, i32) {
    %c0_i32 = arith.constant 0 : i32
    %c0_i32_0 = arith.constant 0 : i32
    %c0_i32_1 = arith.constant 0 : i32
    return %c0_i32, %c0_i32_0 : i32, i32
  }
  func.func @transform_5(%arg0: i32) -> (i32, i32) {
    %c0_i32 = arith.constant 0 : i32
    %c0_i32_0 = arith.constant 0 : i32
    %c0_i32_1 = arith.constant 0 : i32
    return %c0_i32, %c0_i32_0 : i32, i32
  }
  func.func @transform_6(%arg0: i32) -> (i32, i32) {
    %c0_i32 = arith.constant 0 : i32
    %c0_i32_0 = arith.constant 0 : i32
    %c0_i32_1 = arith.constant 0 : i32
    return %c0_i32, %c0_i32_0 : i32, i32
  }
  func.func @transform_7(%arg0: i32) -> (i32, i32) {
    %c0_i32 = arith.constant 0 : i32
    %c0_i32_0 = arith.constant 0 : i32
    %c0_i32_1 = arith.constant 0 : i32
    return %c0_i32, %c0_i32_0 : i32, i32
  }
  func.func @transform_8(%arg0: i32) -> (i32, i32) {
    %c0_i32 = arith.constant 0 : i32
    %c0_i32_0 = arith.constant 0 : i32
    %c0_i32_1 = arith.constant 0 : i32
    return %c0_i32, %c0_i32_0 : i32, i32
  }
  func.func @transform_9(%arg0: i32) -> (i32, i32) {
    %c0_i32 = arith.constant 0 : i32
    %c0_i32_0 = arith.constant 0 : i32
    %c0_i32_1 = arith.constant 0 : i32
    return %c0_i32, %c0_i32_0 : i32, i32
  }
  func.func @transform_10(%arg0: i32) -> (i32, i32) {
    %c0_i32 = arith.constant 0 : i32
    %c0_i32_0 = arith.constant 0 : i32
    %c0_i32_1 = arith.constant 0 : i32
    return %c0_i32, %c0_i32_0 : i32, i32
  }
  func.func @transform_11(%arg0: i32) -> (i32, i32) {
    %c0_i32 = arith.constant 0 : i32
    %c0_i32_0 = arith.constant 0 : i32
    %c0_i32_1 = arith.constant 0 : i32
    return %c0_i32, %c0_i32_0 : i32, i32
  }
  func.func @transform_12(%arg0: i32) -> (i32, i32) {
    %c0_i32 = arith.constant 0 : i32
    %c0_i32_0 = arith.constant 0 : i32
    %c0_i32_1 = arith.constant 0 : i32
    return %c0_i32, %c0_i32_0 : i32, i32
  }
  func.func @transform_13(%arg0: i32) -> (i32, i32) {
    %c0_i32 = arith.constant 0 : i32
    %c0_i32_0 = arith.constant 0 : i32
    %c0_i32_1 = arith.constant 0 : i32
    return %c0_i32, %c0_i32_0 : i32, i32
  }
  func.func @transform_14(%arg0: i32) -> (i32, i32) {
    %c0_i32 = arith.constant 0 : i32
    %c0_i32_0 = arith.constant 0 : i32
    %c0_i32_1 = arith.constant 0 : i32
    return %c0_i32, %c0_i32_0 : i32, i32
  }
  func.func @transform_15(%arg0: i32) -> (i32, i32) {
    %c0_i32 = arith.constant 0 : i32
    %c0_i32_0 = arith.constant 0 : i32
    %c0_i32_1 = arith.constant 0 : i32
    return %c0_i32, %c0_i32_0 : i32, i32
  }
  func.func @transform_16(%arg0: i32) -> (i32, i32) {
    %c0_i32 = arith.constant 0 : i32
    %c0_i32_0 = arith.constant 0 : i32
    %c0_i32_1 = arith.constant 0 : i32
    return %c0_i32, %c0_i32_0 : i32, i32
  }
  func.func @transform_17(%arg0: i32) -> (i32, i32) {
    %c0_i32 = arith.constant 0 : i32
    %c0_i32_0 = arith.constant 0 : i32
    %c0_i32_1 = arith.constant 0 : i32
    return %c0_i32, %c0_i32_0 : i32, i32
  }
  func.func @transform_18(%arg0: i32) -> (i32, i32) {
    %c0_i32 = arith.constant 0 : i32
    %c0_i32_0 = arith.constant 0 : i32
    %c0_i32_1 = arith.constant 0 : i32
    return %c0_i32, %c0_i32_0 : i32, i32
  }
  func.func @transform_19(%arg0: i32) -> (i32, i32) {
    %c0_i32 = arith.constant 0 : i32
    %c0_i32_0 = arith.constant 0 : i32
    %c0_i32_1 = arith.constant 0 : i32
    return %c0_i32, %c0_i32_0 : i32, i32
  }
  func.func @transform_20(%arg0: i32) -> (i32, i32) {
    %c0_i32 = arith.constant 0 : i32
    %c0_i32_0 = arith.constant 0 : i32
    %c0_i32_1 = arith.constant 0 : i32
    return %c0_i32, %c0_i32_0 : i32, i32
  }
  func.func @transform_21(%arg0: i32) -> (i32, i32) {
    %c0_i32 = arith.constant 0 : i32
    %c0_i32_0 = arith.constant 0 : i32
    %c0_i32_1 = arith.constant 0 : i32
    return %c0_i32, %c0_i32_0 : i32, i32
  }
}

</mosaic_0001>

<llo_original>
// kernel: dense_net_encoder.3
$region0: #{dense_net_encoder.3}
  #allocation0 [shape = 'u32[]', space=smem, size = 0x4, offset = 0x4, fixed_abs, tag = 'smem constant byte address 0x4 - core index']
  #allocation1 [shape = 'u32[72,128]{1,0:T(1,128)}', space=vmem, size = 0x9000, scoped, tag = 'internal scratch']
  #allocation2 [shape = 'f32[144,200]{1,0:T(8,128)}', space=vmem, size = 0x24000, scoped, tag = 'scratch operand']
  %s0 = inlined_call_operand.vmem [shape: f32[12,200], index: 0, kind: input, shape index: {}]
  %s1 = inlined_call_operand.vmem [shape: f32[1,200], index: 1, kind: input, shape index: {}]
  %s2 = inlined_call_operand.vmem [shape: bf16[16,108], index: 2, kind: input, shape index: {}]
  %s3 = inlined_call_operand.vmem [shape: f32[16,1], index: 3, kind: input, shape index: {}, may-alias: {3,6,9,12,15}]
  %s4 = inlined_call_operand.vmem [shape: f32[16,1], index: 4, kind: input, shape index: {}, may-alias: {4,7,10,13,16}]
  %s5 = inlined_call_operand.vmem [shape: bf16[16,28], index: 5, kind: input, shape index: {}]
  %s6 = inlined_call_operand.vmem [shape: f32[16,1], index: 6, kind: input, shape index: {}, may-alias: {3,6,9,12,15}]
  %s7 = inlined_call_operand.vmem [shape: f32[16,1], index: 7, kind: input, shape index: {}, may-alias: {4,7,10,13,16}]
  %s8 = inlined_call_operand.vmem [shape: bf16[16,144], index: 8, kind: input, shape index: {}]
  %s9 = inlined_call_operand.vmem [shape: f32[16,1], index: 9, kind: input, shape index: {}, may-alias: {3,6,9,12,15}]
  %s10 = inlined_call_operand.vmem [shape: f32[16,1], index: 10, kind: input, shape index: {}, may-alias: {4,7,10,13,16}]
  %s11 = inlined_call_operand.vmem [shape: bf16[16,44], index: 11, kind: input, shape index: {}]
  %s12 = inlined_call_operand.vmem [shape: f32[16,1], index: 12, kind: input, shape index: {}, may-alias: {3,6,9,12,15}]
  %s13 = inlined_call_operand.vmem [shape: f32[16,1], index: 13, kind: input, shape index: {}, may-alias: {4,7,10,13,16}]
  %s14 = inlined_call_operand.vmem [shape: bf16[16,144], index: 14, kind: input, shape index: {}]
  %s15 = inlined_call_operand.vmem [shape: f32[16,1], index: 15, kind: input, shape index: {}, may-alias: {3,6,9,12,15}]
  %s16 = inlined_call_operand.vmem [shape: f32[16,1], index: 16, kind: input, shape index: {}, may-alias: {4,7,10,13,16}]
  %s17 = inlined_call_operand.vmem [shape: bf16[24,28], index: 17, kind: input, shape index: {}]
  %s18 = inlined_call_operand.vmem [shape: f32[24,1], index: 18, kind: input, shape index: {}]
  %s19 = inlined_call_operand.vmem [shape: f32[24,1], index: 19, kind: input, shape index: {}]
  %s20 = inlined_call_operand.vmem [shape: f32[28,200], index: 20, kind: output, shape index: {0}]
  %s21 = inlined_call_operand.vmem [shape: f32[24,200], index: 21, kind: output, shape index: {1}]
  %22 = xla_tuple %s20, %s21
  %s23 = sld [smem:[#allocation0]]
  $region98: #{dense_net_encoder.3} parent=0
    _
  %s25 = ssub.s32 1, %s23
  %s26 = scalar_select 0, %s25, %s23
  // Predicated region
  $region2: #{dense_net_encoder.3} parent=0 // pred_check
    _
  $region3: #{dense_net_encoder.3} parent=0 // pred_check_branch
    %28 = sbr.rel (0) target = $region5
  $region4: #{dense_net_encoder.3} parent=0 // pred_region
    _
  $region5: #{dense_net_encoder.3} parent=0 // pred_fallthru
    _
  // Predicated region
  $region6: #{dense_net_encoder.3} parent=0 // pred_check
    _
  $region7: #{dense_net_encoder.3} parent=0 // pred_check_branch
    %30 = sbr.rel (0) target = $region9
  $region8: #{dense_net_encoder.3} parent=0 // pred_region
    _
  $region9: #{dense_net_encoder.3} parent=0 // pred_fallthru
    _
  // Predicated region
  $region10: #{dense_net_encoder.3} parent=0 // pred_check
    _
  $region11: #{dense_net_encoder.3} parent=0 // pred_check_branch
    %32 = sbr.rel (0) target = $region13
  $region12: #{dense_net_encoder.3} parent=0 // pred_region
    _
  $region13: #{dense_net_encoder.3} parent=0 // pred_fallthru
    _
  // Predicated region
  $region14: #{dense_net_encoder.3} parent=0 // pred_check
    _
  $region15: #{dense_net_encoder.3} parent=0 // pred_check_branch
    %34 = sbr.rel (0) target = $region17
  $region16: #{dense_net_encoder.3} parent=0 // pred_region
    _
  $region17: #{dense_net_encoder.3} parent=0 // pred_fallthru
    _
  // Predicated region
  $region18: #{dense_net_encoder.3} parent=0 // pred_check
    _
  $region19: #{dense_net_encoder.3} parent=0 // pred_check_branch
    %36 = sbr.rel (0) target = $region21
  $region20: #{dense_net_encoder.3} parent=0 // pred_region
    _
  $region21: #{dense_net_encoder.3} parent=0 // pred_fallthru
    _
  // Predicated region
  $region22: #{dense_net_encoder.3} parent=0 // pred_check
    _
  $region23: #{dense_net_encoder.3} parent=0 // pred_check_branch
    %38 = sbr.rel (0) target = $region25
  $region24: #{dense_net_encoder.3} parent=0 // pred_region
    _
  $region25: #{dense_net_encoder.3} parent=0 // pred_fallthru
    _
  // Predicated region
  $region26: #{dense_net_encoder.3} parent=0 // pred_check
    _
  $region27: #{dense_net_encoder.3} parent=0 // pred_check_branch
    %40 = sbr.rel (0) target = $region29
  $region28: #{dense_net_encoder.3} parent=0 // pred_region
    _
  $region29: #{dense_net_encoder.3} parent=0 // pred_fallthru
    _
  // Predicated region
  $region30: #{dense_net_encoder.3} parent=0 // pred_check
    _
  $region31: #{dense_net_encoder.3} parent=0 // pred_check_branch
    %42 = sbr.rel (0) target = $region33
  $region32: #{dense_net_encoder.3} parent=0 // pred_region
    _
  $region33: #{dense_net_encoder.3} parent=0 // pred_fallthru
    _
  // Predicated region
  $region34: #{dense_net_encoder.3} parent=0 // pred_check
    _
  $region35: #{dense_net_encoder.3} parent=0 // pred_check_branch
    %44 = sbr.rel (0) target = $region37
  $region36: #{dense_net_encoder.3} parent=0 // pred_region
    _
  $region37: #{dense_net_encoder.3} parent=0 // pred_fallthru
    _
  // Predicated region
  $region38: #{dense_net_encoder.3} parent=0 // pred_check
    _
  $region39: #{dense_net_encoder.3} parent=0 // pred_check_branch
    %46 = sbr.rel (0) target = $region41
  $region40: #{dense_net_encoder.3} parent=0 // pred_region
    _
  $region41: #{dense_net_encoder.3} parent=0 // pred_fallthru
    _
  // Predicated region
  $region42: #{dense_net_encoder.3} parent=0 // pred_check
    _
  $region43: #{dense_net_encoder.3} parent=0 // pred_check_branch
    %48 = sbr.rel (0) target = $region45
  $region44: #{dense_net_encoder.3} parent=0 // pred_region
    _
  $region45: #{dense_net_encoder.3} parent=0 // pred_fallthru
    _
  // Predicated region
  $region46: #{dense_net_encoder.3} parent=0 // pred_check
    _
  $region47: #{dense_net_encoder.3} parent=0 // pred_check_branch
    %50 = sbr.rel (0) target = $region49
  $region48: #{dense_net_encoder.3} parent=0 // pred_region
    _
  $region49: #{dense_net_encoder.3} parent=0 // pred_fallthru
    _
  // Predicated region
  $region50: #{dense_net_encoder.3} parent=0 // pred_check
    _
  $region51: #{dense_net_encoder.3} parent=0 // pred_check_branch
    %52 = sbr.rel (0) target = $region53
  $region52: #{dense_net_encoder.3} parent=0 // pred_region
    _
  $region53: #{dense_net_encoder.3} parent=0 // pred_fallthru
    _
  // Predicated region
  $region54: #{dense_net_encoder.3} parent=0 // pred_check
    _
  $region55: #{dense_net_encoder.3} parent=0 // pred_check_branch
    %54 = sbr.rel (0) target = $region57
  $region56: #{dense_net_encoder.3} parent=0 // pred_region
    _
  $region57: #{dense_net_encoder.3} parent=0 // pred_fallthru
    _
  // Predicated region
  $region58: #{dense_net_encoder.3} parent=0 // pred_check
    _
  $region59: #{dense_net_encoder.3} parent=0 // pred_check_branch
    %56 = sbr.rel (0) target = $region61
  $region60: #{dense_net_encoder.3} parent=0 // pred_region
    _
  $region61: #{dense_net_encoder.3} parent=0 // pred_fallthru
    _
  // Predicated region
  $region62: #{dense_net_encoder.3} parent=0 // pred_check
    _
  $region63: #{dense_net_encoder.3} parent=0 // pred_check_branch
    %58 = sbr.rel (0) target = $region65
  $region64: #{dense_net_encoder.3} parent=0 // pred_region
    _
  $region65: #{dense_net_encoder.3} parent=0 // pred_fallthru
    _
  // Predicated region
  $region66: #{dense_net_encoder.3} parent=0 // pred_check
    _
  $region67: #{dense_net_encoder.3} parent=0 // pred_check_branch
    %60 = sbr.rel (0) target = $region69
  $region68: #{dense_net_encoder.3} parent=0 // pred_region
    _
  $region69: #{dense_net_encoder.3} parent=0 // pred_fallthru
    _
  // Predicated region
  $region70: #{dense_net_encoder.3} parent=0 // pred_check
    _
  $region71: #{dense_net_encoder.3} parent=0 // pred_check_branch
    %62 = sbr.rel (0) target = $region73
  $region72: #{dense_net_encoder.3} parent=0 // pred_region
    _
  $region73: #{dense_net_encoder.3} parent=0 // pred_fallthru
    _
  // Predicated region
  $region74: #{dense_net_encoder.3} parent=0 // pred_check
    _
  $region75: #{dense_net_encoder.3} parent=0 // pred_check_branch
    %64 = sbr.rel (0) target = $region77
  $region76: #{dense_net_encoder.3} parent=0 // pred_region
    _
  $region77: #{dense_net_encoder.3} parent=0 // pred_fallthru
    _
  // Predicated region
  $region78: #{dense_net_encoder.3} parent=0 // pred_check
    _
  $region79: #{dense_net_encoder.3} parent=0 // pred_check_branch
    %66 = sbr.rel (0) target = $region81
  $region80: #{dense_net_encoder.3} parent=0 // pred_region
    _
  $region81: #{dense_net_encoder.3} parent=0 // pred_fallthru
    _
  %v68 = vld [vmem:[%s1] sm:$0x3]
  %vm69 = vcmask 89088
  %70 = vst.msk [vmem:[#allocation2] sm:$0xff] %vm69, 0.0
  %71 = vst.msk [vmem:[#allocation2 + $0x10] sm:$0xff] %vm69, 0.0
  %72 = vst.msk [vmem:[#allocation2 + $0x20] sm:$0xff] %vm69, 0.0
  %73 = vst.msk [vmem:[#allocation2 + $0x30] sm:$0xff] %vm69, 0.0
  %74 = vst.msk [vmem:[#allocation2 + $0x40] sm:$0xff] %vm69, 0.0
  %75 = vst.msk [vmem:[#allocation2 + $0x50] sm:$0xff] %vm69, 0.0
  %76 = vst.msk [vmem:[#allocation2 + $0x60] sm:$0xff] %vm69, 0.0
  %77 = vst.msk [vmem:[#allocation2 + $0x70] sm:$0xff] %vm69, 0.0
  %78 = vst.msk [vmem:[#allocation2 + $0x80] sm:$0xff] %vm69, 0.0
  %79 = vst.msk [vmem:[#allocation2 + $0x90] sm:$0xff] %vm69, 0.0
  %80 = vst.msk [vmem:[#allocation2 + $0xa0] sm:$0xff] %vm69, 0.0
  %81 = vst.msk [vmem:[#allocation2 + $0xb0] sm:$0xff] %vm69, 0.0
  %82 = vst.msk [vmem:[#allocation2 + $0xc0] sm:$0xff] %vm69, 0.0
  %83 = vst.msk [vmem:[#allocation2 + $0xd0] sm:$0xff] %vm69, 0.0
  %84 = vst.msk [vmem:[#allocation2 + $0xe0] sm:$0xff] %vm69, 0.0
  %85 = vst.msk [vmem:[#allocation2 + $0xf0] sm:$0xff] %vm69, 0.0
  %86 = vst.msk [vmem:[#allocation2 + $0x100] sm:$0xff] %vm69, 0.0
  %87 = vst.msk [vmem:[#allocation2 + $0x110] sm:$0xff] %vm69, 0.0
  %vm88 = vcmask 589288
  %89 = vst.msk [vmem:[#allocation2 + $0x8] sm:$0xff] %vm88, 0.0
  %90 = vst.msk [vmem:[#allocation2 + $0x18] sm:$0xff] %vm88, 0.0
  %91 = vst.msk [vmem:[#allocation2 + $0x28] sm:$0xff] %vm88, 0.0
  %92 = vst.msk [vmem:[#allocation2 + $0x38] sm:$0xff] %vm88, 0.0
  %93 = vst.msk [vmem:[#allocation2 + $0x48] sm:$0xff] %vm88, 0.0
  %94 = vst.msk [vmem:[#allocation2 + $0x58] sm:$0xff] %vm88, 0.0
  %95 = vst.msk [vmem:[#allocation2 + $0x68] sm:$0xff] %vm88, 0.0
  %96 = vst.msk [vmem:[#allocation2 + $0x78] sm:$0xff] %vm88, 0.0
  %97 = vst.msk [vmem:[#allocation2 + $0x88] sm:$0xff] %vm88, 0.0
  %98 = vst.msk [vmem:[#allocation2 + $0x98] sm:$0xff] %vm88, 0.0
  %99 = vst.msk [vmem:[#allocation2 + $0xa8] sm:$0xff] %vm88, 0.0
  %100 = vst.msk [vmem:[#allocation2 + $0xb8] sm:$0xff] %vm88, 0.0
  %101 = vst.msk [vmem:[#allocation2 + $0xc8] sm:$0xff] %vm88, 0.0
  %102 = vst.msk [vmem:[#allocation2 + $0xd8] sm:$0xff] %vm88, 0.0
  %103 = vst.msk [vmem:[#allocation2 + $0xe8] sm:$0xff] %vm88, 0.0
  %104 = vst.msk [vmem:[#allocation2 + $0xf8] sm:$0xff] %vm88, 0.0
  %105 = vst.msk [vmem:[#allocation2 + $0x108] sm:$0xff] %vm88, 0.0
  %106 = vst.msk [vmem:[#allocation2 + $0x118] sm:$0xff] %vm88, 0.0
  %v107 = vld [vmem:[%s0] sm:$0xff]
  %v108 = vld [vmem:[%s0 + $0x8] sm:$0xff]
  %v109 = vld [vmem:[%s0 + $0x10] sm:$0xf]
  %v110 = vld [vmem:[%s0 + $0x18] sm:$0xf]
  %115 = vrot.lane.b32.xlu0 %v107, 11
  %v116 = vpop.permute.xlu0 %115
  %117 = vrot.lane.b32.xlu0 %v108, 11
  %v118 = vpop.permute.xlu0 %117
  %119 = vrot.lane.b32.xlu0 %v109, 11
  %v120 = vpop.permute.xlu0 %119
  %121 = vrot.lane.b32.xlu0 %v110, 11
  %v122 = vpop.permute.xlu0 %121
  %v123 = vsel %vm69, %v116, %v118
  %v124 = vsel %vm69, %v120, %v122
  %vm129 = vcmask 1047640
  %130 = vst.msk [vmem:[#allocation2] sm:$0xff] %vm129, %v116
  %vm131 = vcmask 588800
  %132 = vst.msk [vmem:[#allocation2 + $0x8] sm:$0xff] %vm131, %v123
  %vm133 = vcmask 1043544
  %134 = vst.msk [vmem:[#allocation2 + $0x10] sm:$0xf] %vm133, %v120
  %vm135 = vcmask 584704
  %136 = vst.msk [vmem:[#allocation2 + $0x18] sm:$0xf] %vm135, %v124
  %vm137 = vcmask 1043456
  %v138 = vrot.slane %v107, 4
  %v139 = vrot.slane %v108, 4
  %v140 = vrot.slane %v109, 4
  %v141 = vsel %vm137, %v138, %v140
  %v142 = vrot.slane %v110, 4
  %v143 = vsel %vm137, %v139, %v142
  %144 = vrot.lane.b32.xlu0 %v138, 10
  %v145 = vpop.permute.xlu0 %144
  %146 = vrot.lane.b32.xlu0 %v139, 10
  %v147 = vpop.permute.xlu0 %146
  %148 = vrot.lane.b32.xlu0 %v141, 10
  %v149 = vpop.permute.xlu0 %148
  %150 = vrot.lane.b32.xlu0 %v143, 10
  %v151 = vpop.permute.xlu0 %150
  %vm152 = vcmask 80896
  %v153 = vsel %vm152, %v145, %v147
  %v154 = vsel %vm152, %v149, %v151
  %vm159 = vcmask 1047636
  %160 = vst.msk [vmem:[#allocation2 + $0x10] sm:$0xf0] %vm159, %v145
  %vm161 = vcmask 588804
  %162 = vst.msk [vmem:[#allocation2 + $0x18] sm:$0xf0] %vm161, %v153
  %vm163 = vcmask 1047632
  %164 = vst.msk [vmem:[#allocation2 + $0x20] sm:$0xff] %vm163, %v149
  %165 = vst.msk [vmem:[#allocation2 + $0x28] sm:$0xff] %vm131, %v154
  %166 = vrot.lane.b32.xlu0 %v107, 9
  %v167 = vpop.permute.xlu0 %166
  %168 = vrot.lane.b32.xlu0 %v108, 9
  %v169 = vpop.permute.xlu0 %168
  %170 = vrot.lane.b32.xlu0 %v109, 9
  %v171 = vpop.permute.xlu0 %170
  %172 = vrot.lane.b32.xlu0 %v110, 9
  %v173 = vpop.permute.xlu0 %172
  %vm174 = vcmask 72704
  %v175 = vsel %vm174, %v167, %v169
  %v176 = vsel %vm174, %v171, %v173
  %vm181 = vcmask 1047624
  %182 = vst.msk [vmem:[#allocation2 + $0x30] sm:$0xff] %vm181, %v167
  %183 = vst.msk [vmem:[#allocation2 + $0x38] sm:$0xff] %vm131, %v175
  %vm184 = vcmask 1043528
  %185 = vst.msk [vmem:[#allocation2 + $0x40] sm:$0xf] %vm184, %v171
  %186 = vst.msk [vmem:[#allocation2 + $0x48] sm:$0xf] %vm135, %v176
  %187 = vrot.lane.b32.xlu0 %v138, 1
  %v188 = vpop.permute.xlu0 %187
  %189 = vrot.lane.b32.xlu0 %v139, 1
  %v190 = vpop.permute.xlu0 %189
  %191 = vrot.lane.b32.xlu0 %v141, 1
  %v192 = vpop.permute.xlu0 %191
  %193 = vrot.lane.b32.xlu0 %v143, 1
  %v194 = vpop.permute.xlu0 %193
  %vm195 = vcmask 7168
  %v196 = vsel %vm195, %v188, %v190
  %v197 = vsel %vm195, %v192, %v194
  %vm202 = vcmask 1047564
  %203 = vst.msk [vmem:[#allocation2 + $0x40] sm:$0xf0] %vm202, %v188
  %204 = vst.msk [vmem:[#allocation2 + $0x48] sm:$0xf0] %vm161, %v196
  %vm205 = vcmask 1047560
  %206 = vst.msk [vmem:[#allocation2 + $0x50] sm:$0xff] %vm205, %v192
  %207 = vst.msk [vmem:[#allocation2 + $0x58] sm:$0xff] %vm131, %v197
  %208 = vst [vmem:[#allocation2 + $0x60] sm:$0xff] %v107
  %209 = vst.msk [vmem:[#allocation2 + $0x68] sm:$0xff] %vm131, %v108
  %210 = vst [vmem:[#allocation2 + $0x70] sm:$0xf] %v109
  %211 = vst.msk [vmem:[#allocation2 + $0x78] sm:$0xf] %vm135, %v110
  %212 = vrot.lane.b32.xlu0 %v138, 127
  %v213 = vpop.permute.xlu0 %212
  %214 = vrot.lane.b32.xlu0 %v139, 127
  %v215 = vpop.permute.xlu0 %214
  %216 = vrot.lane.b32.xlu0 %v141, 127
  %v217 = vpop.permute.xlu0 %216
  %218 = vrot.lane.b32.xlu0 %v143, 127
  %v219 = vpop.permute.xlu0 %218
  %vm220 = vcmask 1039360
  %v221 = vsel %vm220, %v213, %v215
  %v222 = vsel %vm220, %v217, %v219
  %227 = vst [vmem:[#allocation2 + $0x70] sm:$0xf0] %v221
  %vm228 = vcmask 580612
  %229 = vst.msk [vmem:[#allocation2 + $0x78] sm:$0xf0] %vm228, %v215
  %230 = vst [vmem:[#allocation2 + $0x80] sm:$0xff] %v222
  %vm231 = vcmask 580608
  %232 = vst.msk [vmem:[#allocation2 + $0x88] sm:$0xff] %vm231, %v219
  %233 = vrot.lane.b32.xlu0 %v107, 119
  %v234 = vpop.permute.xlu0 %233
  %235 = vrot.lane.b32.xlu0 %v108, 119
  %v236 = vpop.permute.xlu0 %235
  %237 = vrot.lane.b32.xlu0 %v109, 119
  %v238 = vpop.permute.xlu0 %237
  %239 = vrot.lane.b32.xlu0 %v110, 119
  %v240 = vpop.permute.xlu0 %239
  %vm241 = vcmask 973824
  %v242 = vsel %vm241, %v234, %v236
  %v243 = vsel %vm241, %v238, %v240
  %248 = vst [vmem:[#allocation2 + $0x90] sm:$0xff] %v242
  %vm249 = vcmask 515072
  %250 = vst.msk [vmem:[#allocation2 + $0x98] sm:$0xff] %vm249, %v236
  %251 = vst [vmem:[#allocation2 + $0xa0] sm:$0xf] %v243
  %vm252 = vcmask 510976
  %253 = vst.msk [vmem:[#allocation2 + $0xa8] sm:$0xf] %vm252, %v240
  %254 = vrot.lane.b32.xlu0 %v138, 118
  %v255 = vpop.permute.xlu0 %254
  %256 = vrot.lane.b32.xlu0 %v139, 118
  %v257 = vpop.permute.xlu0 %256
  %258 = vrot.lane.b32.xlu0 %v141, 118
  %v259 = vpop.permute.xlu0 %258
  %260 = vrot.lane.b32.xlu0 %v143, 118
  %v261 = vpop.permute.xlu0 %260
  %vm262 = vcmask 965632
  %v263 = vsel %vm262, %v255, %v257
  %v264 = vsel %vm262, %v259, %v261
  %269 = vst [vmem:[#allocation2 + $0xa0] sm:$0xf0] %v263
  %vm270 = vcmask 506884
  %271 = vst.msk [vmem:[#allocation2 + $0xa8] sm:$0xf0] %vm270, %v257
  %272 = vst [vmem:[#allocation2 + $0xb0] sm:$0xff] %v264
  %vm273 = vcmask 506880
  %274 = vst.msk [vmem:[#allocation2 + $0xb8] sm:$0xff] %vm273, %v261
  %275 = vrot.lane.b32.xlu0 %v107, 117
  %v276 = vpop.permute.xlu0 %275
  %277 = vrot.lane.b32.xlu0 %v108, 117
  %v278 = vpop.permute.xlu0 %277
  %279 = vrot.lane.b32.xlu0 %v109, 117
  %v280 = vpop.permute.xlu0 %279
  %281 = vrot.lane.b32.xlu0 %v110, 117
  %v282 = vpop.permute.xlu0 %281
  %vm283 = vcmask 957440
  %v284 = vsel %vm283, %v276, %v278
  %v285 = vsel %vm283, %v280, %v282
  %290 = vst [vmem:[#allocation2 + $0xc0] sm:$0xff] %v284
  %vm291 = vcmask 498688
  %292 = vst.msk [vmem:[#allocation2 + $0xc8] sm:$0xff] %vm291, %v278
  %293 = vst [vmem:[#allocation2 + $0xd0] sm:$0xf] %v285
  %vm294 = vcmask 494592
  %295 = vst.msk [vmem:[#allocation2 + $0xd8] sm:$0xf] %vm294, %v282
  %v296 = vld [vmem:[#allocation2] sm:$0xff]
  %v297 = vld [vmem:[#allocation2 + $0x8] sm:$0xff]
  %v298 = vld [vmem:[#allocation2 + $0x10] sm:$0xff]
  %v299 = vld [vmem:[#allocation2 + $0x18] sm:$0xff]
  %v300 = vld [vmem:[#allocation2 + $0x20] sm:$0xff]
  %v301 = vld [vmem:[#allocation2 + $0x28] sm:$0xff]
  %v302 = vld [vmem:[#allocation2 + $0x30] sm:$0xff]
  %v303 = vld [vmem:[#allocation2 + $0x38] sm:$0xff]
  %v304 = vld [vmem:[#allocation2 + $0x40] sm:$0xff]
  %v305 = vld [vmem:[#allocation2 + $0x48] sm:$0xff]
  %v306 = vld [vmem:[#allocation2 + $0x50] sm:$0xff]
  %v307 = vld [vmem:[#allocation2 + $0x58] sm:$0xff]
  %v308 = vld [vmem:[#allocation2 + $0x60] sm:$0xff]
  %v309 = vld [vmem:[#allocation2 + $0x68] sm:$0xff]
  %v310 = vld [vmem:[#allocation2 + $0x70] sm:$0xff]
  %v311 = vld [vmem:[#allocation2 + $0x78] sm:$0xff]
  %v312 = vld [vmem:[#allocation2 + $0x80] sm:$0xff]
  %v313 = vld [vmem:[#allocation2 + $0x88] sm:$0xff]
  %v314 = vld [vmem:[#allocation2 + $0x90] sm:$0xff]
  %v315 = vld [vmem:[#allocation2 + $0x98] sm:$0xff]
  %v316 = vld [vmem:[#allocation2 + $0xa0] sm:$0xff]
  %v317 = vld [vmem:[#allocation2 + $0xa8] sm:$0xff]
  %v318 = vld [vmem:[#allocation2 + $0xb0] sm:$0xff]
  %v319 = vld [vmem:[#allocation2 + $0xb8] sm:$0xff]
  %v320 = vld [vmem:[#allocation2 + $0xc0] sm:$0xff]
  %v321 = vld [vmem:[#allocation2 + $0xc8] sm:$0xff]
  %v322 = vld [vmem:[#allocation2 + $0xd0] sm:$0xf]
  %v323 = vld [vmem:[#allocation2 + $0xd8] sm:$0xf]
  %v324 = vpack.c.bf16 %v298, %v296
  %v325 = vpack.c.bf16 %v299, %v297
  %v326 = vpack.c.bf16 %v302, %v300
  %v327 = vpack.c.bf16 %v303, %v301
  %v328 = vpack.c.bf16 %v306, %v304
  %v329 = vpack.c.bf16 %v307, %v305
  %v330 = vpack.c.bf16 %v310, %v308
  %v331 = vpack.c.bf16 %v311, %v309
  %v332 = vpack.c.bf16 %v314, %v312
  %v333 = vpack.c.bf16 %v315, %v313
  %v334 = vpack.c.bf16 %v318, %v316
  %v335 = vpack.c.bf16 %v319, %v317
  %v336 = vpack.c.bf16 %v322, %v320
  %v337 = vpack.c.bf16 %v323, %v321
  %v338 = vld [vmem:[%s2] sm:$0xf]
  %v339 = vld [vmem:[%s2 + $0x4] sm:$0xf]
  %v342 = vunpack.c.l.b16 %v338
  %v343 = vunpack.c.l.b16 %v339
  %v344 = vpack.c.b16 %v343, %v342
  %vm345 = vcmask 883712
  %v347 = vsel %vm345, %v344, 0
  %vm349 = vcmask 1045504
  %v351 = vsel %vm349, %v336, 0
  %v354 = vsel %vm349, %v337, 0
  %356 = vmatpush.bf16.msra.mxu0 0
  %357 = vmatpush.bf16.msra.mxu0 %v351
  %358 = vmatpush.bf16.msra.mxu0 %v334
  %359 = vmatpush.bf16.msra.mxu0 %v332
  %360 = vmatpush.bf16.msra.mxu0 %v330
  %361 = vmatpush.bf16.msra.mxu0 %v328
  %362 = vmatpush.bf16.msra.mxu0 %v326
  %363 = vmatpush.bf16.msra.mxu0 %v324
  %364 = vmatmul.bf16.gmra.mxu0 %v347
  %v365 = vpop.f32.mrf.mxu0
  %v366 = vadd.f32 0.0, %v365
  %v367 = vpop.f32.mrf.mxu0
  %v368 = vadd.f32 0.0, %v367
  %369 = vdwg.mxu0
  %370 = vmatpush.bf16.msra.mxu0 0
  %371 = vmatpush.bf16.msra.mxu0 %v354
  %372 = vmatpush.bf16.msra.mxu0 %v335
  %373 = vmatpush.bf16.msra.mxu0 %v333
  %374 = vmatpush.bf16.msra.mxu0 %v331
  %375 = vmatpush.bf16.msra.mxu0 %v329
  %376 = vmatpush.bf16.msra.mxu0 %v327
  %377 = vmatpush.bf16.msra.mxu0 %v325
  %378 = vmatmul.bf16.gmra.mxu0 %v347
  %v379 = vpop.f32.mrf.mxu0
  %v380 = vadd.f32 0.0, %v379
  %v381 = vpop.f32.mrf.mxu0
  %v382 = vadd.f32 0.0, %v381
  %383 = vdwg.mxu0
  %v385 = vperm.slane %v68, 0
  %v386 = vperm.slane %v68, 1
  %v389 = vmul.f32 %v366, %v385
  %v390 = vmul.f32 %v380, %v386
  %v391 = vmul.f32 %v368, %v385
  %v392 = vmul.f32 %v382, %v386
  %v393 = vsel %vm131, %v390, 0.0
  %v394 = vadd.f32 %v389, %v393
  %395 = vadd.xlane.f32.xlu0 %v394
  %v396 = vpop.xlane.xlu0 %395
  %v397 = vsel %vm131, %v392, 0.0
  %v398 = vadd.f32 %v391, %v397
  %399 = vadd.xlane.f32.xlu0 %v398
  %v400 = vpop.xlane.xlu0 %399
  %v401 = vmul.f32 %v396, 0.0078125
  %v402 = vmul.f32 %v400, 0.0078125
  %v403 = vsub.f32 %v366, %v401
  %v404 = vsub.f32 %v380, %v401
  %v405 = vsub.f32 %v368, %v402
  %v406 = vsub.f32 %v382, %v402
  %v407 = vmul.f32 %v403, %v385
  %v408 = vmul.f32 %v404, %v386
  %v409 = vmul.f32 %v405, %v385
  %v410 = vmul.f32 %v406, %v386
  %v411 = vmul.f32 %v407, %v407
  %v412 = vmul.f32 %v408, %v408
  %v413 = vmul.f32 %v409, %v409
  %v414 = vmul.f32 %v410, %v410
  %v415 = vsel %vm131, %v412, 0.0
  %v416 = vadd.f32 %v411, %v415
  %417 = vadd.xlane.f32.xlu0 %v416
  %v418 = vpop.xlane.xlu0 %417
  %v419 = vsel %vm131, %v414, 0.0
  %v420 = vadd.f32 %v413, %v419
  %421 = vadd.xlane.f32.xlu0 %v420
  %v422 = vpop.xlane.xlu0 %421
  %v423 = vmul.f32 %v418, 0.0078125
  %v424 = vmul.f32 %v422, 0.0078125
  %v425 = vld [vmem:[%s3] sm:$0xff]
  %v426 = vld [vmem:[%s3 + $0x8] sm:$0xff]
  %v427 = vadd.f32 %v423, 1e-05
  %v428 = vadd.f32 %v424, 1e-05
  %v429 = vrsqrt.pop %v427
  %v430 = vmul.f32 %v429, %v427
  %v431 = vmul.f32 %v430, %v429
  %v432 = vmul.f32 0.5, %v431
  %v433 = vsub.f32 1.5, %v432
  %v434 = vmul.f32 %v429, %v433
  %vm435 = vweird.f32 %v427
  %vm436 = vweird.f32 %v429
  %vm437 = vmor %vm435, %vm436
  %v438 = vsel %vm437, %v429, %v434
  %v439 = vrsqrt.pop %v428
  %v440 = vmul.f32 %v439, %v428
  %v441 = vmul.f32 %v440, %v439
  %v442 = vmul.f32 0.5, %v441
  %v443 = vsub.f32 1.5, %v442
  %v444 = vmul.f32 %v439, %v443
  %vm445 = vweird.f32 %v428
  %vm446 = vweird.f32 %v439
  %vm447 = vmor %vm445, %vm446
  %v448 = vsel %vm447, %v439, %v444
  %v449 = vmul.f32 %v425, %v438
  %v450 = vmul.f32 %v426, %v448
  %v451 = vld [vmem:[%s4] sm:$0xff]
  %v452 = vld [vmem:[%s4 + $0x8] sm:$0xff]
  %v453 = vmul.f32 %v401, %v449
  %v454 = vmul.f32 %v402, %v450
  %v455 = vsub.f32 %v451, %v453
  %v456 = vsub.f32 %v452, %v454
  %458 = vset.pattern.permute.xlu0 0
  %459 = vperm.xlu0 %458, %v449
  %v460 = vpop.permute.xlu0 %459
  %463 = vset.pattern.permute.xlu0 0
  %464 = vperm.xlu0 %463, %v450
  %v465 = vpop.permute.xlu0 %464
  %v467 = vmul.f32 %v366, %v460
  %v468 = vmul.f32 %v380, %v460
  %v469 = vmul.f32 %v368, %v465
  %v470 = vmul.f32 %v382, %v465
  %472 = vset.pattern.permute.xlu0 0
  %473 = vperm.xlu0 %472, %v455
  %v474 = vpop.permute.xlu0 %473
  %477 = vset.pattern.permute.xlu0 0
  %478 = vperm.xlu0 %477, %v456
  %v479 = vpop.permute.xlu0 %478
  %v481 = vadd.f32 %v467, %v474
  %v482 = vadd.f32 %v468, %v474
  %v483 = vadd.f32 %v469, %v479
  %v484 = vadd.f32 %v470, %v479
  %vm485 = vcmp.ge.f32.partialorder %v481, 0.0
  %vm486 = vcmp.ge.f32.partialorder %v482, 0.0
  %vm487 = vcmp.ge.f32.partialorder %v483, 0.0
  %vm488 = vcmp.ge.f32.partialorder %v484, 0.0
  %v489 = vmul.f32 %v481, 0.01
  %v490 = vmul.f32 %v482, 0.01
  %v491 = vmul.f32 %v483, 0.01
  %v492 = vmul.f32 %v484, 0.01
  %v493 = vsel %vm485, %v481, %v489
  %v494 = vsel %vm486, %v482, %v490
  %v495 = vsel %vm487, %v483, %v491
  %v496 = vsel %vm488, %v484, %v492
  %v497 = vmul.f32 %v493, %v385
  %v498 = vmul.f32 %v494, %v386
  %v499 = vmul.f32 %v495, %v385
  %v500 = vmul.f32 %v496, %v386
  %v501 = vld [vmem:[%s5] sm:$0xf]
  %v502 = vld [vmem:[%s5 + $0x4] sm:$0xf]
  %v503 = vpack.c.bf16 %v109, %v107
  %v504 = vpack.c.bf16 %v110, %v108
  %v505 = vpack.c.bf16 %v499, %v497
  %v506 = vpack.c.bf16 %v500, %v498
  %v509 = vunpack.c.l.b16 %v501
  %v510 = vunpack.c.l.b16 %v502
  %v511 = vpack.c.b16 %v510, %v509
  %512 = vrot.lane.b32.xlu0 %v511, 116
  %v513 = vpop.permute.xlu0 %512
  %vm514 = vcmask 130048
  %v516 = vsel %vm514, %v513, 0
  %518 = vmatpush.bf16.msra.mxu0 0
  %519 = vmatpush.bf16.msra.mxu0 0
  %520 = vmatpush.bf16.msra.mxu0 0
  %521 = vmatpush.bf16.msra.mxu0 0
  %522 = vmatpush.bf16.msra.mxu0 0
  %523 = vmatpush.bf16.msra.mxu0 0
  %524 = vmatpush.bf16.msra.mxu0 0
  %525 = vmatpush.bf16.msra.mxu0 %v505
  %526 = vmatmul.bf16.gmra.mxu0 %v516
  %v527 = vpop.f32.mrf.mxu0
  %v528 = vadd.f32 0.0, %v527
  %v529 = vpop.f32.mrf.mxu0
  %v530 = vadd.f32 0.0, %v529
  %531 = vdwg.mxu0
  %532 = vmatpush.bf16.msra.mxu0 0
  %533 = vmatpush.bf16.msra.mxu0 0
  %534 = vmatpush.bf16.msra.mxu0 0
  %535 = vmatpush.bf16.msra.mxu0 0
  %536 = vmatpush.bf16.msra.mxu0 0
  %537 = vmatpush.bf16.msra.mxu0 0
  %538 = vmatpush.bf16.msra.mxu0 0
  %539 = vmatpush.bf16.msra.mxu0 %v506
  %540 = vmatmul.bf16.gmra.mxu0 %v516
  %v541 = vpop.f32.mrf.mxu0
  %v542 = vadd.f32 0.0, %v541
  %v543 = vpop.f32.mrf.mxu0
  %v544 = vadd.f32 0.0, %v543
  %545 = vdwg.mxu0
  %vm546 = vcmask 97280
  %v548 = vsel %vm546, %v511, 0
  %v551 = vsel %vm349, %v503, 0
  %v554 = vsel %vm349, %v504, 0
  %556 = vmatpush.bf16.msra.mxu0 0
  %557 = vmatpush.bf16.msra.mxu0 0
  %558 = vmatpush.bf16.msra.mxu0 0
  %559 = vmatpush.bf16.msra.mxu0 0
  %560 = vmatpush.bf16.msra.mxu0 0
  %561 = vmatpush.bf16.msra.mxu0 0
  %562 = vmatpush.bf16.msra.mxu0 0
  %563 = vmatpush.bf16.msra.mxu0 %v551
  %564 = vmatmul.bf16.gmra.mxu0 %v548
  %v565 = vpop.f32.mrf.mxu0
  %v566 = vadd.f32 %v528, %v565
  %v567 = vpop.f32.mrf.mxu0
  %v568 = vadd.f32 %v530, %v567
  %569 = vdwg.mxu0
  %570 = vmatpush.bf16.msra.mxu0 0
  %571 = vmatpush.bf16.msra.mxu0 0
  %572 = vmatpush.bf16.msra.mxu0 0
  %573 = vmatpush.bf16.msra.mxu0 0
  %574 = vmatpush.bf16.msra.mxu0 0
  %575 = vmatpush.bf16.msra.mxu0 0
  %576 = vmatpush.bf16.msra.mxu0 0
  %577 = vmatpush.bf16.msra.mxu0 %v554
  %578 = vmatmul.bf16.gmra.mxu0 %v548
  %v579 = vpop.f32.mrf.mxu0
  %v580 = vadd.f32 %v542, %v579
  %v581 = vpop.f32.mrf.mxu0
  %v582 = vadd.f32 %v544, %v581
  %583 = vdwg.mxu0
  %v584 = vmul.f32 %v566, %v385
  %v585 = vmul.f32 %v580, %v386
  %v586 = vmul.f32 %v568, %v385
  %v587 = vmul.f32 %v582, %v386
  %v588 = vsel %vm131, %v585, 0.0
  %v589 = vadd.f32 %v584, %v588
  %590 = vadd.xlane.f32.xlu0 %v589
  %v591 = vpop.xlane.xlu0 %590
  %v592 = vsel %vm131, %v587, 0.0
  %v593 = vadd.f32 %v586, %v592
  %594 = vadd.xlane.f32.xlu0 %v593
  %v595 = vpop.xlane.xlu0 %594
  %v596 = vmul.f32 %v591, 0.0078125
  %v597 = vmul.f32 %v595, 0.0078125
  %v598 = vsub.f32 %v566, %v596
  %v599 = vsub.f32 %v580, %v596
  %v600 = vsub.f32 %v568, %v597
  %v601 = vsub.f32 %v582, %v597
  %v602 = vmul.f32 %v598, %v385
  %v603 = vmul.f32 %v599, %v386
  %v604 = vmul.f32 %v600, %v385
  %v605 = vmul.f32 %v601, %v386
  %v606 = vmul.f32 %v602, %v602
  %v607 = vmul.f32 %v603, %v603
  %v608 = vmul.f32 %v604, %v604
  %v609 = vmul.f32 %v605, %v605
  %v610 = vsel %vm131, %v607, 0.0
  %v611 = vadd.f32 %v606, %v610
  %612 = vadd.xlane.f32.xlu0 %v611
  %v613 = vpop.xlane.xlu0 %612
  %v614 = vsel %vm131, %v609, 0.0
  %v615 = vadd.f32 %v608, %v614
  %616 = vadd.xlane.f32.xlu0 %v615
  %v617 = vpop.xlane.xlu0 %616
  %v618 = vmul.f32 %v613, 0.0078125
  %v619 = vmul.f32 %v617, 0.0078125
  %v620 = vld [vmem:[%s6] sm:$0xff]
  %v621 = vld [vmem:[%s6 + $0x8] sm:$0xff]
  %v622 = vadd.f32 %v618, 1e-05
  %v623 = vadd.f32 %v619, 1e-05
  %v624 = vrsqrt.pop %v622
  %v625 = vmul.f32 %v624, %v622
  %v626 = vmul.f32 %v625, %v624
  %v627 = vmul.f32 0.5, %v626
  %v628 = vsub.f32 1.5, %v627
  %v629 = vmul.f32 %v624, %v628
  %vm630 = vweird.f32 %v622
  %vm631 = vweird.f32 %v624
  %vm632 = vmor %vm630, %vm631
  %v633 = vsel %vm632, %v624, %v629
  %v634 = vrsqrt.pop %v623
  %v635 = vmul.f32 %v634, %v623
  %v636 = vmul.f32 %v635, %v634
  %v637 = vmul.f32 0.5, %v636
  %v638 = vsub.f32 1.5, %v637
  %v639 = vmul.f32 %v634, %v638
  %vm640 = vweird.f32 %v623
  %vm641 = vweird.f32 %v634
  %vm642 = vmor %vm640, %vm641
  %v643 = vsel %vm642, %v634, %v639
  %v644 = vmul.f32 %v620, %v633
  %v645 = vmul.f32 %v621, %v643
  %v646 = vld [vmem:[%s7] sm:$0xff]
  %v647 = vld [vmem:[%s7 + $0x8] sm:$0xff]
  %v648 = vmul.f32 %v596, %v644
  %v649 = vmul.f32 %v597, %v645
  %v650 = vsub.f32 %v646, %v648
  %v651 = vsub.f32 %v647, %v649
  %653 = vset.pattern.permute.xlu0 0
  %654 = vperm.xlu0 %653, %v644
  %v655 = vpop.permute.xlu0 %654
  %658 = vset.pattern.permute.xlu0 0
  %659 = vperm.xlu0 %658, %v645
  %v660 = vpop.permute.xlu0 %659
  %v662 = vmul.f32 %v566, %v655
  %v663 = vmul.f32 %v580, %v655
  %v664 = vmul.f32 %v568, %v660
  %v665 = vmul.f32 %v582, %v660
  %667 = vset.pattern.permute.xlu0 0
  %668 = vperm.xlu0 %667, %v650
  %v669 = vpop.permute.xlu0 %668
  %672 = vset.pattern.permute.xlu0 0
  %673 = vperm.xlu0 %672, %v651
  %v674 = vpop.permute.xlu0 %673
  %v676 = vadd.f32 %v662, %v669
  %v677 = vadd.f32 %v663, %v669
  %v678 = vadd.f32 %v664, %v674
  %v679 = vadd.f32 %v665, %v674
  %vm680 = vcmp.ge.f32.partialorder %v676, 0.0
  %vm681 = vcmp.ge.f32.partialorder %v677, 0.0
  %vm682 = vcmp.ge.f32.partialorder %v678, 0.0
  %vm683 = vcmp.ge.f32.partialorder %v679, 0.0
  %v684 = vmul.f32 %v676, 0.01
  %v685 = vmul.f32 %v677, 0.01
  %v686 = vmul.f32 %v678, 0.01
  %v687 = vmul.f32 %v679, 0.01
  %v688 = vsel %vm680, %v676, %v684
  %v689 = vsel %vm681, %v677, %v685
  %v690 = vsel %vm682, %v678, %v686
  %v691 = vsel %vm683, %v679, %v687
  %v692 = vmul.f32 %v688, %v385
  %v693 = vmul.f32 %v689, %v386
  %v694 = vmul.f32 %v690, %v385
  %v695 = vmul.f32 %v691, %v386
  %700 = vrot.lane.b32.xlu0 %v692, 11
  %v701 = vpop.permute.xlu0 %700
  %702 = vrot.lane.b32.xlu0 %v693, 11
  %v703 = vpop.permute.xlu0 %702
  %704 = vrot.lane.b32.xlu0 %v694, 11
  %v705 = vpop.permute.xlu0 %704
  %706 = vrot.lane.b32.xlu0 %v695, 11
  %v707 = vpop.permute.xlu0 %706
  %v708 = vsel %vm69, %v701, %v703
  %v709 = vsel %vm69, %v705, %v707
  %714 = vst.msk [vmem:[#allocation2] sm:$0xff] %vm129, %v701
  %715 = vst.msk [vmem:[#allocation2 + $0x8] sm:$0xff] %vm131, %v708
  %716 = vst.msk [vmem:[#allocation2 + $0x10] sm:$0xff] %vm129, %v705
  %717 = vst.msk [vmem:[#allocation2 + $0x18] sm:$0xff] %vm131, %v709
  %718 = vrot.lane.b32.xlu0 %v692, 10
  %v719 = vpop.permute.xlu0 %718
  %720 = vrot.lane.b32.xlu0 %v693, 10
  %v721 = vpop.permute.xlu0 %720
  %722 = vrot.lane.b32.xlu0 %v694, 10
  %v723 = vpop.permute.xlu0 %722
  %724 = vrot.lane.b32.xlu0 %v695, 10
  %v725 = vpop.permute.xlu0 %724
  %v726 = vsel %vm152, %v719, %v721
  %v727 = vsel %vm152, %v723, %v725
  %732 = vst.msk [vmem:[#allocation2 + $0x20] sm:$0xff] %vm163, %v719
  %733 = vst.msk [vmem:[#allocation2 + $0x28] sm:$0xff] %vm131, %v726
  %734 = vst.msk [vmem:[#allocation2 + $0x30] sm:$0xff] %vm163, %v723
  %735 = vst.msk [vmem:[#allocation2 + $0x38] sm:$0xff] %vm131, %v727
  %736 = vrot.lane.b32.xlu0 %v692, 9
  %v737 = vpop.permute.xlu0 %736
  %738 = vrot.lane.b32.xlu0 %v693, 9
  %v739 = vpop.permute.xlu0 %738
  %740 = vrot.lane.b32.xlu0 %v694, 9
  %v741 = vpop.permute.xlu0 %740
  %742 = vrot.lane.b32.xlu0 %v695, 9
  %v743 = vpop.permute.xlu0 %742
  %v744 = vsel %vm174, %v737, %v739
  %v745 = vsel %vm174, %v741, %v743
  %750 = vst.msk [vmem:[#allocation2 + $0x40] sm:$0xff] %vm181, %v737
  %751 = vst.msk [vmem:[#allocation2 + $0x48] sm:$0xff] %vm131, %v744
  %752 = vst.msk [vmem:[#allocation2 + $0x50] sm:$0xff] %vm181, %v741
  %753 = vst.msk [vmem:[#allocation2 + $0x58] sm:$0xff] %vm131, %v745
  %754 = vrot.lane.b32.xlu0 %v692, 1
  %v755 = vpop.permute.xlu0 %754
  %756 = vrot.lane.b32.xlu0 %v693, 1
  %v757 = vpop.permute.xlu0 %756
  %758 = vrot.lane.b32.xlu0 %v694, 1
  %v759 = vpop.permute.xlu0 %758
  %760 = vrot.lane.b32.xlu0 %v695, 1
  %v761 = vpop.permute.xlu0 %760
  %v762 = vsel %vm195, %v755, %v757
  %v763 = vsel %vm195, %v759, %v761
  %768 = vst.msk [vmem:[#allocation2 + $0x60] sm:$0xff] %vm205, %v755
  %769 = vst.msk [vmem:[#allocation2 + $0x68] sm:$0xff] %vm131, %v762
  %770 = vst.msk [vmem:[#allocation2 + $0x70] sm:$0xff] %vm205, %v759
  %771 = vst.msk [vmem:[#allocation2 + $0x78] sm:$0xff] %vm131, %v763
  %772 = vst [vmem:[#allocation2 + $0x80] sm:$0xff] %v692
  %773 = vst.msk [vmem:[#allocation2 + $0x88] sm:$0xff] %vm131, %v693
  %774 = vst [vmem:[#allocation2 + $0x90] sm:$0xff] %v694
  %775 = vst.msk [vmem:[#allocation2 + $0x98] sm:$0xff] %vm131, %v695
  %776 = vrot.lane.b32.xlu0 %v692, 127
  %v777 = vpop.permute.xlu0 %776
  %778 = vrot.lane.b32.xlu0 %v693, 127
  %v779 = vpop.permute.xlu0 %778
  %780 = vrot.lane.b32.xlu0 %v694, 127
  %v781 = vpop.permute.xlu0 %780
  %782 = vrot.lane.b32.xlu0 %v695, 127
  %v783 = vpop.permute.xlu0 %782
  %v784 = vsel %vm220, %v777, %v779
  %v785 = vsel %vm220, %v781, %v783
  %790 = vst [vmem:[#allocation2 + $0xa0] sm:$0xff] %v784
  %791 = vst.msk [vmem:[#allocation2 + $0xa8] sm:$0xff] %vm231, %v779
  %792 = vst [vmem:[#allocation2 + $0xb0] sm:$0xff] %v785
  %793 = vst.msk [vmem:[#allocation2 + $0xb8] sm:$0xff] %vm231, %v783
  %794 = vrot.lane.b32.xlu0 %v692, 119
  %v795 = vpop.permute.xlu0 %794
  %796 = vrot.lane.b32.xlu0 %v693, 119
  %v797 = vpop.permute.xlu0 %796
  %798 = vrot.lane.b32.xlu0 %v694, 119
  %v799 = vpop.permute.xlu0 %798
  %800 = vrot.lane.b32.xlu0 %v695, 119
  %v801 = vpop.permute.xlu0 %800
  %v802 = vsel %vm241, %v795, %v797
  %v803 = vsel %vm241, %v799, %v801
  %808 = vst [vmem:[#allocation2 + $0xc0] sm:$0xff] %v802
  %809 = vst.msk [vmem:[#allocation2 + $0xc8] sm:$0xff] %vm249, %v797
  %810 = vst [vmem:[#allocation2 + $0xd0] sm:$0xff] %v803
  %811 = vst.msk [vmem:[#allocation2 + $0xd8] sm:$0xff] %vm249, %v801
  %812 = vrot.lane.b32.xlu0 %v692, 118
  %v813 = vpop.permute.xlu0 %812
  %814 = vrot.lane.b32.xlu0 %v693, 118
  %v815 = vpop.permute.xlu0 %814
  %816 = vrot.lane.b32.xlu0 %v694, 118
  %v817 = vpop.permute.xlu0 %816
  %818 = vrot.lane.b32.xlu0 %v695, 118
  %v819 = vpop.permute.xlu0 %818
  %v820 = vsel %vm262, %v813, %v815
  %v821 = vsel %vm262, %v817, %v819
  %826 = vst [vmem:[#allocation2 + $0xe0] sm:$0xff] %v820
  %827 = vst.msk [vmem:[#allocation2 + $0xe8] sm:$0xff] %vm273, %v815
  %828 = vst [vmem:[#allocation2 + $0xf0] sm:$0xff] %v821
  %829 = vst.msk [vmem:[#allocation2 + $0xf8] sm:$0xff] %vm273, %v819
  %830 = vrot.lane.b32.xlu0 %v692, 117
  %v831 = vpop.permute.xlu0 %830
  %832 = vrot.lane.b32.xlu0 %v693, 117
  %v833 = vpop.permute.xlu0 %832
  %834 = vrot.lane.b32.xlu0 %v694, 117
  %v835 = vpop.permute.xlu0 %834
  %836 = vrot.lane.b32.xlu0 %v695, 117
  %v837 = vpop.permute.xlu0 %836
  %v838 = vsel %vm283, %v831, %v833
  %v839 = vsel %vm283, %v835, %v837
  %844 = vst [vmem:[#allocation2 + $0x100] sm:$0xff] %v838
  %845 = vst.msk [vmem:[#allocation2 + $0x108] sm:$0xff] %vm291, %v833
  %846 = vst [vmem:[#allocation2 + $0x110] sm:$0xff] %v839
  %847 = vst.msk [vmem:[#allocation2 + $0x118] sm:$0xff] %vm291, %v837
  %v848 = vld [vmem:[#allocation2] sm:$0xff]
  %v849 = vld [vmem:[#allocation2 + $0x8] sm:$0xff]
  %v850 = vld [vmem:[#allocation2 + $0x10] sm:$0xff]
  %v851 = vld [vmem:[#allocation2 + $0x18] sm:$0xff]
  %v852 = vld [vmem:[#allocation2 + $0x20] sm:$0xff]
  %v853 = vld [vmem:[#allocation2 + $0x28] sm:$0xff]
  %v854 = vld [vmem:[#allocation2 + $0x30] sm:$0xff]
  %v855 = vld [vmem:[#allocation2 + $0x38] sm:$0xff]
  %v856 = vld [vmem:[#allocation2 + $0x40] sm:$0xff]
  %v857 = vld [vmem:[#allocation2 + $0x48] sm:$0xff]
  %v858 = vld [vmem:[#allocation2 + $0x50] sm:$0xff]
  %v859 = vld [vmem:[#allocation2 + $0x58] sm:$0xff]
  %v860 = vld [vmem:[#allocation2 + $0x60] sm:$0xff]
  %v861 = vld [vmem:[#allocation2 + $0x68] sm:$0xff]
  %v862 = vld [vmem:[#allocation2 + $0x70] sm:$0xff]
  %v863 = vld [vmem:[#allocation2 + $0x78] sm:$0xff]
  %v864 = vld [vmem:[#allocation2 + $0x80] sm:$0xff]
  %v865 = vld [vmem:[#allocation2 + $0x88] sm:$0xff]
  %v866 = vld [vmem:[#allocation2 + $0x90] sm:$0xff]
  %v867 = vld [vmem:[#allocation2 + $0x98] sm:$0xff]
  %v868 = vld [vmem:[#allocation2 + $0xa0] sm:$0xff]
  %v869 = vld [vmem:[#allocation2 + $0xa8] sm:$0xff]
  %v870 = vld [vmem:[#allocation2 + $0xb0] sm:$0xff]
  %v871 = vld [vmem:[#allocation2 + $0xb8] sm:$0xff]
  %v872 = vld [vmem:[#allocation2 + $0xc0] sm:$0xff]
  %v873 = vld [vmem:[#allocation2 + $0xc8] sm:$0xff]
  %v874 = vld [vmem:[#allocation2 + $0xd0] sm:$0xff]
  %v875 = vld [vmem:[#allocation2 + $0xd8] sm:$0xff]
  %v876 = vld [vmem:[#allocation2 + $0xe0] sm:$0xff]
  %v877 = vld [vmem:[#allocation2 + $0xe8] sm:$0xff]
  %v878 = vld [vmem:[#allocation2 + $0xf0] sm:$0xff]
  %v879 = vld [vmem:[#allocation2 + $0xf8] sm:$0xff]
  %v880 = vld [vmem:[#allocation2 + $0x100] sm:$0xff]
  %v881 = vld [vmem:[#allocation2 + $0x108] sm:$0xff]
  %v882 = vld [vmem:[#allocation2 + $0x110] sm:$0xff]
  %v883 = vld [vmem:[#allocation2 + $0x118] sm:$0xff]
  %v884 = vpack.c.bf16 %v850, %v848
  %v885 = vpack.c.bf16 %v851, %v849
  %v886 = vpack.c.bf16 %v854, %v852
  %v887 = vpack.c.bf16 %v855, %v853
  %v888 = vpack.c.bf16 %v858, %v856
  %v889 = vpack.c.bf16 %v859, %v857
  %v890 = vpack.c.bf16 %v862, %v860
  %v891 = vpack.c.bf16 %v863, %v861
  %v892 = vpack.c.bf16 %v866, %v864
  %v893 = vpack.c.bf16 %v867, %v865
  %v894 = vpack.c.bf16 %v870, %v868
  %v895 = vpack.c.bf16 %v871, %v869
  %v896 = vpack.c.bf16 %v874, %v872
  %v897 = vpack.c.bf16 %v875, %v873
  %v898 = vpack.c.bf16 %v878, %v876
  %v899 = vpack.c.bf16 %v879, %v877
  %v900 = vpack.c.bf16 %v882, %v880
  %v901 = vpack.c.bf16 %v883, %v881
  %v902 = vld [vmem:[%s8] sm:$0xff]
  %v903 = vld [vmem:[%s8 + $0x8] sm:$0xff]
  %v906 = vunpack.c.l.b16 %v902
  %v907 = vunpack.c.h.b16 %v902
  %v908 = vunpack.c.l.b16 %v903
  %v909 = vunpack.c.h.b16 %v903
  %v910 = vpack.c.b16 %v908, %v906
  %v911 = vpack.c.b16 %v909, %v907
  %v914 = vsel %vm514, %v911, 0
  %916 = vmatpush.bf16.msra.mxu0 %v898
  %917 = vmatpush.bf16.msra.mxu0 %v896
  %918 = vmatpush.bf16.msra.mxu0 %v894
  %919 = vmatpush.bf16.msra.mxu0 %v892
  %920 = vmatpush.bf16.msra.mxu0 %v890
  %921 = vmatpush.bf16.msra.mxu0 %v888
  %922 = vmatpush.bf16.msra.mxu0 %v886
  %923 = vmatpush.bf16.msra.mxu0 %v884
  %924 = vmatmul.bf16.gmra.mxu0 %v910
  %v925 = vpop.f32.mrf.mxu0
  %v926 = vadd.f32 0.0, %v925
  %v927 = vpop.f32.mrf.mxu0
  %v928 = vadd.f32 0.0, %v927
  %929 = vdwg.mxu0
  %930 = vmatpush.bf16.msra.mxu0 0
  %931 = vmatpush.bf16.msra.mxu0 0
  %932 = vmatpush.bf16.msra.mxu0 0
  %933 = vmatpush.bf16.msra.mxu0 0
  %934 = vmatpush.bf16.msra.mxu0 0
  %935 = vmatpush.bf16.msra.mxu0 0
  %936 = vmatpush.bf16.msra.mxu0 0
  %937 = vmatpush.bf16.msra.mxu0 %v900
  %938 = vmatmul.bf16.gmra.mxu0 %v914
  %v939 = vpop.f32.mrf.mxu0
  %v940 = vadd.f32 %v926, %v939
  %v941 = vpop.f32.mrf.mxu0
  %v942 = vadd.f32 %v928, %v941
  %943 = vdwg.mxu0
  %944 = vmatpush.bf16.msra.mxu0 %v899
  %945 = vmatpush.bf16.msra.mxu0 %v897
  %946 = vmatpush.bf16.msra.mxu0 %v895
  %947 = vmatpush.bf16.msra.mxu0 %v893
  %948 = vmatpush.bf16.msra.mxu0 %v891
  %949 = vmatpush.bf16.msra.mxu0 %v889
  %950 = vmatpush.bf16.msra.mxu0 %v887
  %951 = vmatpush.bf16.msra.mxu0 %v885
  %952 = vmatmul.bf16.gmra.mxu0 %v910
  %v953 = vpop.f32.mrf.mxu0
  %v954 = vadd.f32 0.0, %v953
  %v955 = vpop.f32.mrf.mxu0
  %v956 = vadd.f32 0.0, %v955
  %957 = vdwg.mxu0
  %958 = vmatpush.bf16.msra.mxu0 0
  %959 = vmatpush.bf16.msra.mxu0 0
  %960 = vmatpush.bf16.msra.mxu0 0
  %961 = vmatpush.bf16.msra.mxu0 0
  %962 = vmatpush.bf16.msra.mxu0 0
  %963 = vmatpush.bf16.msra.mxu0 0
  %964 = vmatpush.bf16.msra.mxu0 0
  %965 = vmatpush.bf16.msra.mxu0 %v901
  %966 = vmatmul.bf16.gmra.mxu0 %v914
  %v967 = vpop.f32.mrf.mxu0
  %v968 = vadd.f32 %v954, %v967
  %v969 = vpop.f32.mrf.mxu0
  %v970 = vadd.f32 %v956, %v969
  %971 = vdwg.mxu0
  %v972 = vmul.f32 %v940, %v385
  %v973 = vmul.f32 %v968, %v386
  %v974 = vmul.f32 %v942, %v385
  %v975 = vmul.f32 %v970, %v386
  %v976 = vsel %vm131, %v973, 0.0
  %v977 = vadd.f32 %v972, %v976
  %978 = vadd.xlane.f32.xlu0 %v977
  %v979 = vpop.xlane.xlu0 %978
  %v980 = vsel %vm131, %v975, 0.0
  %v981 = vadd.f32 %v974, %v980
  %982 = vadd.xlane.f32.xlu0 %v981
  %v983 = vpop.xlane.xlu0 %982
  %v984 = vmul.f32 %v979, 0.0078125
  %v985 = vmul.f32 %v983, 0.0078125
  %v986 = vsub.f32 %v940, %v984
  %v987 = vsub.f32 %v968, %v984
  %v988 = vsub.f32 %v942, %v985
  %v989 = vsub.f32 %v970, %v985
  %v990 = vmul.f32 %v986, %v385
  %v991 = vmul.f32 %v987, %v386
  %v992 = vmul.f32 %v988, %v385
  %v993 = vmul.f32 %v989, %v386
  %v994 = vmul.f32 %v990, %v990
  %v995 = vmul.f32 %v991, %v991
  %v996 = vmul.f32 %v992, %v992
  %v997 = vmul.f32 %v993, %v993
  %v998 = vsel %vm131, %v995, 0.0
  %v999 = vadd.f32 %v994, %v998
  %1000 = vadd.xlane.f32.xlu0 %v999
  %v1001 = vpop.xlane.xlu0 %1000
  %v1002 = vsel %vm131, %v997, 0.0
  %v1003 = vadd.f32 %v996, %v1002
  %1004 = vadd.xlane.f32.xlu0 %v1003
  %v1005 = vpop.xlane.xlu0 %1004
  %v1006 = vmul.f32 %v1001, 0.0078125
  %v1007 = vmul.f32 %v1005, 0.0078125
  %v1008 = vld [vmem:[%s9] sm:$0xff]
  %v1009 = vld [vmem:[%s9 + $0x8] sm:$0xff]
  %v1010 = vadd.f32 %v1006, 1e-05
  %v1011 = vadd.f32 %v1007, 1e-05
  %v1012 = vrsqrt.pop %v1010
  %v1013 = vmul.f32 %v1012, %v1010
  %v1014 = vmul.f32 %v1013, %v1012
  %v1015 = vmul.f32 0.5, %v1014
  %v1016 = vsub.f32 1.5, %v1015
  %v1017 = vmul.f32 %v1012, %v1016
  %vm1018 = vweird.f32 %v1010
  %vm1019 = vweird.f32 %v1012
  %vm1020 = vmor %vm1018, %vm1019
  %v1021 = vsel %vm1020, %v1012, %v1017
  %v1022 = vrsqrt.pop %v1011
  %v1023 = vmul.f32 %v1022, %v1011
  %v1024 = vmul.f32 %v1023, %v1022
  %v1025 = vmul.f32 0.5, %v1024
  %v1026 = vsub.f32 1.5, %v1025
  %v1027 = vmul.f32 %v1022, %v1026
  %vm1028 = vweird.f32 %v1011
  %vm1029 = vweird.f32 %v1022
  %vm1030 = vmor %vm1028, %vm1029
  %v1031 = vsel %vm1030, %v1022, %v1027
  %v1032 = vmul.f32 %v1008, %v1021
  %v1033 = vmul.f32 %v1009, %v1031
  %v1034 = vld [vmem:[%s10] sm:$0xff]
  %v1035 = vld [vmem:[%s10 + $0x8] sm:$0xff]
  %v1036 = vmul.f32 %v984, %v1032
  %v1037 = vmul.f32 %v985, %v1033
  %v1038 = vsub.f32 %v1034, %v1036
  %v1039 = vsub.f32 %v1035, %v1037
  %1041 = vset.pattern.permute.xlu0 0
  %1042 = vperm.xlu0 %1041, %v1032
  %v1043 = vpop.permute.xlu0 %1042
  %1046 = vset.pattern.permute.xlu0 0
  %1047 = vperm.xlu0 %1046, %v1033
  %v1048 = vpop.permute.xlu0 %1047
  %v1050 = vmul.f32 %v940, %v1043
  %v1051 = vmul.f32 %v968, %v1043
  %v1052 = vmul.f32 %v942, %v1048
  %v1053 = vmul.f32 %v970, %v1048
  %1055 = vset.pattern.permute.xlu0 0
  %1056 = vperm.xlu0 %1055, %v1038
  %v1057 = vpop.permute.xlu0 %1056
  %1060 = vset.pattern.permute.xlu0 0
  %1061 = vperm.xlu0 %1060, %v1039
  %v1062 = vpop.permute.xlu0 %1061
  %v1064 = vadd.f32 %v1050, %v1057
  %v1065 = vadd.f32 %v1051, %v1057
  %v1066 = vadd.f32 %v1052, %v1062
  %v1067 = vadd.f32 %v1053, %v1062
  %vm1068 = vcmp.ge.f32.partialorder %v1064, 0.0
  %vm1069 = vcmp.ge.f32.partialorder %v1065, 0.0
  %vm1070 = vcmp.ge.f32.partialorder %v1066, 0.0
  %vm1071 = vcmp.ge.f32.partialorder %v1067, 0.0
  %v1072 = vmul.f32 %v1064, 0.01
  %v1073 = vmul.f32 %v1065, 0.01
  %v1074 = vmul.f32 %v1066, 0.01
  %v1075 = vmul.f32 %v1067, 0.01
  %v1076 = vsel %vm1068, %v1064, %v1072
  %v1077 = vsel %vm1069, %v1065, %v1073
  %v1078 = vsel %vm1070, %v1066, %v1074
  %v1079 = vsel %vm1071, %v1067, %v1075
  %v1080 = vmul.f32 %v1076, %v385
  %v1081 = vmul.f32 %v1077, %v386
  %v1082 = vmul.f32 %v1078, %v385
  %v1083 = vmul.f32 %v1079, %v386
  %v1084 = vld [vmem:[%s11] sm:$0xf]
  %v1085 = vld [vmem:[%s11 + $0x4] sm:$0xf]
  %v1088 = vunpack.c.l.b16 %v1084
  %v1089 = vunpack.c.l.b16 %v1085
  %v1090 = vpack.c.b16 %v1089, %v1088
  %1091 = vrot.lane.b32.xlu0 %v1090, 116
  %v1092 = vpop.permute.xlu0 %1091
  %v1094 = vsel %vm514, %v1092, 0
  %1096 = vmatpush.bf16.msra.mxu0 0
  %1097 = vmatpush.bf16.msra.mxu0 0
  %1098 = vmatpush.bf16.msra.mxu0 0
  %1099 = vmatpush.bf16.msra.mxu0 0
  %1100 = vmatpush.bf16.msra.mxu0 0
  %1101 = vmatpush.bf16.msra.mxu0 0
  %1102 = vmatpush.bf16.msra.mxu0 0
  %1103 = vmatpush.bf16.msra.mxu0 %v505
  %1104 = vmatmul.bf16.gmra.mxu0 %v1094
  %v1105 = vpop.f32.mrf.mxu0
  %v1106 = vadd.f32 0.0, %v1105
  %v1107 = vpop.f32.mrf.mxu0
  %v1108 = vadd.f32 0.0, %v1107
  %1109 = vdwg.mxu0
  %1110 = vmatpush.bf16.msra.mxu0 0
  %1111 = vmatpush.bf16.msra.mxu0 0
  %1112 = vmatpush.bf16.msra.mxu0 0
  %1113 = vmatpush.bf16.msra.mxu0 0
  %1114 = vmatpush.bf16.msra.mxu0 0
  %1115 = vmatpush.bf16.msra.mxu0 0
  %1116 = vmatpush.bf16.msra.mxu0 0
  %1117 = vmatpush.bf16.msra.mxu0 %v506
  %1118 = vmatmul.bf16.gmra.mxu0 %v1094
  %v1119 = vpop.f32.mrf.mxu0
  %v1120 = vadd.f32 0.0, %v1119
  %v1121 = vpop.f32.mrf.mxu0
  %v1122 = vadd.f32 0.0, %v1121
  %1123 = vdwg.mxu0
  %v1125 = vsel %vm546, %v1090, 0
  %1127 = vmatpush.bf16.msra.mxu0 0
  %1128 = vmatpush.bf16.msra.mxu0 0
  %1129 = vmatpush.bf16.msra.mxu0 0
  %1130 = vmatpush.bf16.msra.mxu0 0
  %1131 = vmatpush.bf16.msra.mxu0 0
  %1132 = vmatpush.bf16.msra.mxu0 0
  %1133 = vmatpush.bf16.msra.mxu0 0
  %1134 = vmatpush.bf16.msra.mxu0 %v551
  %1135 = vmatmul.bf16.gmra.mxu0 %v1125
  %v1136 = vpop.f32.mrf.mxu0
  %v1137 = vadd.f32 %v1106, %v1136
  %v1138 = vpop.f32.mrf.mxu0
  %v1139 = vadd.f32 %v1108, %v1138
  %1140 = vdwg.mxu0
  %1141 = vmatpush.bf16.msra.mxu0 0
  %1142 = vmatpush.bf16.msra.mxu0 0
  %1143 = vmatpush.bf16.msra.mxu0 0
  %1144 = vmatpush.bf16.msra.mxu0 0
  %1145 = vmatpush.bf16.msra.mxu0 0
  %1146 = vmatpush.bf16.msra.mxu0 0
  %1147 = vmatpush.bf16.msra.mxu0 0
  %1148 = vmatpush.bf16.msra.mxu0 %v554
  %1149 = vmatmul.bf16.gmra.mxu0 %v1125
  %v1150 = vpop.f32.mrf.mxu0
  %v1151 = vadd.f32 %v1120, %v1150
  %v1152 = vpop.f32.mrf.mxu0
  %v1153 = vadd.f32 %v1122, %v1152
  %1154 = vdwg.mxu0
  %v1155 = vpack.c.bf16 %v1082, %v1080
  %v1156 = vpack.c.bf16 %v1083, %v1081
  %1157 = vrot.lane.b32.xlu0 %v1090, 100
  %v1158 = vpop.permute.xlu0 %1157
  %v1160 = vsel %vm514, %v1158, 0
  %1162 = vmatpush.bf16.msra.mxu0 0
  %1163 = vmatpush.bf16.msra.mxu0 0
  %1164 = vmatpush.bf16.msra.mxu0 0
  %1165 = vmatpush.bf16.msra.mxu0 0
  %1166 = vmatpush.bf16.msra.mxu0 0
  %1167 = vmatpush.bf16.msra.mxu0 0
  %1168 = vmatpush.bf16.msra.mxu0 0
  %1169 = vmatpush.bf16.msra.mxu0 %v1155
  %1170 = vmatmul.bf16.gmra.mxu0 %v1160
  %v1171 = vpop.f32.mrf.mxu0
  %v1172 = vadd.f32 0.0, %v1171
  %v1173 = vpop.f32.mrf.mxu0
  %v1174 = vadd.f32 0.0, %v1173
  %1175 = vdwg.mxu0
  %1176 = vmatpush.bf16.msra.mxu0 0
  %1177 = vmatpush.bf16.msra.mxu0 0
  %1178 = vmatpush.bf16.msra.mxu0 0
  %1179 = vmatpush.bf16.msra.mxu0 0
  %1180 = vmatpush.bf16.msra.mxu0 0
  %1181 = vmatpush.bf16.msra.mxu0 0
  %1182 = vmatpush.bf16.msra.mxu0 0
  %1183 = vmatpush.bf16.msra.mxu0 %v1156
  %1184 = vmatmul.bf16.gmra.mxu0 %v1160
  %v1185 = vpop.f32.mrf.mxu0
  %v1186 = vadd.f32 0.0, %v1185
  %v1187 = vpop.f32.mrf.mxu0
  %v1188 = vadd.f32 0.0, %v1187
  %1189 = vdwg.mxu0
  %v1190 = vadd.f32 %v1137, %v1172
  %v1191 = vadd.f32 %v1151, %v1186
  %v1192 = vadd.f32 %v1139, %v1174
  %v1193 = vadd.f32 %v1153, %v1188
  %v1194 = vmul.f32 %v1190, %v385
  %v1195 = vmul.f32 %v1191, %v386
  %v1196 = vmul.f32 %v1192, %v385
  %v1197 = vmul.f32 %v1193, %v386
  %v1198 = vsel %vm131, %v1195, 0.0
  %v1199 = vadd.f32 %v1194, %v1198
  %1200 = vadd.xlane.f32.xlu0 %v1199
  %v1201 = vpop.xlane.xlu0 %1200
  %v1202 = vsel %vm131, %v1197, 0.0
  %v1203 = vadd.f32 %v1196, %v1202
  %1204 = vadd.xlane.f32.xlu0 %v1203
  %v1205 = vpop.xlane.xlu0 %1204
  %v1206 = vmul.f32 %v1201, 0.0078125
  %v1207 = vmul.f32 %v1205, 0.0078125
  %v1208 = vsub.f32 %v1190, %v1206
  %v1209 = vsub.f32 %v1191, %v1206
  %v1210 = vsub.f32 %v1192, %v1207
  %v1211 = vsub.f32 %v1193, %v1207
  %v1212 = vmul.f32 %v1208, %v385
  %v1213 = vmul.f32 %v1209, %v386
  %v1214 = vmul.f32 %v1210, %v385
  %v1215 = vmul.f32 %v1211, %v386
  %v1216 = vmul.f32 %v1212, %v1212
  %v1217 = vmul.f32 %v1213, %v1213
  %v1218 = vmul.f32 %v1214, %v1214
  %v1219 = vmul.f32 %v1215, %v1215
  %v1220 = vsel %vm131, %v1217, 0.0
  %v1221 = vadd.f32 %v1216, %v1220
  %1222 = vadd.xlane.f32.xlu0 %v1221
  %v1223 = vpop.xlane.xlu0 %1222
  %v1224 = vsel %vm131, %v1219, 0.0
  %v1225 = vadd.f32 %v1218, %v1224
  %1226 = vadd.xlane.f32.xlu0 %v1225
  %v1227 = vpop.xlane.xlu0 %1226
  %v1228 = vmul.f32 %v1223, 0.0078125
  %v1229 = vmul.f32 %v1227, 0.0078125
  %v1230 = vld [vmem:[%s12] sm:$0xff]
  %v1231 = vld [vmem:[%s12 + $0x8] sm:$0xff]
  %v1232 = vadd.f32 %v1228, 1e-05
  %v1233 = vadd.f32 %v1229, 1e-05
  %v1234 = vrsqrt.pop %v1232
  %v1235 = vmul.f32 %v1234, %v1232
  %v1236 = vmul.f32 %v1235, %v1234
  %v1237 = vmul.f32 0.5, %v1236
  %v1238 = vsub.f32 1.5, %v1237
  %v1239 = vmul.f32 %v1234, %v1238
  %vm1240 = vweird.f32 %v1232
  %vm1241 = vweird.f32 %v1234
  %vm1242 = vmor %vm1240, %vm1241
  %v1243 = vsel %vm1242, %v1234, %v1239
  %v1244 = vrsqrt.pop %v1233
  %v1245 = vmul.f32 %v1244, %v1233
  %v1246 = vmul.f32 %v1245, %v1244
  %v1247 = vmul.f32 0.5, %v1246
  %v1248 = vsub.f32 1.5, %v1247
  %v1249 = vmul.f32 %v1244, %v1248
  %vm1250 = vweird.f32 %v1233
  %vm1251 = vweird.f32 %v1244
  %vm1252 = vmor %vm1250, %vm1251
  %v1253 = vsel %vm1252, %v1244, %v1249
  %v1254 = vmul.f32 %v1230, %v1243
  %v1255 = vmul.f32 %v1231, %v1253
  %v1256 = vld [vmem:[%s13] sm:$0xff]
  %v1257 = vld [vmem:[%s13 + $0x8] sm:$0xff]
  %v1258 = vmul.f32 %v1206, %v1254
  %v1259 = vmul.f32 %v1207, %v1255
  %v1260 = vsub.f32 %v1256, %v1258
  %v1261 = vsub.f32 %v1257, %v1259
  %1263 = vset.pattern.permute.xlu0 0
  %1264 = vperm.xlu0 %1263, %v1254
  %v1265 = vpop.permute.xlu0 %1264
  %1268 = vset.pattern.permute.xlu0 0
  %1269 = vperm.xlu0 %1268, %v1255
  %v1270 = vpop.permute.xlu0 %1269
  %v1272 = vmul.f32 %v1190, %v1265
  %v1273 = vmul.f32 %v1191, %v1265
  %v1274 = vmul.f32 %v1192, %v1270
  %v1275 = vmul.f32 %v1193, %v1270
  %1277 = vset.pattern.permute.xlu0 0
  %1278 = vperm.xlu0 %1277, %v1260
  %v1279 = vpop.permute.xlu0 %1278
  %1282 = vset.pattern.permute.xlu0 0
  %1283 = vperm.xlu0 %1282, %v1261
  %v1284 = vpop.permute.xlu0 %1283
  %v1286 = vadd.f32 %v1272, %v1279
  %v1287 = vadd.f32 %v1273, %v1279
  %v1288 = vadd.f32 %v1274, %v1284
  %v1289 = vadd.f32 %v1275, %v1284
  %vm1290 = vcmp.ge.f32.partialorder %v1286, 0.0
  %vm1291 = vcmp.ge.f32.partialorder %v1287, 0.0
  %vm1292 = vcmp.ge.f32.partialorder %v1288, 0.0
  %vm1293 = vcmp.ge.f32.partialorder %v1289, 0.0
  %v1294 = vmul.f32 %v1286, 0.01
  %v1295 = vmul.f32 %v1287, 0.01
  %v1296 = vmul.f32 %v1288, 0.01
  %v1297 = vmul.f32 %v1289, 0.01
  %v1298 = vsel %vm1290, %v1286, %v1294
  %v1299 = vsel %vm1291, %v1287, %v1295
  %v1300 = vsel %vm1292, %v1288, %v1296
  %v1301 = vsel %vm1293, %v1289, %v1297
  %v1302 = vmul.f32 %v1298, %v385
  %v1303 = vmul.f32 %v1299, %v386
  %v1304 = vmul.f32 %v1300, %v385
  %v1305 = vmul.f32 %v1301, %v386
  %1310 = vrot.lane.b32.xlu0 %v1302, 11
  %v1311 = vpop.permute.xlu0 %1310
  %1312 = vrot.lane.b32.xlu0 %v1303, 11
  %v1313 = vpop.permute.xlu0 %1312
  %1314 = vrot.lane.b32.xlu0 %v1304, 11
  %v1315 = vpop.permute.xlu0 %1314
  %1316 = vrot.lane.b32.xlu0 %v1305, 11
  %v1317 = vpop.permute.xlu0 %1316
  %v1318 = vsel %vm69, %v1311, %v1313
  %v1319 = vsel %vm69, %v1315, %v1317
  %1324 = vst.msk [vmem:[#allocation2] sm:$0xff] %vm129, %v1311
  %1325 = vst.msk [vmem:[#allocation2 + $0x8] sm:$0xff] %vm131, %v1318
  %1326 = vst.msk [vmem:[#allocation2 + $0x10] sm:$0xff] %vm129, %v1315
  %1327 = vst.msk [vmem:[#allocation2 + $0x18] sm:$0xff] %vm131, %v1319
  %1328 = vrot.lane.b32.xlu0 %v1302, 10
  %v1329 = vpop.permute.xlu0 %1328
  %1330 = vrot.lane.b32.xlu0 %v1303, 10
  %v1331 = vpop.permute.xlu0 %1330
  %1332 = vrot.lane.b32.xlu0 %v1304, 10
  %v1333 = vpop.permute.xlu0 %1332
  %1334 = vrot.lane.b32.xlu0 %v1305, 10
  %v1335 = vpop.permute.xlu0 %1334
  %v1336 = vsel %vm152, %v1329, %v1331
  %v1337 = vsel %vm152, %v1333, %v1335
  %1342 = vst.msk [vmem:[#allocation2 + $0x20] sm:$0xff] %vm163, %v1329
  %1343 = vst.msk [vmem:[#allocation2 + $0x28] sm:$0xff] %vm131, %v1336
  %1344 = vst.msk [vmem:[#allocation2 + $0x30] sm:$0xff] %vm163, %v1333
  %1345 = vst.msk [vmem:[#allocation2 + $0x38] sm:$0xff] %vm131, %v1337
  %1346 = vrot.lane.b32.xlu0 %v1302, 9
  %v1347 = vpop.permute.xlu0 %1346
  %1348 = vrot.lane.b32.xlu0 %v1303, 9
  %v1349 = vpop.permute.xlu0 %1348
  %1350 = vrot.lane.b32.xlu0 %v1304, 9
  %v1351 = vpop.permute.xlu0 %1350
  %1352 = vrot.lane.b32.xlu0 %v1305, 9
  %v1353 = vpop.permute.xlu0 %1352
  %v1354 = vsel %vm174, %v1347, %v1349
  %v1355 = vsel %vm174, %v1351, %v1353
  %1360 = vst.msk [vmem:[#allocation2 + $0x40] sm:$0xff] %vm181, %v1347
  %1361 = vst.msk [vmem:[#allocation2 + $0x48] sm:$0xff] %vm131, %v1354
  %1362 = vst.msk [vmem:[#allocation2 + $0x50] sm:$0xff] %vm181, %v1351
  %1363 = vst.msk [vmem:[#allocation2 + $0x58] sm:$0xff] %vm131, %v1355
  %1364 = vrot.lane.b32.xlu0 %v1302, 1
  %v1365 = vpop.permute.xlu0 %1364
  %1366 = vrot.lane.b32.xlu0 %v1303, 1
  %v1367 = vpop.permute.xlu0 %1366
  %1368 = vrot.lane.b32.xlu0 %v1304, 1
  %v1369 = vpop.permute.xlu0 %1368
  %1370 = vrot.lane.b32.xlu0 %v1305, 1
  %v1371 = vpop.permute.xlu0 %1370
  %v1372 = vsel %vm195, %v1365, %v1367
  %v1373 = vsel %vm195, %v1369, %v1371
  %1378 = vst.msk [vmem:[#allocation2 + $0x60] sm:$0xff] %vm205, %v1365
  %1379 = vst.msk [vmem:[#allocation2 + $0x68] sm:$0xff] %vm131, %v1372
  %1380 = vst.msk [vmem:[#allocation2 + $0x70] sm:$0xff] %vm205, %v1369
  %1381 = vst.msk [vmem:[#allocation2 + $0x78] sm:$0xff] %vm131, %v1373
  %1382 = vst [vmem:[#allocation2 + $0x80] sm:$0xff] %v1302
  %1383 = vst.msk [vmem:[#allocation2 + $0x88] sm:$0xff] %vm131, %v1303
  %1384 = vst [vmem:[#allocation2 + $0x90] sm:$0xff] %v1304
  %1385 = vst.msk [vmem:[#allocation2 + $0x98] sm:$0xff] %vm131, %v1305
  %1386 = vrot.lane.b32.xlu0 %v1302, 127
  %v1387 = vpop.permute.xlu0 %1386
  %1388 = vrot.lane.b32.xlu0 %v1303, 127
  %v1389 = vpop.permute.xlu0 %1388
  %1390 = vrot.lane.b32.xlu0 %v1304, 127
  %v1391 = vpop.permute.xlu0 %1390
  %1392 = vrot.lane.b32.xlu0 %v1305, 127
  %v1393 = vpop.permute.xlu0 %1392
  %v1394 = vsel %vm220, %v1387, %v1389
  %v1395 = vsel %vm220, %v1391, %v1393
  %1400 = vst [vmem:[#allocation2 + $0xa0] sm:$0xff] %v1394
  %1401 = vst.msk [vmem:[#allocation2 + $0xa8] sm:$0xff] %vm231, %v1389
  %1402 = vst [vmem:[#allocation2 + $0xb0] sm:$0xff] %v1395
  %1403 = vst.msk [vmem:[#allocation2 + $0xb8] sm:$0xff] %vm231, %v1393
  %1404 = vrot.lane.b32.xlu0 %v1302, 119
  %v1405 = vpop.permute.xlu0 %1404
  %1406 = vrot.lane.b32.xlu0 %v1303, 119
  %v1407 = vpop.permute.xlu0 %1406
  %1408 = vrot.lane.b32.xlu0 %v1304, 119
  %v1409 = vpop.permute.xlu0 %1408
  %1410 = vrot.lane.b32.xlu0 %v1305, 119
  %v1411 = vpop.permute.xlu0 %1410
  %v1412 = vsel %vm241, %v1405, %v1407
  %v1413 = vsel %vm241, %v1409, %v1411
  %1418 = vst [vmem:[#allocation2 + $0xc0] sm:$0xff] %v1412
  %1419 = vst.msk [vmem:[#allocation2 + $0xc8] sm:$0xff] %vm249, %v1407
  %1420 = vst [vmem:[#allocation2 + $0xd0] sm:$0xff] %v1413
  %1421 = vst.msk [vmem:[#allocation2 + $0xd8] sm:$0xff] %vm249, %v1411
  %1422 = vrot.lane.b32.xlu0 %v1302, 118
  %v1423 = vpop.permute.xlu0 %1422
  %1424 = vrot.lane.b32.xlu0 %v1303, 118
  %v1425 = vpop.permute.xlu0 %1424
  %1426 = vrot.lane.b32.xlu0 %v1304, 118
  %v1427 = vpop.permute.xlu0 %1426
  %1428 = vrot.lane.b32.xlu0 %v1305, 118
  %v1429 = vpop.permute.xlu0 %1428
  %v1430 = vsel %vm262, %v1423, %v1425
  %v1431 = vsel %vm262, %v1427, %v1429
  %1436 = vst [vmem:[#allocation2 + $0xe0] sm:$0xff] %v1430
  %1437 = vst.msk [vmem:[#allocation2 + $0xe8] sm:$0xff] %vm273, %v1425
  %1438 = vst [vmem:[#allocation2 + $0xf0] sm:$0xff] %v1431
  %1439 = vst.msk [vmem:[#allocation2 + $0xf8] sm:$0xff] %vm273, %v1429
  %1440 = vrot.lane.b32.xlu0 %v1302, 117
  %v1441 = vpop.permute.xlu0 %1440
  %1442 = vrot.lane.b32.xlu0 %v1303, 117
  %v1443 = vpop.permute.xlu0 %1442
  %1444 = vrot.lane.b32.xlu0 %v1304, 117
  %v1445 = vpop.permute.xlu0 %1444
  %1446 = vrot.lane.b32.xlu0 %v1305, 117
  %v1447 = vpop.permute.xlu0 %1446
  %v1448 = vsel %vm283, %v1441, %v1443
  %v1449 = vsel %vm283, %v1445, %v1447
  %1454 = vst [vmem:[#allocation2 + $0x100] sm:$0xff] %v1448
  %1455 = vst.msk [vmem:[#allocation2 + $0x108] sm:$0xff] %vm291, %v1443
  %1456 = vst [vmem:[#allocation2 + $0x110] sm:$0xff] %v1449
  %1457 = vst.msk [vmem:[#allocation2 + $0x118] sm:$0xff] %vm291, %v1447
  %v1458 = vld [vmem:[#allocation2] sm:$0xff]
  %v1459 = vld [vmem:[#allocation2 + $0x8] sm:$0xff]
  %v1460 = vld [vmem:[#allocation2 + $0x10] sm:$0xff]
  %v1461 = vld [vmem:[#allocation2 + $0x18] sm:$0xff]
  %v1462 = vld [vmem:[#allocation2 + $0x20] sm:$0xff]
  %v1463 = vld [vmem:[#allocation2 + $0x28] sm:$0xff]
  %v1464 = vld [vmem:[#allocation2 + $0x30] sm:$0xff]
  %v1465 = vld [vmem:[#allocation2 + $0x38] sm:$0xff]
  %v1466 = vld [vmem:[#allocation2 + $0x40] sm:$0xff]
  %v1467 = vld [vmem:[#allocation2 + $0x48] sm:$0xff]
  %v1468 = vld [vmem:[#allocation2 + $0x50] sm:$0xff]
  %v1469 = vld [vmem:[#allocation2 + $0x58] sm:$0xff]
  %v1470 = vld [vmem:[#allocation2 + $0x60] sm:$0xff]
  %v1471 = vld [vmem:[#allocation2 + $0x68] sm:$0xff]
  %v1472 = vld [vmem:[#allocation2 + $0x70] sm:$0xff]
  %v1473 = vld [vmem:[#allocation2 + $0x78] sm:$0xff]
  %v1474 = vld [vmem:[#allocation2 + $0x80] sm:$0xff]
  %v1475 = vld [vmem:[#allocation2 + $0x88] sm:$0xff]
  %v1476 = vld [vmem:[#allocation2 + $0x90] sm:$0xff]
  %v1477 = vld [vmem:[#allocation2 + $0x98] sm:$0xff]
  %v1478 = vld [vmem:[#allocation2 + $0xa0] sm:$0xff]
  %v1479 = vld [vmem:[#allocation2 + $0xa8] sm:$0xff]
  %v1480 = vld [vmem:[#allocation2 + $0xb0] sm:$0xff]
  %v1481 = vld [vmem:[#allocation2 + $0xb8] sm:$0xff]
  %v1482 = vld [vmem:[#allocation2 + $0xc0] sm:$0xff]
  %v1483 = vld [vmem:[#allocation2 + $0xc8] sm:$0xff]
  %v1484 = vld [vmem:[#allocation2 + $0xd0] sm:$0xff]
  %v1485 = vld [vmem:[#allocation2 + $0xd8] sm:$0xff]
  %v1486 = vld [vmem:[#allocation2 + $0xe0] sm:$0xff]
  %v1487 = vld [vmem:[#allocation2 + $0xe8] sm:$0xff]
  %v1488 = vld [vmem:[#allocation2 + $0xf0] sm:$0xff]
  %v1489 = vld [vmem:[#allocation2 + $0xf8] sm:$0xff]
  %v1490 = vld [vmem:[#allocation2 + $0x100] sm:$0xff]
  %v1491 = vld [vmem:[#allocation2 + $0x108] sm:$0xff]
  %v1492 = vld [vmem:[#allocation2 + $0x110] sm:$0xff]
  %v1493 = vld [vmem:[#allocation2 + $0x118] sm:$0xff]
  %v1494 = vpack.c.bf16 %v1460, %v1458
  %v1495 = vpack.c.bf16 %v1461, %v1459
  %v1496 = vpack.c.bf16 %v1464, %v1462
  %v1497 = vpack.c.bf16 %v1465, %v1463
  %v1498 = vpack.c.bf16 %v1468, %v1466
  %v1499 = vpack.c.bf16 %v1469, %v1467
  %v1500 = vpack.c.bf16 %v1472, %v1470
  %v1501 = vpack.c.bf16 %v1473, %v1471
  %v1502 = vpack.c.bf16 %v1476, %v1474
  %v1503 = vpack.c.bf16 %v1477, %v1475
  %v1504 = vpack.c.bf16 %v1480, %v1478
  %v1505 = vpack.c.bf16 %v1481, %v1479
  %v1506 = vpack.c.bf16 %v1484, %v1482
  %v1507 = vpack.c.bf16 %v1485, %v1483
  %v1508 = vpack.c.bf16 %v1488, %v1486
  %v1509 = vpack.c.bf16 %v1489, %v1487
  %v1510 = vpack.c.bf16 %v1492, %v1490
  %v1511 = vpack.c.bf16 %v1493, %v1491
  %v1512 = vld [vmem:[%s14] sm:$0xff]
  %v1513 = vld [vmem:[%s14 + $0x8] sm:$0xff]
  %v1516 = vunpack.c.l.b16 %v1512
  %v1517 = vunpack.c.h.b16 %v1512
  %v1518 = vunpack.c.l.b16 %v1513
  %v1519 = vunpack.c.h.b16 %v1513
  %v1520 = vpack.c.b16 %v1518, %v1516
  %v1521 = vpack.c.b16 %v1519, %v1517
  %v1524 = vsel %vm514, %v1521, 0
  %1526 = vmatpush.bf16.msra.mxu0 %v1508
  %1527 = vmatpush.bf16.msra.mxu0 %v1506
  %1528 = vmatpush.bf16.msra.mxu0 %v1504
  %1529 = vmatpush.bf16.msra.mxu0 %v1502
  %1530 = vmatpush.bf16.msra.mxu0 %v1500
  %1531 = vmatpush.bf16.msra.mxu0 %v1498
  %1532 = vmatpush.bf16.msra.mxu0 %v1496
  %1533 = vmatpush.bf16.msra.mxu0 %v1494
  %1534 = vmatmul.bf16.gmra.mxu0 %v1520
  %v1535 = vpop.f32.mrf.mxu0
  %v1536 = vadd.f32 0.0, %v1535
  %v1537 = vpop.f32.mrf.mxu0
  %v1538 = vadd.f32 0.0, %v1537
  %1539 = vdwg.mxu0
  %1540 = vmatpush.bf16.msra.mxu0 0
  %1541 = vmatpush.bf16.msra.mxu0 0
  %1542 = vmatpush.bf16.msra.mxu0 0
  %1543 = vmatpush.bf16.msra.mxu0 0
  %1544 = vmatpush.bf16.msra.mxu0 0
  %1545 = vmatpush.bf16.msra.mxu0 0
  %1546 = vmatpush.bf16.msra.mxu0 0
  %1547 = vmatpush.bf16.msra.mxu0 %v1510
  %1548 = vmatmul.bf16.gmra.mxu0 %v1524
  %v1549 = vpop.f32.mrf.mxu0
  %v1550 = vadd.f32 %v1536, %v1549
  %v1551 = vpop.f32.mrf.mxu0
  %v1552 = vadd.f32 %v1538, %v1551
  %1553 = vdwg.mxu0
  %1554 = vmatpush.bf16.msra.mxu0 %v1509
  %1555 = vmatpush.bf16.msra.mxu0 %v1507
  %1556 = vmatpush.bf16.msra.mxu0 %v1505
  %1557 = vmatpush.bf16.msra.mxu0 %v1503
  %1558 = vmatpush.bf16.msra.mxu0 %v1501
  %1559 = vmatpush.bf16.msra.mxu0 %v1499
  %1560 = vmatpush.bf16.msra.mxu0 %v1497
  %1561 = vmatpush.bf16.msra.mxu0 %v1495
  %1562 = vmatmul.bf16.gmra.mxu0 %v1520
  %v1563 = vpop.f32.mrf.mxu0
  %v1564 = vadd.f32 0.0, %v1563
  %v1565 = vpop.f32.mrf.mxu0
  %v1566 = vadd.f32 0.0, %v1565
  %1567 = vdwg.mxu0
  %1568 = vmatpush.bf16.msra.mxu0 0
  %1569 = vmatpush.bf16.msra.mxu0 0
  %1570 = vmatpush.bf16.msra.mxu0 0
  %1571 = vmatpush.bf16.msra.mxu0 0
  %1572 = vmatpush.bf16.msra.mxu0 0
  %1573 = vmatpush.bf16.msra.mxu0 0
  %1574 = vmatpush.bf16.msra.mxu0 0
  %1575 = vmatpush.bf16.msra.mxu0 %v1511
  %1576 = vmatmul.bf16.gmra.mxu0 %v1524
  %v1577 = vpop.f32.mrf.mxu0
  %v1578 = vadd.f32 %v1564, %v1577
  %v1579 = vpop.f32.mrf.mxu0
  %v1580 = vadd.f32 %v1566, %v1579
  %1581 = vdwg.mxu0
  %v1582 = vmul.f32 %v1550, %v385
  %v1583 = vmul.f32 %v1578, %v386
  %v1584 = vmul.f32 %v1552, %v385
  %v1585 = vmul.f32 %v1580, %v386
  %v1586 = vsel %vm131, %v1583, 0.0
  %v1587 = vadd.f32 %v1582, %v1586
  %1588 = vadd.xlane.f32.xlu0 %v1587
  %v1589 = vpop.xlane.xlu0 %1588
  %v1590 = vsel %vm131, %v1585, 0.0
  %v1591 = vadd.f32 %v1584, %v1590
  %1592 = vadd.xlane.f32.xlu0 %v1591
  %v1593 = vpop.xlane.xlu0 %1592
  %v1594 = vmul.f32 %v1589, 0.0078125
  %v1595 = vmul.f32 %v1593, 0.0078125
  %v1596 = vsub.f32 %v1550, %v1594
  %v1597 = vsub.f32 %v1578, %v1594
  %v1598 = vsub.f32 %v1552, %v1595
  %v1599 = vsub.f32 %v1580, %v1595
  %v1600 = vmul.f32 %v1596, %v385
  %v1601 = vmul.f32 %v1597, %v386
  %v1602 = vmul.f32 %v1598, %v385
  %v1603 = vmul.f32 %v1599, %v386
  %v1604 = vmul.f32 %v1600, %v1600
  %v1605 = vmul.f32 %v1601, %v1601
  %v1606 = vmul.f32 %v1602, %v1602
  %v1607 = vmul.f32 %v1603, %v1603
  %v1608 = vsel %vm131, %v1605, 0.0
  %v1609 = vadd.f32 %v1604, %v1608
  %1610 = vadd.xlane.f32.xlu0 %v1609
  %v1611 = vpop.xlane.xlu0 %1610
  %v1612 = vsel %vm131, %v1607, 0.0
  %v1613 = vadd.f32 %v1606, %v1612
  %1614 = vadd.xlane.f32.xlu0 %v1613
  %v1615 = vpop.xlane.xlu0 %1614
  %v1616 = vmul.f32 %v1611, 0.0078125
  %v1617 = vmul.f32 %v1615, 0.0078125
  %v1618 = vld [vmem:[%s15] sm:$0xff]
  %v1619 = vld [vmem:[%s15 + $0x8] sm:$0xff]
  %v1620 = vadd.f32 %v1616, 1e-05
  %v1621 = vadd.f32 %v1617, 1e-05
  %v1622 = vrsqrt.pop %v1620
  %v1623 = vmul.f32 %v1622, %v1620
  %v1624 = vmul.f32 %v1623, %v1622
  %v1625 = vmul.f32 0.5, %v1624
  %v1626 = vsub.f32 1.5, %v1625
  %v1627 = vmul.f32 %v1622, %v1626
  %vm1628 = vweird.f32 %v1620
  %vm1629 = vweird.f32 %v1622
  %vm1630 = vmor %vm1628, %vm1629
  %v1631 = vsel %vm1630, %v1622, %v1627
  %v1632 = vrsqrt.pop %v1621
  %v1633 = vmul.f32 %v1632, %v1621
  %v1634 = vmul.f32 %v1633, %v1632
  %v1635 = vmul.f32 0.5, %v1634
  %v1636 = vsub.f32 1.5, %v1635
  %v1637 = vmul.f32 %v1632, %v1636
  %vm1638 = vweird.f32 %v1621
  %vm1639 = vweird.f32 %v1632
  %vm1640 = vmor %vm1638, %vm1639
  %v1641 = vsel %vm1640, %v1632, %v1637
  %v1642 = vmul.f32 %v1618, %v1631
  %v1643 = vmul.f32 %v1619, %v1641
  %v1644 = vld [vmem:[%s16] sm:$0xff]
  %v1645 = vld [vmem:[%s16 + $0x8] sm:$0xff]
  %v1646 = vmul.f32 %v1594, %v1642
  %v1647 = vmul.f32 %v1595, %v1643
  %v1648 = vsub.f32 %v1644, %v1646
  %v1649 = vsub.f32 %v1645, %v1647
  %1651 = vset.pattern.permute.xlu0 0
  %1652 = vperm.xlu0 %1651, %v1642
  %v1653 = vpop.permute.xlu0 %1652
  %1656 = vset.pattern.permute.xlu0 0
  %1657 = vperm.xlu0 %1656, %v1643
  %v1658 = vpop.permute.xlu0 %1657
  %v1660 = vmul.f32 %v1550, %v1653
  %v1661 = vmul.f32 %v1578, %v1653
  %v1662 = vmul.f32 %v1552, %v1658
  %v1663 = vmul.f32 %v1580, %v1658
  %1665 = vset.pattern.permute.xlu0 0
  %1666 = vperm.xlu0 %1665, %v1648
  %v1667 = vpop.permute.xlu0 %1666
  %1670 = vset.pattern.permute.xlu0 0
  %1671 = vperm.xlu0 %1670, %v1649
  %v1672 = vpop.permute.xlu0 %1671
  %v1674 = vadd.f32 %v1660, %v1667
  %v1675 = vadd.f32 %v1661, %v1667
  %v1676 = vadd.f32 %v1662, %v1672
  %v1677 = vadd.f32 %v1663, %v1672
  %vm1678 = vcmp.ge.f32.partialorder %v1674, 0.0
  %vm1679 = vcmp.ge.f32.partialorder %v1675, 0.0
  %vm1680 = vcmp.ge.f32.partialorder %v1676, 0.0
  %vm1681 = vcmp.ge.f32.partialorder %v1677, 0.0
  %v1682 = vmul.f32 %v1674, 0.01
  %v1683 = vmul.f32 %v1675, 0.01
  %v1684 = vmul.f32 %v1676, 0.01
  %v1685 = vmul.f32 %v1677, 0.01
  %v1686 = vsel %vm1678, %v1674, %v1682
  %v1687 = vsel %vm1679, %v1675, %v1683
  %v1688 = vsel %vm1680, %v1676, %v1684
  %v1689 = vsel %vm1681, %v1677, %v1685
  %v1690 = vmul.f32 %v1686, %v385
  %v1691 = vmul.f32 %v1687, %v386
  %v1692 = vmul.f32 %v1688, %v385
  %v1693 = vmul.f32 %v1689, %v386
  %1694 = vst [vmem:[%s20] sm:$0xff] %v1690
  %1695 = vst.msk [vmem:[%s20 + $0x8] sm:$0xff] %vm131, %v1691
  %1696 = vst [vmem:[%s20 + $0x10] sm:$0xff] %v1692
  %1697 = vst.msk [vmem:[%s20 + $0x18] sm:$0xff] %vm131, %v1693
  %1698 = vst [vmem:[%s20 + $0x20] sm:$0xff] %v107
  %1699 = vst.msk [vmem:[%s20 + $0x28] sm:$0xff] %vm131, %v108
  %1700 = vst [vmem:[%s20 + $0x30] sm:$0xf] %v109
  %1701 = vst.msk [vmem:[%s20 + $0x38] sm:$0xf] %vm135, %v110
  %v1702 = vld [vmem:[%s17] sm:$0xf]
  %v1703 = vld [vmem:[%s17 + $0x4] sm:$0xf]
  %v1704 = vld [vmem:[%s17 + $0x8] sm:$0xf]
  %v1705 = vpack.c.bf16 %v1692, %v1690
  %v1706 = vpack.c.bf16 %v1693, %v1691
  %v1710 = vunpack.c.l.b16 %v1702
  %v1711 = vunpack.c.l.b16 %v1703
  %v1712 = vunpack.c.l.b16 %v1704
  %v1713 = vpack.c.b16 %v1711, %v1710
  %v1714 = vpack.c.b16 %v1712, %v1712
  %1715 = vrot.lane.b32.xlu0 %v1713, 112
  %v1716 = vpop.permute.xlu0 %1715
  %1717 = vrot.lane.b32.xlu0 %v1714, 112
  %v1718 = vpop.permute.xlu0 %1717
  %v1720 = vsel %vm546, %v1716, 0
  %v1723 = vsel %vm546, %v1718, 0
  %1725 = vmatpush.bf16.msra.mxu0 0
  %1726 = vmatpush.bf16.msra.mxu0 0
  %1727 = vmatpush.bf16.msra.mxu0 0
  %1728 = vmatpush.bf16.msra.mxu0 0
  %1729 = vmatpush.bf16.msra.mxu0 0
  %1730 = vmatpush.bf16.msra.mxu0 0
  %1731 = vmatpush.bf16.msra.mxu0 0
  %1732 = vmatpush.bf16.msra.mxu0 %v551
  %1733 = vmatmul.bf16.gmra.mxu0 %v1720
  %v1734 = vpop.f32.mrf.mxu0
  %v1735 = vadd.f32 0.0, %v1734
  %v1736 = vpop.f32.mrf.mxu0
  %v1737 = vadd.f32 0.0, %v1736
  %1738 = vmatmul.bf16.gmra.mxu0 %v1723
  %v1739 = vpop.f32.mrf.mxu0
  %v1740 = vadd.f32 0.0, %v1739
  %v1741 = vpop.f32.mrf.mxu0
  %1742 = vdwg.mxu0
  %1743 = vmatpush.bf16.msra.mxu0 0
  %1744 = vmatpush.bf16.msra.mxu0 0
  %1745 = vmatpush.bf16.msra.mxu0 0
  %1746 = vmatpush.bf16.msra.mxu0 0
  %1747 = vmatpush.bf16.msra.mxu0 0
  %1748 = vmatpush.bf16.msra.mxu0 0
  %1749 = vmatpush.bf16.msra.mxu0 0
  %1750 = vmatpush.bf16.msra.mxu0 %v554
  %1751 = vmatmul.bf16.gmra.mxu0 %v1720
  %v1752 = vpop.f32.mrf.mxu0
  %v1753 = vadd.f32 0.0, %v1752
  %v1754 = vpop.f32.mrf.mxu0
  %v1755 = vadd.f32 0.0, %v1754
  %1756 = vmatmul.bf16.gmra.mxu0 %v1723
  %v1757 = vpop.f32.mrf.mxu0
  %v1758 = vadd.f32 0.0, %v1757
  %v1759 = vpop.f32.mrf.mxu0
  %1760 = vdwg.mxu0
  %v1762 = vsel %vm514, %v1713, 0
  %v1765 = vsel %vm514, %v1714, 0
  %1767 = vmatpush.bf16.msra.mxu0 0
  %1768 = vmatpush.bf16.msra.mxu0 0
  %1769 = vmatpush.bf16.msra.mxu0 0
  %1770 = vmatpush.bf16.msra.mxu0 0
  %1771 = vmatpush.bf16.msra.mxu0 0
  %1772 = vmatpush.bf16.msra.mxu0 0
  %1773 = vmatpush.bf16.msra.mxu0 0
  %1774 = vmatpush.bf16.msra.mxu0 %v1705
  %1775 = vmatmul.bf16.gmra.mxu0 %v1762
  %v1776 = vpop.f32.mrf.mxu0
  %v1777 = vadd.f32 %v1735, %v1776
  %v1778 = vpop.f32.mrf.mxu0
  %v1779 = vadd.f32 %v1737, %v1778
  %1780 = vmatmul.bf16.gmra.mxu0 %v1765
  %v1781 = vpop.f32.mrf.mxu0
  %v1782 = vadd.f32 %v1740, %v1781
  %v1783 = vpop.f32.mrf.mxu0
  %1784 = vdwg.mxu0
  %1785 = vmatpush.bf16.msra.mxu0 0
  %1786 = vmatpush.bf16.msra.mxu0 0
  %1787 = vmatpush.bf16.msra.mxu0 0
  %1788 = vmatpush.bf16.msra.mxu0 0
  %1789 = vmatpush.bf16.msra.mxu0 0
  %1790 = vmatpush.bf16.msra.mxu0 0
  %1791 = vmatpush.bf16.msra.mxu0 0
  %1792 = vmatpush.bf16.msra.mxu0 %v1706
  %1793 = vmatmul.bf16.gmra.mxu0 %v1762
  %v1794 = vpop.f32.mrf.mxu0
  %v1795 = vadd.f32 %v1753, %v1794
  %v1796 = vpop.f32.mrf.mxu0
  %v1797 = vadd.f32 %v1755, %v1796
  %1798 = vmatmul.bf16.gmra.mxu0 %v1765
  %v1799 = vpop.f32.mrf.mxu0
  %v1800 = vadd.f32 %v1758, %v1799
  %v1801 = vpop.f32.mrf.mxu0
  %1802 = vdwg.mxu0
  %v1803 = vmul.f32 %v1777, %v385
  %v1804 = vmul.f32 %v1795, %v386
  %v1805 = vmul.f32 %v1779, %v385
  %v1806 = vmul.f32 %v1797, %v386
  %v1807 = vmul.f32 %v1782, %v385
  %v1808 = vmul.f32 %v1800, %v386
  %v1809 = vsel %vm131, %v1804, 0.0
  %v1810 = vadd.f32 %v1803, %v1809
  %1811 = vadd.xlane.f32.xlu0 %v1810
  %v1812 = vpop.xlane.xlu0 %1811
  %v1813 = vsel %vm131, %v1806, 0.0
  %v1814 = vadd.f32 %v1805, %v1813
  %1815 = vadd.xlane.f32.xlu0 %v1814
  %v1816 = vpop.xlane.xlu0 %1815
  %v1817 = vsel %vm131, %v1808, 0.0
  %v1818 = vadd.f32 %v1807, %v1817
  %1819 = vadd.xlane.f32.xlu0 %v1818
  %v1820 = vpop.xlane.xlu0 %1819
  %v1821 = vmul.f32 %v1812, 0.0078125
  %v1822 = vmul.f32 %v1816, 0.0078125
  %v1823 = vmul.f32 %v1820, 0.0078125
  %v1824 = vsub.f32 %v1777, %v1821
  %v1825 = vsub.f32 %v1795, %v1821
  %v1826 = vsub.f32 %v1779, %v1822
  %v1827 = vsub.f32 %v1797, %v1822
  %v1828 = vsub.f32 %v1782, %v1823
  %v1829 = vsub.f32 %v1800, %v1823
  %v1830 = vmul.f32 %v1824, %v385
  %v1831 = vmul.f32 %v1825, %v386
  %v1832 = vmul.f32 %v1826, %v385
  %v1833 = vmul.f32 %v1827, %v386
  %v1834 = vmul.f32 %v1828, %v385
  %v1835 = vmul.f32 %v1829, %v386
  %v1836 = vmul.f32 %v1830, %v1830
  %v1837 = vmul.f32 %v1831, %v1831
  %v1838 = vmul.f32 %v1832, %v1832
  %v1839 = vmul.f32 %v1833, %v1833
  %v1840 = vmul.f32 %v1834, %v1834
  %v1841 = vmul.f32 %v1835, %v1835
  %v1842 = vsel %vm131, %v1837, 0.0
  %v1843 = vadd.f32 %v1836, %v1842
  %1844 = vadd.xlane.f32.xlu0 %v1843
  %v1845 = vpop.xlane.xlu0 %1844
  %v1846 = vsel %vm131, %v1839, 0.0
  %v1847 = vadd.f32 %v1838, %v1846
  %1848 = vadd.xlane.f32.xlu0 %v1847
  %v1849 = vpop.xlane.xlu0 %1848
  %v1850 = vsel %vm131, %v1841, 0.0
  %v1851 = vadd.f32 %v1840, %v1850
  %1852 = vadd.xlane.f32.xlu0 %v1851
  %v1853 = vpop.xlane.xlu0 %1852
  %v1854 = vmul.f32 %v1845, 0.0078125
  %v1855 = vmul.f32 %v1849, 0.0078125
  %v1856 = vmul.f32 %v1853, 0.0078125
  %v1857 = vld [vmem:[%s18] sm:$0xff]
  %v1858 = vld [vmem:[%s18 + $0x8] sm:$0xff]
  %v1859 = vld [vmem:[%s18 + $0x10] sm:$0xff]
  %v1860 = vadd.f32 %v1854, 1e-05
  %v1861 = vadd.f32 %v1855, 1e-05
  %v1862 = vadd.f32 %v1856, 1e-05
  %v1863 = vrsqrt.pop %v1860
  %v1864 = vmul.f32 %v1863, %v1860
  %v1865 = vmul.f32 %v1864, %v1863
  %v1866 = vmul.f32 0.5, %v1865
  %v1867 = vsub.f32 1.5, %v1866
  %v1868 = vmul.f32 %v1863, %v1867
  %vm1869 = vweird.f32 %v1860
  %vm1870 = vweird.f32 %v1863
  %vm1871 = vmor %vm1869, %vm1870
  %v1872 = vsel %vm1871, %v1863, %v1868
  %v1873 = vrsqrt.pop %v1861
  %v1874 = vmul.f32 %v1873, %v1861
  %v1875 = vmul.f32 %v1874, %v1873
  %v1876 = vmul.f32 0.5, %v1875
  %v1877 = vsub.f32 1.5, %v1876
  %v1878 = vmul.f32 %v1873, %v1877
  %vm1879 = vweird.f32 %v1861
  %vm1880 = vweird.f32 %v1873
  %vm1881 = vmor %vm1879, %vm1880
  %v1882 = vsel %vm1881, %v1873, %v1878
  %v1883 = vrsqrt.pop %v1862
  %v1884 = vmul.f32 %v1883, %v1862
  %v1885 = vmul.f32 %v1884, %v1883
  %v1886 = vmul.f32 0.5, %v1885
  %v1887 = vsub.f32 1.5, %v1886
  %v1888 = vmul.f32 %v1883, %v1887
  %vm1889 = vweird.f32 %v1862
  %vm1890 = vweird.f32 %v1883
  %vm1891 = vmor %vm1889, %vm1890
  %v1892 = vsel %vm1891, %v1883, %v1888
  %v1893 = vmul.f32 %v1857, %v1872
  %v1894 = vmul.f32 %v1858, %v1882
  %v1895 = vmul.f32 %v1859, %v1892
  %v1896 = vld [vmem:[%s19] sm:$0xff]
  %v1897 = vld [vmem:[%s19 + $0x8] sm:$0xff]
  %v1898 = vld [vmem:[%s19 + $0x10] sm:$0xff]
  %v1899 = vmul.f32 %v1821, %v1893
  %v1900 = vmul.f32 %v1822, %v1894
  %v1901 = vmul.f32 %v1823, %v1895
  %v1902 = vsub.f32 %v1896, %v1899
  %v1903 = vsub.f32 %v1897, %v1900
  %v1904 = vsub.f32 %v1898, %v1901
  %1906 = vset.pattern.permute.xlu0 0
  %1907 = vperm.xlu0 %1906, %v1893
  %v1908 = vpop.permute.xlu0 %1907
  %1911 = vset.pattern.permute.xlu0 0
  %1912 = vperm.xlu0 %1911, %v1894
  %v1913 = vpop.permute.xlu0 %1912
  %1916 = vset.pattern.permute.xlu0 0
  %1917 = vperm.xlu0 %1916, %v1895
  %v1918 = vpop.permute.xlu0 %1917
  %v1920 = vmul.f32 %v1777, %v1908
  %v1921 = vmul.f32 %v1795, %v1908
  %v1922 = vmul.f32 %v1779, %v1913
  %v1923 = vmul.f32 %v1797, %v1913
  %v1924 = vmul.f32 %v1782, %v1918
  %v1925 = vmul.f32 %v1800, %v1918
  %1927 = vset.pattern.permute.xlu0 0
  %1928 = vperm.xlu0 %1927, %v1902
  %v1929 = vpop.permute.xlu0 %1928
  %1932 = vset.pattern.permute.xlu0 0
  %1933 = vperm.xlu0 %1932, %v1903
  %v1934 = vpop.permute.xlu0 %1933
  %1937 = vset.pattern.permute.xlu0 0
  %1938 = vperm.xlu0 %1937, %v1904
  %v1939 = vpop.permute.xlu0 %1938
  %v1941 = vadd.f32 %v1920, %v1929
  %v1942 = vadd.f32 %v1921, %v1929
  %v1943 = vadd.f32 %v1922, %v1934
  %v1944 = vadd.f32 %v1923, %v1934
  %v1945 = vadd.f32 %v1924, %v1939
  %v1946 = vadd.f32 %v1925, %v1939
  %vm1947 = vcmp.ge.f32.partialorder %v1941, 0.0
  %vm1948 = vcmp.ge.f32.partialorder %v1942, 0.0
  %vm1949 = vcmp.ge.f32.partialorder %v1943, 0.0
  %vm1950 = vcmp.ge.f32.partialorder %v1944, 0.0
  %vm1951 = vcmp.ge.f32.partialorder %v1945, 0.0
  %vm1952 = vcmp.ge.f32.partialorder %v1946, 0.0
  %v1953 = vmul.f32 %v1941, 0.01
  %v1954 = vmul.f32 %v1942, 0.01
  %v1955 = vmul.f32 %v1943, 0.01
  %v1956 = vmul.f32 %v1944, 0.01
  %v1957 = vmul.f32 %v1945, 0.01
  %v1958 = vmul.f32 %v1946, 0.01
  %v1959 = vsel %vm1947, %v1941, %v1953
  %v1960 = vsel %vm1948, %v1942, %v1954
  %v1961 = vsel %vm1949, %v1943, %v1955
  %v1962 = vsel %vm1950, %v1944, %v1956
  %v1963 = vsel %vm1951, %v1945, %v1957
  %v1964 = vsel %vm1952, %v1946, %v1958
  %v1965 = vmul.f32 %v1959, %v385
  %v1966 = vmul.f32 %v1960, %v386
  %v1967 = vmul.f32 %v1961, %v385
  %v1968 = vmul.f32 %v1962, %v386
  %v1969 = vmul.f32 %v1963, %v385
  %v1970 = vmul.f32 %v1964, %v386
  %1971 = vst [vmem:[%s21] sm:$0xff] %v1965
  %1972 = vst.msk [vmem:[%s21 + $0x8] sm:$0xff] %vm131, %v1966
  %1973 = vst [vmem:[%s21 + $0x10] sm:$0xff] %v1967
  %1974 = vst.msk [vmem:[%s21 + $0x18] sm:$0xff] %vm131, %v1968
  %1975 = vst [vmem:[%s21 + $0x20] sm:$0xff] %v1969
  %1976 = vst.msk [vmem:[%s21 + $0x28] sm:$0xff] %vm131, %v1970
  // Predicated region
  $region82: #{dense_net_encoder.3} parent=0 // pred_check
    _
  $region83: #{dense_net_encoder.3} parent=0 // pred_check_branch
    %1978 = sbr.rel (0) target = $region85
  $region84: #{dense_net_encoder.3} parent=0 // pred_region
    _
  $region85: #{dense_net_encoder.3} parent=0 // pred_fallthru
    _
  // Predicated region
  $region86: #{dense_net_encoder.3} parent=0 // pred_check
    _
  $region87: #{dense_net_encoder.3} parent=0 // pred_check_branch
    %1980 = sbr.rel (0) target = $region89
  $region88: #{dense_net_encoder.3} parent=0 // pred_region
    _
  $region89: #{dense_net_encoder.3} parent=0 // pred_fallthru
    _
  // Predicated region
  $region90: #{dense_net_encoder.3} parent=0 // pred_check
    _
  $region91: #{dense_net_encoder.3} parent=0 // pred_check_branch
    %1982 = sbr.rel (0) target = $region93
  $region92: #{dense_net_encoder.3} parent=0 // pred_region
    _
  $region93: #{dense_net_encoder.3} parent=0 // pred_fallthru
    _
  // Predicated region
  $region94: #{dense_net_encoder.3} parent=0 // pred_check
    _
  $region95: #{dense_net_encoder.3} parent=0 // pred_check_branch
    %1984 = sbr.rel (0) target = $region97
  $region96: #{dense_net_encoder.3} parent=0 // pred_region
    _
  $region97: #{dense_net_encoder.3} parent=0 // pred_fallthru
    _

// kernel: dense_net_encoder.2
$region0: #{dense_net_encoder.2}
  #allocation0 [shape = 'u32[]', space=smem, size = 0x4, offset = 0x4, fixed_abs, tag = 'smem constant byte address 0x4 - core index']
  #allocation1 [shape = 'u32[72,128]{1,0:T(1,128)}', space=vmem, size = 0x9000, scoped, tag = 'internal scratch']
  #allocation2 [shape = 'f32[72,648]{1,0:T(8,128)}', space=vmem, size = 0x36000, scoped, tag = 'scratch operand']
  %s0 = inlined_call_operand.vmem [shape: f32[4,648], index: 0, kind: input, shape index: {}]
  %s1 = inlined_call_operand.vmem [shape: f32[1,648], index: 1, kind: input, shape index: {}]
  %s2 = inlined_call_operand.vmem [shape: bf16[8,36], index: 2, kind: input, shape index: {}]
  %s3 = inlined_call_operand.vmem [shape: f32[8,1], index: 3, kind: input, shape index: {}, may-alias: {3,6,9,12,15,18}]
  %s4 = inlined_call_operand.vmem [shape: f32[8,1], index: 4, kind: input, shape index: {}, may-alias: {4,7,10,13,16,19}]
  %s5 = inlined_call_operand.vmem [shape: bf16[8,72], index: 5, kind: input, shape index: {}]
  %s6 = inlined_call_operand.vmem [shape: f32[8,1], index: 6, kind: input, shape index: {}, may-alias: {3,6,9,12,15,18}]
  %s7 = inlined_call_operand.vmem [shape: f32[8,1], index: 7, kind: input, shape index: {}, may-alias: {4,7,10,13,16,19}]
  %s8 = inlined_call_operand.vmem [shape: bf16[8,16], index: 8, kind: input, shape index: {}]
  %s9 = inlined_call_operand.vmem [shape: f32[8,1], index: 9, kind: input, shape index: {}, may-alias: {3,6,9,12,15,18}]
  %s10 = inlined_call_operand.vmem [shape: f32[8,1], index: 10, kind: input, shape index: {}, may-alias: {4,7,10,13,16,19}]
  %s11 = inlined_call_operand.vmem [shape: bf16[8,72], index: 11, kind: input, shape index: {}]
  %s12 = inlined_call_operand.vmem [shape: f32[8,1], index: 12, kind: input, shape index: {}, may-alias: {3,6,9,12,15,18}]
  %s13 = inlined_call_operand.vmem [shape: f32[8,1], index: 13, kind: input, shape index: {}, may-alias: {4,7,10,13,16,19}]
  %s14 = inlined_call_operand.vmem [shape: bf16[8,24], index: 14, kind: input, shape index: {}]
  %s15 = inlined_call_operand.vmem [shape: f32[8,1], index: 15, kind: input, shape index: {}, may-alias: {3,6,9,12,15,18}]
  %s16 = inlined_call_operand.vmem [shape: f32[8,1], index: 16, kind: input, shape index: {}, may-alias: {4,7,10,13,16,19}]
  %s17 = inlined_call_operand.vmem [shape: bf16[8,72], index: 17, kind: input, shape index: {}]
  %s18 = inlined_call_operand.vmem [shape: f32[8,1], index: 18, kind: input, shape index: {}, may-alias: {3,6,9,12,15,18}]
  %s19 = inlined_call_operand.vmem [shape: f32[8,1], index: 19, kind: input, shape index: {}, may-alias: {4,7,10,13,16,19}]
  %s20 = inlined_call_operand.vmem [shape: bf16[12,16], index: 20, kind: input, shape index: {}]
  %s21 = inlined_call_operand.vmem [shape: f32[12,1], index: 21, kind: input, shape index: {}]
  %s22 = inlined_call_operand.vmem [shape: f32[12,1], index: 22, kind: input, shape index: {}]
  %s23 = inlined_call_operand.vmem [shape: f32[16,648], index: 23, kind: output, shape index: {0}]
  %s24 = inlined_call_operand.vmem [shape: f32[12,648], index: 24, kind: output, shape index: {1}]
  %25 = xla_tuple %s23, %s24
  %s26 = sld [smem:[#allocation0]]
  $region110: #{dense_net_encoder.2} parent=0
    _
  %s28 = ssub.s32 1, %s26
  %s29 = scalar_select 0, %s28, %s26
  // Predicated region
  $region2: #{dense_net_encoder.2} parent=0 // pred_check
    _
  $region3: #{dense_net_encoder.2} parent=0 // pred_check_branch
    %31 = sbr.rel (0) target = $region5
  $region4: #{dense_net_encoder.2} parent=0 // pred_region
    _
  $region5: #{dense_net_encoder.2} parent=0 // pred_fallthru
    _
  // Predicated region
  $region6: #{dense_net_encoder.2} parent=0 // pred_check
    _
  $region7: #{dense_net_encoder.2} parent=0 // pred_check_branch
    %33 = sbr.rel (0) target = $region9
  $region8: #{dense_net_encoder.2} parent=0 // pred_region
    _
  $region9: #{dense_net_encoder.2} parent=0 // pred_fallthru
    _
  // Predicated region
  $region10: #{dense_net_encoder.2} parent=0 // pred_check
    _
  $region11: #{dense_net_encoder.2} parent=0 // pred_check_branch
    %35 = sbr.rel (0) target = $region13
  $region12: #{dense_net_encoder.2} parent=0 // pred_region
    _
  $region13: #{dense_net_encoder.2} parent=0 // pred_fallthru
    _
  // Predicated region
  $region14: #{dense_net_encoder.2} parent=0 // pred_check
    _
  $region15: #{dense_net_encoder.2} parent=0 // pred_check_branch
    %37 = sbr.rel (0) target = $region17
  $region16: #{dense_net_encoder.2} parent=0 // pred_region
    _
  $region17: #{dense_net_encoder.2} parent=0 // pred_fallthru
    _
  // Predicated region
  $region18: #{dense_net_encoder.2} parent=0 // pred_check
    _
  $region19: #{dense_net_encoder.2} parent=0 // pred_check_branch
    %39 = sbr.rel (0) target = $region21
  $region20: #{dense_net_encoder.2} parent=0 // pred_region
    _
  $region21: #{dense_net_encoder.2} parent=0 // pred_fallthru
    _
  // Predicated region
  $region22: #{dense_net_encoder.2} parent=0 // pred_check
    _
  $region23: #{dense_net_encoder.2} parent=0 // pred_check_branch
    %41 = sbr.rel (0) target = $region25
  $region24: #{dense_net_encoder.2} parent=0 // pred_region
    _
  $region25: #{dense_net_encoder.2} parent=0 // pred_fallthru
    _
  // Predicated region
  $region26: #{dense_net_encoder.2} parent=0 // pred_check
    _
  $region27: #{dense_net_encoder.2} parent=0 // pred_check_branch
    %43 = sbr.rel (0) target = $region29
  $region28: #{dense_net_encoder.2} parent=0 // pred_region
    _
  $region29: #{dense_net_encoder.2} parent=0 // pred_fallthru
    _
  // Predicated region
  $region30: #{dense_net_encoder.2} parent=0 // pred_check
    _
  $region31: #{dense_net_encoder.2} parent=0 // pred_check_branch
    %45 = sbr.rel (0) target = $region33
  $region32: #{dense_net_encoder.2} parent=0 // pred_region
    _
  $region33: #{dense_net_encoder.2} parent=0 // pred_fallthru
    _
  // Predicated region
  $region34: #{dense_net_encoder.2} parent=0 // pred_check
    _
  $region35: #{dense_net_encoder.2} parent=0 // pred_check_branch
    %47 = sbr.rel (0) target = $region37
  $region36: #{dense_net_encoder.2} parent=0 // pred_region
    _
  $region37: #{dense_net_encoder.2} parent=0 // pred_fallthru
    _
  // Predicated region
  $region38: #{dense_net_encoder.2} parent=0 // pred_check
    _
  $region39: #{dense_net_encoder.2} parent=0 // pred_check_branch
    %49 = sbr.rel (0) target = $region41
  $region40: #{dense_net_encoder.2} parent=0 // pred_region
    _
  $region41: #{dense_net_encoder.2} parent=0 // pred_fallthru
    _
  // Predicated region
  $region42: #{dense_net_encoder.2} parent=0 // pred_check
    _
  $region43: #{dense_net_encoder.2} parent=0 // pred_check_branch
    %51 = sbr.rel (0) target = $region45
  $region44: #{dense_net_encoder.2} parent=0 // pred_region
    _
  $region45: #{dense_net_encoder.2} parent=0 // pred_fallthru
    _
  // Predicated region
  $region46: #{dense_net_encoder.2} parent=0 // pred_check
    _
  $region47: #{dense_net_encoder.2} parent=0 // pred_check_branch
    %53 = sbr.rel (0) target = $region49
  $region48: #{dense_net_encoder.2} parent=0 // pred_region
    _
  $region49: #{dense_net_encoder.2} parent=0 // pred_fallthru
    _
  // Predicated region
  $region50: #{dense_net_encoder.2} parent=0 // pred_check
    _
  $region51: #{dense_net_encoder.2} parent=0 // pred_check_branch
    %55 = sbr.rel (0) target = $region53
  $region52: #{dense_net_encoder.2} parent=0 // pred_region
    _
  $region53: #{dense_net_encoder.2} parent=0 // pred_fallthru
    _
  // Predicated region
  $region54: #{dense_net_encoder.2} parent=0 // pred_check
    _
  $region55: #{dense_net_encoder.2} parent=0 // pred_check_branch
    %57 = sbr.rel (0) target = $region57
  $region56: #{dense_net_encoder.2} parent=0 // pred_region
    _
  $region57: #{dense_net_encoder.2} parent=0 // pred_fallthru
    _
  // Predicated region
  $region58: #{dense_net_encoder.2} parent=0 // pred_check
    _
  $region59: #{dense_net_encoder.2} parent=0 // pred_check_branch
    %59 = sbr.rel (0) target = $region61
  $region60: #{dense_net_encoder.2} parent=0 // pred_region
    _
  $region61: #{dense_net_encoder.2} parent=0 // pred_fallthru
    _
  // Predicated region
  $region62: #{dense_net_encoder.2} parent=0 // pred_check
    _
  $region63: #{dense_net_encoder.2} parent=0 // pred_check_branch
    %61 = sbr.rel (0) target = $region65
  $region64: #{dense_net_encoder.2} parent=0 // pred_region
    _
  $region65: #{dense_net_encoder.2} parent=0 // pred_fallthru
    _
  // Predicated region
  $region66: #{dense_net_encoder.2} parent=0 // pred_check
    _
  $region67: #{dense_net_encoder.2} parent=0 // pred_check_branch
    %63 = sbr.rel (0) target = $region69
  $region68: #{dense_net_encoder.2} parent=0 // pred_region
    _
  $region69: #{dense_net_encoder.2} parent=0 // pred_fallthru
    _
  // Predicated region
  $region70: #{dense_net_encoder.2} parent=0 // pred_check
    _
  $region71: #{dense_net_encoder.2} parent=0 // pred_check_branch
    %65 = sbr.rel (0) target = $region73
  $region72: #{dense_net_encoder.2} parent=0 // pred_region
    _
  $region73: #{dense_net_encoder.2} parent=0 // pred_fallthru
    _
  // Predicated region
  $region74: #{dense_net_encoder.2} parent=0 // pred_check
    _
  $region75: #{dense_net_encoder.2} parent=0 // pred_check_branch
    %67 = sbr.rel (0) target = $region77
  $region76: #{dense_net_encoder.2} parent=0 // pred_region
    _
  $region77: #{dense_net_encoder.2} parent=0 // pred_fallthru
    _
  // Predicated region
  $region78: #{dense_net_encoder.2} parent=0 // pred_check
    _
  $region79: #{dense_net_encoder.2} parent=0 // pred_check_branch
    %69 = sbr.rel (0) target = $region81
  $region80: #{dense_net_encoder.2} parent=0 // pred_region
    _
  $region81: #{dense_net_encoder.2} parent=0 // pred_fallthru
    _
  // Predicated region
  $region82: #{dense_net_encoder.2} parent=0 // pred_check
    _
  $region83: #{dense_net_encoder.2} parent=0 // pred_check_branch
    %71 = sbr.rel (0) target = $region85
  $region84: #{dense_net_encoder.2} parent=0 // pred_region
    _
  $region85: #{dense_net_encoder.2} parent=0 // pred_fallthru
    _
  // Predicated region
  $region86: #{dense_net_encoder.2} parent=0 // pred_check
    _
  $region87: #{dense_net_encoder.2} parent=0 // pred_check_branch
    %73 = sbr.rel (0) target = $region89
  $region88: #{dense_net_encoder.2} parent=0 // pred_region
    _
  $region89: #{dense_net_encoder.2} parent=0 // pred_fallthru
    _
  // Predicated region
  $region90: #{dense_net_encoder.2} parent=0 // pred_check
    _
  $region91: #{dense_net_encoder.2} parent=0 // pred_check_branch
    %75 = sbr.rel (0) target = $region93
  $region92: #{dense_net_encoder.2} parent=0 // pred_region
    _
  $region93: #{dense_net_encoder.2} parent=0 // pred_fallthru
    _
  %v77 = vld [vmem:[%s1] sm:$0x3f]
  %vm78 = vcmask 154624
  %79 = vst.msk [vmem:[#allocation2] sm:$0xff] %vm78, 0.0
  %80 = vst.msk [vmem:[#allocation2 + $0x30] sm:$0xff] %vm78, 0.0
  %81 = vst.msk [vmem:[#allocation2 + $0x60] sm:$0xff] %vm78, 0.0
  %82 = vst.msk [vmem:[#allocation2 + $0x90] sm:$0xff] %vm78, 0.0
  %83 = vst.msk [vmem:[#allocation2 + $0xc0] sm:$0xff] %vm78, 0.0
  %84 = vst.msk [vmem:[#allocation2 + $0xf0] sm:$0xff] %vm78, 0.0
  %85 = vst.msk [vmem:[#allocation2 + $0x120] sm:$0xff] %vm78, 0.0
  %86 = vst.msk [vmem:[#allocation2 + $0x150] sm:$0xff] %vm78, 0.0
  %87 = vst.msk [vmem:[#allocation2 + $0x180] sm:$0xff] %vm78, 0.0
  %vm88 = vcmask 1048488
  %89 = vst.msk [vmem:[#allocation2 + $0x20] sm:$0xff] %vm88, 0.0
  %vm90 = vcmask 64512
  %91 = vst.msk [vmem:[#allocation2 + $0x28] sm:$0xff] %vm90, 0.0
  %92 = vst.msk [vmem:[#allocation2 + $0x50] sm:$0xff] %vm88, 0.0
  %93 = vst.msk [vmem:[#allocation2 + $0x58] sm:$0xff] %vm90, 0.0
  %94 = vst.msk [vmem:[#allocation2 + $0x80] sm:$0xff] %vm88, 0.0
  %95 = vst.msk [vmem:[#allocation2 + $0x88] sm:$0xff] %vm90, 0.0
  %96 = vst.msk [vmem:[#allocation2 + $0xb0] sm:$0xff] %vm88, 0.0
  %97 = vst.msk [vmem:[#allocation2 + $0xb8] sm:$0xff] %vm90, 0.0
  %98 = vst.msk [vmem:[#allocation2 + $0xe0] sm:$0xff] %vm88, 0.0
  %99 = vst.msk [vmem:[#allocation2 + $0xe8] sm:$0xff] %vm90, 0.0
  %100 = vst.msk [vmem:[#allocation2 + $0x110] sm:$0xff] %vm88, 0.0
  %101 = vst.msk [vmem:[#allocation2 + $0x118] sm:$0xff] %vm90, 0.0
  %102 = vst.msk [vmem:[#allocation2 + $0x140] sm:$0xff] %vm88, 0.0
  %103 = vst.msk [vmem:[#allocation2 + $0x148] sm:$0xff] %vm90, 0.0
  %104 = vst.msk [vmem:[#allocation2 + $0x170] sm:$0xff] %vm88, 0.0
  %105 = vst.msk [vmem:[#allocation2 + $0x178] sm:$0xff] %vm90, 0.0
  %106 = vst.msk [vmem:[#allocation2 + $0x1a0] sm:$0xff] %vm88, 0.0
  %107 = vst.msk [vmem:[#allocation2 + $0x1a8] sm:$0xff] %vm90, 0.0
  %v108 = vld [vmem:[%s0] sm:$0xff]
  %v109 = vld [vmem:[%s0 + $0x8] sm:$0xff]
  %v110 = vld [vmem:[%s0 + $0x10] sm:$0xff]
  %114 = vst [vmem:[#allocation1] ss:$2 sm:$0xff] %v108
  %s115 = scalar_lea.vmem [#allocation1], 16
  %116 = vst [vmem:[%s115] ss:$2 sm:$0xff] %v109
  %s117 = scalar_lea.vmem [#allocation1], 32
  %118 = vst [vmem:[%s117] ss:$2 sm:$0xff] %v110
  %v119 = vld.sshfl [vmem:[#allocation1] sm:$0xff pattern:$0x75316420]
  %v120 = vld.sshfl [vmem:[#allocation1 + $0x8] sm:$0xff pattern:$0x75316420]
  %v121 = vld.sshfl [vmem:[#allocation1 + $0x10] sm:$0xff pattern:$0x75316420]
  %v122 = vld.sshfl [vmem:[#allocation1 + $0x18] sm:$0xff pattern:$0x75316420]
  %v123 = vld.sshfl [vmem:[#allocation1 + $0x20] sm:$0xff pattern:$0x75316420]
  %124 = vrot.lane.b32.xlu0 %v119, 19
  %v125 = vpop.permute.xlu0 %124
  %126 = vrot.lane.b32.xlu0 %v120, 19
  %v127 = vpop.permute.xlu0 %126
  %128 = vrot.lane.b32.xlu0 %v121, 19
  %v129 = vpop.permute.xlu0 %128
  %130 = vrot.lane.b32.xlu0 %v122, 19
  %v131 = vpop.permute.xlu0 %130
  %132 = vrot.lane.b32.xlu0 %v123, 19
  %v133 = vpop.permute.xlu0 %132
  %v134 = vsel %vm78, %v125, %v127
  %v135 = vsel %vm78, %v127, %v129
  %v136 = vsel %vm78, %v129, %v131
  %v137 = vsel %vm78, %v131, %v133
  %vm144 = vcmask 1043608
  %145 = vst.msk [vmem:[#allocation2] sm:$0xf] %vm144, %v125
  %146 = vst [vmem:[#allocation2 + $0x8] sm:$0xf] %v134
  %147 = vst [vmem:[#allocation2 + $0x10] sm:$0xf] %v135
  %148 = vst [vmem:[#allocation2 + $0x18] sm:$0xf] %v136
  %149 = vst [vmem:[#allocation2 + $0x20] sm:$0xf] %v137
  %vm150 = vcmask 60416
  %151 = vst.msk [vmem:[#allocation2 + $0x28] sm:$0xf] %vm150, %v133
  %s152 = scalar_lea.vmem [#allocation1], 1
  %153 = vst [vmem:[%s152] ss:$2 sm:$0xff] %v108
  %s154 = scalar_lea.vmem [#allocation1], 17
  %155 = vst [vmem:[%s154] ss:$2 sm:$0xff] %v109
  %s156 = scalar_lea.vmem [#allocation1], 33
  %157 = vst [vmem:[%s156] ss:$2 sm:$0xff] %v110
  %v158 = vld.sshfl [vmem:[#allocation1] sm:$0xff pattern:$0x75316420]
  %v159 = vld.sshfl [vmem:[#allocation1 + $0x8] sm:$0xff pattern:$0x75316420]
  %v160 = vld.sshfl [vmem:[#allocation1 + $0x10] sm:$0xff pattern:$0x75316420]
  %v161 = vld.sshfl [vmem:[#allocation1 + $0x18] sm:$0xff pattern:$0x75316420]
  %v162 = vld.sshfl [vmem:[#allocation1 + $0x20] sm:$0xff pattern:$0x75316420]
  %163 = vrot.lane.b32.xlu0 %v158, 18
  %v164 = vpop.permute.xlu0 %163
  %165 = vrot.lane.b32.xlu0 %v159, 18
  %v166 = vpop.permute.xlu0 %165
  %167 = vrot.lane.b32.xlu0 %v160, 18
  %v168 = vpop.permute.xlu0 %167
  %169 = vrot.lane.b32.xlu0 %v161, 18
  %v170 = vpop.permute.xlu0 %169
  %171 = vrot.lane.b32.xlu0 %v162, 18
  %v172 = vpop.permute.xlu0 %171
  %vm173 = vcmask 146432
  %v174 = vsel %vm173, %v164, %v166
  %v175 = vsel %vm173, %v166, %v168
  %v176 = vsel %vm173, %v168, %v170
  %v177 = vsel %vm173, %v170, %v172
  %vm184 = vcmask 1047700
  %185 = vst.msk [vmem:[#allocation2] sm:$0xf0] %vm184, %v164
  %186 = vst [vmem:[#allocation2 + $0x8] sm:$0xf0] %v174
  %187 = vst [vmem:[#allocation2 + $0x10] sm:$0xf0] %v175
  %188 = vst [vmem:[#allocation2 + $0x18] sm:$0xf0] %v176
  %189 = vst [vmem:[#allocation2 + $0x20] sm:$0xf0] %v177
  %vm190 = vcmask 64516
  %191 = vst.msk [vmem:[#allocation2 + $0x28] sm:$0xf0] %vm190, %v172
  %192 = vst [vmem:[#allocation1] ss:$2 sm:$0xff] %v108
  %s193 = scalar_lea.vmem [#allocation1], 16
  %194 = vst [vmem:[%s193] ss:$2 sm:$0xff] %v109
  %s195 = scalar_lea.vmem [#allocation1], 32
  %196 = vst [vmem:[%s195] ss:$2 sm:$0xff] %v110
  %v197 = vld.sshfl [vmem:[#allocation1] sm:$0xff pattern:$0x75316420]
  %v198 = vld.sshfl [vmem:[#allocation1 + $0x8] sm:$0xff pattern:$0x75316420]
  %v199 = vld.sshfl [vmem:[#allocation1 + $0x10] sm:$0xff pattern:$0x75316420]
  %v200 = vld.sshfl [vmem:[#allocation1 + $0x18] sm:$0xff pattern:$0x75316420]
  %v201 = vld.sshfl [vmem:[#allocation1 + $0x20] sm:$0xff pattern:$0x75316420]
  %202 = vrot.lane.b32.xlu0 %v197, 17
  %v203 = vpop.permute.xlu0 %202
  %204 = vrot.lane.b32.xlu0 %v198, 17
  %v205 = vpop.permute.xlu0 %204
  %206 = vrot.lane.b32.xlu0 %v199, 17
  %v207 = vpop.permute.xlu0 %206
  %208 = vrot.lane.b32.xlu0 %v200, 17
  %v209 = vpop.permute.xlu0 %208
  %210 = vrot.lane.b32.xlu0 %v201, 17
  %v211 = vpop.permute.xlu0 %210
  %vm212 = vcmask 138240
  %v213 = vsel %vm212, %v203, %v205
  %v214 = vsel %vm212, %v205, %v207
  %v215 = vsel %vm212, %v207, %v209
  %v216 = vsel %vm212, %v209, %v211
  %vm223 = vcmask 1043592
  %224 = vst.msk [vmem:[#allocation2 + $0x30] sm:$0xf] %vm223, %v203
  %225 = vst [vmem:[#allocation2 + $0x38] sm:$0xf] %v213
  %226 = vst [vmem:[#allocation2 + $0x40] sm:$0xf] %v214
  %227 = vst [vmem:[#allocation2 + $0x48] sm:$0xf] %v215
  %228 = vst [vmem:[#allocation2 + $0x50] sm:$0xf] %v216
  %229 = vst.msk [vmem:[#allocation2 + $0x58] sm:$0xf] %vm150, %v211
  %s230 = scalar_lea.vmem [#allocation1], 1
  %231 = vst [vmem:[%s230] ss:$2 sm:$0xff] %v108
  %s232 = scalar_lea.vmem [#allocation1], 17
  %233 = vst [vmem:[%s232] ss:$2 sm:$0xff] %v109
  %s234 = scalar_lea.vmem [#allocation1], 33
  %235 = vst [vmem:[%s234] ss:$2 sm:$0xff] %v110
  %v236 = vld.sshfl [vmem:[#allocation1] sm:$0xff pattern:$0x75316420]
  %v237 = vld.sshfl [vmem:[#allocation1 + $0x8] sm:$0xff pattern:$0x75316420]
  %v238 = vld.sshfl [vmem:[#allocation1 + $0x10] sm:$0xff pattern:$0x75316420]
  %v239 = vld.sshfl [vmem:[#allocation1 + $0x18] sm:$0xff pattern:$0x75316420]
  %v240 = vld.sshfl [vmem:[#allocation1 + $0x20] sm:$0xff pattern:$0x75316420]
  %v241 = vld.sshfl [vmem:[#allocation1 + $0x28] sm:$0xff pattern:$0x75316420]
  %242 = vrot.lane.b32.xlu0 %v236, 1
  %v243 = vpop.permute.xlu0 %242
  %244 = vrot.lane.b32.xlu0 %v237, 1
  %v245 = vpop.permute.xlu0 %244
  %246 = vrot.lane.b32.xlu0 %v238, 1
  %v247 = vpop.permute.xlu0 %246
  %248 = vrot.lane.b32.xlu0 %v239, 1
  %v249 = vpop.permute.xlu0 %248
  %250 = vrot.lane.b32.xlu0 %v240, 1
  %v251 = vpop.permute.xlu0 %250
  %252 = vrot.lane.b32.xlu0 %v241, 1
  %v253 = vpop.permute.xlu0 %252
  %vm254 = vcmask 7168
  %v255 = vsel %vm254, %v243, %v245
  %v256 = vsel %vm254, %v245, %v247
  %v257 = vsel %vm254, %v247, %v249
  %v258 = vsel %vm254, %v249, %v251
  %v259 = vsel %vm254, %v251, %v253
  %vm266 = vcmask 1047564
  %267 = vst.msk [vmem:[#allocation2 + $0x30] sm:$0xf0] %vm266, %v243
  %268 = vst [vmem:[#allocation2 + $0x38] sm:$0xf0] %v255
  %269 = vst [vmem:[#allocation2 + $0x40] sm:$0xf0] %v256
  %270 = vst [vmem:[#allocation2 + $0x48] sm:$0xf0] %v257
  %271 = vst [vmem:[#allocation2 + $0x50] sm:$0xf0] %v258
  %272 = vst.msk [vmem:[#allocation2 + $0x58] sm:$0xf0] %vm190, %v259
  %273 = vst [vmem:[#allocation1] ss:$2 sm:$0xff] %v108
  %s274 = scalar_lea.vmem [#allocation1], 16
  %275 = vst [vmem:[%s274] ss:$2 sm:$0xff] %v109
  %s276 = scalar_lea.vmem [#allocation1], 32
  %277 = vst [vmem:[%s276] ss:$2 sm:$0xff] %v110
  %v278 = vld.sshfl [vmem:[#allocation1] sm:$0xff pattern:$0x75316420]
  %v279 = vld.sshfl [vmem:[#allocation1 + $0x8] sm:$0xff pattern:$0x75316420]
  %v280 = vld.sshfl [vmem:[#allocation1 + $0x10] sm:$0xff pattern:$0x75316420]
  %v281 = vld.sshfl [vmem:[#allocation1 + $0x18] sm:$0xff pattern:$0x75316420]
  %v282 = vld.sshfl [vmem:[#allocation1 + $0x20] sm:$0xff pattern:$0x75316420]
  %v283 = vld.sshfl [vmem:[#allocation1 + $0x28] sm:$0xff pattern:$0x75316420]
  %290 = vst [vmem:[#allocation2 + $0x60] sm:$0xf] %v278
  %291 = vst [vmem:[#allocation2 + $0x68] sm:$0xf] %v279
  %292 = vst [vmem:[#allocation2 + $0x70] sm:$0xf] %v280
  %293 = vst [vmem:[#allocation2 + $0x78] sm:$0xf] %v281
  %294 = vst [vmem:[#allocation2 + $0x80] sm:$0xf] %v282
  %295 = vst.msk [vmem:[#allocation2 + $0x88] sm:$0xf] %vm150, %v283
  %s296 = scalar_lea.vmem [#allocation1], 1
  %297 = vst [vmem:[%s296] ss:$2 sm:$0xff] %v108
  %s298 = scalar_lea.vmem [#allocation1], 17
  %299 = vst [vmem:[%s298] ss:$2 sm:$0xff] %v109
  %s300 = scalar_lea.vmem [#allocation1], 33
  %301 = vst [vmem:[%s300] ss:$2 sm:$0xff] %v110
  %v302 = vld.sshfl [vmem:[#allocation1] sm:$0xff pattern:$0x75316420]
  %v303 = vld.sshfl [vmem:[#allocation1 + $0x8] sm:$0xff pattern:$0x75316420]
  %v304 = vld.sshfl [vmem:[#allocation1 + $0x10] sm:$0xff pattern:$0x75316420]
  %v305 = vld.sshfl [vmem:[#allocation1 + $0x18] sm:$0xff pattern:$0x75316420]
  %v306 = vld.sshfl [vmem:[#allocation1 + $0x20] sm:$0xff pattern:$0x75316420]
  %v307 = vld.sshfl [vmem:[#allocation1 + $0x28] sm:$0xff pattern:$0x75316420]
  %308 = vrot.lane.b32.xlu0 %v302, 127
  %v309 = vpop.permute.xlu0 %308
  %310 = vrot.lane.b32.xlu0 %v303, 127
  %v311 = vpop.permute.xlu0 %310
  %312 = vrot.lane.b32.xlu0 %v304, 127
  %v313 = vpop.permute.xlu0 %312
  %314 = vrot.lane.b32.xlu0 %v305, 127
  %v315 = vpop.permute.xlu0 %314
  %316 = vrot.lane.b32.xlu0 %v306, 127
  %v317 = vpop.permute.xlu0 %316
  %318 = vrot.lane.b32.xlu0 %v307, 127
  %v319 = vpop.permute.xlu0 %318
  %vm320 = vcmask 1039360
  %v321 = vsel %vm320, %v309, %v311
  %v322 = vsel %vm320, %v311, %v313
  %v323 = vsel %vm320, %v313, %v315
  %v324 = vsel %vm320, %v315, %v317
  %v325 = vsel %vm320, %v317, %v319
  %332 = vst [vmem:[#allocation2 + $0x60] sm:$0xf0] %v321
  %333 = vst [vmem:[#allocation2 + $0x68] sm:$0xf0] %v322
  %334 = vst [vmem:[#allocation2 + $0x70] sm:$0xf0] %v323
  %335 = vst [vmem:[#allocation2 + $0x78] sm:$0xf0] %v324
  %336 = vst [vmem:[#allocation2 + $0x80] sm:$0xf0] %v325
  %vm337 = vcmask 56324
  %338 = vst.msk [vmem:[#allocation2 + $0x88] sm:$0xf0] %vm337, %v319
  %339 = vst [vmem:[#allocation1] ss:$2 sm:$0xff] %v108
  %s340 = scalar_lea.vmem [#allocation1], 16
  %341 = vst [vmem:[%s340] ss:$2 sm:$0xff] %v109
  %s342 = scalar_lea.vmem [#allocation1], 32
  %343 = vst [vmem:[%s342] ss:$2 sm:$0xff] %v110
  %v344 = vld.sshfl [vmem:[#allocation1] sm:$0xff pattern:$0x75316420]
  %v345 = vld.sshfl [vmem:[#allocation1 + $0x8] sm:$0xff pattern:$0x75316420]
  %v346 = vld.sshfl [vmem:[#allocation1 + $0x10] sm:$0xff pattern:$0x75316420]
  %v347 = vld.sshfl [vmem:[#allocation1 + $0x18] sm:$0xff pattern:$0x75316420]
  %v348 = vld.sshfl [vmem:[#allocation1 + $0x20] sm:$0xff pattern:$0x75316420]
  %v349 = vld.sshfl [vmem:[#allocation1 + $0x28] sm:$0xff pattern:$0x75316420]
  %350 = vrot.lane.b32.xlu0 %v344, 111
  %v351 = vpop.permute.xlu0 %350
  %352 = vrot.lane.b32.xlu0 %v345, 111
  %v353 = vpop.permute.xlu0 %352
  %354 = vrot.lane.b32.xlu0 %v346, 111
  %v355 = vpop.permute.xlu0 %354
  %356 = vrot.lane.b32.xlu0 %v347, 111
  %v357 = vpop.permute.xlu0 %356
  %358 = vrot.lane.b32.xlu0 %v348, 111
  %v359 = vpop.permute.xlu0 %358
  %360 = vrot.lane.b32.xlu0 %v349, 111
  %v361 = vpop.permute.xlu0 %360
  %vm362 = vcmask 908288
  %v363 = vsel %vm362, %v351, %v353
  %v364 = vsel %vm362, %v353, %v355
  %v365 = vsel %vm362, %v355, %v357
  %v366 = vsel %vm362, %v357, %v359
  %v367 = vsel %vm362, %v359, %v361
  %373 = vst [vmem:[#allocation2 + $0x90] sm:$0xf] %v363
  %374 = vst [vmem:[#allocation2 + $0x98] sm:$0xf] %v364
  %375 = vst [vmem:[#allocation2 + $0xa0] sm:$0xf] %v365
  %376 = vst [vmem:[#allocation2 + $0xa8] sm:$0xf] %v366
  %vm377 = vcmask 969728
  %378 = vst.msk [vmem:[#allocation2 + $0xb0] sm:$0xf] %vm377, %v367
  %s379 = scalar_lea.vmem [#allocation1], 1
  %380 = vst [vmem:[%s379] ss:$2 sm:$0xff] %v108
  %s381 = scalar_lea.vmem [#allocation1], 17
  %382 = vst [vmem:[%s381] ss:$2 sm:$0xff] %v109
  %s383 = scalar_lea.vmem [#allocation1], 33
  %384 = vst [vmem:[%s383] ss:$2 sm:$0xff] %v110
  %v385 = vld.sshfl [vmem:[#allocation1] sm:$0xff pattern:$0x75316420]
  %v386 = vld.sshfl [vmem:[#allocation1 + $0x8] sm:$0xff pattern:$0x75316420]
  %v387 = vld.sshfl [vmem:[#allocation1 + $0x10] sm:$0xff pattern:$0x75316420]
  %v388 = vld.sshfl [vmem:[#allocation1 + $0x18] sm:$0xff pattern:$0x75316420]
  %v389 = vld.sshfl [vmem:[#allocation1 + $0x20] sm:$0xff pattern:$0x75316420]
  %v390 = vld.sshfl [vmem:[#allocation1 + $0x28] sm:$0xff pattern:$0x75316420]
  %391 = vrot.lane.b32.xlu0 %v385, 110
  %v392 = vpop.permute.xlu0 %391
  %393 = vrot.lane.b32.xlu0 %v386, 110
  %v394 = vpop.permute.xlu0 %393
  %395 = vrot.lane.b32.xlu0 %v387, 110
  %v396 = vpop.permute.xlu0 %395
  %397 = vrot.lane.b32.xlu0 %v388, 110
  %v398 = vpop.permute.xlu0 %397
  %399 = vrot.lane.b32.xlu0 %v389, 110
  %v400 = vpop.permute.xlu0 %399
  %401 = vrot.lane.b32.xlu0 %v390, 110
  %v402 = vpop.permute.xlu0 %401
  %vm403 = vcmask 900096
  %v404 = vsel %vm403, %v392, %v394
  %v405 = vsel %vm403, %v394, %v396
  %v406 = vsel %vm403, %v396, %v398
  %v407 = vsel %vm403, %v398, %v400
  %v408 = vsel %vm403, %v400, %v402
  %414 = vst [vmem:[#allocation2 + $0x90] sm:$0xf0] %v404
  %415 = vst [vmem:[#allocation2 + $0x98] sm:$0xf0] %v405
  %416 = vst [vmem:[#allocation2 + $0xa0] sm:$0xf0] %v406
  %417 = vst [vmem:[#allocation2 + $0xa8] sm:$0xf0] %v407
  %vm418 = vcmask 965636
  %419 = vst.msk [vmem:[#allocation2 + $0xb0] sm:$0xf0] %vm418, %v408
  %420 = vst [vmem:[#allocation1] ss:$2 sm:$0xff] %v108
  %s421 = scalar_lea.vmem [#allocation1], 16
  %422 = vst [vmem:[%s421] ss:$2 sm:$0xff] %v109
  %s423 = scalar_lea.vmem [#allocation1], 32
  %424 = vst [vmem:[%s423] ss:$2 sm:$0xff] %v110
  %v425 = vld.sshfl [vmem:[#allocation1] sm:$0xff pattern:$0x75316420]
  %v426 = vld.sshfl [vmem:[#allocation1 + $0x8] sm:$0xff pattern:$0x75316420]
  %v427 = vld.sshfl [vmem:[#allocation1 + $0x10] sm:$0xff pattern:$0x75316420]
  %v428 = vld.sshfl [vmem:[#allocation1 + $0x18] sm:$0xff pattern:$0x75316420]
  %v429 = vld.sshfl [vmem:[#allocation1 + $0x20] sm:$0xff pattern:$0x75316420]
  %v430 = vld.sshfl [vmem:[#allocation1 + $0x28] sm:$0xff pattern:$0x75316420]
  %431 = vrot.lane.b32.xlu0 %v425, 109
  %v432 = vpop.permute.xlu0 %431
  %433 = vrot.lane.b32.xlu0 %v426, 109
  %v434 = vpop.permute.xlu0 %433
  %435 = vrot.lane.b32.xlu0 %v427, 109
  %v436 = vpop.permute.xlu0 %435
  %437 = vrot.lane.b32.xlu0 %v428, 109
  %v438 = vpop.permute.xlu0 %437
  %439 = vrot.lane.b32.xlu0 %v429, 109
  %v440 = vpop.permute.xlu0 %439
  %441 = vrot.lane.b32.xlu0 %v430, 109
  %v442 = vpop.permute.xlu0 %441
  %vm443 = vcmask 891904
  %v444 = vsel %vm443, %v432, %v434
  %v445 = vsel %vm443, %v434, %v436
  %v446 = vsel %vm443, %v436, %v438
  %v447 = vsel %vm443, %v438, %v440
  %v448 = vsel %vm443, %v440, %v442
  %454 = vst [vmem:[#allocation2 + $0xc0] sm:$0xf] %v444
  %455 = vst [vmem:[#allocation2 + $0xc8] sm:$0xf] %v445
  %456 = vst [vmem:[#allocation2 + $0xd0] sm:$0xf] %v446
  %457 = vst [vmem:[#allocation2 + $0xd8] sm:$0xf] %v447
  %vm458 = vcmask 953344
  %459 = vst.msk [vmem:[#allocation2 + $0xe0] sm:$0xf] %vm458, %v448
  %v460 = vld [vmem:[#allocation2] sm:$0xff]
  %v461 = vld [vmem:[#allocation2 + $0x8] sm:$0xff]
  %v462 = vld [vmem:[#allocation2 + $0x10] sm:$0xff]
  %v463 = vld [vmem:[#allocation2 + $0x18] sm:$0xff]
  %v464 = vld [vmem:[#allocation2 + $0x20] sm:$0xff]
  %v465 = vld [vmem:[#allocation2 + $0x28] sm:$0xff]
  %v466 = vld [vmem:[#allocation2 + $0x30] sm:$0xff]
  %v467 = vld [vmem:[#allocation2 + $0x38] sm:$0xff]
  %v468 = vld [vmem:[#allocation2 + $0x40] sm:$0xff]
  %v469 = vld [vmem:[#allocation2 + $0x48] sm:$0xff]
  %v470 = vld [vmem:[#allocation2 + $0x50] sm:$0xff]
  %v471 = vld [vmem:[#allocation2 + $0x58] sm:$0xff]
  %v472 = vld [vmem:[#allocation2 + $0x60] sm:$0xff]
  %v473 = vld [vmem:[#allocation2 + $0x68] sm:$0xff]
  %v474 = vld [vmem:[#allocation2 + $0x70] sm:$0xff]
  %v475 = vld [vmem:[#allocation2 + $0x78] sm:$0xff]
  %v476 = vld [vmem:[#allocation2 + $0x80] sm:$0xff]
  %v477 = vld [vmem:[#allocation2 + $0x88] sm:$0xff]
  %v478 = vld [vmem:[#allocation2 + $0x90] sm:$0xff]
  %v479 = vld [vmem:[#allocation2 + $0x98] sm:$0xff]
  %v480 = vld [vmem:[#allocation2 + $0xa0] sm:$0xff]
  %v481 = vld [vmem:[#allocation2 + $0xa8] sm:$0xff]
  %v482 = vld [vmem:[#allocation2 + $0xb0] sm:$0xff]
  %v483 = vld [vmem:[#allocation2 + $0xb8] sm:$0xff]
  %v484 = vld [vmem:[#allocation2 + $0xc0] sm:$0xf]
  %v485 = vld [vmem:[#allocation2 + $0xc8] sm:$0xf]
  %v486 = vld [vmem:[#allocation2 + $0xd0] sm:$0xf]
  %v487 = vld [vmem:[#allocation2 + $0xd8] sm:$0xf]
  %v488 = vld [vmem:[#allocation2 + $0xe0] sm:$0xf]
  %v489 = vld [vmem:[#allocation2 + $0xe8] sm:$0xf]
  %v490 = vpack.c.bf16 %v466, %v460
  %v491 = vpack.c.bf16 %v467, %v461
  %v492 = vpack.c.bf16 %v468, %v462
  %v493 = vpack.c.bf16 %v469, %v463
  %v494 = vpack.c.bf16 %v470, %v464
  %v495 = vpack.c.bf16 %v471, %v465
  %v496 = vpack.c.bf16 %v478, %v472
  %v497 = vpack.c.bf16 %v479, %v473
  %v498 = vpack.c.bf16 %v480, %v474
  %v499 = vpack.c.bf16 %v481, %v475
  %v500 = vpack.c.bf16 %v482, %v476
  %v501 = vpack.c.bf16 %v483, %v477
  %v502 = vpack.c.bf16 %v484, %v484
  %v503 = vpack.c.bf16 %v485, %v485
  %v504 = vpack.c.bf16 %v486, %v486
  %v505 = vpack.c.bf16 %v487, %v487
  %v506 = vpack.c.bf16 %v488, %v488
  %v507 = vpack.c.bf16 %v489, %v489
  %v508 = vld [vmem:[%s2] sm:$0xf]
  %vm509 = vcmask 293888
  %v511 = vsel %vm509, %v508, 0
  %vm513 = vcmask 1041408
  %v515 = vsel %vm513, %v502, 0
  %v518 = vsel %vm513, %v503, 0
  %v521 = vsel %vm513, %v504, 0
  %v524 = vsel %vm513, %v505, 0
  %v527 = vsel %vm513, %v506, 0
  %v530 = vsel %vm513, %v507, 0
  %532 = vmatpush.bf16.msra.mxu0 0
  %533 = vmatpush.bf16.msra.mxu0 0
  %534 = vmatpush.bf16.msra.mxu0 0
  %535 = vmatpush.bf16.msra.mxu0 0
  %536 = vmatpush.bf16.msra.mxu0 0
  %537 = vmatpush.bf16.msra.mxu0 %v515
  %538 = vmatpush.bf16.msra.mxu0 %v496
  %539 = vmatpush.bf16.msra.mxu0 %v490
  %540 = vmatmul.bf16.gmra.mxu0 %v511
  %v541 = vpop.f32.mrf.mxu0
  %v542 = vadd.f32 0.0, %v541
  %v543 = vpop.f32.mrf.mxu0
  %544 = vdwg.mxu0
  %545 = vmatpush.bf16.msra.mxu0 0
  %546 = vmatpush.bf16.msra.mxu0 0
  %547 = vmatpush.bf16.msra.mxu0 0
  %548 = vmatpush.bf16.msra.mxu0 0
  %549 = vmatpush.bf16.msra.mxu0 0
  %550 = vmatpush.bf16.msra.mxu0 %v518
  %551 = vmatpush.bf16.msra.mxu0 %v497
  %552 = vmatpush.bf16.msra.mxu0 %v491
  %553 = vmatmul.bf16.gmra.mxu0 %v511
  %v554 = vpop.f32.mrf.mxu0
  %v555 = vadd.f32 0.0, %v554
  %v556 = vpop.f32.mrf.mxu0
  %557 = vdwg.mxu0
  %558 = vmatpush.bf16.msra.mxu0 0
  %559 = vmatpush.bf16.msra.mxu0 0
  %560 = vmatpush.bf16.msra.mxu0 0
  %561 = vmatpush.bf16.msra.mxu0 0
  %562 = vmatpush.bf16.msra.mxu0 0
  %563 = vmatpush.bf16.msra.mxu0 %v521
  %564 = vmatpush.bf16.msra.mxu0 %v498
  %565 = vmatpush.bf16.msra.mxu0 %v492
  %566 = vmatmul.bf16.gmra.mxu0 %v511
  %v567 = vpop.f32.mrf.mxu0
  %v568 = vadd.f32 0.0, %v567
  %v569 = vpop.f32.mrf.mxu0
  %570 = vdwg.mxu0
  %571 = vmatpush.bf16.msra.mxu0 0
  %572 = vmatpush.bf16.msra.mxu0 0
  %573 = vmatpush.bf16.msra.mxu0 0
  %574 = vmatpush.bf16.msra.mxu0 0
  %575 = vmatpush.bf16.msra.mxu0 0
  %576 = vmatpush.bf16.msra.mxu0 %v524
  %577 = vmatpush.bf16.msra.mxu0 %v499
  %578 = vmatpush.bf16.msra.mxu0 %v493
  %579 = vmatmul.bf16.gmra.mxu0 %v511
  %v580 = vpop.f32.mrf.mxu0
  %v581 = vadd.f32 0.0, %v580
  %v582 = vpop.f32.mrf.mxu0
  %583 = vdwg.mxu0
  %584 = vmatpush.bf16.msra.mxu0 0
  %585 = vmatpush.bf16.msra.mxu0 0
  %586 = vmatpush.bf16.msra.mxu0 0
  %587 = vmatpush.bf16.msra.mxu0 0
  %588 = vmatpush.bf16.msra.mxu0 0
  %589 = vmatpush.bf16.msra.mxu0 %v527
  %590 = vmatpush.bf16.msra.mxu0 %v500
  %591 = vmatpush.bf16.msra.mxu0 %v494
  %592 = vmatmul.bf16.gmra.mxu0 %v511
  %v593 = vpop.f32.mrf.mxu0
  %v594 = vadd.f32 0.0, %v593
  %v595 = vpop.f32.mrf.mxu0
  %596 = vdwg.mxu0
  %597 = vmatpush.bf16.msra.mxu0 0
  %598 = vmatpush.bf16.msra.mxu0 0
  %599 = vmatpush.bf16.msra.mxu0 0
  %600 = vmatpush.bf16.msra.mxu0 0
  %601 = vmatpush.bf16.msra.mxu0 0
  %602 = vmatpush.bf16.msra.mxu0 %v530
  %603 = vmatpush.bf16.msra.mxu0 %v501
  %604 = vmatpush.bf16.msra.mxu0 %v495
  %605 = vmatmul.bf16.gmra.mxu0 %v511
  %v606 = vpop.f32.mrf.mxu0
  %v607 = vadd.f32 0.0, %v606
  %v608 = vpop.f32.mrf.mxu0
  %609 = vdwg.mxu0
  %v611 = vperm.slane %v77, 0
  %v612 = vperm.slane %v77, 1
  %v613 = vperm.slane %v77, 2
  %v614 = vperm.slane %v77, 3
  %v615 = vperm.slane %v77, 4
  %v616 = vperm.slane %v77, 5
  %v623 = vmul.f32 %v542, %v611
  %v624 = vmul.f32 %v555, %v612
  %v625 = vmul.f32 %v568, %v613
  %v626 = vmul.f32 %v581, %v614
  %v627 = vmul.f32 %v594, %v615
  %v628 = vmul.f32 %v607, %v616
  %v629 = vadd.f32 %v623, %v624
  %v630 = vadd.f32 %v629, %v625
  %v631 = vadd.f32 %v630, %v626
  %v632 = vadd.f32 %v631, %v627
  %v633 = vsel %vm90, %v628, 0.0
  %v634 = vadd.f32 %v632, %v633
  %635 = vadd.xlane.f32.xlu0 %v634
  %v636 = vpop.xlane.xlu0 %635
  %v637 = vmul.f32 %v636, 0.001953125
  %v638 = vsub.f32 %v542, %v637
  %v639 = vsub.f32 %v555, %v637
  %v640 = vsub.f32 %v568, %v637
  %v641 = vsub.f32 %v581, %v637
  %v642 = vsub.f32 %v594, %v637
  %v643 = vsub.f32 %v607, %v637
  %v644 = vmul.f32 %v638, %v611
  %v645 = vmul.f32 %v639, %v612
  %v646 = vmul.f32 %v640, %v613
  %v647 = vmul.f32 %v641, %v614
  %v648 = vmul.f32 %v642, %v615
  %v649 = vmul.f32 %v643, %v616
  %v650 = vmul.f32 %v644, %v644
  %v651 = vmul.f32 %v645, %v645
  %v652 = vmul.f32 %v646, %v646
  %v653 = vmul.f32 %v647, %v647
  %v654 = vmul.f32 %v648, %v648
  %v655 = vmul.f32 %v649, %v649
  %v656 = vadd.f32 %v650, %v651
  %v657 = vadd.f32 %v656, %v652
  %v658 = vadd.f32 %v657, %v653
  %v659 = vadd.f32 %v658, %v654
  %v660 = vsel %vm90, %v655, 0.0
  %v661 = vadd.f32 %v659, %v660
  %662 = vadd.xlane.f32.xlu0 %v661
  %v663 = vpop.xlane.xlu0 %662
  %v664 = vmul.f32 %v663, 0.001953125
  %v665 = vld [vmem:[%s3] sm:$0xff]
  %v666 = vadd.f32 %v664, 1e-05
  %v667 = vrsqrt.pop %v666
  %v668 = vmul.f32 %v667, %v666
  %v669 = vmul.f32 %v668, %v667
  %v670 = vmul.f32 0.5, %v669
  %v671 = vsub.f32 1.5, %v670
  %v672 = vmul.f32 %v667, %v671
  %vm673 = vweird.f32 %v666
  %vm674 = vweird.f32 %v667
  %vm675 = vmor %vm673, %vm674
  %v676 = vsel %vm675, %v667, %v672
  %v677 = vmul.f32 %v665, %v676
  %v678 = vld [vmem:[%s4] sm:$0xff]
  %v679 = vmul.f32 %v637, %v677
  %v680 = vsub.f32 %v678, %v679
  %682 = vset.pattern.permute.xlu0 0
  %683 = vperm.xlu0 %682, %v677
  %v684 = vpop.permute.xlu0 %683
  %v686 = vmul.f32 %v542, %v684
  %v687 = vmul.f32 %v555, %v684
  %v688 = vmul.f32 %v568, %v684
  %v689 = vmul.f32 %v581, %v684
  %v690 = vmul.f32 %v594, %v684
  %v691 = vmul.f32 %v607, %v684
  %693 = vset.pattern.permute.xlu0 0
  %694 = vperm.xlu0 %693, %v680
  %v695 = vpop.permute.xlu0 %694
  %v697 = vadd.f32 %v686, %v695
  %v698 = vadd.f32 %v687, %v695
  %v699 = vadd.f32 %v688, %v695
  %v700 = vadd.f32 %v689, %v695
  %v701 = vadd.f32 %v690, %v695
  %v702 = vadd.f32 %v691, %v695
  %vm703 = vcmp.ge.f32.partialorder %v697, 0.0
  %vm704 = vcmp.ge.f32.partialorder %v698, 0.0
  %vm705 = vcmp.ge.f32.partialorder %v699, 0.0
  %vm706 = vcmp.ge.f32.partialorder %v700, 0.0
  %vm707 = vcmp.ge.f32.partialorder %v701, 0.0
  %vm708 = vcmp.ge.f32.partialorder %v702, 0.0
  %v709 = vmul.f32 %v697, 0.01
  %v710 = vmul.f32 %v698, 0.01
  %v711 = vmul.f32 %v699, 0.01
  %v712 = vmul.f32 %v700, 0.01
  %v713 = vmul.f32 %v701, 0.01
  %v714 = vmul.f32 %v702, 0.01
  %v715 = vsel %vm703, %v697, %v709
  %v716 = vsel %vm704, %v698, %v710
  %v717 = vsel %vm705, %v699, %v711
  %v718 = vsel %vm706, %v700, %v712
  %v719 = vsel %vm707, %v701, %v713
  %v720 = vsel %vm708, %v702, %v714
  %v721 = vmul.f32 %v715, %v611
  %v722 = vmul.f32 %v716, %v612
  %v723 = vmul.f32 %v717, %v613
  %v724 = vmul.f32 %v718, %v614
  %v725 = vmul.f32 %v719, %v615
  %v726 = vmul.f32 %v720, %v616
  %732 = vrot.lane.b32.xlu0 %v721, 19
  %v733 = vpop.permute.xlu0 %732
  %734 = vrot.lane.b32.xlu0 %v722, 19
  %v735 = vpop.permute.xlu0 %734
  %736 = vrot.lane.b32.xlu0 %v723, 19
  %v737 = vpop.permute.xlu0 %736
  %738 = vrot.lane.b32.xlu0 %v724, 19
  %v739 = vpop.permute.xlu0 %738
  %740 = vrot.lane.b32.xlu0 %v725, 19
  %v741 = vpop.permute.xlu0 %740
  %v742 = vsel %vm78, %v733, %v735
  %v743 = vsel %vm78, %v735, %v737
  %v744 = vsel %vm78, %v737, %v739
  %v745 = vsel %vm78, %v739, %v741
  %vm752 = vcmask 1047704
  %753 = vst.msk [vmem:[#allocation2] sm:$0xff] %vm752, %v733
  %754 = vst [vmem:[#allocation2 + $0x8] sm:$0xff] %v742
  %755 = vst [vmem:[#allocation2 + $0x10] sm:$0xff] %v743
  %756 = vst [vmem:[#allocation2 + $0x18] sm:$0xff] %v744
  %757 = vst [vmem:[#allocation2 + $0x20] sm:$0xff] %v745
  %758 = vst.msk [vmem:[#allocation2 + $0x28] sm:$0xff] %vm90, %v741
  %759 = vrot.lane.b32.xlu0 %v721, 18
  %v760 = vpop.permute.xlu0 %759
  %761 = vrot.lane.b32.xlu0 %v722, 18
  %v762 = vpop.permute.xlu0 %761
  %763 = vrot.lane.b32.xlu0 %v723, 18
  %v764 = vpop.permute.xlu0 %763
  %765 = vrot.lane.b32.xlu0 %v724, 18
  %v766 = vpop.permute.xlu0 %765
  %767 = vrot.lane.b32.xlu0 %v725, 18
  %v768 = vpop.permute.xlu0 %767
  %v769 = vsel %vm173, %v760, %v762
  %v770 = vsel %vm173, %v762, %v764
  %v771 = vsel %vm173, %v764, %v766
  %v772 = vsel %vm173, %v766, %v768
  %vm779 = vcmask 1047696
  %780 = vst.msk [vmem:[#allocation2 + $0x30] sm:$0xff] %vm779, %v760
  %781 = vst [vmem:[#allocation2 + $0x38] sm:$0xff] %v769
  %782 = vst [vmem:[#allocation2 + $0x40] sm:$0xff] %v770
  %783 = vst [vmem:[#allocation2 + $0x48] sm:$0xff] %v771
  %784 = vst [vmem:[#allocation2 + $0x50] sm:$0xff] %v772
  %785 = vst.msk [vmem:[#allocation2 + $0x58] sm:$0xff] %vm90, %v768
  %786 = vrot.lane.b32.xlu0 %v721, 17
  %v787 = vpop.permute.xlu0 %786
  %788 = vrot.lane.b32.xlu0 %v722, 17
  %v789 = vpop.permute.xlu0 %788
  %790 = vrot.lane.b32.xlu0 %v723, 17
  %v791 = vpop.permute.xlu0 %790
  %792 = vrot.lane.b32.xlu0 %v724, 17
  %v793 = vpop.permute.xlu0 %792
  %794 = vrot.lane.b32.xlu0 %v725, 17
  %v795 = vpop.permute.xlu0 %794
  %v796 = vsel %vm212, %v787, %v789
  %v797 = vsel %vm212, %v789, %v791
  %v798 = vsel %vm212, %v791, %v793
  %v799 = vsel %vm212, %v793, %v795
  %vm806 = vcmask 1047688
  %807 = vst.msk [vmem:[#allocation2 + $0x60] sm:$0xff] %vm806, %v787
  %808 = vst [vmem:[#allocation2 + $0x68] sm:$0xff] %v796
  %809 = vst [vmem:[#allocation2 + $0x70] sm:$0xff] %v797
  %810 = vst [vmem:[#allocation2 + $0x78] sm:$0xff] %v798
  %811 = vst [vmem:[#allocation2 + $0x80] sm:$0xff] %v799
  %812 = vst.msk [vmem:[#allocation2 + $0x88] sm:$0xff] %vm90, %v795
  %814 = vrot.lane.b32.xlu0 %v721, 1
  %v815 = vpop.permute.xlu0 %814
  %816 = vrot.lane.b32.xlu0 %v722, 1
  %v817 = vpop.permute.xlu0 %816
  %818 = vrot.lane.b32.xlu0 %v723, 1
  %v819 = vpop.permute.xlu0 %818
  %820 = vrot.lane.b32.xlu0 %v724, 1
  %v821 = vpop.permute.xlu0 %820
  %822 = vrot.lane.b32.xlu0 %v725, 1
  %v823 = vpop.permute.xlu0 %822
  %824 = vrot.lane.b32.xlu0 %v726, 1
  %v825 = vpop.permute.xlu0 %824
  %v826 = vsel %vm254, %v815, %v817
  %v827 = vsel %vm254, %v817, %v819
  %v828 = vsel %vm254, %v819, %v821
  %v829 = vsel %vm254, %v821, %v823
  %v830 = vsel %vm254, %v823, %v825
  %vm837 = vcmask 1047560
  %838 = vst.msk [vmem:[#allocation2 + $0x90] sm:$0xff] %vm837, %v815
  %839 = vst [vmem:[#allocation2 + $0x98] sm:$0xff] %v826
  %840 = vst [vmem:[#allocation2 + $0xa0] sm:$0xff] %v827
  %841 = vst [vmem:[#allocation2 + $0xa8] sm:$0xff] %v828
  %842 = vst [vmem:[#allocation2 + $0xb0] sm:$0xff] %v829
  %843 = vst.msk [vmem:[#allocation2 + $0xb8] sm:$0xff] %vm90, %v830
  %844 = vst [vmem:[#allocation2 + $0xc0] sm:$0xff] %v721
  %845 = vst [vmem:[#allocation2 + $0xc8] sm:$0xff] %v722
  %846 = vst [vmem:[#allocation2 + $0xd0] sm:$0xff] %v723
  %847 = vst [vmem:[#allocation2 + $0xd8] sm:$0xff] %v724
  %848 = vst [vmem:[#allocation2 + $0xe0] sm:$0xff] %v725
  %849 = vst.msk [vmem:[#allocation2 + $0xe8] sm:$0xff] %vm90, %v726
  %850 = vrot.lane.b32.xlu0 %v721, 127
  %v851 = vpop.permute.xlu0 %850
  %852 = vrot.lane.b32.xlu0 %v722, 127
  %v853 = vpop.permute.xlu0 %852
  %854 = vrot.lane.b32.xlu0 %v723, 127
  %v855 = vpop.permute.xlu0 %854
  %856 = vrot.lane.b32.xlu0 %v724, 127
  %v857 = vpop.permute.xlu0 %856
  %858 = vrot.lane.b32.xlu0 %v725, 127
  %v859 = vpop.permute.xlu0 %858
  %860 = vrot.lane.b32.xlu0 %v726, 127
  %v861 = vpop.permute.xlu0 %860
  %v862 = vsel %vm320, %v851, %v853
  %v863 = vsel %vm320, %v853, %v855
  %v864 = vsel %vm320, %v855, %v857
  %v865 = vsel %vm320, %v857, %v859
  %v866 = vsel %vm320, %v859, %v861
  %873 = vst [vmem:[#allocation2 + $0xf0] sm:$0xff] %v862
  %874 = vst [vmem:[#allocation2 + $0xf8] sm:$0xff] %v863
  %875 = vst [vmem:[#allocation2 + $0x100] sm:$0xff] %v864
  %876 = vst [vmem:[#allocation2 + $0x108] sm:$0xff] %v865
  %877 = vst [vmem:[#allocation2 + $0x110] sm:$0xff] %v866
  %vm878 = vcmask 56320
  %879 = vst.msk [vmem:[#allocation2 + $0x118] sm:$0xff] %vm878, %v861
  %880 = vrot.lane.b32.xlu0 %v721, 111
  %v881 = vpop.permute.xlu0 %880
  %882 = vrot.lane.b32.xlu0 %v722, 111
  %v883 = vpop.permute.xlu0 %882
  %884 = vrot.lane.b32.xlu0 %v723, 111
  %v885 = vpop.permute.xlu0 %884
  %886 = vrot.lane.b32.xlu0 %v724, 111
  %v887 = vpop.permute.xlu0 %886
  %888 = vrot.lane.b32.xlu0 %v725, 111
  %v889 = vpop.permute.xlu0 %888
  %890 = vrot.lane.b32.xlu0 %v726, 111
  %v891 = vpop.permute.xlu0 %890
  %v892 = vsel %vm362, %v881, %v883
  %v893 = vsel %vm362, %v883, %v885
  %v894 = vsel %vm362, %v885, %v887
  %v895 = vsel %vm362, %v887, %v889
  %v896 = vsel %vm362, %v889, %v891
  %902 = vst [vmem:[#allocation2 + $0x120] sm:$0xff] %v892
  %903 = vst [vmem:[#allocation2 + $0x128] sm:$0xff] %v893
  %904 = vst [vmem:[#allocation2 + $0x130] sm:$0xff] %v894
  %905 = vst [vmem:[#allocation2 + $0x138] sm:$0xff] %v895
  %vm906 = vcmask 973824
  %907 = vst.msk [vmem:[#allocation2 + $0x140] sm:$0xff] %vm906, %v896
  %908 = vrot.lane.b32.xlu0 %v721, 110
  %v909 = vpop.permute.xlu0 %908
  %910 = vrot.lane.b32.xlu0 %v722, 110
  %v911 = vpop.permute.xlu0 %910
  %912 = vrot.lane.b32.xlu0 %v723, 110
  %v913 = vpop.permute.xlu0 %912
  %914 = vrot.lane.b32.xlu0 %v724, 110
  %v915 = vpop.permute.xlu0 %914
  %916 = vrot.lane.b32.xlu0 %v725, 110
  %v917 = vpop.permute.xlu0 %916
  %918 = vrot.lane.b32.xlu0 %v726, 110
  %v919 = vpop.permute.xlu0 %918
  %v920 = vsel %vm403, %v909, %v911
  %v921 = vsel %vm403, %v911, %v913
  %v922 = vsel %vm403, %v913, %v915
  %v923 = vsel %vm403, %v915, %v917
  %v924 = vsel %vm403, %v917, %v919
  %930 = vst [vmem:[#allocation2 + $0x150] sm:$0xff] %v920
  %931 = vst [vmem:[#allocation2 + $0x158] sm:$0xff] %v921
  %932 = vst [vmem:[#allocation2 + $0x160] sm:$0xff] %v922
  %933 = vst [vmem:[#allocation2 + $0x168] sm:$0xff] %v923
  %vm934 = vcmask 965632
  %935 = vst.msk [vmem:[#allocation2 + $0x170] sm:$0xff] %vm934, %v924
  %936 = vrot.lane.b32.xlu0 %v721, 109
  %v937 = vpop.permute.xlu0 %936
  %938 = vrot.lane.b32.xlu0 %v722, 109
  %v939 = vpop.permute.xlu0 %938
  %940 = vrot.lane.b32.xlu0 %v723, 109
  %v941 = vpop.permute.xlu0 %940
  %942 = vrot.lane.b32.xlu0 %v724, 109
  %v943 = vpop.permute.xlu0 %942
  %944 = vrot.lane.b32.xlu0 %v725, 109
  %v945 = vpop.permute.xlu0 %944
  %946 = vrot.lane.b32.xlu0 %v726, 109
  %v947 = vpop.permute.xlu0 %946
  %v948 = vsel %vm443, %v937, %v939
  %v949 = vsel %vm443, %v939, %v941
  %v950 = vsel %vm443, %v941, %v943
  %v951 = vsel %vm443, %v943, %v945
  %v952 = vsel %vm443, %v945, %v947
  %958 = vst [vmem:[#allocation2 + $0x180] sm:$0xff] %v948
  %959 = vst [vmem:[#allocation2 + $0x188] sm:$0xff] %v949
  %960 = vst [vmem:[#allocation2 + $0x190] sm:$0xff] %v950
  %961 = vst [vmem:[#allocation2 + $0x198] sm:$0xff] %v951
  %vm962 = vcmask 957440
  %963 = vst.msk [vmem:[#allocation2 + $0x1a0] sm:$0xff] %vm962, %v952
  %v964 = vld [vmem:[#allocation2] sm:$0xff]
  %v965 = vld [vmem:[#allocation2 + $0x8] sm:$0xff]
  %v966 = vld [vmem:[#allocation2 + $0x10] sm:$0xff]
  %v967 = vld [vmem:[#allocation2 + $0x18] sm:$0xff]
  %v968 = vld [vmem:[#allocation2 + $0x20] sm:$0xff]
  %v969 = vld [vmem:[#allocation2 + $0x28] sm:$0xff]
  %v970 = vld [vmem:[#allocation2 + $0x30] sm:$0xff]
  %v971 = vld [vmem:[#allocation2 + $0x38] sm:$0xff]
  %v972 = vld [vmem:[#allocation2 + $0x40] sm:$0xff]
  %v973 = vld [vmem:[#allocation2 + $0x48] sm:$0xff]
  %v974 = vld [vmem:[#allocation2 + $0x50] sm:$0xff]
  %v975 = vld [vmem:[#allocation2 + $0x58] sm:$0xff]
  %v976 = vld [vmem:[#allocation2 + $0x60] sm:$0xff]
  %v977 = vld [vmem:[#allocation2 + $0x68] sm:$0xff]
  %v978 = vld [vmem:[#allocation2 + $0x70] sm:$0xff]
  %v979 = vld [vmem:[#allocation2 + $0x78] sm:$0xff]
  %v980 = vld [vmem:[#allocation2 + $0x80] sm:$0xff]
  %v981 = vld [vmem:[#allocation2 + $0x88] sm:$0xff]
  %v982 = vld [vmem:[#allocation2 + $0x90] sm:$0xff]
  %v983 = vld [vmem:[#allocation2 + $0x98] sm:$0xff]
  %v984 = vld [vmem:[#allocation2 + $0xa0] sm:$0xff]
  %v985 = vld [vmem:[#allocation2 + $0xa8] sm:$0xff]
  %v986 = vld [vmem:[#allocation2 + $0xb0] sm:$0xff]
  %v987 = vld [vmem:[#allocation2 + $0xb8] sm:$0xff]
  %v988 = vld [vmem:[#allocation2 + $0xc0] sm:$0xff]
  %v989 = vld [vmem:[#allocation2 + $0xc8] sm:$0xff]
  %v990 = vld [vmem:[#allocation2 + $0xd0] sm:$0xff]
  %v991 = vld [vmem:[#allocation2 + $0xd8] sm:$0xff]
  %v992 = vld [vmem:[#allocation2 + $0xe0] sm:$0xff]
  %v993 = vld [vmem:[#allocation2 + $0xe8] sm:$0xff]
  %v994 = vld [vmem:[#allocation2 + $0xf0] sm:$0xff]
  %v995 = vld [vmem:[#allocation2 + $0xf8] sm:$0xff]
  %v996 = vld [vmem:[#allocation2 + $0x100] sm:$0xff]
  %v997 = vld [vmem:[#allocation2 + $0x108] sm:$0xff]
  %v998 = vld [vmem:[#allocation2 + $0x110] sm:$0xff]
  %v999 = vld [vmem:[#allocation2 + $0x118] sm:$0xff]
  %v1000 = vld [vmem:[#allocation2 + $0x120] sm:$0xff]
  %v1001 = vld [vmem:[#allocation2 + $0x128] sm:$0xff]
  %v1002 = vld [vmem:[#allocation2 + $0x130] sm:$0xff]
  %v1003 = vld [vmem:[#allocation2 + $0x138] sm:$0xff]
  %v1004 = vld [vmem:[#allocation2 + $0x140] sm:$0xff]
  %v1005 = vld [vmem:[#allocation2 + $0x148] sm:$0xff]
  %v1006 = vld [vmem:[#allocation2 + $0x150] sm:$0xff]
  %v1007 = vld [vmem:[#allocation2 + $0x158] sm:$0xff]
  %v1008 = vld [vmem:[#allocation2 + $0x160] sm:$0xff]
  %v1009 = vld [vmem:[#allocation2 + $0x168] sm:$0xff]
  %v1010 = vld [vmem:[#allocation2 + $0x170] sm:$0xff]
  %v1011 = vld [vmem:[#allocation2 + $0x178] sm:$0xff]
  %v1012 = vld [vmem:[#allocation2 + $0x180] sm:$0xff]
  %v1013 = vld [vmem:[#allocation2 + $0x188] sm:$0xff]
  %v1014 = vld [vmem:[#allocation2 + $0x190] sm:$0xff]
  %v1015 = vld [vmem:[#allocation2 + $0x198] sm:$0xff]
  %v1016 = vld [vmem:[#allocation2 + $0x1a0] sm:$0xff]
  %v1017 = vld [vmem:[#allocation2 + $0x1a8] sm:$0xff]
  %v1018 = vpack.c.bf16 %v970, %v964
  %v1019 = vpack.c.bf16 %v971, %v965
  %v1020 = vpack.c.bf16 %v972, %v966
  %v1021 = vpack.c.bf16 %v973, %v967
  %v1022 = vpack.c.bf16 %v974, %v968
  %v1023 = vpack.c.bf16 %v975, %v969
  %v1024 = vpack.c.bf16 %v982, %v976
  %v1025 = vpack.c.bf16 %v983, %v977
  %v1026 = vpack.c.bf16 %v984, %v978
  %v1027 = vpack.c.bf16 %v985, %v979
  %v1028 = vpack.c.bf16 %v986, %v980
  %v1029 = vpack.c.bf16 %v987, %v981
  %v1030 = vpack.c.bf16 %v994, %v988
  %v1031 = vpack.c.bf16 %v995, %v989
  %v1032 = vpack.c.bf16 %v996, %v990
  %v1033 = vpack.c.bf16 %v997, %v991
  %v1034 = vpack.c.bf16 %v998, %v992
  %v1035 = vpack.c.bf16 %v999, %v993
  %v1036 = vpack.c.bf16 %v1006, %v1000
  %v1037 = vpack.c.bf16 %v1007, %v1001
  %v1038 = vpack.c.bf16 %v1008, %v1002
  %v1039 = vpack.c.bf16 %v1009, %v1003
  %v1040 = vpack.c.bf16 %v1010, %v1004
  %v1041 = vpack.c.bf16 %v1011, %v1005
  %v1042 = vpack.c.bf16 %v1012, %v1012
  %v1043 = vpack.c.bf16 %v1013, %v1013
  %v1044 = vpack.c.bf16 %v1014, %v1014
  %v1045 = vpack.c.bf16 %v1015, %v1015
  %v1046 = vpack.c.bf16 %v1016, %v1016
  %v1047 = vpack.c.bf16 %v1017, %v1017
  %v1048 = vld [vmem:[%s5] sm:$0xf]
  %vm1049 = vcmask 588800
  %v1051 = vsel %vm1049, %v1048, 0
  %vm1053 = vcmask 1043456
  %v1055 = vsel %vm1053, %v1042, 0
  %v1058 = vsel %vm1053, %v1043, 0
  %v1061 = vsel %vm1053, %v1044, 0
  %v1064 = vsel %vm1053, %v1045, 0
  %v1067 = vsel %vm1053, %v1046, 0
  %v1070 = vsel %vm1053, %v1047, 0
  %1072 = vmatpush.bf16.msra.mxu0 0
  %1073 = vmatpush.bf16.msra.mxu0 0
  %1074 = vmatpush.bf16.msra.mxu0 0
  %1075 = vmatpush.bf16.msra.mxu0 %v1055
  %1076 = vmatpush.bf16.msra.mxu0 %v1036
  %1077 = vmatpush.bf16.msra.mxu0 %v1030
  %1078 = vmatpush.bf16.msra.mxu0 %v1024
  %1079 = vmatpush.bf16.msra.mxu0 %v1018
  %1080 = vmatmul.bf16.gmra.mxu0 %v1051
  %v1081 = vpop.f32.mrf.mxu0
  %v1082 = vadd.f32 0.0, %v1081
  %v1083 = vpop.f32.mrf.mxu0
  %1084 = vdwg.mxu0
  %1085 = vmatpush.bf16.msra.mxu0 0
  %1086 = vmatpush.bf16.msra.mxu0 0
  %1087 = vmatpush.bf16.msra.mxu0 0
  %1088 = vmatpush.bf16.msra.mxu0 %v1058
  %1089 = vmatpush.bf16.msra.mxu0 %v1037
  %1090 = vmatpush.bf16.msra.mxu0 %v1031
  %1091 = vmatpush.bf16.msra.mxu0 %v1025
  %1092 = vmatpush.bf16.msra.mxu0 %v1019
  %1093 = vmatmul.bf16.gmra.mxu0 %v1051
  %v1094 = vpop.f32.mrf.mxu0
  %v1095 = vadd.f32 0.0, %v1094
  %v1096 = vpop.f32.mrf.mxu0
  %1097 = vdwg.mxu0
  %1098 = vmatpush.bf16.msra.mxu0 0
  %1099 = vmatpush.bf16.msra.mxu0 0
  %1100 = vmatpush.bf16.msra.mxu0 0
  %1101 = vmatpush.bf16.msra.mxu0 %v1061
  %1102 = vmatpush.bf16.msra.mxu0 %v1038
  %1103 = vmatpush.bf16.msra.mxu0 %v1032
  %1104 = vmatpush.bf16.msra.mxu0 %v1026
  %1105 = vmatpush.bf16.msra.mxu0 %v1020
  %1106 = vmatmul.bf16.gmra.mxu0 %v1051
  %v1107 = vpop.f32.mrf.mxu0
  %v1108 = vadd.f32 0.0, %v1107
  %v1109 = vpop.f32.mrf.mxu0
  %1110 = vdwg.mxu0
  %1111 = vmatpush.bf16.msra.mxu0 0
  %1112 = vmatpush.bf16.msra.mxu0 0
  %1113 = vmatpush.bf16.msra.mxu0 0
  %1114 = vmatpush.bf16.msra.mxu0 %v1064
  %1115 = vmatpush.bf16.msra.mxu0 %v1039
  %1116 = vmatpush.bf16.msra.mxu0 %v1033
  %1117 = vmatpush.bf16.msra.mxu0 %v1027
  %1118 = vmatpush.bf16.msra.mxu0 %v1021
  %1119 = vmatmul.bf16.gmra.mxu0 %v1051
  %v1120 = vpop.f32.mrf.mxu0
  %v1121 = vadd.f32 0.0, %v1120
  %v1122 = vpop.f32.mrf.mxu0
  %1123 = vdwg.mxu0
  %1124 = vmatpush.bf16.msra.mxu0 0
  %1125 = vmatpush.bf16.msra.mxu0 0
  %1126 = vmatpush.bf16.msra.mxu0 0
  %1127 = vmatpush.bf16.msra.mxu0 %v1067
  %1128 = vmatpush.bf16.msra.mxu0 %v1040
  %1129 = vmatpush.bf16.msra.mxu0 %v1034
  %1130 = vmatpush.bf16.msra.mxu0 %v1028
  %1131 = vmatpush.bf16.msra.mxu0 %v1022
  %1132 = vmatmul.bf16.gmra.mxu0 %v1051
  %v1133 = vpop.f32.mrf.mxu0
  %v1134 = vadd.f32 0.0, %v1133
  %v1135 = vpop.f32.mrf.mxu0
  %1136 = vdwg.mxu0
  %1137 = vmatpush.bf16.msra.mxu0 0
  %1138 = vmatpush.bf16.msra.mxu0 0
  %1139 = vmatpush.bf16.msra.mxu0 0
  %1140 = vmatpush.bf16.msra.mxu0 %v1070
  %1141 = vmatpush.bf16.msra.mxu0 %v1041
  %1142 = vmatpush.bf16.msra.mxu0 %v1035
  %1143 = vmatpush.bf16.msra.mxu0 %v1029
  %1144 = vmatpush.bf16.msra.mxu0 %v1023
  %1145 = vmatmul.bf16.gmra.mxu0 %v1051
  %v1146 = vpop.f32.mrf.mxu0
  %v1147 = vadd.f32 0.0, %v1146
  %v1148 = vpop.f32.mrf.mxu0
  %1149 = vdwg.mxu0
  %v1150 = vmul.f32 %v1082, %v611
  %v1151 = vmul.f32 %v1095, %v612
  %v1152 = vmul.f32 %v1108, %v613
  %v1153 = vmul.f32 %v1121, %v614
  %v1154 = vmul.f32 %v1134, %v615
  %v1155 = vmul.f32 %v1147, %v616
  %v1156 = vadd.f32 %v1150, %v1151
  %v1157 = vadd.f32 %v1156, %v1152
  %v1158 = vadd.f32 %v1157, %v1153
  %v1159 = vadd.f32 %v1158, %v1154
  %v1160 = vsel %vm90, %v1155, 0.0
  %v1161 = vadd.f32 %v1159, %v1160
  %1162 = vadd.xlane.f32.xlu0 %v1161
  %v1163 = vpop.xlane.xlu0 %1162
  %v1164 = vmul.f32 %v1163, 0.001953125
  %v1165 = vsub.f32 %v1082, %v1164
  %v1166 = vsub.f32 %v1095, %v1164
  %v1167 = vsub.f32 %v1108, %v1164
  %v1168 = vsub.f32 %v1121, %v1164
  %v1169 = vsub.f32 %v1134, %v1164
  %v1170 = vsub.f32 %v1147, %v1164
  %v1171 = vmul.f32 %v1165, %v611
  %v1172 = vmul.f32 %v1166, %v612
  %v1173 = vmul.f32 %v1167, %v613
  %v1174 = vmul.f32 %v1168, %v614
  %v1175 = vmul.f32 %v1169, %v615
  %v1176 = vmul.f32 %v1170, %v616
  %v1177 = vmul.f32 %v1171, %v1171
  %v1178 = vmul.f32 %v1172, %v1172
  %v1179 = vmul.f32 %v1173, %v1173
  %v1180 = vmul.f32 %v1174, %v1174
  %v1181 = vmul.f32 %v1175, %v1175
  %v1182 = vmul.f32 %v1176, %v1176
  %v1183 = vadd.f32 %v1177, %v1178
  %v1184 = vadd.f32 %v1183, %v1179
  %v1185 = vadd.f32 %v1184, %v1180
  %v1186 = vadd.f32 %v1185, %v1181
  %v1187 = vsel %vm90, %v1182, 0.0
  %v1188 = vadd.f32 %v1186, %v1187
  %1189 = vadd.xlane.f32.xlu0 %v1188
  %v1190 = vpop.xlane.xlu0 %1189
  %v1191 = vmul.f32 %v1190, 0.001953125
  %v1192 = vld [vmem:[%s6] sm:$0xff]
  %v1193 = vadd.f32 %v1191, 1e-05
  %v1194 = vrsqrt.pop %v1193
  %v1195 = vmul.f32 %v1194, %v1193
  %v1196 = vmul.f32 %v1195, %v1194
  %v1197 = vmul.f32 0.5, %v1196
  %v1198 = vsub.f32 1.5, %v1197
  %v1199 = vmul.f32 %v1194, %v1198
  %vm1200 = vweird.f32 %v1193
  %vm1201 = vweird.f32 %v1194
  %vm1202 = vmor %vm1200, %vm1201
  %v1203 = vsel %vm1202, %v1194, %v1199
  %v1204 = vmul.f32 %v1192, %v1203
  %v1205 = vld [vmem:[%s7] sm:$0xff]
  %v1206 = vmul.f32 %v1164, %v1204
  %v1207 = vsub.f32 %v1205, %v1206
  %1209 = vset.pattern.permute.xlu0 0
  %1210 = vperm.xlu0 %1209, %v1204
  %v1211 = vpop.permute.xlu0 %1210
  %v1213 = vmul.f32 %v1082, %v1211
  %v1214 = vmul.f32 %v1095, %v1211
  %v1215 = vmul.f32 %v1108, %v1211
  %v1216 = vmul.f32 %v1121, %v1211
  %v1217 = vmul.f32 %v1134, %v1211
  %v1218 = vmul.f32 %v1147, %v1211
  %1220 = vset.pattern.permute.xlu0 0
  %1221 = vperm.xlu0 %1220, %v1207
  %v1222 = vpop.permute.xlu0 %1221
  %v1224 = vadd.f32 %v1213, %v1222
  %v1225 = vadd.f32 %v1214, %v1222
  %v1226 = vadd.f32 %v1215, %v1222
  %v1227 = vadd.f32 %v1216, %v1222
  %v1228 = vadd.f32 %v1217, %v1222
  %v1229 = vadd.f32 %v1218, %v1222
  %vm1230 = vcmp.ge.f32.partialorder %v1224, 0.0
  %vm1231 = vcmp.ge.f32.partialorder %v1225, 0.0
  %vm1232 = vcmp.ge.f32.partialorder %v1226, 0.0
  %vm1233 = vcmp.ge.f32.partialorder %v1227, 0.0
  %vm1234 = vcmp.ge.f32.partialorder %v1228, 0.0
  %vm1235 = vcmp.ge.f32.partialorder %v1229, 0.0
  %v1236 = vmul.f32 %v1224, 0.01
  %v1237 = vmul.f32 %v1225, 0.01
  %v1238 = vmul.f32 %v1226, 0.01
  %v1239 = vmul.f32 %v1227, 0.01
  %v1240 = vmul.f32 %v1228, 0.01
  %v1241 = vmul.f32 %v1229, 0.01
  %v1242 = vsel %vm1230, %v1224, %v1236
  %v1243 = vsel %vm1231, %v1225, %v1237
  %v1244 = vsel %vm1232, %v1226, %v1238
  %v1245 = vsel %vm1233, %v1227, %v1239
  %v1246 = vsel %vm1234, %v1228, %v1240
  %v1247 = vsel %vm1235, %v1229, %v1241
  %v1248 = vmul.f32 %v1242, %v611
  %v1249 = vmul.f32 %v1243, %v612
  %v1250 = vmul.f32 %v1244, %v613
  %v1251 = vmul.f32 %v1245, %v614
  %v1252 = vmul.f32 %v1246, %v615
  %v1253 = vmul.f32 %v1247, %v616
  %v1254 = vld [vmem:[%s8] sm:$0xf]
  %v1255 = vpack.c.bf16 %v721, %v721
  %v1256 = vpack.c.bf16 %v722, %v722
  %v1257 = vpack.c.bf16 %v723, %v723
  %v1258 = vpack.c.bf16 %v724, %v724
  %v1259 = vpack.c.bf16 %v725, %v725
  %v1260 = vpack.c.bf16 %v726, %v726
  %v1261 = vpack.c.bf16 %v1248, %v1248
  %v1262 = vpack.c.bf16 %v1249, %v1249
  %v1263 = vpack.c.bf16 %v1250, %v1250
  %v1264 = vpack.c.bf16 %v1251, %v1251
  %v1265 = vpack.c.bf16 %v1252, %v1252
  %v1266 = vpack.c.bf16 %v1253, %v1253
  %v1268 = vunpack.c.l.b16 %v1254
  %v1269 = vpack.c.b16 %v1268, %v1268
  %1270 = vrot.lane.b32.xlu0 %v1269, 120
  %v1271 = vpop.permute.xlu0 %1270
  %v1273 = vsel %vm90, %v1271, 0
  %v1276 = vsel %vm1053, %v1261, 0
  %v1279 = vsel %vm1053, %v1262, 0
  %v1282 = vsel %vm1053, %v1263, 0
  %v1285 = vsel %vm1053, %v1264, 0
  %v1288 = vsel %vm1053, %v1265, 0
  %v1291 = vsel %vm1053, %v1266, 0
  %1293 = vmatpush.bf16.msra.mxu0 0
  %1294 = vmatpush.bf16.msra.mxu0 0
  %1295 = vmatpush.bf16.msra.mxu0 0
  %1296 = vmatpush.bf16.msra.mxu0 0
  %1297 = vmatpush.bf16.msra.mxu0 0
  %1298 = vmatpush.bf16.msra.mxu0 0
  %1299 = vmatpush.bf16.msra.mxu0 0
  %1300 = vmatpush.bf16.msra.mxu0 %v1276
  %1301 = vmatmul.bf16.gmra.mxu0 %v1273
  %v1302 = vpop.f32.mrf.mxu0
  %v1303 = vadd.f32 0.0, %v1302
  %v1304 = vpop.f32.mrf.mxu0
  %1305 = vdwg.mxu0
  %1306 = vmatpush.bf16.msra.mxu0 0
  %1307 = vmatpush.bf16.msra.mxu0 0
  %1308 = vmatpush.bf16.msra.mxu0 0
  %1309 = vmatpush.bf16.msra.mxu0 0
  %1310 = vmatpush.bf16.msra.mxu0 0
  %1311 = vmatpush.bf16.msra.mxu0 0
  %1312 = vmatpush.bf16.msra.mxu0 0
  %1313 = vmatpush.bf16.msra.mxu0 %v1279
  %1314 = vmatmul.bf16.gmra.mxu0 %v1273
  %v1315 = vpop.f32.mrf.mxu0
  %v1316 = vadd.f32 0.0, %v1315
  %v1317 = vpop.f32.mrf.mxu0
  %1318 = vdwg.mxu0
  %1319 = vmatpush.bf16.msra.mxu0 0
  %1320 = vmatpush.bf16.msra.mxu0 0
  %1321 = vmatpush.bf16.msra.mxu0 0
  %1322 = vmatpush.bf16.msra.mxu0 0
  %1323 = vmatpush.bf16.msra.mxu0 0
  %1324 = vmatpush.bf16.msra.mxu0 0
  %1325 = vmatpush.bf16.msra.mxu0 0
  %1326 = vmatpush.bf16.msra.mxu0 %v1282
  %1327 = vmatmul.bf16.gmra.mxu0 %v1273
  %v1328 = vpop.f32.mrf.mxu0
  %v1329 = vadd.f32 0.0, %v1328
  %v1330 = vpop.f32.mrf.mxu0
  %1331 = vdwg.mxu0
  %1332 = vmatpush.bf16.msra.mxu0 0
  %1333 = vmatpush.bf16.msra.mxu0 0
  %1334 = vmatpush.bf16.msra.mxu0 0
  %1335 = vmatpush.bf16.msra.mxu0 0
  %1336 = vmatpush.bf16.msra.mxu0 0
  %1337 = vmatpush.bf16.msra.mxu0 0
  %1338 = vmatpush.bf16.msra.mxu0 0
  %1339 = vmatpush.bf16.msra.mxu0 %v1285
  %1340 = vmatmul.bf16.gmra.mxu0 %v1273
  %v1341 = vpop.f32.mrf.mxu0
  %v1342 = vadd.f32 0.0, %v1341
  %v1343 = vpop.f32.mrf.mxu0
  %1344 = vdwg.mxu0
  %1345 = vmatpush.bf16.msra.mxu0 0
  %1346 = vmatpush.bf16.msra.mxu0 0
  %1347 = vmatpush.bf16.msra.mxu0 0
  %1348 = vmatpush.bf16.msra.mxu0 0
  %1349 = vmatpush.bf16.msra.mxu0 0
  %1350 = vmatpush.bf16.msra.mxu0 0
  %1351 = vmatpush.bf16.msra.mxu0 0
  %1352 = vmatpush.bf16.msra.mxu0 %v1288
  %1353 = vmatmul.bf16.gmra.mxu0 %v1273
  %v1354 = vpop.f32.mrf.mxu0
  %v1355 = vadd.f32 0.0, %v1354
  %v1356 = vpop.f32.mrf.mxu0
  %1357 = vdwg.mxu0
  %1358 = vmatpush.bf16.msra.mxu0 0
  %1359 = vmatpush.bf16.msra.mxu0 0
  %1360 = vmatpush.bf16.msra.mxu0 0
  %1361 = vmatpush.bf16.msra.mxu0 0
  %1362 = vmatpush.bf16.msra.mxu0 0
  %1363 = vmatpush.bf16.msra.mxu0 0
  %1364 = vmatpush.bf16.msra.mxu0 0
  %1365 = vmatpush.bf16.msra.mxu0 %v1291
  %1366 = vmatmul.bf16.gmra.mxu0 %v1273
  %v1367 = vpop.f32.mrf.mxu0
  %v1368 = vadd.f32 0.0, %v1367
  %v1369 = vpop.f32.mrf.mxu0
  %1370 = vdwg.mxu0
  %v1372 = vsel %vm90, %v1254, 0
  %v1375 = vsel %vm1053, %v1255, 0
  %v1378 = vsel %vm1053, %v1256, 0
  %v1381 = vsel %vm1053, %v1257, 0
  %v1384 = vsel %vm1053, %v1258, 0
  %v1387 = vsel %vm1053, %v1259, 0
  %v1390 = vsel %vm1053, %v1260, 0
  %1392 = vmatpush.bf16.msra.mxu0 0
  %1393 = vmatpush.bf16.msra.mxu0 0
  %1394 = vmatpush.bf16.msra.mxu0 0
  %1395 = vmatpush.bf16.msra.mxu0 0
  %1396 = vmatpush.bf16.msra.mxu0 0
  %1397 = vmatpush.bf16.msra.mxu0 0
  %1398 = vmatpush.bf16.msra.mxu0 0
  %1399 = vmatpush.bf16.msra.mxu0 %v1375
  %1400 = vmatmul.bf16.gmra.mxu0 %v1372
  %v1401 = vpop.f32.mrf.mxu0
  %v1402 = vadd.f32 %v1303, %v1401
  %v1403 = vpop.f32.mrf.mxu0
  %1404 = vdwg.mxu0
  %1405 = vmatpush.bf16.msra.mxu0 0
  %1406 = vmatpush.bf16.msra.mxu0 0
  %1407 = vmatpush.bf16.msra.mxu0 0
  %1408 = vmatpush.bf16.msra.mxu0 0
  %1409 = vmatpush.bf16.msra.mxu0 0
  %1410 = vmatpush.bf16.msra.mxu0 0
  %1411 = vmatpush.bf16.msra.mxu0 0
  %1412 = vmatpush.bf16.msra.mxu0 %v1378
  %1413 = vmatmul.bf16.gmra.mxu0 %v1372
  %v1414 = vpop.f32.mrf.mxu0
  %v1415 = vadd.f32 %v1316, %v1414
  %v1416 = vpop.f32.mrf.mxu0
  %1417 = vdwg.mxu0
  %1418 = vmatpush.bf16.msra.mxu0 0
  %1419 = vmatpush.bf16.msra.mxu0 0
  %1420 = vmatpush.bf16.msra.mxu0 0
  %1421 = vmatpush.bf16.msra.mxu0 0
  %1422 = vmatpush.bf16.msra.mxu0 0
  %1423 = vmatpush.bf16.msra.mxu0 0
  %1424 = vmatpush.bf16.msra.mxu0 0
  %1425 = vmatpush.bf16.msra.mxu0 %v1381
  %1426 = vmatmul.bf16.gmra.mxu0 %v1372
  %v1427 = vpop.f32.mrf.mxu0
  %v1428 = vadd.f32 %v1329, %v1427
  %v1429 = vpop.f32.mrf.mxu0
  %1430 = vdwg.mxu0
  %1431 = vmatpush.bf16.msra.mxu0 0
  %1432 = vmatpush.bf16.msra.mxu0 0
  %1433 = vmatpush.bf16.msra.mxu0 0
  %1434 = vmatpush.bf16.msra.mxu0 0
  %1435 = vmatpush.bf16.msra.mxu0 0
  %1436 = vmatpush.bf16.msra.mxu0 0
  %1437 = vmatpush.bf16.msra.mxu0 0
  %1438 = vmatpush.bf16.msra.mxu0 %v1384
  %1439 = vmatmul.bf16.gmra.mxu0 %v1372
  %v1440 = vpop.f32.mrf.mxu0
  %v1441 = vadd.f32 %v1342, %v1440
  %v1442 = vpop.f32.mrf.mxu0
  %1443 = vdwg.mxu0
  %1444 = vmatpush.bf16.msra.mxu0 0
  %1445 = vmatpush.bf16.msra.mxu0 0
  %1446 = vmatpush.bf16.msra.mxu0 0
  %1447 = vmatpush.bf16.msra.mxu0 0
  %1448 = vmatpush.bf16.msra.mxu0 0
  %1449 = vmatpush.bf16.msra.mxu0 0
  %1450 = vmatpush.bf16.msra.mxu0 0
  %1451 = vmatpush.bf16.msra.mxu0 %v1387
  %1452 = vmatmul.bf16.gmra.mxu0 %v1372
  %v1453 = vpop.f32.mrf.mxu0
  %v1454 = vadd.f32 %v1355, %v1453
  %v1455 = vpop.f32.mrf.mxu0
  %1456 = vdwg.mxu0
  %1457 = vmatpush.bf16.msra.mxu0 0
  %1458 = vmatpush.bf16.msra.mxu0 0
  %1459 = vmatpush.bf16.msra.mxu0 0
  %1460 = vmatpush.bf16.msra.mxu0 0
  %1461 = vmatpush.bf16.msra.mxu0 0
  %1462 = vmatpush.bf16.msra.mxu0 0
  %1463 = vmatpush.bf16.msra.mxu0 0
  %1464 = vmatpush.bf16.msra.mxu0 %v1390
  %1465 = vmatmul.bf16.gmra.mxu0 %v1372
  %v1466 = vpop.f32.mrf.mxu0
  %v1467 = vadd.f32 %v1368, %v1466
  %v1468 = vpop.f32.mrf.mxu0
  %1469 = vdwg.mxu0
  %v1470 = vmul.f32 %v1402, %v611
  %v1471 = vmul.f32 %v1415, %v612
  %v1472 = vmul.f32 %v1428, %v613
  %v1473 = vmul.f32 %v1441, %v614
  %v1474 = vmul.f32 %v1454, %v615
  %v1475 = vmul.f32 %v1467, %v616
  %v1476 = vadd.f32 %v1470, %v1471
  %v1477 = vadd.f32 %v1476, %v1472
  %v1478 = vadd.f32 %v1477, %v1473
  %v1479 = vadd.f32 %v1478, %v1474
  %v1480 = vsel %vm90, %v1475, 0.0
  %v1481 = vadd.f32 %v1479, %v1480
  %1482 = vadd.xlane.f32.xlu0 %v1481
  %v1483 = vpop.xlane.xlu0 %1482
  %v1484 = vmul.f32 %v1483, 0.001953125
  %v1485 = vsub.f32 %v1402, %v1484
  %v1486 = vsub.f32 %v1415, %v1484
  %v1487 = vsub.f32 %v1428, %v1484
  %v1488 = vsub.f32 %v1441, %v1484
  %v1489 = vsub.f32 %v1454, %v1484
  %v1490 = vsub.f32 %v1467, %v1484
  %v1491 = vmul.f32 %v1485, %v611
  %v1492 = vmul.f32 %v1486, %v612
  %v1493 = vmul.f32 %v1487, %v613
  %v1494 = vmul.f32 %v1488, %v614
  %v1495 = vmul.f32 %v1489, %v615
  %v1496 = vmul.f32 %v1490, %v616
  %v1497 = vmul.f32 %v1491, %v1491
  %v1498 = vmul.f32 %v1492, %v1492
  %v1499 = vmul.f32 %v1493, %v1493
  %v1500 = vmul.f32 %v1494, %v1494
  %v1501 = vmul.f32 %v1495, %v1495
  %v1502 = vmul.f32 %v1496, %v1496
  %v1503 = vadd.f32 %v1497, %v1498
  %v1504 = vadd.f32 %v1503, %v1499
  %v1505 = vadd.f32 %v1504, %v1500
  %v1506 = vadd.f32 %v1505, %v1501
  %v1507 = vsel %vm90, %v1502, 0.0
  %v1508 = vadd.f32 %v1506, %v1507
  %1509 = vadd.xlane.f32.xlu0 %v1508
  %v1510 = vpop.xlane.xlu0 %1509
  %v1511 = vmul.f32 %v1510, 0.001953125
  %v1512 = vld [vmem:[%s9] sm:$0xff]
  %v1513 = vadd.f32 %v1511, 1e-05
  %v1514 = vrsqrt.pop %v1513
  %v1515 = vmul.f32 %v1514, %v1513
  %v1516 = vmul.f32 %v1515, %v1514
  %v1517 = vmul.f32 0.5, %v1516
  %v1518 = vsub.f32 1.5, %v1517
  %v1519 = vmul.f32 %v1514, %v1518
  %vm1520 = vweird.f32 %v1513
  %vm1521 = vweird.f32 %v1514
  %vm1522 = vmor %vm1520, %vm1521
  %v1523 = vsel %vm1522, %v1514, %v1519
  %v1524 = vmul.f32 %v1512, %v1523
  %v1525 = vld [vmem:[%s10] sm:$0xff]
  %v1526 = vmul.f32 %v1484, %v1524
  %v1527 = vsub.f32 %v1525, %v1526
  %1529 = vset.pattern.permute.xlu0 0
  %1530 = vperm.xlu0 %1529, %v1524
  %v1531 = vpop.permute.xlu0 %1530
  %v1533 = vmul.f32 %v1402, %v1531
  %v1534 = vmul.f32 %v1415, %v1531
  %v1535 = vmul.f32 %v1428, %v1531
  %v1536 = vmul.f32 %v1441, %v1531
  %v1537 = vmul.f32 %v1454, %v1531
  %v1538 = vmul.f32 %v1467, %v1531
  %1540 = vset.pattern.permute.xlu0 0
  %1541 = vperm.xlu0 %1540, %v1527
  %v1542 = vpop.permute.xlu0 %1541
  %v1544 = vadd.f32 %v1533, %v1542
  %v1545 = vadd.f32 %v1534, %v1542
  %v1546 = vadd.f32 %v1535, %v1542
  %v1547 = vadd.f32 %v1536, %v1542
  %v1548 = vadd.f32 %v1537, %v1542
  %v1549 = vadd.f32 %v1538, %v1542
  %vm1550 = vcmp.ge.f32.partialorder %v1544, 0.0
  %vm1551 = vcmp.ge.f32.partialorder %v1545, 0.0
  %vm1552 = vcmp.ge.f32.partialorder %v1546, 0.0
  %vm1553 = vcmp.ge.f32.partialorder %v1547, 0.0
  %vm1554 = vcmp.ge.f32.partialorder %v1548, 0.0
  %vm1555 = vcmp.ge.f32.partialorder %v1549, 0.0
  %v1556 = vmul.f32 %v1544, 0.01
  %v1557 = vmul.f32 %v1545, 0.01
  %v1558 = vmul.f32 %v1546, 0.01
  %v1559 = vmul.f32 %v1547, 0.01
  %v1560 = vmul.f32 %v1548, 0.01
  %v1561 = vmul.f32 %v1549, 0.01
  %v1562 = vsel %vm1550, %v1544, %v1556
  %v1563 = vsel %vm1551, %v1545, %v1557
  %v1564 = vsel %vm1552, %v1546, %v1558
  %v1565 = vsel %vm1553, %v1547, %v1559
  %v1566 = vsel %vm1554, %v1548, %v1560
  %v1567 = vsel %vm1555, %v1549, %v1561
  %v1568 = vmul.f32 %v1562, %v611
  %v1569 = vmul.f32 %v1563, %v612
  %v1570 = vmul.f32 %v1564, %v613
  %v1571 = vmul.f32 %v1565, %v614
  %v1572 = vmul.f32 %v1566, %v615
  %v1573 = vmul.f32 %v1567, %v616
  %1579 = vrot.lane.b32.xlu0 %v1568, 19
  %v1580 = vpop.permute.xlu0 %1579
  %1581 = vrot.lane.b32.xlu0 %v1569, 19
  %v1582 = vpop.permute.xlu0 %1581
  %1583 = vrot.lane.b32.xlu0 %v1570, 19
  %v1584 = vpop.permute.xlu0 %1583
  %1585 = vrot.lane.b32.xlu0 %v1571, 19
  %v1586 = vpop.permute.xlu0 %1585
  %1587 = vrot.lane.b32.xlu0 %v1572, 19
  %v1588 = vpop.permute.xlu0 %1587
  %v1589 = vsel %vm78, %v1580, %v1582
  %v1590 = vsel %vm78, %v1582, %v1584
  %v1591 = vsel %vm78, %v1584, %v1586
  %v1592 = vsel %vm78, %v1586, %v1588
  %1599 = vst.msk [vmem:[#allocation2] sm:$0xff] %vm752, %v1580
  %1600 = vst [vmem:[#allocation2 + $0x8] sm:$0xff] %v1589
  %1601 = vst [vmem:[#allocation2 + $0x10] sm:$0xff] %v1590
  %1602 = vst [vmem:[#allocation2 + $0x18] sm:$0xff] %v1591
  %1603 = vst [vmem:[#allocation2 + $0x20] sm:$0xff] %v1592
  %1604 = vst.msk [vmem:[#allocation2 + $0x28] sm:$0xff] %vm90, %v1588
  %1605 = vrot.lane.b32.xlu0 %v1568, 18
  %v1606 = vpop.permute.xlu0 %1605
  %1607 = vrot.lane.b32.xlu0 %v1569, 18
  %v1608 = vpop.permute.xlu0 %1607
  %1609 = vrot.lane.b32.xlu0 %v1570, 18
  %v1610 = vpop.permute.xlu0 %1609
  %1611 = vrot.lane.b32.xlu0 %v1571, 18
  %v1612 = vpop.permute.xlu0 %1611
  %1613 = vrot.lane.b32.xlu0 %v1572, 18
  %v1614 = vpop.permute.xlu0 %1613
  %v1615 = vsel %vm173, %v1606, %v1608
  %v1616 = vsel %vm173, %v1608, %v1610
  %v1617 = vsel %vm173, %v1610, %v1612
  %v1618 = vsel %vm173, %v1612, %v1614
  %1625 = vst.msk [vmem:[#allocation2 + $0x30] sm:$0xff] %vm779, %v1606
  %1626 = vst [vmem:[#allocation2 + $0x38] sm:$0xff] %v1615
  %1627 = vst [vmem:[#allocation2 + $0x40] sm:$0xff] %v1616
  %1628 = vst [vmem:[#allocation2 + $0x48] sm:$0xff] %v1617
  %1629 = vst [vmem:[#allocation2 + $0x50] sm:$0xff] %v1618
  %1630 = vst.msk [vmem:[#allocation2 + $0x58] sm:$0xff] %vm90, %v1614
  %1631 = vrot.lane.b32.xlu0 %v1568, 17
  %v1632 = vpop.permute.xlu0 %1631
  %1633 = vrot.lane.b32.xlu0 %v1569, 17
  %v1634 = vpop.permute.xlu0 %1633
  %1635 = vrot.lane.b32.xlu0 %v1570, 17
  %v1636 = vpop.permute.xlu0 %1635
  %1637 = vrot.lane.b32.xlu0 %v1571, 17
  %v1638 = vpop.permute.xlu0 %1637
  %1639 = vrot.lane.b32.xlu0 %v1572, 17
  %v1640 = vpop.permute.xlu0 %1639
  %v1641 = vsel %vm212, %v1632, %v1634
  %v1642 = vsel %vm212, %v1634, %v1636
  %v1643 = vsel %vm212, %v1636, %v1638
  %v1644 = vsel %vm212, %v1638, %v1640
  %1651 = vst.msk [vmem:[#allocation2 + $0x60] sm:$0xff] %vm806, %v1632
  %1652 = vst [vmem:[#allocation2 + $0x68] sm:$0xff] %v1641
  %1653 = vst [vmem:[#allocation2 + $0x70] sm:$0xff] %v1642
  %1654 = vst [vmem:[#allocation2 + $0x78] sm:$0xff] %v1643
  %1655 = vst [vmem:[#allocation2 + $0x80] sm:$0xff] %v1644
  %1656 = vst.msk [vmem:[#allocation2 + $0x88] sm:$0xff] %vm90, %v1640
  %1658 = vrot.lane.b32.xlu0 %v1568, 1
  %v1659 = vpop.permute.xlu0 %1658
  %1660 = vrot.lane.b32.xlu0 %v1569, 1
  %v1661 = vpop.permute.xlu0 %1660
  %1662 = vrot.lane.b32.xlu0 %v1570, 1
  %v1663 = vpop.permute.xlu0 %1662
  %1664 = vrot.lane.b32.xlu0 %v1571, 1
  %v1665 = vpop.permute.xlu0 %1664
  %1666 = vrot.lane.b32.xlu0 %v1572, 1
  %v1667 = vpop.permute.xlu0 %1666
  %1668 = vrot.lane.b32.xlu0 %v1573, 1
  %v1669 = vpop.permute.xlu0 %1668
  %v1670 = vsel %vm254, %v1659, %v1661
  %v1671 = vsel %vm254, %v1661, %v1663
  %v1672 = vsel %vm254, %v1663, %v1665
  %v1673 = vsel %vm254, %v1665, %v1667
  %v1674 = vsel %vm254, %v1667, %v1669
  %1681 = vst.msk [vmem:[#allocation2 + $0x90] sm:$0xff] %vm837, %v1659
  %1682 = vst [vmem:[#allocation2 + $0x98] sm:$0xff] %v1670
  %1683 = vst [vmem:[#allocation2 + $0xa0] sm:$0xff] %v1671
  %1684 = vst [vmem:[#allocation2 + $0xa8] sm:$0xff] %v1672
  %1685 = vst [vmem:[#allocation2 + $0xb0] sm:$0xff] %v1673
  %1686 = vst.msk [vmem:[#allocation2 + $0xb8] sm:$0xff] %vm90, %v1674
  %1687 = vst [vmem:[#allocation2 + $0xc0] sm:$0xff] %v1568
  %1688 = vst [vmem:[#allocation2 + $0xc8] sm:$0xff] %v1569
  %1689 = vst [vmem:[#allocation2 + $0xd0] sm:$0xff] %v1570
  %1690 = vst [vmem:[#allocation2 + $0xd8] sm:$0xff] %v1571
  %1691 = vst [vmem:[#allocation2 + $0xe0] sm:$0xff] %v1572
  %1692 = vst.msk [vmem:[#allocation2 + $0xe8] sm:$0xff] %vm90, %v1573
  %1693 = vrot.lane.b32.xlu0 %v1568, 127
  %v1694 = vpop.permute.xlu0 %1693
  %1695 = vrot.lane.b32.xlu0 %v1569, 127
  %v1696 = vpop.permute.xlu0 %1695
  %1697 = vrot.lane.b32.xlu0 %v1570, 127
  %v1698 = vpop.permute.xlu0 %1697
  %1699 = vrot.lane.b32.xlu0 %v1571, 127
  %v1700 = vpop.permute.xlu0 %1699
  %1701 = vrot.lane.b32.xlu0 %v1572, 127
  %v1702 = vpop.permute.xlu0 %1701
  %1703 = vrot.lane.b32.xlu0 %v1573, 127
  %v1704 = vpop.permute.xlu0 %1703
  %v1705 = vsel %vm320, %v1694, %v1696
  %v1706 = vsel %vm320, %v1696, %v1698
  %v1707 = vsel %vm320, %v1698, %v1700
  %v1708 = vsel %vm320, %v1700, %v1702
  %v1709 = vsel %vm320, %v1702, %v1704
  %1716 = vst [vmem:[#allocation2 + $0xf0] sm:$0xff] %v1705
  %1717 = vst [vmem:[#allocation2 + $0xf8] sm:$0xff] %v1706
  %1718 = vst [vmem:[#allocation2 + $0x100] sm:$0xff] %v1707
  %1719 = vst [vmem:[#allocation2 + $0x108] sm:$0xff] %v1708
  %1720 = vst [vmem:[#allocation2 + $0x110] sm:$0xff] %v1709
  %1721 = vst.msk [vmem:[#allocation2 + $0x118] sm:$0xff] %vm878, %v1704
  %1722 = vrot.lane.b32.xlu0 %v1568, 111
  %v1723 = vpop.permute.xlu0 %1722
  %1724 = vrot.lane.b32.xlu0 %v1569, 111
  %v1725 = vpop.permute.xlu0 %1724
  %1726 = vrot.lane.b32.xlu0 %v1570, 111
  %v1727 = vpop.permute.xlu0 %1726
  %1728 = vrot.lane.b32.xlu0 %v1571, 111
  %v1729 = vpop.permute.xlu0 %1728
  %1730 = vrot.lane.b32.xlu0 %v1572, 111
  %v1731 = vpop.permute.xlu0 %1730
  %1732 = vrot.lane.b32.xlu0 %v1573, 111
  %v1733 = vpop.permute.xlu0 %1732
  %v1734 = vsel %vm362, %v1723, %v1725
  %v1735 = vsel %vm362, %v1725, %v1727
  %v1736 = vsel %vm362, %v1727, %v1729
  %v1737 = vsel %vm362, %v1729, %v1731
  %v1738 = vsel %vm362, %v1731, %v1733
  %1744 = vst [vmem:[#allocation2 + $0x120] sm:$0xff] %v1734
  %1745 = vst [vmem:[#allocation2 + $0x128] sm:$0xff] %v1735
  %1746 = vst [vmem:[#allocation2 + $0x130] sm:$0xff] %v1736
  %1747 = vst [vmem:[#allocation2 + $0x138] sm:$0xff] %v1737
  %1748 = vst.msk [vmem:[#allocation2 + $0x140] sm:$0xff] %vm906, %v1738
  %1749 = vrot.lane.b32.xlu0 %v1568, 110
  %v1750 = vpop.permute.xlu0 %1749
  %1751 = vrot.lane.b32.xlu0 %v1569, 110
  %v1752 = vpop.permute.xlu0 %1751
  %1753 = vrot.lane.b32.xlu0 %v1570, 110
  %v1754 = vpop.permute.xlu0 %1753
  %1755 = vrot.lane.b32.xlu0 %v1571, 110
  %v1756 = vpop.permute.xlu0 %1755
  %1757 = vrot.lane.b32.xlu0 %v1572, 110
  %v1758 = vpop.permute.xlu0 %1757
  %1759 = vrot.lane.b32.xlu0 %v1573, 110
  %v1760 = vpop.permute.xlu0 %1759
  %v1761 = vsel %vm403, %v1750, %v1752
  %v1762 = vsel %vm403, %v1752, %v1754
  %v1763 = vsel %vm403, %v1754, %v1756
  %v1764 = vsel %vm403, %v1756, %v1758
  %v1765 = vsel %vm403, %v1758, %v1760
  %1771 = vst [vmem:[#allocation2 + $0x150] sm:$0xff] %v1761
  %1772 = vst [vmem:[#allocation2 + $0x158] sm:$0xff] %v1762
  %1773 = vst [vmem:[#allocation2 + $0x160] sm:$0xff] %v1763
  %1774 = vst [vmem:[#allocation2 + $0x168] sm:$0xff] %v1764
  %1775 = vst.msk [vmem:[#allocation2 + $0x170] sm:$0xff] %vm934, %v1765
  %1776 = vrot.lane.b32.xlu0 %v1568, 109
  %v1777 = vpop.permute.xlu0 %1776
  %1778 = vrot.lane.b32.xlu0 %v1569, 109
  %v1779 = vpop.permute.xlu0 %1778
  %1780 = vrot.lane.b32.xlu0 %v1570, 109
  %v1781 = vpop.permute.xlu0 %1780
  %1782 = vrot.lane.b32.xlu0 %v1571, 109
  %v1783 = vpop.permute.xlu0 %1782
  %1784 = vrot.lane.b32.xlu0 %v1572, 109
  %v1785 = vpop.permute.xlu0 %1784
  %1786 = vrot.lane.b32.xlu0 %v1573, 109
  %v1787 = vpop.permute.xlu0 %1786
  %v1788 = vsel %vm443, %v1777, %v1779
  %v1789 = vsel %vm443, %v1779, %v1781
  %v1790 = vsel %vm443, %v1781, %v1783
  %v1791 = vsel %vm443, %v1783, %v1785
  %v1792 = vsel %vm443, %v1785, %v1787
  %1798 = vst [vmem:[#allocation2 + $0x180] sm:$0xff] %v1788
  %1799 = vst [vmem:[#allocation2 + $0x188] sm:$0xff] %v1789
  %1800 = vst [vmem:[#allocation2 + $0x190] sm:$0xff] %v1790
  %1801 = vst [vmem:[#allocation2 + $0x198] sm:$0xff] %v1791
  %1802 = vst.msk [vmem:[#allocation2 + $0x1a0] sm:$0xff] %vm962, %v1792
  %v1803 = vld [vmem:[#allocation2] sm:$0xff]
  %v1804 = vld [vmem:[#allocation2 + $0x8] sm:$0xff]
  %v1805 = vld [vmem:[#allocation2 + $0x10] sm:$0xff]
  %v1806 = vld [vmem:[#allocation2 + $0x18] sm:$0xff]
  %v1807 = vld [vmem:[#allocation2 + $0x20] sm:$0xff]
  %v1808 = vld [vmem:[#allocation2 + $0x28] sm:$0xff]
  %v1809 = vld [vmem:[#allocation2 + $0x30] sm:$0xff]
  %v1810 = vld [vmem:[#allocation2 + $0x38] sm:$0xff]
  %v1811 = vld [vmem:[#allocation2 + $0x40] sm:$0xff]
  %v1812 = vld [vmem:[#allocation2 + $0x48] sm:$0xff]
  %v1813 = vld [vmem:[#allocation2 + $0x50] sm:$0xff]
  %v1814 = vld [vmem:[#allocation2 + $0x58] sm:$0xff]
  %v1815 = vld [vmem:[#allocation2 + $0x60] sm:$0xff]
  %v1816 = vld [vmem:[#allocation2 + $0x68] sm:$0xff]
  %v1817 = vld [vmem:[#allocation2 + $0x70] sm:$0xff]
  %v1818 = vld [vmem:[#allocation2 + $0x78] sm:$0xff]
  %v1819 = vld [vmem:[#allocation2 + $0x80] sm:$0xff]
  %v1820 = vld [vmem:[#allocation2 + $0x88] sm:$0xff]
  %v1821 = vld [vmem:[#allocation2 + $0x90] sm:$0xff]
  %v1822 = vld [vmem:[#allocation2 + $0x98] sm:$0xff]
  %v1823 = vld [vmem:[#allocation2 + $0xa0] sm:$0xff]
  %v1824 = vld [vmem:[#allocation2 + $0xa8] sm:$0xff]
  %v1825 = vld [vmem:[#allocation2 + $0xb0] sm:$0xff]
  %v1826 = vld [vmem:[#allocation2 + $0xb8] sm:$0xff]
  %v1827 = vld [vmem:[#allocation2 + $0xc0] sm:$0xff]
  %v1828 = vld [vmem:[#allocation2 + $0xc8] sm:$0xff]
  %v1829 = vld [vmem:[#allocation2 + $0xd0] sm:$0xff]
  %v1830 = vld [vmem:[#allocation2 + $0xd8] sm:$0xff]
  %v1831 = vld [vmem:[#allocation2 + $0xe0] sm:$0xff]
  %v1832 = vld [vmem:[#allocation2 + $0xe8] sm:$0xff]
  %v1833 = vld [vmem:[#allocation2 + $0xf0] sm:$0xff]
  %v1834 = vld [vmem:[#allocation2 + $0xf8] sm:$0xff]
  %v1835 = vld [vmem:[#allocation2 + $0x100] sm:$0xff]
  %v1836 = vld [vmem:[#allocation2 + $0x108] sm:$0xff]
  %v1837 = vld [vmem:[#allocation2 + $0x110] sm:$0xff]
  %v1838 = vld [vmem:[#allocation2 + $0x118] sm:$0xff]
  %v1839 = vld [vmem:[#allocation2 + $0x120] sm:$0xff]
  %v1840 = vld [vmem:[#allocation2 + $0x128] sm:$0xff]
  %v1841 = vld [vmem:[#allocation2 + $0x130] sm:$0xff]
  %v1842 = vld [vmem:[#allocation2 + $0x138] sm:$0xff]
  %v1843 = vld [vmem:[#allocation2 + $0x140] sm:$0xff]
  %v1844 = vld [vmem:[#allocation2 + $0x148] sm:$0xff]
  %v1845 = vld [vmem:[#allocation2 + $0x150] sm:$0xff]
  %v1846 = vld [vmem:[#allocation2 + $0x158] sm:$0xff]
  %v1847 = vld [vmem:[#allocation2 + $0x160] sm:$0xff]
  %v1848 = vld [vmem:[#allocation2 + $0x168] sm:$0xff]
  %v1849 = vld [vmem:[#allocation2 + $0x170] sm:$0xff]
  %v1850 = vld [vmem:[#allocation2 + $0x178] sm:$0xff]
  %v1851 = vld [vmem:[#allocation2 + $0x180] sm:$0xff]
  %v1852 = vld [vmem:[#allocation2 + $0x188] sm:$0xff]
  %v1853 = vld [vmem:[#allocation2 + $0x190] sm:$0xff]
  %v1854 = vld [vmem:[#allocation2 + $0x198] sm:$0xff]
  %v1855 = vld [vmem:[#allocation2 + $0x1a0] sm:$0xff]
  %v1856 = vld [vmem:[#allocation2 + $0x1a8] sm:$0xff]
  %v1857 = vpack.c.bf16 %v1809, %v1803
  %v1858 = vpack.c.bf16 %v1810, %v1804
  %v1859 = vpack.c.bf16 %v1811, %v1805
  %v1860 = vpack.c.bf16 %v1812, %v1806
  %v1861 = vpack.c.bf16 %v1813, %v1807
  %v1862 = vpack.c.bf16 %v1814, %v1808
  %v1863 = vpack.c.bf16 %v1821, %v1815
  %v1864 = vpack.c.bf16 %v1822, %v1816
  %v1865 = vpack.c.bf16 %v1823, %v1817
  %v1866 = vpack.c.bf16 %v1824, %v1818
  %v1867 = vpack.c.bf16 %v1825, %v1819
  %v1868 = vpack.c.bf16 %v1826, %v1820
  %v1869 = vpack.c.bf16 %v1833, %v1827
  %v1870 = vpack.c.bf16 %v1834, %v1828
  %v1871 = vpack.c.bf16 %v1835, %v1829
  %v1872 = vpack.c.bf16 %v1836, %v1830
  %v1873 = vpack.c.bf16 %v1837, %v1831
  %v1874 = vpack.c.bf16 %v1838, %v1832
  %v1875 = vpack.c.bf16 %v1845, %v1839
  %v1876 = vpack.c.bf16 %v1846, %v1840
  %v1877 = vpack.c.bf16 %v1847, %v1841
  %v1878 = vpack.c.bf16 %v1848, %v1842
  %v1879 = vpack.c.bf16 %v1849, %v1843
  %v1880 = vpack.c.bf16 %v1850, %v1844
  %v1881 = vpack.c.bf16 %v1851, %v1851
  %v1882 = vpack.c.bf16 %v1852, %v1852
  %v1883 = vpack.c.bf16 %v1853, %v1853
  %v1884 = vpack.c.bf16 %v1854, %v1854
  %v1885 = vpack.c.bf16 %v1855, %v1855
  %v1886 = vpack.c.bf16 %v1856, %v1856
  %v1887 = vld [vmem:[%s11] sm:$0xf]
  %v1889 = vsel %vm1049, %v1887, 0
  %v1892 = vsel %vm1053, %v1881, 0
  %v1895 = vsel %vm1053, %v1882, 0
  %v1898 = vsel %vm1053, %v1883, 0
  %v1901 = vsel %vm1053, %v1884, 0
  %v1904 = vsel %vm1053, %v1885, 0
  %v1907 = vsel %vm1053, %v1886, 0
  %1909 = vmatpush.bf16.msra.mxu0 0
  %1910 = vmatpush.bf16.msra.mxu0 0
  %1911 = vmatpush.bf16.msra.mxu0 0
  %1912 = vmatpush.bf16.msra.mxu0 %v1892
  %1913 = vmatpush.bf16.msra.mxu0 %v1875
  %1914 = vmatpush.bf16.msra.mxu0 %v1869
  %1915 = vmatpush.bf16.msra.mxu0 %v1863
  %1916 = vmatpush.bf16.msra.mxu0 %v1857
  %1917 = vmatmul.bf16.gmra.mxu0 %v1889
  %v1918 = vpop.f32.mrf.mxu0
  %v1919 = vadd.f32 0.0, %v1918
  %v1920 = vpop.f32.mrf.mxu0
  %1921 = vdwg.mxu0
  %1922 = vmatpush.bf16.msra.mxu0 0
  %1923 = vmatpush.bf16.msra.mxu0 0
  %1924 = vmatpush.bf16.msra.mxu0 0
  %1925 = vmatpush.bf16.msra.mxu0 %v1895
  %1926 = vmatpush.bf16.msra.mxu0 %v1876
  %1927 = vmatpush.bf16.msra.mxu0 %v1870
  %1928 = vmatpush.bf16.msra.mxu0 %v1864
  %1929 = vmatpush.bf16.msra.mxu0 %v1858
  %1930 = vmatmul.bf16.gmra.mxu0 %v1889
  %v1931 = vpop.f32.mrf.mxu0
  %v1932 = vadd.f32 0.0, %v1931
  %v1933 = vpop.f32.mrf.mxu0
  %1934 = vdwg.mxu0
  %1935 = vmatpush.bf16.msra.mxu0 0
  %1936 = vmatpush.bf16.msra.mxu0 0
  %1937 = vmatpush.bf16.msra.mxu0 0
  %1938 = vmatpush.bf16.msra.mxu0 %v1898
  %1939 = vmatpush.bf16.msra.mxu0 %v1877
  %1940 = vmatpush.bf16.msra.mxu0 %v1871
  %1941 = vmatpush.bf16.msra.mxu0 %v1865
  %1942 = vmatpush.bf16.msra.mxu0 %v1859
  %1943 = vmatmul.bf16.gmra.mxu0 %v1889
  %v1944 = vpop.f32.mrf.mxu0
  %v1945 = vadd.f32 0.0, %v1944
  %v1946 = vpop.f32.mrf.mxu0
  %1947 = vdwg.mxu0
  %1948 = vmatpush.bf16.msra.mxu0 0
  %1949 = vmatpush.bf16.msra.mxu0 0
  %1950 = vmatpush.bf16.msra.mxu0 0
  %1951 = vmatpush.bf16.msra.mxu0 %v1901
  %1952 = vmatpush.bf16.msra.mxu0 %v1878
  %1953 = vmatpush.bf16.msra.mxu0 %v1872
  %1954 = vmatpush.bf16.msra.mxu0 %v1866
  %1955 = vmatpush.bf16.msra.mxu0 %v1860
  %1956 = vmatmul.bf16.gmra.mxu0 %v1889
  %v1957 = vpop.f32.mrf.mxu0
  %v1958 = vadd.f32 0.0, %v1957
  %v1959 = vpop.f32.mrf.mxu0
  %1960 = vdwg.mxu0
  %1961 = vmatpush.bf16.msra.mxu0 0
  %1962 = vmatpush.bf16.msra.mxu0 0
  %1963 = vmatpush.bf16.msra.mxu0 0
  %1964 = vmatpush.bf16.msra.mxu0 %v1904
  %1965 = vmatpush.bf16.msra.mxu0 %v1879
  %1966 = vmatpush.bf16.msra.mxu0 %v1873
  %1967 = vmatpush.bf16.msra.mxu0 %v1867
  %1968 = vmatpush.bf16.msra.mxu0 %v1861
  %1969 = vmatmul.bf16.gmra.mxu0 %v1889
  %v1970 = vpop.f32.mrf.mxu0
  %v1971 = vadd.f32 0.0, %v1970
  %v1972 = vpop.f32.mrf.mxu0
  %1973 = vdwg.mxu0
  %1974 = vmatpush.bf16.msra.mxu0 0
  %1975 = vmatpush.bf16.msra.mxu0 0
  %1976 = vmatpush.bf16.msra.mxu0 0
  %1977 = vmatpush.bf16.msra.mxu0 %v1907
  %1978 = vmatpush.bf16.msra.mxu0 %v1880
  %1979 = vmatpush.bf16.msra.mxu0 %v1874
  %1980 = vmatpush.bf16.msra.mxu0 %v1868
  %1981 = vmatpush.bf16.msra.mxu0 %v1862
  %1982 = vmatmul.bf16.gmra.mxu0 %v1889
  %v1983 = vpop.f32.mrf.mxu0
  %v1984 = vadd.f32 0.0, %v1983
  %v1985 = vpop.f32.mrf.mxu0
  %1986 = vdwg.mxu0
  %v1987 = vmul.f32 %v1919, %v611
  %v1988 = vmul.f32 %v1932, %v612
  %v1989 = vmul.f32 %v1945, %v613
  %v1990 = vmul.f32 %v1958, %v614
  %v1991 = vmul.f32 %v1971, %v615
  %v1992 = vmul.f32 %v1984, %v616
  %v1993 = vadd.f32 %v1987, %v1988
  %v1994 = vadd.f32 %v1993, %v1989
  %v1995 = vadd.f32 %v1994, %v1990
  %v1996 = vadd.f32 %v1995, %v1991
  %v1997 = vsel %vm90, %v1992, 0.0
  %v1998 = vadd.f32 %v1996, %v1997
  %1999 = vadd.xlane.f32.xlu0 %v1998
  %v2000 = vpop.xlane.xlu0 %1999
  %v2001 = vmul.f32 %v2000, 0.001953125
  %v2002 = vsub.f32 %v1919, %v2001
  %v2003 = vsub.f32 %v1932, %v2001
  %v2004 = vsub.f32 %v1945, %v2001
  %v2005 = vsub.f32 %v1958, %v2001
  %v2006 = vsub.f32 %v1971, %v2001
  %v2007 = vsub.f32 %v1984, %v2001
  %v2008 = vmul.f32 %v2002, %v611
  %v2009 = vmul.f32 %v2003, %v612
  %v2010 = vmul.f32 %v2004, %v613
  %v2011 = vmul.f32 %v2005, %v614
  %v2012 = vmul.f32 %v2006, %v615
  %v2013 = vmul.f32 %v2007, %v616
  %v2014 = vmul.f32 %v2008, %v2008
  %v2015 = vmul.f32 %v2009, %v2009
  %v2016 = vmul.f32 %v2010, %v2010
  %v2017 = vmul.f32 %v2011, %v2011
  %v2018 = vmul.f32 %v2012, %v2012
  %v2019 = vmul.f32 %v2013, %v2013
  %v2020 = vadd.f32 %v2014, %v2015
  %v2021 = vadd.f32 %v2020, %v2016
  %v2022 = vadd.f32 %v2021, %v2017
  %v2023 = vadd.f32 %v2022, %v2018
  %v2024 = vsel %vm90, %v2019, 0.0
  %v2025 = vadd.f32 %v2023, %v2024
  %2026 = vadd.xlane.f32.xlu0 %v2025
  %v2027 = vpop.xlane.xlu0 %2026
  %v2028 = vmul.f32 %v2027, 0.001953125
  %v2029 = vld [vmem:[%s12] sm:$0xff]
  %v2030 = vadd.f32 %v2028, 1e-05
  %v2031 = vrsqrt.pop %v2030
  %v2032 = vmul.f32 %v2031, %v2030
  %v2033 = vmul.f32 %v2032, %v2031
  %v2034 = vmul.f32 0.5, %v2033
  %v2035 = vsub.f32 1.5, %v2034
  %v2036 = vmul.f32 %v2031, %v2035
  %vm2037 = vweird.f32 %v2030
  %vm2038 = vweird.f32 %v2031
  %vm2039 = vmor %vm2037, %vm2038
  %v2040 = vsel %vm2039, %v2031, %v2036
  %v2041 = vmul.f32 %v2029, %v2040
  %v2042 = vld [vmem:[%s13] sm:$0xff]
  %v2043 = vmul.f32 %v2001, %v2041
  %v2044 = vsub.f32 %v2042, %v2043
  %2046 = vset.pattern.permute.xlu0 0
  %2047 = vperm.xlu0 %2046, %v2041
  %v2048 = vpop.permute.xlu0 %2047
  %v2050 = vmul.f32 %v1919, %v2048
  %v2051 = vmul.f32 %v1932, %v2048
  %v2052 = vmul.f32 %v1945, %v2048
  %v2053 = vmul.f32 %v1958, %v2048
  %v2054 = vmul.f32 %v1971, %v2048
  %v2055 = vmul.f32 %v1984, %v2048
  %2057 = vset.pattern.permute.xlu0 0
  %2058 = vperm.xlu0 %2057, %v2044
  %v2059 = vpop.permute.xlu0 %2058
  %v2061 = vadd.f32 %v2050, %v2059
  %v2062 = vadd.f32 %v2051, %v2059
  %v2063 = vadd.f32 %v2052, %v2059
  %v2064 = vadd.f32 %v2053, %v2059
  %v2065 = vadd.f32 %v2054, %v2059
  %v2066 = vadd.f32 %v2055, %v2059
  %vm2067 = vcmp.ge.f32.partialorder %v2061, 0.0
  %vm2068 = vcmp.ge.f32.partialorder %v2062, 0.0
  %vm2069 = vcmp.ge.f32.partialorder %v2063, 0.0
  %vm2070 = vcmp.ge.f32.partialorder %v2064, 0.0
  %vm2071 = vcmp.ge.f32.partialorder %v2065, 0.0
  %vm2072 = vcmp.ge.f32.partialorder %v2066, 0.0
  %v2073 = vmul.f32 %v2061, 0.01
  %v2074 = vmul.f32 %v2062, 0.01
  %v2075 = vmul.f32 %v2063, 0.01
  %v2076 = vmul.f32 %v2064, 0.01
  %v2077 = vmul.f32 %v2065, 0.01
  %v2078 = vmul.f32 %v2066, 0.01
  %v2079 = vsel %vm2067, %v2061, %v2073
  %v2080 = vsel %vm2068, %v2062, %v2074
  %v2081 = vsel %vm2069, %v2063, %v2075
  %v2082 = vsel %vm2070, %v2064, %v2076
  %v2083 = vsel %vm2071, %v2065, %v2077
  %v2084 = vsel %vm2072, %v2066, %v2078
  %v2085 = vmul.f32 %v2079, %v611
  %v2086 = vmul.f32 %v2080, %v612
  %v2087 = vmul.f32 %v2081, %v613
  %v2088 = vmul.f32 %v2082, %v614
  %v2089 = vmul.f32 %v2083, %v615
  %v2090 = vmul.f32 %v2084, %v616
  %v2091 = vld [vmem:[%s14] sm:$0xf]
  %v2093 = vunpack.c.l.b16 %v2091
  %v2094 = vpack.c.b16 %v2093, %v2093
  %2095 = vrot.lane.b32.xlu0 %v2094, 120
  %v2096 = vpop.permute.xlu0 %2095
  %v2098 = vsel %vm90, %v2096, 0
  %2100 = vmatpush.bf16.msra.mxu0 0
  %2101 = vmatpush.bf16.msra.mxu0 0
  %2102 = vmatpush.bf16.msra.mxu0 0
  %2103 = vmatpush.bf16.msra.mxu0 0
  %2104 = vmatpush.bf16.msra.mxu0 0
  %2105 = vmatpush.bf16.msra.mxu0 0
  %2106 = vmatpush.bf16.msra.mxu0 0
  %2107 = vmatpush.bf16.msra.mxu0 %v1276
  %2108 = vmatmul.bf16.gmra.mxu0 %v2098
  %v2109 = vpop.f32.mrf.mxu0
  %v2110 = vadd.f32 0.0, %v2109
  %v2111 = vpop.f32.mrf.mxu0
  %2112 = vdwg.mxu0
  %2113 = vmatpush.bf16.msra.mxu0 0
  %2114 = vmatpush.bf16.msra.mxu0 0
  %2115 = vmatpush.bf16.msra.mxu0 0
  %2116 = vmatpush.bf16.msra.mxu0 0
  %2117 = vmatpush.bf16.msra.mxu0 0
  %2118 = vmatpush.bf16.msra.mxu0 0
  %2119 = vmatpush.bf16.msra.mxu0 0
  %2120 = vmatpush.bf16.msra.mxu0 %v1279
  %2121 = vmatmul.bf16.gmra.mxu0 %v2098
  %v2122 = vpop.f32.mrf.mxu0
  %v2123 = vadd.f32 0.0, %v2122
  %v2124 = vpop.f32.mrf.mxu0
  %2125 = vdwg.mxu0
  %2126 = vmatpush.bf16.msra.mxu0 0
  %2127 = vmatpush.bf16.msra.mxu0 0
  %2128 = vmatpush.bf16.msra.mxu0 0
  %2129 = vmatpush.bf16.msra.mxu0 0
  %2130 = vmatpush.bf16.msra.mxu0 0
  %2131 = vmatpush.bf16.msra.mxu0 0
  %2132 = vmatpush.bf16.msra.mxu0 0
  %2133 = vmatpush.bf16.msra.mxu0 %v1282
  %2134 = vmatmul.bf16.gmra.mxu0 %v2098
  %v2135 = vpop.f32.mrf.mxu0
  %v2136 = vadd.f32 0.0, %v2135
  %v2137 = vpop.f32.mrf.mxu0
  %2138 = vdwg.mxu0
  %2139 = vmatpush.bf16.msra.mxu0 0
  %2140 = vmatpush.bf16.msra.mxu0 0
  %2141 = vmatpush.bf16.msra.mxu0 0
  %2142 = vmatpush.bf16.msra.mxu0 0
  %2143 = vmatpush.bf16.msra.mxu0 0
  %2144 = vmatpush.bf16.msra.mxu0 0
  %2145 = vmatpush.bf16.msra.mxu0 0
  %2146 = vmatpush.bf16.msra.mxu0 %v1285
  %2147 = vmatmul.bf16.gmra.mxu0 %v2098
  %v2148 = vpop.f32.mrf.mxu0
  %v2149 = vadd.f32 0.0, %v2148
  %v2150 = vpop.f32.mrf.mxu0
  %2151 = vdwg.mxu0
  %2152 = vmatpush.bf16.msra.mxu0 0
  %2153 = vmatpush.bf16.msra.mxu0 0
  %2154 = vmatpush.bf16.msra.mxu0 0
  %2155 = vmatpush.bf16.msra.mxu0 0
  %2156 = vmatpush.bf16.msra.mxu0 0
  %2157 = vmatpush.bf16.msra.mxu0 0
  %2158 = vmatpush.bf16.msra.mxu0 0
  %2159 = vmatpush.bf16.msra.mxu0 %v1288
  %2160 = vmatmul.bf16.gmra.mxu0 %v2098
  %v2161 = vpop.f32.mrf.mxu0
  %v2162 = vadd.f32 0.0, %v2161
  %v2163 = vpop.f32.mrf.mxu0
  %2164 = vdwg.mxu0
  %2165 = vmatpush.bf16.msra.mxu0 0
  %2166 = vmatpush.bf16.msra.mxu0 0
  %2167 = vmatpush.bf16.msra.mxu0 0
  %2168 = vmatpush.bf16.msra.mxu0 0
  %2169 = vmatpush.bf16.msra.mxu0 0
  %2170 = vmatpush.bf16.msra.mxu0 0
  %2171 = vmatpush.bf16.msra.mxu0 0
  %2172 = vmatpush.bf16.msra.mxu0 %v1291
  %2173 = vmatmul.bf16.gmra.mxu0 %v2098
  %v2174 = vpop.f32.mrf.mxu0
  %v2175 = vadd.f32 0.0, %v2174
  %v2176 = vpop.f32.mrf.mxu0
  %2177 = vdwg.mxu0
  %v2179 = vsel %vm90, %v2091, 0
  %2181 = vmatpush.bf16.msra.mxu0 0
  %2182 = vmatpush.bf16.msra.mxu0 0
  %2183 = vmatpush.bf16.msra.mxu0 0
  %2184 = vmatpush.bf16.msra.mxu0 0
  %2185 = vmatpush.bf16.msra.mxu0 0
  %2186 = vmatpush.bf16.msra.mxu0 0
  %2187 = vmatpush.bf16.msra.mxu0 0
  %2188 = vmatpush.bf16.msra.mxu0 %v1375
  %2189 = vmatmul.bf16.gmra.mxu0 %v2179
  %v2190 = vpop.f32.mrf.mxu0
  %v2191 = vadd.f32 %v2110, %v2190
  %v2192 = vpop.f32.mrf.mxu0
  %2193 = vdwg.mxu0
  %2194 = vmatpush.bf16.msra.mxu0 0
  %2195 = vmatpush.bf16.msra.mxu0 0
  %2196 = vmatpush.bf16.msra.mxu0 0
  %2197 = vmatpush.bf16.msra.mxu0 0
  %2198 = vmatpush.bf16.msra.mxu0 0
  %2199 = vmatpush.bf16.msra.mxu0 0
  %2200 = vmatpush.bf16.msra.mxu0 0
  %2201 = vmatpush.bf16.msra.mxu0 %v1378
  %2202 = vmatmul.bf16.gmra.mxu0 %v2179
  %v2203 = vpop.f32.mrf.mxu0
  %v2204 = vadd.f32 %v2123, %v2203
  %v2205 = vpop.f32.mrf.mxu0
  %2206 = vdwg.mxu0
  %2207 = vmatpush.bf16.msra.mxu0 0
  %2208 = vmatpush.bf16.msra.mxu0 0
  %2209 = vmatpush.bf16.msra.mxu0 0
  %2210 = vmatpush.bf16.msra.mxu0 0
  %2211 = vmatpush.bf16.msra.mxu0 0
  %2212 = vmatpush.bf16.msra.mxu0 0
  %2213 = vmatpush.bf16.msra.mxu0 0
  %2214 = vmatpush.bf16.msra.mxu0 %v1381
  %2215 = vmatmul.bf16.gmra.mxu0 %v2179
  %v2216 = vpop.f32.mrf.mxu0
  %v2217 = vadd.f32 %v2136, %v2216
  %v2218 = vpop.f32.mrf.mxu0
  %2219 = vdwg.mxu0
  %2220 = vmatpush.bf16.msra.mxu0 0
  %2221 = vmatpush.bf16.msra.mxu0 0
  %2222 = vmatpush.bf16.msra.mxu0 0
  %2223 = vmatpush.bf16.msra.mxu0 0
  %2224 = vmatpush.bf16.msra.mxu0 0
  %2225 = vmatpush.bf16.msra.mxu0 0
  %2226 = vmatpush.bf16.msra.mxu0 0
  %2227 = vmatpush.bf16.msra.mxu0 %v1384
  %2228 = vmatmul.bf16.gmra.mxu0 %v2179
  %v2229 = vpop.f32.mrf.mxu0
  %v2230 = vadd.f32 %v2149, %v2229
  %v2231 = vpop.f32.mrf.mxu0
  %2232 = vdwg.mxu0
  %2233 = vmatpush.bf16.msra.mxu0 0
  %2234 = vmatpush.bf16.msra.mxu0 0
  %2235 = vmatpush.bf16.msra.mxu0 0
  %2236 = vmatpush.bf16.msra.mxu0 0
  %2237 = vmatpush.bf16.msra.mxu0 0
  %2238 = vmatpush.bf16.msra.mxu0 0
  %2239 = vmatpush.bf16.msra.mxu0 0
  %2240 = vmatpush.bf16.msra.mxu0 %v1387
  %2241 = vmatmul.bf16.gmra.mxu0 %v2179
  %v2242 = vpop.f32.mrf.mxu0
  %v2243 = vadd.f32 %v2162, %v2242
  %v2244 = vpop.f32.mrf.mxu0
  %2245 = vdwg.mxu0
  %2246 = vmatpush.bf16.msra.mxu0 0
  %2247 = vmatpush.bf16.msra.mxu0 0
  %2248 = vmatpush.bf16.msra.mxu0 0
  %2249 = vmatpush.bf16.msra.mxu0 0
  %2250 = vmatpush.bf16.msra.mxu0 0
  %2251 = vmatpush.bf16.msra.mxu0 0
  %2252 = vmatpush.bf16.msra.mxu0 0
  %2253 = vmatpush.bf16.msra.mxu0 %v1390
  %2254 = vmatmul.bf16.gmra.mxu0 %v2179
  %v2255 = vpop.f32.mrf.mxu0
  %v2256 = vadd.f32 %v2175, %v2255
  %v2257 = vpop.f32.mrf.mxu0
  %2258 = vdwg.mxu0
  %v2259 = vpack.c.bf16 %v2085, %v2085
  %v2260 = vpack.c.bf16 %v2086, %v2086
  %v2261 = vpack.c.bf16 %v2087, %v2087
  %v2262 = vpack.c.bf16 %v2088, %v2088
  %v2263 = vpack.c.bf16 %v2089, %v2089
  %v2264 = vpack.c.bf16 %v2090, %v2090
  %2265 = vrot.lane.b32.xlu0 %v2094, 112
  %v2266 = vpop.permute.xlu0 %2265
  %v2268 = vsel %vm90, %v2266, 0
  %v2271 = vsel %vm1053, %v2259, 0
  %v2274 = vsel %vm1053, %v2260, 0
  %v2277 = vsel %vm1053, %v2261, 0
  %v2280 = vsel %vm1053, %v2262, 0
  %v2283 = vsel %vm1053, %v2263, 0
  %v2286 = vsel %vm1053, %v2264, 0
  %2288 = vmatpush.bf16.msra.mxu0 0
  %2289 = vmatpush.bf16.msra.mxu0 0
  %2290 = vmatpush.bf16.msra.mxu0 0
  %2291 = vmatpush.bf16.msra.mxu0 0
  %2292 = vmatpush.bf16.msra.mxu0 0
  %2293 = vmatpush.bf16.msra.mxu0 0
  %2294 = vmatpush.bf16.msra.mxu0 0
  %2295 = vmatpush.bf16.msra.mxu0 %v2271
  %2296 = vmatmul.bf16.gmra.mxu0 %v2268
  %v2297 = vpop.f32.mrf.mxu0
  %v2298 = vadd.f32 0.0, %v2297
  %v2299 = vpop.f32.mrf.mxu0
  %2300 = vdwg.mxu0
  %2301 = vmatpush.bf16.msra.mxu0 0
  %2302 = vmatpush.bf16.msra.mxu0 0
  %2303 = vmatpush.bf16.msra.mxu0 0
  %2304 = vmatpush.bf16.msra.mxu0 0
  %2305 = vmatpush.bf16.msra.mxu0 0
  %2306 = vmatpush.bf16.msra.mxu0 0
  %2307 = vmatpush.bf16.msra.mxu0 0
  %2308 = vmatpush.bf16.msra.mxu0 %v2274
  %2309 = vmatmul.bf16.gmra.mxu0 %v2268
  %v2310 = vpop.f32.mrf.mxu0
  %v2311 = vadd.f32 0.0, %v2310
  %v2312 = vpop.f32.mrf.mxu0
  %2313 = vdwg.mxu0
  %2314 = vmatpush.bf16.msra.mxu0 0
  %2315 = vmatpush.bf16.msra.mxu0 0
  %2316 = vmatpush.bf16.msra.mxu0 0
  %2317 = vmatpush.bf16.msra.mxu0 0
  %2318 = vmatpush.bf16.msra.mxu0 0
  %2319 = vmatpush.bf16.msra.mxu0 0
  %2320 = vmatpush.bf16.msra.mxu0 0
  %2321 = vmatpush.bf16.msra.mxu0 %v2277
  %2322 = vmatmul.bf16.gmra.mxu0 %v2268
  %v2323 = vpop.f32.mrf.mxu0
  %v2324 = vadd.f32 0.0, %v2323
  %v2325 = vpop.f32.mrf.mxu0
  %2326 = vdwg.mxu0
  %2327 = vmatpush.bf16.msra.mxu0 0
  %2328 = vmatpush.bf16.msra.mxu0 0
  %2329 = vmatpush.bf16.msra.mxu0 0
  %2330 = vmatpush.bf16.msra.mxu0 0
  %2331 = vmatpush.bf16.msra.mxu0 0
  %2332 = vmatpush.bf16.msra.mxu0 0
  %2333 = vmatpush.bf16.msra.mxu0 0
  %2334 = vmatpush.bf16.msra.mxu0 %v2280
  %2335 = vmatmul.bf16.gmra.mxu0 %v2268
  %v2336 = vpop.f32.mrf.mxu0
  %v2337 = vadd.f32 0.0, %v2336
  %v2338 = vpop.f32.mrf.mxu0
  %2339 = vdwg.mxu0
  %2340 = vmatpush.bf16.msra.mxu0 0
  %2341 = vmatpush.bf16.msra.mxu0 0
  %2342 = vmatpush.bf16.msra.mxu0 0
  %2343 = vmatpush.bf16.msra.mxu0 0
  %2344 = vmatpush.bf16.msra.mxu0 0
  %2345 = vmatpush.bf16.msra.mxu0 0
  %2346 = vmatpush.bf16.msra.mxu0 0
  %2347 = vmatpush.bf16.msra.mxu0 %v2283
  %2348 = vmatmul.bf16.gmra.mxu0 %v2268
  %v2349 = vpop.f32.mrf.mxu0
  %v2350 = vadd.f32 0.0, %v2349
  %v2351 = vpop.f32.mrf.mxu0
  %2352 = vdwg.mxu0
  %2353 = vmatpush.bf16.msra.mxu0 0
  %2354 = vmatpush.bf16.msra.mxu0 0
  %2355 = vmatpush.bf16.msra.mxu0 0
  %2356 = vmatpush.bf16.msra.mxu0 0
  %2357 = vmatpush.bf16.msra.mxu0 0
  %2358 = vmatpush.bf16.msra.mxu0 0
  %2359 = vmatpush.bf16.msra.mxu0 0
  %2360 = vmatpush.bf16.msra.mxu0 %v2286
  %2361 = vmatmul.bf16.gmra.mxu0 %v2268
  %v2362 = vpop.f32.mrf.mxu0
  %v2363 = vadd.f32 0.0, %v2362
  %v2364 = vpop.f32.mrf.mxu0
  %2365 = vdwg.mxu0
  %v2366 = vadd.f32 %v2191, %v2298
  %v2367 = vadd.f32 %v2204, %v2311
  %v2368 = vadd.f32 %v2217, %v2324
  %v2369 = vadd.f32 %v2230, %v2337
  %v2370 = vadd.f32 %v2243, %v2350
  %v2371 = vadd.f32 %v2256, %v2363
  %v2372 = vmul.f32 %v2366, %v611
  %v2373 = vmul.f32 %v2367, %v612
  %v2374 = vmul.f32 %v2368, %v613
  %v2375 = vmul.f32 %v2369, %v614
  %v2376 = vmul.f32 %v2370, %v615
  %v2377 = vmul.f32 %v2371, %v616
  %v2378 = vadd.f32 %v2372, %v2373
  %v2379 = vadd.f32 %v2378, %v2374
  %v2380 = vadd.f32 %v2379, %v2375
  %v2381 = vadd.f32 %v2380, %v2376
  %v2382 = vsel %vm90, %v2377, 0.0
  %v2383 = vadd.f32 %v2381, %v2382
  %2384 = vadd.xlane.f32.xlu0 %v2383
  %v2385 = vpop.xlane.xlu0 %2384
  %v2386 = vmul.f32 %v2385, 0.001953125
  %v2387 = vsub.f32 %v2366, %v2386
  %v2388 = vsub.f32 %v2367, %v2386
  %v2389 = vsub.f32 %v2368, %v2386
  %v2390 = vsub.f32 %v2369, %v2386
  %v2391 = vsub.f32 %v2370, %v2386
  %v2392 = vsub.f32 %v2371, %v2386
  %v2393 = vmul.f32 %v2387, %v611
  %v2394 = vmul.f32 %v2388, %v612
  %v2395 = vmul.f32 %v2389, %v613
  %v2396 = vmul.f32 %v2390, %v614
  %v2397 = vmul.f32 %v2391, %v615
  %v2398 = vmul.f32 %v2392, %v616
  %v2399 = vmul.f32 %v2393, %v2393
  %v2400 = vmul.f32 %v2394, %v2394
  %v2401 = vmul.f32 %v2395, %v2395
  %v2402 = vmul.f32 %v2396, %v2396
  %v2403 = vmul.f32 %v2397, %v2397
  %v2404 = vmul.f32 %v2398, %v2398
  %v2405 = vadd.f32 %v2399, %v2400
  %v2406 = vadd.f32 %v2405, %v2401
  %v2407 = vadd.f32 %v2406, %v2402
  %v2408 = vadd.f32 %v2407, %v2403
  %v2409 = vsel %vm90, %v2404, 0.0
  %v2410 = vadd.f32 %v2408, %v2409
  %2411 = vadd.xlane.f32.xlu0 %v2410
  %v2412 = vpop.xlane.xlu0 %2411
  %v2413 = vmul.f32 %v2412, 0.001953125
  %v2414 = vld [vmem:[%s15] sm:$0xff]
  %v2415 = vadd.f32 %v2413, 1e-05
  %v2416 = vrsqrt.pop %v2415
  %v2417 = vmul.f32 %v2416, %v2415
  %v2418 = vmul.f32 %v2417, %v2416
  %v2419 = vmul.f32 0.5, %v2418
  %v2420 = vsub.f32 1.5, %v2419
  %v2421 = vmul.f32 %v2416, %v2420
  %vm2422 = vweird.f32 %v2415
  %vm2423 = vweird.f32 %v2416
  %vm2424 = vmor %vm2422, %vm2423
  %v2425 = vsel %vm2424, %v2416, %v2421
  %v2426 = vmul.f32 %v2414, %v2425
  %v2427 = vld [vmem:[%s16] sm:$0xff]
  %v2428 = vmul.f32 %v2386, %v2426
  %v2429 = vsub.f32 %v2427, %v2428
  %2431 = vset.pattern.permute.xlu0 0
  %2432 = vperm.xlu0 %2431, %v2426
  %v2433 = vpop.permute.xlu0 %2432
  %v2435 = vmul.f32 %v2366, %v2433
  %v2436 = vmul.f32 %v2367, %v2433
  %v2437 = vmul.f32 %v2368, %v2433
  %v2438 = vmul.f32 %v2369, %v2433
  %v2439 = vmul.f32 %v2370, %v2433
  %v2440 = vmul.f32 %v2371, %v2433
  %2442 = vset.pattern.permute.xlu0 0
  %2443 = vperm.xlu0 %2442, %v2429
  %v2444 = vpop.permute.xlu0 %2443
  %v2446 = vadd.f32 %v2435, %v2444
  %v2447 = vadd.f32 %v2436, %v2444
  %v2448 = vadd.f32 %v2437, %v2444
  %v2449 = vadd.f32 %v2438, %v2444
  %v2450 = vadd.f32 %v2439, %v2444
  %v2451 = vadd.f32 %v2440, %v2444
  %vm2452 = vcmp.ge.f32.partialorder %v2446, 0.0
  %vm2453 = vcmp.ge.f32.partialorder %v2447, 0.0
  %vm2454 = vcmp.ge.f32.partialorder %v2448, 0.0
  %vm2455 = vcmp.ge.f32.partialorder %v2449, 0.0
  %vm2456 = vcmp.ge.f32.partialorder %v2450, 0.0
  %vm2457 = vcmp.ge.f32.partialorder %v2451, 0.0
  %v2458 = vmul.f32 %v2446, 0.01
  %v2459 = vmul.f32 %v2447, 0.01
  %v2460 = vmul.f32 %v2448, 0.01
  %v2461 = vmul.f32 %v2449, 0.01
  %v2462 = vmul.f32 %v2450, 0.01
  %v2463 = vmul.f32 %v2451, 0.01
  %v2464 = vsel %vm2452, %v2446, %v2458
  %v2465 = vsel %vm2453, %v2447, %v2459
  %v2466 = vsel %vm2454, %v2448, %v2460
  %v2467 = vsel %vm2455, %v2449, %v2461
  %v2468 = vsel %vm2456, %v2450, %v2462
  %v2469 = vsel %vm2457, %v2451, %v2463
  %v2470 = vmul.f32 %v2464, %v611
  %v2471 = vmul.f32 %v2465, %v612
  %v2472 = vmul.f32 %v2466, %v613
  %v2473 = vmul.f32 %v2467, %v614
  %v2474 = vmul.f32 %v2468, %v615
  %v2475 = vmul.f32 %v2469, %v616
  %2481 = vrot.lane.b32.xlu0 %v2470, 19
  %v2482 = vpop.permute.xlu0 %2481
  %2483 = vrot.lane.b32.xlu0 %v2471, 19
  %v2484 = vpop.permute.xlu0 %2483
  %2485 = vrot.lane.b32.xlu0 %v2472, 19
  %v2486 = vpop.permute.xlu0 %2485
  %2487 = vrot.lane.b32.xlu0 %v2473, 19
  %v2488 = vpop.permute.xlu0 %2487
  %2489 = vrot.lane.b32.xlu0 %v2474, 19
  %v2490 = vpop.permute.xlu0 %2489
  %v2491 = vsel %vm78, %v2482, %v2484
  %v2492 = vsel %vm78, %v2484, %v2486
  %v2493 = vsel %vm78, %v2486, %v2488
  %v2494 = vsel %vm78, %v2488, %v2490
  %2501 = vst.msk [vmem:[#allocation2] sm:$0xff] %vm752, %v2482
  %2502 = vst [vmem:[#allocation2 + $0x8] sm:$0xff] %v2491
  %2503 = vst [vmem:[#allocation2 + $0x10] sm:$0xff] %v2492
  %2504 = vst [vmem:[#allocation2 + $0x18] sm:$0xff] %v2493
  %2505 = vst [vmem:[#allocation2 + $0x20] sm:$0xff] %v2494
  %2506 = vst.msk [vmem:[#allocation2 + $0x28] sm:$0xff] %vm90, %v2490
  %2507 = vrot.lane.b32.xlu0 %v2470, 18
  %v2508 = vpop.permute.xlu0 %2507
  %2509 = vrot.lane.b32.xlu0 %v2471, 18
  %v2510 = vpop.permute.xlu0 %2509
  %2511 = vrot.lane.b32.xlu0 %v2472, 18
  %v2512 = vpop.permute.xlu0 %2511
  %2513 = vrot.lane.b32.xlu0 %v2473, 18
  %v2514 = vpop.permute.xlu0 %2513
  %2515 = vrot.lane.b32.xlu0 %v2474, 18
  %v2516 = vpop.permute.xlu0 %2515
  %v2517 = vsel %vm173, %v2508, %v2510
  %v2518 = vsel %vm173, %v2510, %v2512
  %v2519 = vsel %vm173, %v2512, %v2514
  %v2520 = vsel %vm173, %v2514, %v2516
  %2527 = vst.msk [vmem:[#allocation2 + $0x30] sm:$0xff] %vm779, %v2508
  %2528 = vst [vmem:[#allocation2 + $0x38] sm:$0xff] %v2517
  %2529 = vst [vmem:[#allocation2 + $0x40] sm:$0xff] %v2518
  %2530 = vst [vmem:[#allocation2 + $0x48] sm:$0xff] %v2519
  %2531 = vst [vmem:[#allocation2 + $0x50] sm:$0xff] %v2520
  %2532 = vst.msk [vmem:[#allocation2 + $0x58] sm:$0xff] %vm90, %v2516
  %2533 = vrot.lane.b32.xlu0 %v2470, 17
  %v2534 = vpop.permute.xlu0 %2533
  %2535 = vrot.lane.b32.xlu0 %v2471, 17
  %v2536 = vpop.permute.xlu0 %2535
  %2537 = vrot.lane.b32.xlu0 %v2472, 17
  %v2538 = vpop.permute.xlu0 %2537
  %2539 = vrot.lane.b32.xlu0 %v2473, 17
  %v2540 = vpop.permute.xlu0 %2539
  %2541 = vrot.lane.b32.xlu0 %v2474, 17
  %v2542 = vpop.permute.xlu0 %2541
  %v2543 = vsel %vm212, %v2534, %v2536
  %v2544 = vsel %vm212, %v2536, %v2538
  %v2545 = vsel %vm212, %v2538, %v2540
  %v2546 = vsel %vm212, %v2540, %v2542
  %2553 = vst.msk [vmem:[#allocation2 + $0x60] sm:$0xff] %vm806, %v2534
  %2554 = vst [vmem:[#allocation2 + $0x68] sm:$0xff] %v2543
  %2555 = vst [vmem:[#allocation2 + $0x70] sm:$0xff] %v2544
  %2556 = vst [vmem:[#allocation2 + $0x78] sm:$0xff] %v2545
  %2557 = vst [vmem:[#allocation2 + $0x80] sm:$0xff] %v2546
  %2558 = vst.msk [vmem:[#allocation2 + $0x88] sm:$0xff] %vm90, %v2542
  %2560 = vrot.lane.b32.xlu0 %v2470, 1
  %v2561 = vpop.permute.xlu0 %2560
  %2562 = vrot.lane.b32.xlu0 %v2471, 1
  %v2563 = vpop.permute.xlu0 %2562
  %2564 = vrot.lane.b32.xlu0 %v2472, 1
  %v2565 = vpop.permute.xlu0 %2564
  %2566 = vrot.lane.b32.xlu0 %v2473, 1
  %v2567 = vpop.permute.xlu0 %2566
  %2568 = vrot.lane.b32.xlu0 %v2474, 1
  %v2569 = vpop.permute.xlu0 %2568
  %2570 = vrot.lane.b32.xlu0 %v2475, 1
  %v2571 = vpop.permute.xlu0 %2570
  %v2572 = vsel %vm254, %v2561, %v2563
  %v2573 = vsel %vm254, %v2563, %v2565
  %v2574 = vsel %vm254, %v2565, %v2567
  %v2575 = vsel %vm254, %v2567, %v2569
  %v2576 = vsel %vm254, %v2569, %v2571
  %2583 = vst.msk [vmem:[#allocation2 + $0x90] sm:$0xff] %vm837, %v2561
  %2584 = vst [vmem:[#allocation2 + $0x98] sm:$0xff] %v2572
  %2585 = vst [vmem:[#allocation2 + $0xa0] sm:$0xff] %v2573
  %2586 = vst [vmem:[#allocation2 + $0xa8] sm:$0xff] %v2574
  %2587 = vst [vmem:[#allocation2 + $0xb0] sm:$0xff] %v2575
  %2588 = vst.msk [vmem:[#allocation2 + $0xb8] sm:$0xff] %vm90, %v2576
  %2589 = vst [vmem:[#allocation2 + $0xc0] sm:$0xff] %v2470
  %2590 = vst [vmem:[#allocation2 + $0xc8] sm:$0xff] %v2471
  %2591 = vst [vmem:[#allocation2 + $0xd0] sm:$0xff] %v2472
  %2592 = vst [vmem:[#allocation2 + $0xd8] sm:$0xff] %v2473
  %2593 = vst [vmem:[#allocation2 + $0xe0] sm:$0xff] %v2474
  %2594 = vst.msk [vmem:[#allocation2 + $0xe8] sm:$0xff] %vm90, %v2475
  %2595 = vrot.lane.b32.xlu0 %v2470, 127
  %v2596 = vpop.permute.xlu0 %2595
  %2597 = vrot.lane.b32.xlu0 %v2471, 127
  %v2598 = vpop.permute.xlu0 %2597
  %2599 = vrot.lane.b32.xlu0 %v2472, 127
  %v2600 = vpop.permute.xlu0 %2599
  %2601 = vrot.lane.b32.xlu0 %v2473, 127
  %v2602 = vpop.permute.xlu0 %2601
  %2603 = vrot.lane.b32.xlu0 %v2474, 127
  %v2604 = vpop.permute.xlu0 %2603
  %2605 = vrot.lane.b32.xlu0 %v2475, 127
  %v2606 = vpop.permute.xlu0 %2605
  %v2607 = vsel %vm320, %v2596, %v2598
  %v2608 = vsel %vm320, %v2598, %v2600
  %v2609 = vsel %vm320, %v2600, %v2602
  %v2610 = vsel %vm320, %v2602, %v2604
  %v2611 = vsel %vm320, %v2604, %v2606
  %2618 = vst [vmem:[#allocation2 + $0xf0] sm:$0xff] %v2607
  %2619 = vst [vmem:[#allocation2 + $0xf8] sm:$0xff] %v2608
  %2620 = vst [vmem:[#allocation2 + $0x100] sm:$0xff] %v2609
  %2621 = vst [vmem:[#allocation2 + $0x108] sm:$0xff] %v2610
  %2622 = vst [vmem:[#allocation2 + $0x110] sm:$0xff] %v2611
  %2623 = vst.msk [vmem:[#allocation2 + $0x118] sm:$0xff] %vm878, %v2606
  %2624 = vrot.lane.b32.xlu0 %v2470, 111
  %v2625 = vpop.permute.xlu0 %2624
  %2626 = vrot.lane.b32.xlu0 %v2471, 111
  %v2627 = vpop.permute.xlu0 %2626
  %2628 = vrot.lane.b32.xlu0 %v2472, 111
  %v2629 = vpop.permute.xlu0 %2628
  %2630 = vrot.lane.b32.xlu0 %v2473, 111
  %v2631 = vpop.permute.xlu0 %2630
  %2632 = vrot.lane.b32.xlu0 %v2474, 111
  %v2633 = vpop.permute.xlu0 %2632
  %2634 = vrot.lane.b32.xlu0 %v2475, 111
  %v2635 = vpop.permute.xlu0 %2634
  %v2636 = vsel %vm362, %v2625, %v2627
  %v2637 = vsel %vm362, %v2627, %v2629
  %v2638 = vsel %vm362, %v2629, %v2631
  %v2639 = vsel %vm362, %v2631, %v2633
  %v2640 = vsel %vm362, %v2633, %v2635
  %2646 = vst [vmem:[#allocation2 + $0x120] sm:$0xff] %v2636
  %2647 = vst [vmem:[#allocation2 + $0x128] sm:$0xff] %v2637
  %2648 = vst [vmem:[#allocation2 + $0x130] sm:$0xff] %v2638
  %2649 = vst [vmem:[#allocation2 + $0x138] sm:$0xff] %v2639
  %2650 = vst.msk [vmem:[#allocation2 + $0x140] sm:$0xff] %vm906, %v2640
  %2651 = vrot.lane.b32.xlu0 %v2470, 110
  %v2652 = vpop.permute.xlu0 %2651
  %2653 = vrot.lane.b32.xlu0 %v2471, 110
  %v2654 = vpop.permute.xlu0 %2653
  %2655 = vrot.lane.b32.xlu0 %v2472, 110
  %v2656 = vpop.permute.xlu0 %2655
  %2657 = vrot.lane.b32.xlu0 %v2473, 110
  %v2658 = vpop.permute.xlu0 %2657
  %2659 = vrot.lane.b32.xlu0 %v2474, 110
  %v2660 = vpop.permute.xlu0 %2659
  %2661 = vrot.lane.b32.xlu0 %v2475, 110
  %v2662 = vpop.permute.xlu0 %2661
  %v2663 = vsel %vm403, %v2652, %v2654
  %v2664 = vsel %vm403, %v2654, %v2656
  %v2665 = vsel %vm403, %v2656, %v2658
  %v2666 = vsel %vm403, %v2658, %v2660
  %v2667 = vsel %vm403, %v2660, %v2662
  %2673 = vst [vmem:[#allocation2 + $0x150] sm:$0xff] %v2663
  %2674 = vst [vmem:[#allocation2 + $0x158] sm:$0xff] %v2664
  %2675 = vst [vmem:[#allocation2 + $0x160] sm:$0xff] %v2665
  %2676 = vst [vmem:[#allocation2 + $0x168] sm:$0xff] %v2666
  %2677 = vst.msk [vmem:[#allocation2 + $0x170] sm:$0xff] %vm934, %v2667
  %2678 = vrot.lane.b32.xlu0 %v2470, 109
  %v2679 = vpop.permute.xlu0 %2678
  %2680 = vrot.lane.b32.xlu0 %v2471, 109
  %v2681 = vpop.permute.xlu0 %2680
  %2682 = vrot.lane.b32.xlu0 %v2472, 109
  %v2683 = vpop.permute.xlu0 %2682
  %2684 = vrot.lane.b32.xlu0 %v2473, 109
  %v2685 = vpop.permute.xlu0 %2684
  %2686 = vrot.lane.b32.xlu0 %v2474, 109
  %v2687 = vpop.permute.xlu0 %2686
  %2688 = vrot.lane.b32.xlu0 %v2475, 109
  %v2689 = vpop.permute.xlu0 %2688
  %v2690 = vsel %vm443, %v2679, %v2681
  %v2691 = vsel %vm443, %v2681, %v2683
  %v2692 = vsel %vm443, %v2683, %v2685
  %v2693 = vsel %vm443, %v2685, %v2687
  %v2694 = vsel %vm443, %v2687, %v2689
  %2700 = vst [vmem:[#allocation2 + $0x180] sm:$0xff] %v2690
  %2701 = vst [vmem:[#allocation2 + $0x188] sm:$0xff] %v2691
  %2702 = vst [vmem:[#allocation2 + $0x190] sm:$0xff] %v2692
  %2703 = vst [vmem:[#allocation2 + $0x198] sm:$0xff] %v2693
  %2704 = vst.msk [vmem:[#allocation2 + $0x1a0] sm:$0xff] %vm962, %v2694
  %v2705 = vld [vmem:[#allocation2] sm:$0xff]
  %v2706 = vld [vmem:[#allocation2 + $0x8] sm:$0xff]
  %v2707 = vld [vmem:[#allocation2 + $0x10] sm:$0xff]
  %v2708 = vld [vmem:[#allocation2 + $0x18] sm:$0xff]
  %v2709 = vld [vmem:[#allocation2 + $0x20] sm:$0xff]
  %v2710 = vld [vmem:[#allocation2 + $0x28] sm:$0xff]
  %v2711 = vld [vmem:[#allocation2 + $0x30] sm:$0xff]
  %v2712 = vld [vmem:[#allocation2 + $0x38] sm:$0xff]
  %v2713 = vld [vmem:[#allocation2 + $0x40] sm:$0xff]
  %v2714 = vld [vmem:[#allocation2 + $0x48] sm:$0xff]
  %v2715 = vld [vmem:[#allocation2 + $0x50] sm:$0xff]
  %v2716 = vld [vmem:[#allocation2 + $0x58] sm:$0xff]
  %v2717 = vld [vmem:[#allocation2 + $0x60] sm:$0xff]
  %v2718 = vld [vmem:[#allocation2 + $0x68] sm:$0xff]
  %v2719 = vld [vmem:[#allocation2 + $0x70] sm:$0xff]
  %v2720 = vld [vmem:[#allocation2 + $0x78] sm:$0xff]
  %v2721 = vld [vmem:[#allocation2 + $0x80] sm:$0xff]
  %v2722 = vld [vmem:[#allocation2 + $0x88] sm:$0xff]
  %v2723 = vld [vmem:[#allocation2 + $0x90] sm:$0xff]
  %v2724 = vld [vmem:[#allocation2 + $0x98] sm:$0xff]
  %v2725 = vld [vmem:[#allocation2 + $0xa0] sm:$0xff]
  %v2726 = vld [vmem:[#allocation2 + $0xa8] sm:$0xff]
  %v2727 = vld [vmem:[#allocation2 + $0xb0] sm:$0xff]
  %v2728 = vld [vmem:[#allocation2 + $0xb8] sm:$0xff]
  %v2729 = vld [vmem:[#allocation2 + $0xc0] sm:$0xff]
  %v2730 = vld [vmem:[#allocation2 + $0xc8] sm:$0xff]
  %v2731 = vld [vmem:[#allocation2 + $0xd0] sm:$0xff]
  %v2732 = vld [vmem:[#allocation2 + $0xd8] sm:$0xff]
  %v2733 = vld [vmem:[#allocation2 + $0xe0] sm:$0xff]
  %v2734 = vld [vmem:[#allocation2 + $0xe8] sm:$0xff]
  %v2735 = vld [vmem:[#allocation2 + $0xf0] sm:$0xff]
  %v2736 = vld [vmem:[#allocation2 + $0xf8] sm:$0xff]
  %v2737 = vld [vmem:[#allocation2 + $0x100] sm:$0xff]
  %v2738 = vld [vmem:[#allocation2 + $0x108] sm:$0xff]
  %v2739 = vld [vmem:[#allocation2 + $0x110] sm:$0xff]
  %v2740 = vld [vmem:[#allocation2 + $0x118] sm:$0xff]
  %v2741 = vld [vmem:[#allocation2 + $0x120] sm:$0xff]
  %v2742 = vld [vmem:[#allocation2 + $0x128] sm:$0xff]
  %v2743 = vld [vmem:[#allocation2 + $0x130] sm:$0xff]
  %v2744 = vld [vmem:[#allocation2 + $0x138] sm:$0xff]
  %v2745 = vld [vmem:[#allocation2 + $0x140] sm:$0xff]
  %v2746 = vld [vmem:[#allocation2 + $0x148] sm:$0xff]
  %v2747 = vld [vmem:[#allocation2 + $0x150] sm:$0xff]
  %v2748 = vld [vmem:[#allocation2 + $0x158] sm:$0xff]
  %v2749 = vld [vmem:[#allocation2 + $0x160] sm:$0xff]
  %v2750 = vld [vmem:[#allocation2 + $0x168] sm:$0xff]
  %v2751 = vld [vmem:[#allocation2 + $0x170] sm:$0xff]
  %v2752 = vld [vmem:[#allocation2 + $0x178] sm:$0xff]
  %v2753 = vld [vmem:[#allocation2 + $0x180] sm:$0xff]
  %v2754 = vld [vmem:[#allocation2 + $0x188] sm:$0xff]
  %v2755 = vld [vmem:[#allocation2 + $0x190] sm:$0xff]
  %v2756 = vld [vmem:[#allocation2 + $0x198] sm:$0xff]
  %v2757 = vld [vmem:[#allocation2 + $0x1a0] sm:$0xff]
  %v2758 = vld [vmem:[#allocation2 + $0x1a8] sm:$0xff]
  %v2759 = vpack.c.bf16 %v2711, %v2705
  %v2760 = vpack.c.bf16 %v2712, %v2706
  %v2761 = vpack.c.bf16 %v2713, %v2707
  %v2762 = vpack.c.bf16 %v2714, %v2708
  %v2763 = vpack.c.bf16 %v2715, %v2709
  %v2764 = vpack.c.bf16 %v2716, %v2710
  %v2765 = vpack.c.bf16 %v2723, %v2717
  %v2766 = vpack.c.bf16 %v2724, %v2718
  %v2767 = vpack.c.bf16 %v2725, %v2719
  %v2768 = vpack.c.bf16 %v2726, %v2720
  %v2769 = vpack.c.bf16 %v2727, %v2721
  %v2770 = vpack.c.bf16 %v2728, %v2722
  %v2771 = vpack.c.bf16 %v2735, %v2729
  %v2772 = vpack.c.bf16 %v2736, %v2730
  %v2773 = vpack.c.bf16 %v2737, %v2731
  %v2774 = vpack.c.bf16 %v2738, %v2732
  %v2775 = vpack.c.bf16 %v2739, %v2733
  %v2776 = vpack.c.bf16 %v2740, %v2734
  %v2777 = vpack.c.bf16 %v2747, %v2741
  %v2778 = vpack.c.bf16 %v2748, %v2742
  %v2779 = vpack.c.bf16 %v2749, %v2743
  %v2780 = vpack.c.bf16 %v2750, %v2744
  %v2781 = vpack.c.bf16 %v2751, %v2745
  %v2782 = vpack.c.bf16 %v2752, %v2746
  %v2783 = vpack.c.bf16 %v2753, %v2753
  %v2784 = vpack.c.bf16 %v2754, %v2754
  %v2785 = vpack.c.bf16 %v2755, %v2755
  %v2786 = vpack.c.bf16 %v2756, %v2756
  %v2787 = vpack.c.bf16 %v2757, %v2757
  %v2788 = vpack.c.bf16 %v2758, %v2758
  %v2789 = vld [vmem:[%s17] sm:$0xf]
  %v2791 = vsel %vm1049, %v2789, 0
  %v2794 = vsel %vm1053, %v2783, 0
  %v2797 = vsel %vm1053, %v2784, 0
  %v2800 = vsel %vm1053, %v2785, 0
  %v2803 = vsel %vm1053, %v2786, 0
  %v2806 = vsel %vm1053, %v2787, 0
  %v2809 = vsel %vm1053, %v2788, 0
  %2811 = vmatpush.bf16.msra.mxu0 0
  %2812 = vmatpush.bf16.msra.mxu0 0
  %2813 = vmatpush.bf16.msra.mxu0 0
  %2814 = vmatpush.bf16.msra.mxu0 %v2794
  %2815 = vmatpush.bf16.msra.mxu0 %v2777
  %2816 = vmatpush.bf16.msra.mxu0 %v2771
  %2817 = vmatpush.bf16.msra.mxu0 %v2765
  %2818 = vmatpush.bf16.msra.mxu0 %v2759
  %2819 = vmatmul.bf16.gmra.mxu0 %v2791
  %v2820 = vpop.f32.mrf.mxu0
  %v2821 = vadd.f32 0.0, %v2820
  %v2822 = vpop.f32.mrf.mxu0
  %2823 = vdwg.mxu0
  %2824 = vmatpush.bf16.msra.mxu0 0
  %2825 = vmatpush.bf16.msra.mxu0 0
  %2826 = vmatpush.bf16.msra.mxu0 0
  %2827 = vmatpush.bf16.msra.mxu0 %v2797
  %2828 = vmatpush.bf16.msra.mxu0 %v2778
  %2829 = vmatpush.bf16.msra.mxu0 %v2772
  %2830 = vmatpush.bf16.msra.mxu0 %v2766
  %2831 = vmatpush.bf16.msra.mxu0 %v2760
  %2832 = vmatmul.bf16.gmra.mxu0 %v2791
  %v2833 = vpop.f32.mrf.mxu0
  %v2834 = vadd.f32 0.0, %v2833
  %v2835 = vpop.f32.mrf.mxu0
  %2836 = vdwg.mxu0
  %2837 = vmatpush.bf16.msra.mxu0 0
  %2838 = vmatpush.bf16.msra.mxu0 0
  %2839 = vmatpush.bf16.msra.mxu0 0
  %2840 = vmatpush.bf16.msra.mxu0 %v2800
  %2841 = vmatpush.bf16.msra.mxu0 %v2779
  %2842 = vmatpush.bf16.msra.mxu0 %v2773
  %2843 = vmatpush.bf16.msra.mxu0 %v2767
  %2844 = vmatpush.bf16.msra.mxu0 %v2761
  %2845 = vmatmul.bf16.gmra.mxu0 %v2791
  %v2846 = vpop.f32.mrf.mxu0
  %v2847 = vadd.f32 0.0, %v2846
  %v2848 = vpop.f32.mrf.mxu0
  %2849 = vdwg.mxu0
  %2850 = vmatpush.bf16.msra.mxu0 0
  %2851 = vmatpush.bf16.msra.mxu0 0
  %2852 = vmatpush.bf16.msra.mxu0 0
  %2853 = vmatpush.bf16.msra.mxu0 %v2803
  %2854 = vmatpush.bf16.msra.mxu0 %v2780
  %2855 = vmatpush.bf16.msra.mxu0 %v2774
  %2856 = vmatpush.bf16.msra.mxu0 %v2768
  %2857 = vmatpush.bf16.msra.mxu0 %v2762
  %2858 = vmatmul.bf16.gmra.mxu0 %v2791
  %v2859 = vpop.f32.mrf.mxu0
  %v2860 = vadd.f32 0.0, %v2859
  %v2861 = vpop.f32.mrf.mxu0
  %2862 = vdwg.mxu0
  %2863 = vmatpush.bf16.msra.mxu0 0
  %2864 = vmatpush.bf16.msra.mxu0 0
  %2865 = vmatpush.bf16.msra.mxu0 0
  %2866 = vmatpush.bf16.msra.mxu0 %v2806
  %2867 = vmatpush.bf16.msra.mxu0 %v2781
  %2868 = vmatpush.bf16.msra.mxu0 %v2775
  %2869 = vmatpush.bf16.msra.mxu0 %v2769
  %2870 = vmatpush.bf16.msra.mxu0 %v2763
  %2871 = vmatmul.bf16.gmra.mxu0 %v2791
  %v2872 = vpop.f32.mrf.mxu0
  %v2873 = vadd.f32 0.0, %v2872
  %v2874 = vpop.f32.mrf.mxu0
  %2875 = vdwg.mxu0
  %2876 = vmatpush.bf16.msra.mxu0 0
  %2877 = vmatpush.bf16.msra.mxu0 0
  %2878 = vmatpush.bf16.msra.mxu0 0
  %2879 = vmatpush.bf16.msra.mxu0 %v2809
  %2880 = vmatpush.bf16.msra.mxu0 %v2782
  %2881 = vmatpush.bf16.msra.mxu0 %v2776
  %2882 = vmatpush.bf16.msra.mxu0 %v2770
  %2883 = vmatpush.bf16.msra.mxu0 %v2764
  %2884 = vmatmul.bf16.gmra.mxu0 %v2791
  %v2885 = vpop.f32.mrf.mxu0
  %v2886 = vadd.f32 0.0, %v2885
  %v2887 = vpop.f32.mrf.mxu0
  %2888 = vdwg.mxu0
  %v2889 = vmul.f32 %v2821, %v611
  %v2890 = vmul.f32 %v2834, %v612
  %v2891 = vmul.f32 %v2847, %v613
  %v2892 = vmul.f32 %v2860, %v614
  %v2893 = vmul.f32 %v2873, %v615
  %v2894 = vmul.f32 %v2886, %v616
  %v2895 = vadd.f32 %v2889, %v2890
  %v2896 = vadd.f32 %v2895, %v2891
  %v2897 = vadd.f32 %v2896, %v2892
  %v2898 = vadd.f32 %v2897, %v2893
  %v2899 = vsel %vm90, %v2894, 0.0
  %v2900 = vadd.f32 %v2898, %v2899
  %2901 = vadd.xlane.f32.xlu0 %v2900
  %v2902 = vpop.xlane.xlu0 %2901
  %v2903 = vmul.f32 %v2902, 0.001953125
  %v2904 = vsub.f32 %v2821, %v2903
  %v2905 = vsub.f32 %v2834, %v2903
  %v2906 = vsub.f32 %v2847, %v2903
  %v2907 = vsub.f32 %v2860, %v2903
  %v2908 = vsub.f32 %v2873, %v2903
  %v2909 = vsub.f32 %v2886, %v2903
  %v2910 = vmul.f32 %v2904, %v611
  %v2911 = vmul.f32 %v2905, %v612
  %v2912 = vmul.f32 %v2906, %v613
  %v2913 = vmul.f32 %v2907, %v614
  %v2914 = vmul.f32 %v2908, %v615
  %v2915 = vmul.f32 %v2909, %v616
  %v2916 = vmul.f32 %v2910, %v2910
  %v2917 = vmul.f32 %v2911, %v2911
  %v2918 = vmul.f32 %v2912, %v2912
  %v2919 = vmul.f32 %v2913, %v2913
  %v2920 = vmul.f32 %v2914, %v2914
  %v2921 = vmul.f32 %v2915, %v2915
  %v2922 = vadd.f32 %v2916, %v2917
  %v2923 = vadd.f32 %v2922, %v2918
  %v2924 = vadd.f32 %v2923, %v2919
  %v2925 = vadd.f32 %v2924, %v2920
  %v2926 = vsel %vm90, %v2921, 0.0
  %v2927 = vadd.f32 %v2925, %v2926
  %2928 = vadd.xlane.f32.xlu0 %v2927
  %v2929 = vpop.xlane.xlu0 %2928
  %v2930 = vmul.f32 %v2929, 0.001953125
  %v2931 = vld [vmem:[%s18] sm:$0xff]
  %v2932 = vadd.f32 %v2930, 1e-05
  %v2933 = vrsqrt.pop %v2932
  %v2934 = vmul.f32 %v2933, %v2932
  %v2935 = vmul.f32 %v2934, %v2933
  %v2936 = vmul.f32 0.5, %v2935
  %v2937 = vsub.f32 1.5, %v2936
  %v2938 = vmul.f32 %v2933, %v2937
  %vm2939 = vweird.f32 %v2932
  %vm2940 = vweird.f32 %v2933
  %vm2941 = vmor %vm2939, %vm2940
  %v2942 = vsel %vm2941, %v2933, %v2938
  %v2943 = vmul.f32 %v2931, %v2942
  %v2944 = vld [vmem:[%s19] sm:$0xff]
  %v2945 = vmul.f32 %v2903, %v2943
  %v2946 = vsub.f32 %v2944, %v2945
  %2948 = vset.pattern.permute.xlu0 0
  %2949 = vperm.xlu0 %2948, %v2943
  %v2950 = vpop.permute.xlu0 %2949
  %v2952 = vmul.f32 %v2821, %v2950
  %v2953 = vmul.f32 %v2834, %v2950
  %v2954 = vmul.f32 %v2847, %v2950
  %v2955 = vmul.f32 %v2860, %v2950
  %v2956 = vmul.f32 %v2873, %v2950
  %v2957 = vmul.f32 %v2886, %v2950
  %2959 = vset.pattern.permute.xlu0 0
  %2960 = vperm.xlu0 %2959, %v2946
  %v2961 = vpop.permute.xlu0 %2960
  %v2963 = vadd.f32 %v2952, %v2961
  %v2964 = vadd.f32 %v2953, %v2961
  %v2965 = vadd.f32 %v2954, %v2961
  %v2966 = vadd.f32 %v2955, %v2961
  %v2967 = vadd.f32 %v2956, %v2961
  %v2968 = vadd.f32 %v2957, %v2961
  %vm2969 = vcmp.ge.f32.partialorder %v2963, 0.0
  %vm2970 = vcmp.ge.f32.partialorder %v2964, 0.0
  %vm2971 = vcmp.ge.f32.partialorder %v2965, 0.0
  %vm2972 = vcmp.ge.f32.partialorder %v2966, 0.0
  %vm2973 = vcmp.ge.f32.partialorder %v2967, 0.0
  %vm2974 = vcmp.ge.f32.partialorder %v2968, 0.0
  %v2975 = vmul.f32 %v2963, 0.01
  %v2976 = vmul.f32 %v2964, 0.01
  %v2977 = vmul.f32 %v2965, 0.01
  %v2978 = vmul.f32 %v2966, 0.01
  %v2979 = vmul.f32 %v2967, 0.01
  %v2980 = vmul.f32 %v2968, 0.01
  %v2981 = vsel %vm2969, %v2963, %v2975
  %v2982 = vsel %vm2970, %v2964, %v2976
  %v2983 = vsel %vm2971, %v2965, %v2977
  %v2984 = vsel %vm2972, %v2966, %v2978
  %v2985 = vsel %vm2973, %v2967, %v2979
  %v2986 = vsel %vm2974, %v2968, %v2980
  %v2987 = vmul.f32 %v2981, %v611
  %v2988 = vmul.f32 %v2982, %v612
  %v2989 = vmul.f32 %v2983, %v613
  %v2990 = vmul.f32 %v2984, %v614
  %v2991 = vmul.f32 %v2985, %v615
  %v2992 = vmul.f32 %v2986, %v616
  %2993 = vst [vmem:[%s23] sm:$0xff] %v2987
  %2994 = vst [vmem:[%s23 + $0x8] sm:$0xff] %v2988
  %2995 = vst [vmem:[%s23 + $0x10] sm:$0xff] %v2989
  %2996 = vst [vmem:[%s23 + $0x18] sm:$0xff] %v2990
  %2997 = vst [vmem:[%s23 + $0x20] sm:$0xff] %v2991
  %2998 = vst.msk [vmem:[%s23 + $0x28] sm:$0xff] %vm90, %v2992
  %2999 = vst [vmem:[%s23 + $0x30] sm:$0xff] %v721
  %3000 = vst [vmem:[%s23 + $0x38] sm:$0xff] %v722
  %3001 = vst [vmem:[%s23 + $0x40] sm:$0xff] %v723
  %3002 = vst [vmem:[%s23 + $0x48] sm:$0xff] %v724
  %3003 = vst [vmem:[%s23 + $0x50] sm:$0xff] %v725
  %3004 = vst.msk [vmem:[%s23 + $0x58] sm:$0xff] %vm90, %v726
  %v3005 = vld [vmem:[%s20] sm:$0xf]
  %v3006 = vld [vmem:[%s20 + $0x4] sm:$0x3]
  %v3007 = vpack.c.bf16 %v2987, %v2987
  %v3008 = vpack.c.bf16 %v2988, %v2988
  %v3009 = vpack.c.bf16 %v2989, %v2989
  %v3010 = vpack.c.bf16 %v2990, %v2990
  %v3011 = vpack.c.bf16 %v2991, %v2991
  %v3012 = vpack.c.bf16 %v2992, %v2992
  %v3015 = vunpack.c.l.b16 %v3005
  %v3016 = vunpack.c.l.b16 %v3006
  %v3017 = vpack.c.b16 %v3016, %v3015
  %3018 = vrot.lane.b32.xlu0 %v3017, 120
  %v3019 = vpop.permute.xlu0 %3018
  %v3021 = vsel %vm90, %v3019, 0
  %3023 = vmatpush.bf16.msra.mxu0 0
  %3024 = vmatpush.bf16.msra.mxu0 0
  %3025 = vmatpush.bf16.msra.mxu0 0
  %3026 = vmatpush.bf16.msra.mxu0 0
  %3027 = vmatpush.bf16.msra.mxu0 0
  %3028 = vmatpush.bf16.msra.mxu0 0
  %3029 = vmatpush.bf16.msra.mxu0 0
  %3030 = vmatpush.bf16.msra.mxu0 %v1375
  %3031 = vmatmul.bf16.gmra.mxu0 %v3021
  %v3032 = vpop.f32.mrf.mxu0
  %v3033 = vadd.f32 0.0, %v3032
  %v3034 = vpop.f32.mrf.mxu0
  %v3035 = vadd.f32 0.0, %v3034
  %3036 = vdwg.mxu0
  %3037 = vmatpush.bf16.msra.mxu0 0
  %3038 = vmatpush.bf16.msra.mxu0 0
  %3039 = vmatpush.bf16.msra.mxu0 0
  %3040 = vmatpush.bf16.msra.mxu0 0
  %3041 = vmatpush.bf16.msra.mxu0 0
  %3042 = vmatpush.bf16.msra.mxu0 0
  %3043 = vmatpush.bf16.msra.mxu0 0
  %3044 = vmatpush.bf16.msra.mxu0 %v1378
  %3045 = vmatmul.bf16.gmra.mxu0 %v3021
  %v3046 = vpop.f32.mrf.mxu0
  %v3047 = vadd.f32 0.0, %v3046
  %v3048 = vpop.f32.mrf.mxu0
  %v3049 = vadd.f32 0.0, %v3048
  %3050 = vdwg.mxu0
  %3051 = vmatpush.bf16.msra.mxu0 0
  %3052 = vmatpush.bf16.msra.mxu0 0
  %3053 = vmatpush.bf16.msra.mxu0 0
  %3054 = vmatpush.bf16.msra.mxu0 0
  %3055 = vmatpush.bf16.msra.mxu0 0
  %3056 = vmatpush.bf16.msra.mxu0 0
  %3057 = vmatpush.bf16.msra.mxu0 0
  %3058 = vmatpush.bf16.msra.mxu0 %v1381
  %3059 = vmatmul.bf16.gmra.mxu0 %v3021
  %v3060 = vpop.f32.mrf.mxu0
  %v3061 = vadd.f32 0.0, %v3060
  %v3062 = vpop.f32.mrf.mxu0
  %v3063 = vadd.f32 0.0, %v3062
  %3064 = vdwg.mxu0
  %3065 = vmatpush.bf16.msra.mxu0 0
  %3066 = vmatpush.bf16.msra.mxu0 0
  %3067 = vmatpush.bf16.msra.mxu0 0
  %3068 = vmatpush.bf16.msra.mxu0 0
  %3069 = vmatpush.bf16.msra.mxu0 0
  %3070 = vmatpush.bf16.msra.mxu0 0
  %3071 = vmatpush.bf16.msra.mxu0 0
  %3072 = vmatpush.bf16.msra.mxu0 %v1384
  %3073 = vmatmul.bf16.gmra.mxu0 %v3021
  %v3074 = vpop.f32.mrf.mxu0
  %v3075 = vadd.f32 0.0, %v3074
  %v3076 = vpop.f32.mrf.mxu0
  %v3077 = vadd.f32 0.0, %v3076
  %3078 = vdwg.mxu0
  %3079 = vmatpush.bf16.msra.mxu0 0
  %3080 = vmatpush.bf16.msra.mxu0 0
  %3081 = vmatpush.bf16.msra.mxu0 0
  %3082 = vmatpush.bf16.msra.mxu0 0
  %3083 = vmatpush.bf16.msra.mxu0 0
  %3084 = vmatpush.bf16.msra.mxu0 0
  %3085 = vmatpush.bf16.msra.mxu0 0
  %3086 = vmatpush.bf16.msra.mxu0 %v1387
  %3087 = vmatmul.bf16.gmra.mxu0 %v3021
  %v3088 = vpop.f32.mrf.mxu0
  %v3089 = vadd.f32 0.0, %v3088
  %v3090 = vpop.f32.mrf.mxu0
  %v3091 = vadd.f32 0.0, %v3090
  %3092 = vdwg.mxu0
  %3093 = vmatpush.bf16.msra.mxu0 0
  %3094 = vmatpush.bf16.msra.mxu0 0
  %3095 = vmatpush.bf16.msra.mxu0 0
  %3096 = vmatpush.bf16.msra.mxu0 0
  %3097 = vmatpush.bf16.msra.mxu0 0
  %3098 = vmatpush.bf16.msra.mxu0 0
  %3099 = vmatpush.bf16.msra.mxu0 0
  %3100 = vmatpush.bf16.msra.mxu0 %v1390
  %3101 = vmatmul.bf16.gmra.mxu0 %v3021
  %v3102 = vpop.f32.mrf.mxu0
  %v3103 = vadd.f32 0.0, %v3102
  %v3104 = vpop.f32.mrf.mxu0
  %v3105 = vadd.f32 0.0, %v3104
  %3106 = vdwg.mxu0
  %v3108 = vsel %vm90, %v3017, 0
  %v3111 = vsel %vm1053, %v3007, 0
  %v3114 = vsel %vm1053, %v3008, 0
  %v3117 = vsel %vm1053, %v3009, 0
  %v3120 = vsel %vm1053, %v3010, 0
  %v3123 = vsel %vm1053, %v3011, 0
  %v3126 = vsel %vm1053, %v3012, 0
  %3128 = vmatpush.bf16.msra.mxu0 0
  %3129 = vmatpush.bf16.msra.mxu0 0
  %3130 = vmatpush.bf16.msra.mxu0 0
  %3131 = vmatpush.bf16.msra.mxu0 0
  %3132 = vmatpush.bf16.msra.mxu0 0
  %3133 = vmatpush.bf16.msra.mxu0 0
  %3134 = vmatpush.bf16.msra.mxu0 0
  %3135 = vmatpush.bf16.msra.mxu0 %v3111
  %3136 = vmatmul.bf16.gmra.mxu0 %v3108
  %v3137 = vpop.f32.mrf.mxu0
  %v3138 = vadd.f32 %v3033, %v3137
  %v3139 = vpop.f32.mrf.mxu0
  %v3140 = vadd.f32 %v3035, %v3139
  %3141 = vdwg.mxu0
  %3142 = vmatpush.bf16.msra.mxu0 0
  %3143 = vmatpush.bf16.msra.mxu0 0
  %3144 = vmatpush.bf16.msra.mxu0 0
  %3145 = vmatpush.bf16.msra.mxu0 0
  %3146 = vmatpush.bf16.msra.mxu0 0
  %3147 = vmatpush.bf16.msra.mxu0 0
  %3148 = vmatpush.bf16.msra.mxu0 0
  %3149 = vmatpush.bf16.msra.mxu0 %v3114
  %3150 = vmatmul.bf16.gmra.mxu0 %v3108
  %v3151 = vpop.f32.mrf.mxu0
  %v3152 = vadd.f32 %v3047, %v3151
  %v3153 = vpop.f32.mrf.mxu0
  %v3154 = vadd.f32 %v3049, %v3153
  %3155 = vdwg.mxu0
  %3156 = vmatpush.bf16.msra.mxu0 0
  %3157 = vmatpush.bf16.msra.mxu0 0
  %3158 = vmatpush.bf16.msra.mxu0 0
  %3159 = vmatpush.bf16.msra.mxu0 0
  %3160 = vmatpush.bf16.msra.mxu0 0
  %3161 = vmatpush.bf16.msra.mxu0 0
  %3162 = vmatpush.bf16.msra.mxu0 0
  %3163 = vmatpush.bf16.msra.mxu0 %v3117
  %3164 = vmatmul.bf16.gmra.mxu0 %v3108
  %v3165 = vpop.f32.mrf.mxu0
  %v3166 = vadd.f32 %v3061, %v3165
  %v3167 = vpop.f32.mrf.mxu0
  %v3168 = vadd.f32 %v3063, %v3167
  %3169 = vdwg.mxu0
  %3170 = vmatpush.bf16.msra.mxu0 0
  %3171 = vmatpush.bf16.msra.mxu0 0
  %3172 = vmatpush.bf16.msra.mxu0 0
  %3173 = vmatpush.bf16.msra.mxu0 0
  %3174 = vmatpush.bf16.msra.mxu0 0
  %3175 = vmatpush.bf16.msra.mxu0 0
  %3176 = vmatpush.bf16.msra.mxu0 0
  %3177 = vmatpush.bf16.msra.mxu0 %v3120
  %3178 = vmatmul.bf16.gmra.mxu0 %v3108
  %v3179 = vpop.f32.mrf.mxu0
  %v3180 = vadd.f32 %v3075, %v3179
  %v3181 = vpop.f32.mrf.mxu0
  %v3182 = vadd.f32 %v3077, %v3181
  %3183 = vdwg.mxu0
  %3184 = vmatpush.bf16.msra.mxu0 0
  %3185 = vmatpush.bf16.msra.mxu0 0
  %3186 = vmatpush.bf16.msra.mxu0 0
  %3187 = vmatpush.bf16.msra.mxu0 0
  %3188 = vmatpush.bf16.msra.mxu0 0
  %3189 = vmatpush.bf16.msra.mxu0 0
  %3190 = vmatpush.bf16.msra.mxu0 0
  %3191 = vmatpush.bf16.msra.mxu0 %v3123
  %3192 = vmatmul.bf16.gmra.mxu0 %v3108
  %v3193 = vpop.f32.mrf.mxu0
  %v3194 = vadd.f32 %v3089, %v3193
  %v3195 = vpop.f32.mrf.mxu0
  %v3196 = vadd.f32 %v3091, %v3195
  %3197 = vdwg.mxu0
  %3198 = vmatpush.bf16.msra.mxu0 0
  %3199 = vmatpush.bf16.msra.mxu0 0
  %3200 = vmatpush.bf16.msra.mxu0 0
  %3201 = vmatpush.bf16.msra.mxu0 0
  %3202 = vmatpush.bf16.msra.mxu0 0
  %3203 = vmatpush.bf16.msra.mxu0 0
  %3204 = vmatpush.bf16.msra.mxu0 0
  %3205 = vmatpush.bf16.msra.mxu0 %v3126
  %3206 = vmatmul.bf16.gmra.mxu0 %v3108
  %v3207 = vpop.f32.mrf.mxu0
  %v3208 = vadd.f32 %v3103, %v3207
  %v3209 = vpop.f32.mrf.mxu0
  %v3210 = vadd.f32 %v3105, %v3209
  %3211 = vdwg.mxu0
  %v3212 = vmul.f32 %v3138, %v611
  %v3213 = vmul.f32 %v3152, %v612
  %v3214 = vmul.f32 %v3166, %v613
  %v3215 = vmul.f32 %v3180, %v614
  %v3216 = vmul.f32 %v3194, %v615
  %v3217 = vmul.f32 %v3208, %v616
  %v3218 = vmul.f32 %v3140, %v611
  %v3219 = vmul.f32 %v3154, %v612
  %v3220 = vmul.f32 %v3168, %v613
  %v3221 = vmul.f32 %v3182, %v614
  %v3222 = vmul.f32 %v3196, %v615
  %v3223 = vmul.f32 %v3210, %v616
  %v3224 = vadd.f32 %v3212, %v3213
  %v3225 = vadd.f32 %v3224, %v3214
  %v3226 = vadd.f32 %v3225, %v3215
  %v3227 = vadd.f32 %v3226, %v3216
  %v3228 = vsel %vm90, %v3217, 0.0
  %v3229 = vadd.f32 %v3227, %v3228
  %3230 = vadd.xlane.f32.xlu0 %v3229
  %v3231 = vpop.xlane.xlu0 %3230
  %v3232 = vsel %vm1053, %v3218, 0.0
  %v3233 = vsel %vm1053, %v3219, 0.0
  %v3234 = vadd.f32 %v3232, %v3233
  %v3235 = vsel %vm1053, %v3220, 0.0
  %v3236 = vadd.f32 %v3234, %v3235
  %v3237 = vsel %vm1053, %v3221, 0.0
  %v3238 = vadd.f32 %v3236, %v3237
  %v3239 = vsel %vm1053, %v3222, 0.0
  %v3240 = vadd.f32 %v3238, %v3239
  %v3241 = vsel %vm150, %v3223, 0.0
  %v3242 = vadd.f32 %v3240, %v3241
  %3243 = vadd.xlane.f32.xlu0 %v3242
  %v3244 = vpop.xlane.xlu0 %3243
  %v3245 = vmul.f32 %v3231, 0.001953125
  %v3246 = vmul.f32 %v3244, 0.001953125
  %v3247 = vsub.f32 %v3138, %v3245
  %v3248 = vsub.f32 %v3152, %v3245
  %v3249 = vsub.f32 %v3166, %v3245
  %v3250 = vsub.f32 %v3180, %v3245
  %v3251 = vsub.f32 %v3194, %v3245
  %v3252 = vsub.f32 %v3208, %v3245
  %v3253 = vsub.f32 %v3140, %v3246
  %v3254 = vsub.f32 %v3154, %v3246
  %v3255 = vsub.f32 %v3168, %v3246
  %v3256 = vsub.f32 %v3182, %v3246
  %v3257 = vsub.f32 %v3196, %v3246
  %v3258 = vsub.f32 %v3210, %v3246
  %v3259 = vmul.f32 %v3247, %v611
  %v3260 = vmul.f32 %v3248, %v612
  %v3261 = vmul.f32 %v3249, %v613
  %v3262 = vmul.f32 %v3250, %v614
  %v3263 = vmul.f32 %v3251, %v615
  %v3264 = vmul.f32 %v3252, %v616
  %v3265 = vmul.f32 %v3253, %v611
  %v3266 = vmul.f32 %v3254, %v612
  %v3267 = vmul.f32 %v3255, %v613
  %v3268 = vmul.f32 %v3256, %v614
  %v3269 = vmul.f32 %v3257, %v615
  %v3270 = vmul.f32 %v3258, %v616
  %v3271 = vmul.f32 %v3259, %v3259
  %v3272 = vmul.f32 %v3260, %v3260
  %v3273 = vmul.f32 %v3261, %v3261
  %v3274 = vmul.f32 %v3262, %v3262
  %v3275 = vmul.f32 %v3263, %v3263
  %v3276 = vmul.f32 %v3264, %v3264
  %v3277 = vmul.f32 %v3265, %v3265
  %v3278 = vmul.f32 %v3266, %v3266
  %v3279 = vmul.f32 %v3267, %v3267
  %v3280 = vmul.f32 %v3268, %v3268
  %v3281 = vmul.f32 %v3269, %v3269
  %v3282 = vmul.f32 %v3270, %v3270
  %v3283 = vadd.f32 %v3271, %v3272
  %v3284 = vadd.f32 %v3283, %v3273
  %v3285 = vadd.f32 %v3284, %v3274
  %v3286 = vadd.f32 %v3285, %v3275
  %v3287 = vsel %vm90, %v3276, 0.0
  %v3288 = vadd.f32 %v3286, %v3287
  %3289 = vadd.xlane.f32.xlu0 %v3288
  %v3290 = vpop.xlane.xlu0 %3289
  %v3291 = vsel %vm1053, %v3277, 0.0
  %v3292 = vsel %vm1053, %v3278, 0.0
  %v3293 = vadd.f32 %v3291, %v3292
  %v3294 = vsel %vm1053, %v3279, 0.0
  %v3295 = vadd.f32 %v3293, %v3294
  %v3296 = vsel %vm1053, %v3280, 0.0
  %v3297 = vadd.f32 %v3295, %v3296
  %v3298 = vsel %vm1053, %v3281, 0.0
  %v3299 = vadd.f32 %v3297, %v3298
  %v3300 = vsel %vm150, %v3282, 0.0
  %v3301 = vadd.f32 %v3299, %v3300
  %3302 = vadd.xlane.f32.xlu0 %v3301
  %v3303 = vpop.xlane.xlu0 %3302
  %v3304 = vmul.f32 %v3290, 0.001953125
  %v3305 = vmul.f32 %v3303, 0.001953125
  %v3306 = vld [vmem:[%s21] sm:$0xff]
  %v3307 = vld [vmem:[%s21 + $0x8] sm:$0xf]
  %v3308 = vadd.f32 %v3304, 1e-05
  %v3309 = vadd.f32 %v3305, 1e-05
  %v3310 = vrsqrt.pop %v3308
  %v3311 = vmul.f32 %v3310, %v3308
  %v3312 = vmul.f32 %v3311, %v3310
  %v3313 = vmul.f32 0.5, %v3312
  %v3314 = vsub.f32 1.5, %v3313
  %v3315 = vmul.f32 %v3310, %v3314
  %vm3316 = vweird.f32 %v3308
  %vm3317 = vweird.f32 %v3310
  %vm3318 = vmor %vm3316, %vm3317
  %v3319 = vsel %vm3318, %v3310, %v3315
  %v3320 = vrsqrt.pop %v3309
  %v3321 = vmul.f32 %v3320, %v3309
  %v3322 = vmul.f32 %v3321, %v3320
  %v3323 = vmul.f32 0.5, %v3322
  %v3324 = vsub.f32 1.5, %v3323
  %v3325 = vmul.f32 %v3320, %v3324
  %vm3326 = vweird.f32 %v3309
  %vm3327 = vweird.f32 %v3320
  %vm3328 = vmor %vm3326, %vm3327
  %v3329 = vsel %vm3328, %v3320, %v3325
  %v3330 = vmul.f32 %v3306, %v3319
  %v3331 = vmul.f32 %v3307, %v3329
  %v3332 = vld [vmem:[%s22] sm:$0xff]
  %v3333 = vld [vmem:[%s22 + $0x8] sm:$0xf]
  %v3334 = vmul.f32 %v3245, %v3330
  %v3335 = vmul.f32 %v3246, %v3331
  %v3336 = vsub.f32 %v3332, %v3334
  %v3337 = vsub.f32 %v3333, %v3335
  %3339 = vset.pattern.permute.xlu0 0
  %3340 = vperm.xlu0 %3339, %v3330
  %v3341 = vpop.permute.xlu0 %3340
  %3344 = vset.pattern.permute.xlu0 0
  %3345 = vperm.xlu0 %3344, %v3331
  %v3346 = vpop.permute.xlu0 %3345
  %v3348 = vmul.f32 %v3138, %v3341
  %v3349 = vmul.f32 %v3152, %v3341
  %v3350 = vmul.f32 %v3166, %v3341
  %v3351 = vmul.f32 %v3180, %v3341
  %v3352 = vmul.f32 %v3194, %v3341
  %v3353 = vmul.f32 %v3208, %v3341
  %v3354 = vmul.f32 %v3140, %v3346
  %v3355 = vmul.f32 %v3154, %v3346
  %v3356 = vmul.f32 %v3168, %v3346
  %v3357 = vmul.f32 %v3182, %v3346
  %v3358 = vmul.f32 %v3196, %v3346
  %v3359 = vmul.f32 %v3210, %v3346
  %3361 = vset.pattern.permute.xlu0 0
  %3362 = vperm.xlu0 %3361, %v3336
  %v3363 = vpop.permute.xlu0 %3362
  %3366 = vset.pattern.permute.xlu0 0
  %3367 = vperm.xlu0 %3366, %v3337
  %v3368 = vpop.permute.xlu0 %3367
  %v3370 = vadd.f32 %v3348, %v3363
  %v3371 = vadd.f32 %v3349, %v3363
  %v3372 = vadd.f32 %v3350, %v3363
  %v3373 = vadd.f32 %v3351, %v3363
  %v3374 = vadd.f32 %v3352, %v3363
  %v3375 = vadd.f32 %v3353, %v3363
  %v3376 = vadd.f32 %v3354, %v3368
  %v3377 = vadd.f32 %v3355, %v3368
  %v3378 = vadd.f32 %v3356, %v3368
  %v3379 = vadd.f32 %v3357, %v3368
  %v3380 = vadd.f32 %v3358, %v3368
  %v3381 = vadd.f32 %v3359, %v3368
  %vm3382 = vcmp.ge.f32.partialorder %v3370, 0.0
  %vm3383 = vcmp.ge.f32.partialorder %v3371, 0.0
  %vm3384 = vcmp.ge.f32.partialorder %v3372, 0.0
  %vm3385 = vcmp.ge.f32.partialorder %v3373, 0.0
  %vm3386 = vcmp.ge.f32.partialorder %v3374, 0.0
  %vm3387 = vcmp.ge.f32.partialorder %v3375, 0.0
  %vm3388 = vcmp.ge.f32.partialorder %v3376, 0.0
  %vm3389 = vcmp.ge.f32.partialorder %v3377, 0.0
  %vm3390 = vcmp.ge.f32.partialorder %v3378, 0.0
  %vm3391 = vcmp.ge.f32.partialorder %v3379, 0.0
  %vm3392 = vcmp.ge.f32.partialorder %v3380, 0.0
  %vm3393 = vcmp.ge.f32.partialorder %v3381, 0.0
  %v3394 = vmul.f32 %v3370, 0.01
  %v3395 = vmul.f32 %v3371, 0.01
  %v3396 = vmul.f32 %v3372, 0.01
  %v3397 = vmul.f32 %v3373, 0.01
  %v3398 = vmul.f32 %v3374, 0.01
  %v3399 = vmul.f32 %v3375, 0.01
  %v3400 = vmul.f32 %v3376, 0.01
  %v3401 = vmul.f32 %v3377, 0.01
  %v3402 = vmul.f32 %v3378, 0.01
  %v3403 = vmul.f32 %v3379, 0.01
  %v3404 = vmul.f32 %v3380, 0.01
  %v3405 = vmul.f32 %v3381, 0.01
  %v3406 = vsel %vm3382, %v3370, %v3394
  %v3407 = vsel %vm3383, %v3371, %v3395
  %v3408 = vsel %vm3384, %v3372, %v3396
  %v3409 = vsel %vm3385, %v3373, %v3397
  %v3410 = vsel %vm3386, %v3374, %v3398
  %v3411 = vsel %vm3387, %v3375, %v3399
  %v3412 = vsel %vm3388, %v3376, %v3400
  %v3413 = vsel %vm3389, %v3377, %v3401
  %v3414 = vsel %vm3390, %v3378, %v3402
  %v3415 = vsel %vm3391, %v3379, %v3403
  %v3416 = vsel %vm3392, %v3380, %v3404
  %v3417 = vsel %vm3393, %v3381, %v3405
  %v3418 = vmul.f32 %v3406, %v611
  %v3419 = vmul.f32 %v3407, %v612
  %v3420 = vmul.f32 %v3408, %v613
  %v3421 = vmul.f32 %v3409, %v614
  %v3422 = vmul.f32 %v3410, %v615
  %v3423 = vmul.f32 %v3411, %v616
  %v3424 = vmul.f32 %v3412, %v611
  %v3425 = vmul.f32 %v3413, %v612
  %v3426 = vmul.f32 %v3414, %v613
  %v3427 = vmul.f32 %v3415, %v614
  %v3428 = vmul.f32 %v3416, %v615
  %v3429 = vmul.f32 %v3417, %v616
  %3430 = vst [vmem:[%s24] sm:$0xff] %v3418
  %3431 = vst [vmem:[%s24 + $0x8] sm:$0xff] %v3419
  %3432 = vst [vmem:[%s24 + $0x10] sm:$0xff] %v3420
  %3433 = vst [vmem:[%s24 + $0x18] sm:$0xff] %v3421
  %3434 = vst [vmem:[%s24 + $0x20] sm:$0xff] %v3422
  %3435 = vst.msk [vmem:[%s24 + $0x28] sm:$0xff] %vm90, %v3423
  %3436 = vst [vmem:[%s24 + $0x30] sm:$0xf] %v3424
  %3437 = vst [vmem:[%s24 + $0x38] sm:$0xf] %v3425
  %3438 = vst [vmem:[%s24 + $0x40] sm:$0xf] %v3426
  %3439 = vst [vmem:[%s24 + $0x48] sm:$0xf] %v3427
  %3440 = vst [vmem:[%s24 + $0x50] sm:$0xf] %v3428
  %3441 = vst.msk [vmem:[%s24 + $0x58] sm:$0xf] %vm150, %v3429
  // Predicated region
  $region94: #{dense_net_encoder.2} parent=0 // pred_check
    _
  $region95: #{dense_net_encoder.2} parent=0 // pred_check_branch
    %3443 = sbr.rel (0) target = $region97
  $region96: #{dense_net_encoder.2} parent=0 // pred_region
    _
  $region97: #{dense_net_encoder.2} parent=0 // pred_fallthru
    _
  // Predicated region
  $region98: #{dense_net_encoder.2} parent=0 // pred_check
    _
  $region99: #{dense_net_encoder.2} parent=0 // pred_check_branch
    %3445 = sbr.rel (0) target = $region101
  $region100: #{dense_net_encoder.2} parent=0 // pred_region
    _
  $region101: #{dense_net_encoder.2} parent=0 // pred_fallthru
    _
  // Predicated region
  $region102: #{dense_net_encoder.2} parent=0 // pred_check
    _
  $region103: #{dense_net_encoder.2} parent=0 // pred_check_branch
    %3447 = sbr.rel (0) target = $region105
  $region104: #{dense_net_encoder.2} parent=0 // pred_region
    _
  $region105: #{dense_net_encoder.2} parent=0 // pred_fallthru
    _
  // Predicated region
  $region106: #{dense_net_encoder.2} parent=0 // pred_check
    _
  $region107: #{dense_net_encoder.2} parent=0 // pred_check_branch
    %3449 = sbr.rel (0) target = $region109
  $region108: #{dense_net_encoder.2} parent=0 // pred_region
    _
  $region109: #{dense_net_encoder.2} parent=0 // pred_fallthru
    _

</llo_original>
